<compile_context>
chip_gen: v6e
topology: v6e:2x2x1
jax: 0.10.0
libtpu: 0.0.40
codegen_flags: <defaults>
</compile_context>

<pallas_src>
import jax
import jax.numpy as jnp
from jax import lax
from jax.experimental import pallas as pl
from jax.experimental.pallas import tpu as pltpu


def _round_up(n, m):
    return ((n + m - 1) // m) * m


def _sigmoid(z):
    # logistic(z) == 0.5*tanh(0.5*z) + 0.5 : single EUP tanh, no divide.
    return 0.5 * jnp.tanh(0.5 * z) + 0.5


def lstm_recurrence_kernel(x_ref, whh_ref, wxb_ref, hw_ref, hb_ref, out_ref):
    """LSTM recurrence + fused output heads for one batch block.

    x_ref:   (T, BB, IA)  raw inputs, time-major; col I holds 1.0 (bias column)
    whh_ref: (H, 4H)      W_hh^T, PyTorch gate order (i, f, g, o), no padding
    wxb_ref: (IA, 4H)     rows 0..I-1 = W_ih^T, row I = b_ih + b_hh, rest zero
    hw_ref:  (H, OW)      fused heads: col 0 = fc.weight^T, cols 1..E = embed^T
    hb_ref:  (1, OW)      fused head bias
    out_ref: (BB, OW)     col 0 = final_score, cols 1..E = embed_vector
    """
    T, BB, _ = x_ref.shape
    H = whh_ref.shape[0]

    def step(t, carry):
        h, c = carry
        # Recurrent matmul + folded input projection (+ bias via the ones column).
        # Both are MXU pushes; the x-projection does not depend on h, so it hides
        # under the recurrent matmul latency.
        gates = (jnp.dot(h, whh_ref[...], preferred_element_type=jnp.float32)
                 + jnp.dot(x_ref[t], wxb_ref[...],
                           preferred_element_type=jnp.float32))
        i_g = _sigmoid(gates[:, 0 * H:1 * H])
        f_g = _sigmoid(gates[:, 1 * H:2 * H])
        g_g = jnp.tanh(gates[:, 2 * H:3 * H])
        o_g = _sigmoid(gates[:, 3 * H:4 * H])
        c = f_g * c + i_g * g_g
        h = o_g * jnp.tanh(c)
        return h, c

    h0 = jnp.zeros((BB, H), jnp.float32)
    c0 = jnp.zeros((BB, H), jnp.float32)
    h_last, _ = lax.fori_loop(0, T, step, (h0, c0),
                              unroll=True if T <= 16 else 8)

    # Single lane-dense epilogue store: [score | embed | zero padding].
    out_ref[...] = (jnp.dot(h_last, hw_ref[...],
                            preferred_element_type=jnp.float32)
                    + hb_ref[...])


@jax.jit
def horse_race_lstm_forward(x, params):
    """x: (B, T, I) float32.  Returns (final_score (B,), embed_vector (B, E))."""
    B, T, I = x.shape
    H = params["w_hh_t"].shape[0]
    G = 4 * H                          # contiguous gate packing, no per-gate pad
    E = params["emb_w_t"].shape[1]
    f32 = jnp.float32

    IA = _round_up(I + 1, 8)           # raw features + bias-ones column (sublane pad)
    OW = _round_up(1 + E, 128)         # fused (score | embed) head width, lane-dense
    Bp = _round_up(B, 8)               # sublane-align batch
    BB = min(Bp, 128)                  # keep h/c/gates vreg-resident
    if Bp >= 16 and BB == Bp:          # >= 2 parallel blocks -> both TCs on v7x
        BB = _round_up(Bp // 2, 8)
    Bp = _round_up(Bp, BB)

    # Recurrent weight, gate-contiguous at 4H (PyTorch gate order i, f, g, o).
    w_hh = params["w_hh_t"].astype(f32)                               # (H, 4H)

    # Input projection + combined bias folded into a tiny (IA, 4H) weight that is
    # consumed inside the recurrent step (so no (T, B, 4H) x_proj slab anywhere).
    w_xb = jnp.zeros((IA, G), f32)
    w_xb = w_xb.at[:I, :].set(params["w_ih_t"].astype(f32))
    w_xb = w_xb.at[I, :].set((params["b_ih"] + params["b_hh"]).astype(f32))

    # Fused output heads: col 0 = fc, cols 1..E = embed_projector.
    head_w = jnp.zeros((H, OW), f32)
    head_w = head_w.at[:, 0:1].set(params["fc_w_t"].astype(f32))
    head_w = head_w.at[:, 1:1 + E].set(params["emb_w_t"].astype(f32))
    head_b = jnp.zeros((1, OW), f32)
    head_b = head_b.at[0, 0].set(params["fc_b"][0])
    head_b = head_b.at[0, 1:1 + E].set(params["emb_b"])

    # Raw x, time-major, batch padded, with the bias-ones column appended:
    # (T, Bp, IA) so that x_ref[t] is a directly addressable (BB, IA) tile.
    xt = jnp.transpose(x.astype(f32), (1, 0, 2))                      # (T, B, I)
    xt = jnp.pad(xt, ((0, 0), (0, Bp - B), (0, 0)))                   # (T, Bp, I)
    x_aug = jnp.concatenate([xt, jnp.ones((T, Bp, 1), f32)], axis=-1)
    x_aug = jnp.pad(x_aug, ((0, 0), (0, 0), (0, IA - I - 1)))         # (T, Bp, IA)

    flops = 2 * Bp * T * (H + IA) * G + 2 * Bp * H * OW
    transcendentals = 5 * T * Bp * H
    bytes_accessed = 4 * (x_aug.size + w_hh.size + w_xb.size
                          + head_w.size + head_b.size + Bp * OW)

    out = pl.pallas_call(
        lstm_recurrence_kernel,
        out_shape=jax.ShapeDtypeStruct((Bp, OW), f32),
        grid_spec=pltpu.PrefetchScalarGridSpec(
            num_scalar_prefetch=0,
            grid=(Bp // BB,),                                  # independent batch blocks
            in_specs=[
                pl.BlockSpec((T, BB, IA), lambda b: (0, b, 0)),   # raw x (+ ones)
                pl.BlockSpec((H, G), lambda b: (0, 0)),           # W_hh^T
                pl.BlockSpec((IA, G), lambda b: (0, 0)),          # [W_ih^T ; bias]
                pl.BlockSpec((H, OW), lambda b: (0, 0)),          # fused head W
                pl.BlockSpec((1, OW), lambda b: (0, 0)),          # fused head b
            ],
            out_specs=pl.BlockSpec((BB, OW), lambda b: (b, 0)),
        ),
        compiler_params=pltpu.CompilerParams(
            dimension_semantics=("parallel",)),                # batch axis independent
        cost_estimate=pl.CostEstimate(flops=int(flops),
                                      transcendentals=int(transcendentals),
                                      bytes_accessed=int(bytes_accessed)),
    )(x_aug, w_hh, w_xb, head_w, head_b)

    score = out[:B, 0]          # == fc(last_hidden).squeeze(1)
    embed = out[:B, 1:1 + E]    # == embed_projector(last_hidden)
    return score, embed


def init_params(key, input_size=3, hidden_size=64, out_embed_size=8):
    """Deterministic synthetic parameters (PyTorch-style uniform(-k, k))."""
    H, I, E = hidden_size, input_size, out_embed_size
    k_lstm = 1.0 / jnp.sqrt(H)
    keys = jax.random.split(key, 8)

    def u(k, shape, bound):
        return jax.random.uniform(k, shape, jnp.float32, -bound, bound)

    return {
        # stored already transposed for x @ W^T (PyTorch gate order i, f, g, o)
        "w_ih_t": u(keys[0], (I, 4 * H), k_lstm),
        "w_hh_t": u(keys[1], (H, 4 * H), k_lstm),
        "b_ih":   u(keys[2], (4 * H,), k_lstm),
        "b_hh":   u(keys[3], (4 * H,), k_lstm),
        "fc_w_t": u(keys[4], (H, 1), 1.0 / jnp.sqrt(H)),
        "fc_b":   u(keys[5], (1,), 1.0 / jnp.sqrt(H)),
        "emb_w_t": u(keys[6], (H, E), 1.0 / jnp.sqrt(H)),
        "emb_b":   u(keys[7], (E,), 1.0 / jnp.sqrt(H)),
    }


def reference_forward(x, params):
    """Pure-JAX reference matching torch.nn.LSTM + Linear semantics."""
    B, T, I = x.shape
    H = params["w_hh_t"].shape[0]
    bias = params["b_ih"] + params["b_hh"]

    def step(carry, x_t):
        h, c = carry
        gates = x_t @ params["w_ih_t"] + h @ params["w_hh_t"] + bias
        i = jax.nn.sigmoid(gates[:, 0 * H:1 * H])
        f = jax.nn.sigmoid(gates[:, 1 * H:2 * H])
        g = jnp.tanh(gates[:, 2 * H:3 * H])
        o = jax.nn.sigmoid(gates[:, 3 * H:4 * H])
        c = f * c + i * g
        h = o * jnp.tanh(c)
        return (h, c), None

    h0 = jnp.zeros((B, H), jnp.float32)
    (h_last, _), _ = jax.lax.scan(step, (h0, h0), jnp.transpose(x, (1, 0, 2)))
    score = (h_last @ params["fc_w_t"])[:, 0] + params["fc_b"][0]
    embed = h_last @ params["emb_w_t"] + params["emb_b"]
    return score, embed


if __name__ == "__main__":
    # Keep both the kernel and the pure-JAX reference at full f32 matmul
    # precision so the numerical comparison below is meaningful.
    jax.config.update("jax_default_matmul_precision", "highest")

    B, T, I, H, E = 2, 8, 3, 64, 8
    key = jax.random.PRNGKey(0)
    k_x, k_p = jax.random.split(key)

    x = jax.random.normal(k_x, (B, T, I), jnp.float32)
    params = init_params(k_p, input_size=I, hidden_size=H, out_embed_size=E)

    score, embed = horse_race_lstm_forward(x, params)
    jax.block_until_ready((score, embed))

    ref_score, ref_embed = reference_forward(x, params)
    assert score.shape == (B,) and embed.shape == (B, E)
    assert jnp.allclose(score, ref_score, rtol=1e-4, atol=1e-4)
    assert jnp.allclose(embed, ref_embed, rtol=1e-4, atol=1e-4)

    print("KERNEL_OK")
</pallas_src>

<mosaic_0001>
module attributes {stable_mosaic.version = 11 : i64} {
  func.func @lstm_recurrence_kernel(%arg0: i32, %arg1: memref<8x8x8xf32, #tpu.memory_space<vmem>>, %arg2: memref<64x256xf32, #tpu.memory_space<vmem>>, %arg3: memref<8x256xf32, #tpu.memory_space<vmem>>, %arg4: memref<64x128xf32, #tpu.memory_space<vmem>>, %arg5: memref<1x128xf32, #tpu.memory_space<vmem>>, %arg6: memref<8x128xf32, #tpu.memory_space<vmem>>) attributes {dimension_semantics = [#tpu.dimension_semantics<parallel>], iteration_bounds = array<i64: 1>, scalar_prefetch = 0 : i64, scratch_operands = 0 : i64, tpu.core_type = #tpu.core_type<tc>, window_params = [{transform_indices = @transform_0, window_bounds = array<i64: 8, 8, 8>}, {pipeline_mode = #tpu.pipeline_mode<synchronous>, transform_indices = @transform_1, window_bounds = array<i64: 64, 256>}, {pipeline_mode = #tpu.pipeline_mode<synchronous>, transform_indices = @transform_2, window_bounds = array<i64: 8, 256>}, {pipeline_mode = #tpu.pipeline_mode<synchronous>, transform_indices = @transform_3, window_bounds = array<i64: 64, 128>}, {pipeline_mode = #tpu.pipeline_mode<synchronous>, transform_indices = @transform_4, window_bounds = array<i64: 1, 128>}, {transform_indices = @transform_5, window_bounds = array<i64: 8, 128>}]} {
    %cst = arith.constant 0.000000e+00 : f32
    %0 = vector.broadcast %cst : f32 to vector<8x64xf32>
    %cst_0 = arith.constant 0.000000e+00 : f32
    %1 = vector.broadcast %cst_0 : f32 to vector<8x64xf32>
    %c0_i32 = arith.constant 0 : i32
    %c0 = arith.constant 0 : index
    %c0_1 = arith.constant 0 : index
    %2 = vector.load %arg2[%c0, %c0_1] : memref<64x256xf32, #tpu.memory_space<vmem>>, vector<64x256xf32>
    %cst_2 = arith.constant dense<0.000000e+00> : vector<8x256xf32>
    %3 = tpu.matmul %0, %2, %cst_2 {dimension_numbers = #tpu.dot_dimension_numbers<[1], [0], [0], [1], [0, 0, 1, 1], [], []>, precision = #tpu.contract_precision<fp32>} : vector<8x64xf32>, vector<64x256xf32>, vector<8x256xf32> -> vector<8x256xf32>
    %4 = arith.index_cast %c0_i32 : i32 to index
    %c0_3 = arith.constant 0 : index
    %c0_4 = arith.constant 0 : index
    %5 = vector.load %arg1[%4, %c0_3, %c0_4] : memref<8x8x8xf32, #tpu.memory_space<vmem>>, vector<1x8x8xf32>
    %6 = vector.shape_cast %5 : vector<1x8x8xf32> to vector<8x8xf32>
    %c0_5 = arith.constant 0 : index
    %c0_6 = arith.constant 0 : index
    %7 = vector.load %arg3[%c0_5, %c0_6] : memref<8x256xf32, #tpu.memory_space<vmem>>, vector<8x256xf32>
    %cst_7 = arith.constant dense<0.000000e+00> : vector<8x256xf32>
    %8 = tpu.matmul %6, %7, %cst_7 {dimension_numbers = #tpu.dot_dimension_numbers<[1], [0], [0], [1], [0, 0, 1, 1], [], []>, precision = #tpu.contract_precision<fp32>} : vector<8x8xf32>, vector<8x256xf32>, vector<8x256xf32> -> vector<8x256xf32>
    %9 = arith.addf %3, %8 : vector<8x256xf32>
    %10 = vector.extract_strided_slice %9 {offsets = [0, 0], sizes = [8, 64], strides = [1, 1]} : vector<8x256xf32> to vector<8x64xf32>
    %cst_8 = arith.constant 5.000000e-01 : f32
    %11 = vector.broadcast %cst_8 : f32 to vector<8x64xf32>
    %12 = arith.mulf %11, %10 : vector<8x64xf32>
    %13 = math.tanh %12 : vector<8x64xf32>
    %cst_9 = arith.constant 5.000000e-01 : f32
    %14 = vector.broadcast %cst_9 : f32 to vector<8x64xf32>
    %15 = arith.mulf %14, %13 : vector<8x64xf32>
    %cst_10 = arith.constant 5.000000e-01 : f32
    %16 = vector.broadcast %cst_10 : f32 to vector<8x64xf32>
    %17 = arith.addf %15, %16 : vector<8x64xf32>
    %18 = vector.extract_strided_slice %9 {offsets = [0, 64], sizes = [8, 64], strides = [1, 1]} : vector<8x256xf32> to vector<8x64xf32>
    %cst_11 = arith.constant 5.000000e-01 : f32
    %19 = vector.broadcast %cst_11 : f32 to vector<8x64xf32>
    %20 = arith.mulf %19, %18 : vector<8x64xf32>
    %21 = math.tanh %20 : vector<8x64xf32>
    %cst_12 = arith.constant 5.000000e-01 : f32
    %22 = vector.broadcast %cst_12 : f32 to vector<8x64xf32>
    %23 = arith.mulf %22, %21 : vector<8x64xf32>
    %cst_13 = arith.constant 5.000000e-01 : f32
    %24 = vector.broadcast %cst_13 : f32 to vector<8x64xf32>
    %25 = arith.addf %23, %24 : vector<8x64xf32>
    %26 = vector.extract_strided_slice %9 {offsets = [0, 128], sizes = [8, 64], strides = [1, 1]} : vector<8x256xf32> to vector<8x64xf32>
    %27 = math.tanh %26 : vector<8x64xf32>
    %28 = vector.extract_strided_slice %9 {offsets = [0, 192], sizes = [8, 64], strides = [1, 1]} : vector<8x256xf32> to vector<8x64xf32>
    %cst_14 = arith.constant 5.000000e-01 : f32
    %29 = vector.broadcast %cst_14 : f32 to vector<8x64xf32>
    %30 = arith.mulf %29, %28 : vector<8x64xf32>
    %31 = math.tanh %30 : vector<8x64xf32>
    %cst_15 = arith.constant 5.000000e-01 : f32
    %32 = vector.broadcast %cst_15 : f32 to vector<8x64xf32>
    %33 = arith.mulf %32, %31 : vector<8x64xf32>
    %cst_16 = arith.constant 5.000000e-01 : f32
    %34 = vector.broadcast %cst_16 : f32 to vector<8x64xf32>
    %35 = arith.addf %33, %34 : vector<8x64xf32>
    %36 = arith.mulf %25, %1 : vector<8x64xf32>
    %37 = arith.mulf %17, %27 : vector<8x64xf32>
    %38 = arith.addf %36, %37 : vector<8x64xf32>
    %39 = math.tanh %38 : vector<8x64xf32>
    %40 = arith.mulf %35, %39 : vector<8x64xf32>
    %c1_i32 = arith.constant 1 : i32
    %c0_17 = arith.constant 0 : index
    %c0_18 = arith.constant 0 : index
    %41 = vector.load %arg2[%c0_17, %c0_18] : memref<64x256xf32, #tpu.memory_space<vmem>>, vector<64x256xf32>
    %cst_19 = arith.constant dense<0.000000e+00> : vector<8x256xf32>
    %42 = tpu.matmul %40, %41, %cst_19 {dimension_numbers = #tpu.dot_dimension_numbers<[1], [0], [0], [1], [0, 0, 1, 1], [], []>, precision = #tpu.contract_precision<fp32>} : vector<8x64xf32>, vector<64x256xf32>, vector<8x256xf32> -> vector<8x256xf32>
    %43 = arith.index_cast %c1_i32 : i32 to index
    %c0_20 = arith.constant 0 : index
    %c0_21 = arith.constant 0 : index
    %44 = vector.load %arg1[%43, %c0_20, %c0_21] : memref<8x8x8xf32, #tpu.memory_space<vmem>>, vector<1x8x8xf32>
    %45 = vector.shape_cast %44 : vector<1x8x8xf32> to vector<8x8xf32>
    %c0_22 = arith.constant 0 : index
    %c0_23 = arith.constant 0 : index
    %46 = vector.load %arg3[%c0_22, %c0_23] : memref<8x256xf32, #tpu.memory_space<vmem>>, vector<8x256xf32>
    %cst_24 = arith.constant dense<0.000000e+00> : vector<8x256xf32>
    %47 = tpu.matmul %45, %46, %cst_24 {dimension_numbers = #tpu.dot_dimension_numbers<[1], [0], [0], [1], [0, 0, 1, 1], [], []>, precision = #tpu.contract_precision<fp32>} : vector<8x8xf32>, vector<8x256xf32>, vector<8x256xf32> -> vector<8x256xf32>
    %48 = arith.addf %42, %47 : vector<8x256xf32>
    %49 = vector.extract_strided_slice %48 {offsets = [0, 0], sizes = [8, 64], strides = [1, 1]} : vector<8x256xf32> to vector<8x64xf32>
    %cst_25 = arith.constant 5.000000e-01 : f32
    %50 = vector.broadcast %cst_25 : f32 to vector<8x64xf32>
    %51 = arith.mulf %50, %49 : vector<8x64xf32>
    %52 = math.tanh %51 : vector<8x64xf32>
    %cst_26 = arith.constant 5.000000e-01 : f32
    %53 = vector.broadcast %cst_26 : f32 to vector<8x64xf32>
    %54 = arith.mulf %53, %52 : vector<8x64xf32>
    %cst_27 = arith.constant 5.000000e-01 : f32
    %55 = vector.broadcast %cst_27 : f32 to vector<8x64xf32>
    %56 = arith.addf %54, %55 : vector<8x64xf32>
    %57 = vector.extract_strided_slice %48 {offsets = [0, 64], sizes = [8, 64], strides = [1, 1]} : vector<8x256xf32> to vector<8x64xf32>
    %cst_28 = arith.constant 5.000000e-01 : f32
    %58 = vector.broadcast %cst_28 : f32 to vector<8x64xf32>
    %59 = arith.mulf %58, %57 : vector<8x64xf32>
    %60 = math.tanh %59 : vector<8x64xf32>
    %cst_29 = arith.constant 5.000000e-01 : f32
    %61 = vector.broadcast %cst_29 : f32 to vector<8x64xf32>
    %62 = arith.mulf %61, %60 : vector<8x64xf32>
    %cst_30 = arith.constant 5.000000e-01 : f32
    %63 = vector.broadcast %cst_30 : f32 to vector<8x64xf32>
    %64 = arith.addf %62, %63 : vector<8x64xf32>
    %65 = vector.extract_strided_slice %48 {offsets = [0, 128], sizes = [8, 64], strides = [1, 1]} : vector<8x256xf32> to vector<8x64xf32>
    %66 = math.tanh %65 : vector<8x64xf32>
    %67 = vector.extract_strided_slice %48 {offsets = [0, 192], sizes = [8, 64], strides = [1, 1]} : vector<8x256xf32> to vector<8x64xf32>
    %cst_31 = arith.constant 5.000000e-01 : f32
    %68 = vector.broadcast %cst_31 : f32 to vector<8x64xf32>
    %69 = arith.mulf %68, %67 : vector<8x64xf32>
    %70 = math.tanh %69 : vector<8x64xf32>
    %cst_32 = arith.constant 5.000000e-01 : f32
    %71 = vector.broadcast %cst_32 : f32 to vector<8x64xf32>
    %72 = arith.mulf %71, %70 : vector<8x64xf32>
    %cst_33 = arith.constant 5.000000e-01 : f32
    %73 = vector.broadcast %cst_33 : f32 to vector<8x64xf32>
    %74 = arith.addf %72, %73 : vector<8x64xf32>
    %75 = arith.mulf %64, %38 : vector<8x64xf32>
    %76 = arith.mulf %56, %66 : vector<8x64xf32>
    %77 = arith.addf %75, %76 : vector<8x64xf32>
    %78 = math.tanh %77 : vector<8x64xf32>
    %79 = arith.mulf %74, %78 : vector<8x64xf32>
    %c2_i32 = arith.constant 2 : i32
    %c0_34 = arith.constant 0 : index
    %c0_35 = arith.constant 0 : index
    %80 = vector.load %arg2[%c0_34, %c0_35] : memref<64x256xf32, #tpu.memory_space<vmem>>, vector<64x256xf32>
    %cst_36 = arith.constant dense<0.000000e+00> : vector<8x256xf32>
    %81 = tpu.matmul %79, %80, %cst_36 {dimension_numbers = #tpu.dot_dimension_numbers<[1], [0], [0], [1], [0, 0, 1, 1], [], []>, precision = #tpu.contract_precision<fp32>} : vector<8x64xf32>, vector<64x256xf32>, vector<8x256xf32> -> vector<8x256xf32>
    %82 = arith.index_cast %c2_i32 : i32 to index
    %c0_37 = arith.constant 0 : index
    %c0_38 = arith.constant 0 : index
    %83 = vector.load %arg1[%82, %c0_37, %c0_38] : memref<8x8x8xf32, #tpu.memory_space<vmem>>, vector<1x8x8xf32>
    %84 = vector.shape_cast %83 : vector<1x8x8xf32> to vector<8x8xf32>
    %c0_39 = arith.constant 0 : index
    %c0_40 = arith.constant 0 : index
    %85 = vector.load %arg3[%c0_39, %c0_40] : memref<8x256xf32, #tpu.memory_space<vmem>>, vector<8x256xf32>
    %cst_41 = arith.constant dense<0.000000e+00> : vector<8x256xf32>
    %86 = tpu.matmul %84, %85, %cst_41 {dimension_numbers = #tpu.dot_dimension_numbers<[1], [0], [0], [1], [0, 0, 1, 1], [], []>, precision = #tpu.contract_precision<fp32>} : vector<8x8xf32>, vector<8x256xf32>, vector<8x256xf32> -> vector<8x256xf32>
    %87 = arith.addf %81, %86 : vector<8x256xf32>
    %88 = vector.extract_strided_slice %87 {offsets = [0, 0], sizes = [8, 64], strides = [1, 1]} : vector<8x256xf32> to vector<8x64xf32>
    %cst_42 = arith.constant 5.000000e-01 : f32
    %89 = vector.broadcast %cst_42 : f32 to vector<8x64xf32>
    %90 = arith.mulf %89, %88 : vector<8x64xf32>
    %91 = math.tanh %90 : vector<8x64xf32>
    %cst_43 = arith.constant 5.000000e-01 : f32
    %92 = vector.broadcast %cst_43 : f32 to vector<8x64xf32>
    %93 = arith.mulf %92, %91 : vector<8x64xf32>
    %cst_44 = arith.constant 5.000000e-01 : f32
    %94 = vector.broadcast %cst_44 : f32 to vector<8x64xf32>
    %95 = arith.addf %93, %94 : vector<8x64xf32>
    %96 = vector.extract_strided_slice %87 {offsets = [0, 64], sizes = [8, 64], strides = [1, 1]} : vector<8x256xf32> to vector<8x64xf32>
    %cst_45 = arith.constant 5.000000e-01 : f32
    %97 = vector.broadcast %cst_45 : f32 to vector<8x64xf32>
    %98 = arith.mulf %97, %96 : vector<8x64xf32>
    %99 = math.tanh %98 : vector<8x64xf32>
    %cst_46 = arith.constant 5.000000e-01 : f32
    %100 = vector.broadcast %cst_46 : f32 to vector<8x64xf32>
    %101 = arith.mulf %100, %99 : vector<8x64xf32>
    %cst_47 = arith.constant 5.000000e-01 : f32
    %102 = vector.broadcast %cst_47 : f32 to vector<8x64xf32>
    %103 = arith.addf %101, %102 : vector<8x64xf32>
    %104 = vector.extract_strided_slice %87 {offsets = [0, 128], sizes = [8, 64], strides = [1, 1]} : vector<8x256xf32> to vector<8x64xf32>
    %105 = math.tanh %104 : vector<8x64xf32>
    %106 = vector.extract_strided_slice %87 {offsets = [0, 192], sizes = [8, 64], strides = [1, 1]} : vector<8x256xf32> to vector<8x64xf32>
    %cst_48 = arith.constant 5.000000e-01 : f32
    %107 = vector.broadcast %cst_48 : f32 to vector<8x64xf32>
    %108 = arith.mulf %107, %106 : vector<8x64xf32>
    %109 = math.tanh %108 : vector<8x64xf32>
    %cst_49 = arith.constant 5.000000e-01 : f32
    %110 = vector.broadcast %cst_49 : f32 to vector<8x64xf32>
    %111 = arith.mulf %110, %109 : vector<8x64xf32>
    %cst_50 = arith.constant 5.000000e-01 : f32
    %112 = vector.broadcast %cst_50 : f32 to vector<8x64xf32>
    %113 = arith.addf %111, %112 : vector<8x64xf32>
    %114 = arith.mulf %103, %77 : vector<8x64xf32>
    %115 = arith.mulf %95, %105 : vector<8x64xf32>
    %116 = arith.addf %114, %115 : vector<8x64xf32>
    %117 = math.tanh %116 : vector<8x64xf32>
    %118 = arith.mulf %113, %117 : vector<8x64xf32>
    %c3_i32 = arith.constant 3 : i32
    %c0_51 = arith.constant 0 : index
    %c0_52 = arith.constant 0 : index
    %119 = vector.load %arg2[%c0_51, %c0_52] : memref<64x256xf32, #tpu.memory_space<vmem>>, vector<64x256xf32>
    %cst_53 = arith.constant dense<0.000000e+00> : vector<8x256xf32>
    %120 = tpu.matmul %118, %119, %cst_53 {dimension_numbers = #tpu.dot_dimension_numbers<[1], [0], [0], [1], [0, 0, 1, 1], [], []>, precision = #tpu.contract_precision<fp32>} : vector<8x64xf32>, vector<64x256xf32>, vector<8x256xf32> -> vector<8x256xf32>
    %121 = arith.index_cast %c3_i32 : i32 to index
    %c0_54 = arith.constant 0 : index
    %c0_55 = arith.constant 0 : index
    %122 = vector.load %arg1[%121, %c0_54, %c0_55] : memref<8x8x8xf32, #tpu.memory_space<vmem>>, vector<1x8x8xf32>
    %123 = vector.shape_cast %122 : vector<1x8x8xf32> to vector<8x8xf32>
    %c0_56 = arith.constant 0 : index
    %c0_57 = arith.constant 0 : index
    %124 = vector.load %arg3[%c0_56, %c0_57] : memref<8x256xf32, #tpu.memory_space<vmem>>, vector<8x256xf32>
    %cst_58 = arith.constant dense<0.000000e+00> : vector<8x256xf32>
    %125 = tpu.matmul %123, %124, %cst_58 {dimension_numbers = #tpu.dot_dimension_numbers<[1], [0], [0], [1], [0, 0, 1, 1], [], []>, precision = #tpu.contract_precision<fp32>} : vector<8x8xf32>, vector<8x256xf32>, vector<8x256xf32> -> vector<8x256xf32>
    %126 = arith.addf %120, %125 : vector<8x256xf32>
    %127 = vector.extract_strided_slice %126 {offsets = [0, 0], sizes = [8, 64], strides = [1, 1]} : vector<8x256xf32> to vector<8x64xf32>
    %cst_59 = arith.constant 5.000000e-01 : f32
    %128 = vector.broadcast %cst_59 : f32 to vector<8x64xf32>
    %129 = arith.mulf %128, %127 : vector<8x64xf32>
    %130 = math.tanh %129 : vector<8x64xf32>
    %cst_60 = arith.constant 5.000000e-01 : f32
    %131 = vector.broadcast %cst_60 : f32 to vector<8x64xf32>
    %132 = arith.mulf %131, %130 : vector<8x64xf32>
    %cst_61 = arith.constant 5.000000e-01 : f32
    %133 = vector.broadcast %cst_61 : f32 to vector<8x64xf32>
    %134 = arith.addf %132, %133 : vector<8x64xf32>
    %135 = vector.extract_strided_slice %126 {offsets = [0, 64], sizes = [8, 64], strides = [1, 1]} : vector<8x256xf32> to vector<8x64xf32>
    %cst_62 = arith.constant 5.000000e-01 : f32
    %136 = vector.broadcast %cst_62 : f32 to vector<8x64xf32>
    %137 = arith.mulf %136, %135 : vector<8x64xf32>
    %138 = math.tanh %137 : vector<8x64xf32>
    %cst_63 = arith.constant 5.000000e-01 : f32
    %139 = vector.broadcast %cst_63 : f32 to vector<8x64xf32>
    %140 = arith.mulf %139, %138 : vector<8x64xf32>
    %cst_64 = arith.constant 5.000000e-01 : f32
    %141 = vector.broadcast %cst_64 : f32 to vector<8x64xf32>
    %142 = arith.addf %140, %141 : vector<8x64xf32>
    %143 = vector.extract_strided_slice %126 {offsets = [0, 128], sizes = [8, 64], strides = [1, 1]} : vector<8x256xf32> to vector<8x64xf32>
    %144 = math.tanh %143 : vector<8x64xf32>
    %145 = vector.extract_strided_slice %126 {offsets = [0, 192], sizes = [8, 64], strides = [1, 1]} : vector<8x256xf32> to vector<8x64xf32>
    %cst_65 = arith.constant 5.000000e-01 : f32
    %146 = vector.broadcast %cst_65 : f32 to vector<8x64xf32>
    %147 = arith.mulf %146, %145 : vector<8x64xf32>
    %148 = math.tanh %147 : vector<8x64xf32>
    %cst_66 = arith.constant 5.000000e-01 : f32
    %149 = vector.broadcast %cst_66 : f32 to vector<8x64xf32>
    %150 = arith.mulf %149, %148 : vector<8x64xf32>
    %cst_67 = arith.constant 5.000000e-01 : f32
    %151 = vector.broadcast %cst_67 : f32 to vector<8x64xf32>
    %152 = arith.addf %150, %151 : vector<8x64xf32>
    %153 = arith.mulf %142, %116 : vector<8x64xf32>
    %154 = arith.mulf %134, %144 : vector<8x64xf32>
    %155 = arith.addf %153, %154 : vector<8x64xf32>
    %156 = math.tanh %155 : vector<8x64xf32>
    %157 = arith.mulf %152, %156 : vector<8x64xf32>
    %c4_i32 = arith.constant 4 : i32
    %c0_68 = arith.constant 0 : index
    %c0_69 = arith.constant 0 : index
    %158 = vector.load %arg2[%c0_68, %c0_69] : memref<64x256xf32, #tpu.memory_space<vmem>>, vector<64x256xf32>
    %cst_70 = arith.constant dense<0.000000e+00> : vector<8x256xf32>
    %159 = tpu.matmul %157, %158, %cst_70 {dimension_numbers = #tpu.dot_dimension_numbers<[1], [0], [0], [1], [0, 0, 1, 1], [], []>, precision = #tpu.contract_precision<fp32>} : vector<8x64xf32>, vector<64x256xf32>, vector<8x256xf32> -> vector<8x256xf32>
    %160 = arith.index_cast %c4_i32 : i32 to index
    %c0_71 = arith.constant 0 : index
    %c0_72 = arith.constant 0 : index
    %161 = vector.load %arg1[%160, %c0_71, %c0_72] : memref<8x8x8xf32, #tpu.memory_space<vmem>>, vector<1x8x8xf32>
    %162 = vector.shape_cast %161 : vector<1x8x8xf32> to vector<8x8xf32>
    %c0_73 = arith.constant 0 : index
    %c0_74 = arith.constant 0 : index
    %163 = vector.load %arg3[%c0_73, %c0_74] : memref<8x256xf32, #tpu.memory_space<vmem>>, vector<8x256xf32>
    %cst_75 = arith.constant dense<0.000000e+00> : vector<8x256xf32>
    %164 = tpu.matmul %162, %163, %cst_75 {dimension_numbers = #tpu.dot_dimension_numbers<[1], [0], [0], [1], [0, 0, 1, 1], [], []>, precision = #tpu.contract_precision<fp32>} : vector<8x8xf32>, vector<8x256xf32>, vector<8x256xf32> -> vector<8x256xf32>
    %165 = arith.addf %159, %164 : vector<8x256xf32>
    %166 = vector.extract_strided_slice %165 {offsets = [0, 0], sizes = [8, 64], strides = [1, 1]} : vector<8x256xf32> to vector<8x64xf32>
    %cst_76 = arith.constant 5.000000e-01 : f32
    %167 = vector.broadcast %cst_76 : f32 to vector<8x64xf32>
    %168 = arith.mulf %167, %166 : vector<8x64xf32>
    %169 = math.tanh %168 : vector<8x64xf32>
    %cst_77 = arith.constant 5.000000e-01 : f32
    %170 = vector.broadcast %cst_77 : f32 to vector<8x64xf32>
    %171 = arith.mulf %170, %169 : vector<8x64xf32>
    %cst_78 = arith.constant 5.000000e-01 : f32
    %172 = vector.broadcast %cst_78 : f32 to vector<8x64xf32>
    %173 = arith.addf %171, %172 : vector<8x64xf32>
    %174 = vector.extract_strided_slice %165 {offsets = [0, 64], sizes = [8, 64], strides = [1, 1]} : vector<8x256xf32> to vector<8x64xf32>
    %cst_79 = arith.constant 5.000000e-01 : f32
    %175 = vector.broadcast %cst_79 : f32 to vector<8x64xf32>
    %176 = arith.mulf %175, %174 : vector<8x64xf32>
    %177 = math.tanh %176 : vector<8x64xf32>
    %cst_80 = arith.constant 5.000000e-01 : f32
    %178 = vector.broadcast %cst_80 : f32 to vector<8x64xf32>
    %179 = arith.mulf %178, %177 : vector<8x64xf32>
    %cst_81 = arith.constant 5.000000e-01 : f32
    %180 = vector.broadcast %cst_81 : f32 to vector<8x64xf32>
    %181 = arith.addf %179, %180 : vector<8x64xf32>
    %182 = vector.extract_strided_slice %165 {offsets = [0, 128], sizes = [8, 64], strides = [1, 1]} : vector<8x256xf32> to vector<8x64xf32>
    %183 = math.tanh %182 : vector<8x64xf32>
    %184 = vector.extract_strided_slice %165 {offsets = [0, 192], sizes = [8, 64], strides = [1, 1]} : vector<8x256xf32> to vector<8x64xf32>
    %cst_82 = arith.constant 5.000000e-01 : f32
    %185 = vector.broadcast %cst_82 : f32 to vector<8x64xf32>
    %186 = arith.mulf %185, %184 : vector<8x64xf32>
    %187 = math.tanh %186 : vector<8x64xf32>
    %cst_83 = arith.constant 5.000000e-01 : f32
    %188 = vector.broadcast %cst_83 : f32 to vector<8x64xf32>
    %189 = arith.mulf %188, %187 : vector<8x64xf32>
    %cst_84 = arith.constant 5.000000e-01 : f32
    %190 = vector.broadcast %cst_84 : f32 to vector<8x64xf32>
    %191 = arith.addf %189, %190 : vector<8x64xf32>
    %192 = arith.mulf %181, %155 : vector<8x64xf32>
    %193 = arith.mulf %173, %183 : vector<8x64xf32>
    %194 = arith.addf %192, %193 : vector<8x64xf32>
    %195 = math.tanh %194 : vector<8x64xf32>
    %196 = arith.mulf %191, %195 : vector<8x64xf32>
    %c5_i32 = arith.constant 5 : i32
    %c0_85 = arith.constant 0 : index
    %c0_86 = arith.constant 0 : index
    %197 = vector.load %arg2[%c0_85, %c0_86] : memref<64x256xf32, #tpu.memory_space<vmem>>, vector<64x256xf32>
    %cst_87 = arith.constant dense<0.000000e+00> : vector<8x256xf32>
    %198 = tpu.matmul %196, %197, %cst_87 {dimension_numbers = #tpu.dot_dimension_numbers<[1], [0], [0], [1], [0, 0, 1, 1], [], []>, precision = #tpu.contract_precision<fp32>} : vector<8x64xf32>, vector<64x256xf32>, vector<8x256xf32> -> vector<8x256xf32>
    %199 = arith.index_cast %c5_i32 : i32 to index
    %c0_88 = arith.constant 0 : index
    %c0_89 = arith.constant 0 : index
    %200 = vector.load %arg1[%199, %c0_88, %c0_89] : memref<8x8x8xf32, #tpu.memory_space<vmem>>, vector<1x8x8xf32>
    %201 = vector.shape_cast %200 : vector<1x8x8xf32> to vector<8x8xf32>
    %c0_90 = arith.constant 0 : index
    %c0_91 = arith.constant 0 : index
    %202 = vector.load %arg3[%c0_90, %c0_91] : memref<8x256xf32, #tpu.memory_space<vmem>>, vector<8x256xf32>
    %cst_92 = arith.constant dense<0.000000e+00> : vector<8x256xf32>
    %203 = tpu.matmul %201, %202, %cst_92 {dimension_numbers = #tpu.dot_dimension_numbers<[1], [0], [0], [1], [0, 0, 1, 1], [], []>, precision = #tpu.contract_precision<fp32>} : vector<8x8xf32>, vector<8x256xf32>, vector<8x256xf32> -> vector<8x256xf32>
    %204 = arith.addf %198, %203 : vector<8x256xf32>
    %205 = vector.extract_strided_slice %204 {offsets = [0, 0], sizes = [8, 64], strides = [1, 1]} : vector<8x256xf32> to vector<8x64xf32>
    %cst_93 = arith.constant 5.000000e-01 : f32
    %206 = vector.broadcast %cst_93 : f32 to vector<8x64xf32>
    %207 = arith.mulf %206, %205 : vector<8x64xf32>
    %208 = math.tanh %207 : vector<8x64xf32>
    %cst_94 = arith.constant 5.000000e-01 : f32
    %209 = vector.broadcast %cst_94 : f32 to vector<8x64xf32>
    %210 = arith.mulf %209, %208 : vector<8x64xf32>
    %cst_95 = arith.constant 5.000000e-01 : f32
    %211 = vector.broadcast %cst_95 : f32 to vector<8x64xf32>
    %212 = arith.addf %210, %211 : vector<8x64xf32>
    %213 = vector.extract_strided_slice %204 {offsets = [0, 64], sizes = [8, 64], strides = [1, 1]} : vector<8x256xf32> to vector<8x64xf32>
    %cst_96 = arith.constant 5.000000e-01 : f32
    %214 = vector.broadcast %cst_96 : f32 to vector<8x64xf32>
    %215 = arith.mulf %214, %213 : vector<8x64xf32>
    %216 = math.tanh %215 : vector<8x64xf32>
    %cst_97 = arith.constant 5.000000e-01 : f32
    %217 = vector.broadcast %cst_97 : f32 to vector<8x64xf32>
    %218 = arith.mulf %217, %216 : vector<8x64xf32>
    %cst_98 = arith.constant 5.000000e-01 : f32
    %219 = vector.broadcast %cst_98 : f32 to vector<8x64xf32>
    %220 = arith.addf %218, %219 : vector<8x64xf32>
    %221 = vector.extract_strided_slice %204 {offsets = [0, 128], sizes = [8, 64], strides = [1, 1]} : vector<8x256xf32> to vector<8x64xf32>
    %222 = math.tanh %221 : vector<8x64xf32>
    %223 = vector.extract_strided_slice %204 {offsets = [0, 192], sizes = [8, 64], strides = [1, 1]} : vector<8x256xf32> to vector<8x64xf32>
    %cst_99 = arith.constant 5.000000e-01 : f32
    %224 = vector.broadcast %cst_99 : f32 to vector<8x64xf32>
    %225 = arith.mulf %224, %223 : vector<8x64xf32>
    %226 = math.tanh %225 : vector<8x64xf32>
    %cst_100 = arith.constant 5.000000e-01 : f32
    %227 = vector.broadcast %cst_100 : f32 to vector<8x64xf32>
    %228 = arith.mulf %227, %226 : vector<8x64xf32>
    %cst_101 = arith.constant 5.000000e-01 : f32
    %229 = vector.broadcast %cst_101 : f32 to vector<8x64xf32>
    %230 = arith.addf %228, %229 : vector<8x64xf32>
    %231 = arith.mulf %220, %194 : vector<8x64xf32>
    %232 = arith.mulf %212, %222 : vector<8x64xf32>
    %233 = arith.addf %231, %232 : vector<8x64xf32>
    %234 = math.tanh %233 : vector<8x64xf32>
    %235 = arith.mulf %230, %234 : vector<8x64xf32>
    %c6_i32 = arith.constant 6 : i32
    %c0_102 = arith.constant 0 : index
    %c0_103 = arith.constant 0 : index
    %236 = vector.load %arg2[%c0_102, %c0_103] : memref<64x256xf32, #tpu.memory_space<vmem>>, vector<64x256xf32>
    %cst_104 = arith.constant dense<0.000000e+00> : vector<8x256xf32>
    %237 = tpu.matmul %235, %236, %cst_104 {dimension_numbers = #tpu.dot_dimension_numbers<[1], [0], [0], [1], [0, 0, 1, 1], [], []>, precision = #tpu.contract_precision<fp32>} : vector<8x64xf32>, vector<64x256xf32>, vector<8x256xf32> -> vector<8x256xf32>
    %238 = arith.index_cast %c6_i32 : i32 to index
    %c0_105 = arith.constant 0 : index
    %c0_106 = arith.constant 0 : index
    %239 = vector.load %arg1[%238, %c0_105, %c0_106] : memref<8x8x8xf32, #tpu.memory_space<vmem>>, vector<1x8x8xf32>
    %240 = vector.shape_cast %239 : vector<1x8x8xf32> to vector<8x8xf32>
    %c0_107 = arith.constant 0 : index
    %c0_108 = arith.constant 0 : index
    %241 = vector.load %arg3[%c0_107, %c0_108] : memref<8x256xf32, #tpu.memory_space<vmem>>, vector<8x256xf32>
    %cst_109 = arith.constant dense<0.000000e+00> : vector<8x256xf32>
    %242 = tpu.matmul %240, %241, %cst_109 {dimension_numbers = #tpu.dot_dimension_numbers<[1], [0], [0], [1], [0, 0, 1, 1], [], []>, precision = #tpu.contract_precision<fp32>} : vector<8x8xf32>, vector<8x256xf32>, vector<8x256xf32> -> vector<8x256xf32>
    %243 = arith.addf %237, %242 : vector<8x256xf32>
    %244 = vector.extract_strided_slice %243 {offsets = [0, 0], sizes = [8, 64], strides = [1, 1]} : vector<8x256xf32> to vector<8x64xf32>
    %cst_110 = arith.constant 5.000000e-01 : f32
    %245 = vector.broadcast %cst_110 : f32 to vector<8x64xf32>
    %246 = arith.mulf %245, %244 : vector<8x64xf32>
    %247 = math.tanh %246 : vector<8x64xf32>
    %cst_111 = arith.constant 5.000000e-01 : f32
    %248 = vector.broadcast %cst_111 : f32 to vector<8x64xf32>
    %249 = arith.mulf %248, %247 : vector<8x64xf32>
    %cst_112 = arith.constant 5.000000e-01 : f32
    %250 = vector.broadcast %cst_112 : f32 to vector<8x64xf32>
    %251 = arith.addf %249, %250 : vector<8x64xf32>
    %252 = vector.extract_strided_slice %243 {offsets = [0, 64], sizes = [8, 64], strides = [1, 1]} : vector<8x256xf32> to vector<8x64xf32>
    %cst_113 = arith.constant 5.000000e-01 : f32
    %253 = vector.broadcast %cst_113 : f32 to vector<8x64xf32>
    %254 = arith.mulf %253, %252 : vector<8x64xf32>
    %255 = math.tanh %254 : vector<8x64xf32>
    %cst_114 = arith.constant 5.000000e-01 : f32
    %256 = vector.broadcast %cst_114 : f32 to vector<8x64xf32>
    %257 = arith.mulf %256, %255 : vector<8x64xf32>
    %cst_115 = arith.constant 5.000000e-01 : f32
    %258 = vector.broadcast %cst_115 : f32 to vector<8x64xf32>
    %259 = arith.addf %257, %258 : vector<8x64xf32>
    %260 = vector.extract_strided_slice %243 {offsets = [0, 128], sizes = [8, 64], strides = [1, 1]} : vector<8x256xf32> to vector<8x64xf32>
    %261 = math.tanh %260 : vector<8x64xf32>
    %262 = vector.extract_strided_slice %243 {offsets = [0, 192], sizes = [8, 64], strides = [1, 1]} : vector<8x256xf32> to vector<8x64xf32>
    %cst_116 = arith.constant 5.000000e-01 : f32
    %263 = vector.broadcast %cst_116 : f32 to vector<8x64xf32>
    %264 = arith.mulf %263, %262 : vector<8x64xf32>
    %265 = math.tanh %264 : vector<8x64xf32>
    %cst_117 = arith.constant 5.000000e-01 : f32
    %266 = vector.broadcast %cst_117 : f32 to vector<8x64xf32>
    %267 = arith.mulf %266, %265 : vector<8x64xf32>
    %cst_118 = arith.constant 5.000000e-01 : f32
    %268 = vector.broadcast %cst_118 : f32 to vector<8x64xf32>
    %269 = arith.addf %267, %268 : vector<8x64xf32>
    %270 = arith.mulf %259, %233 : vector<8x64xf32>
    %271 = arith.mulf %251, %261 : vector<8x64xf32>
    %272 = arith.addf %270, %271 : vector<8x64xf32>
    %273 = math.tanh %272 : vector<8x64xf32>
    %274 = arith.mulf %269, %273 : vector<8x64xf32>
    %c7_i32 = arith.constant 7 : i32
    %c0_119 = arith.constant 0 : index
    %c0_120 = arith.constant 0 : index
    %275 = vector.load %arg2[%c0_119, %c0_120] : memref<64x256xf32, #tpu.memory_space<vmem>>, vector<64x256xf32>
    %cst_121 = arith.constant dense<0.000000e+00> : vector<8x256xf32>
    %276 = tpu.matmul %274, %275, %cst_121 {dimension_numbers = #tpu.dot_dimension_numbers<[1], [0], [0], [1], [0, 0, 1, 1], [], []>, precision = #tpu.contract_precision<fp32>} : vector<8x64xf32>, vector<64x256xf32>, vector<8x256xf32> -> vector<8x256xf32>
    %277 = arith.index_cast %c7_i32 : i32 to index
    %c0_122 = arith.constant 0 : index
    %c0_123 = arith.constant 0 : index
    %278 = vector.load %arg1[%277, %c0_122, %c0_123] : memref<8x8x8xf32, #tpu.memory_space<vmem>>, vector<1x8x8xf32>
    %279 = vector.shape_cast %278 : vector<1x8x8xf32> to vector<8x8xf32>
    %c0_124 = arith.constant 0 : index
    %c0_125 = arith.constant 0 : index
    %280 = vector.load %arg3[%c0_124, %c0_125] : memref<8x256xf32, #tpu.memory_space<vmem>>, vector<8x256xf32>
    %cst_126 = arith.constant dense<0.000000e+00> : vector<8x256xf32>
    %281 = tpu.matmul %279, %280, %cst_126 {dimension_numbers = #tpu.dot_dimension_numbers<[1], [0], [0], [1], [0, 0, 1, 1], [], []>, precision = #tpu.contract_precision<fp32>} : vector<8x8xf32>, vector<8x256xf32>, vector<8x256xf32> -> vector<8x256xf32>
    %282 = arith.addf %276, %281 : vector<8x256xf32>
    %283 = vector.extract_strided_slice %282 {offsets = [0, 0], sizes = [8, 64], strides = [1, 1]} : vector<8x256xf32> to vector<8x64xf32>
    %cst_127 = arith.constant 5.000000e-01 : f32
    %284 = vector.broadcast %cst_127 : f32 to vector<8x64xf32>
    %285 = arith.mulf %284, %283 : vector<8x64xf32>
    %286 = math.tanh %285 : vector<8x64xf32>
    %cst_128 = arith.constant 5.000000e-01 : f32
    %287 = vector.broadcast %cst_128 : f32 to vector<8x64xf32>
    %288 = arith.mulf %287, %286 : vector<8x64xf32>
    %cst_129 = arith.constant 5.000000e-01 : f32
    %289 = vector.broadcast %cst_129 : f32 to vector<8x64xf32>
    %290 = arith.addf %288, %289 : vector<8x64xf32>
    %291 = vector.extract_strided_slice %282 {offsets = [0, 64], sizes = [8, 64], strides = [1, 1]} : vector<8x256xf32> to vector<8x64xf32>
    %cst_130 = arith.constant 5.000000e-01 : f32
    %292 = vector.broadcast %cst_130 : f32 to vector<8x64xf32>
    %293 = arith.mulf %292, %291 : vector<8x64xf32>
    %294 = math.tanh %293 : vector<8x64xf32>
    %cst_131 = arith.constant 5.000000e-01 : f32
    %295 = vector.broadcast %cst_131 : f32 to vector<8x64xf32>
    %296 = arith.mulf %295, %294 : vector<8x64xf32>
    %cst_132 = arith.constant 5.000000e-01 : f32
    %297 = vector.broadcast %cst_132 : f32 to vector<8x64xf32>
    %298 = arith.addf %296, %297 : vector<8x64xf32>
    %299 = vector.extract_strided_slice %282 {offsets = [0, 128], sizes = [8, 64], strides = [1, 1]} : vector<8x256xf32> to vector<8x64xf32>
    %300 = math.tanh %299 : vector<8x64xf32>
    %301 = vector.extract_strided_slice %282 {offsets = [0, 192], sizes = [8, 64], strides = [1, 1]} : vector<8x256xf32> to vector<8x64xf32>
    %cst_133 = arith.constant 5.000000e-01 : f32
    %302 = vector.broadcast %cst_133 : f32 to vector<8x64xf32>
    %303 = arith.mulf %302, %301 : vector<8x64xf32>
    %304 = math.tanh %303 : vector<8x64xf32>
    %cst_134 = arith.constant 5.000000e-01 : f32
    %305 = vector.broadcast %cst_134 : f32 to vector<8x64xf32>
    %306 = arith.mulf %305, %304 : vector<8x64xf32>
    %cst_135 = arith.constant 5.000000e-01 : f32
    %307 = vector.broadcast %cst_135 : f32 to vector<8x64xf32>
    %308 = arith.addf %306, %307 : vector<8x64xf32>
    %309 = arith.mulf %298, %272 : vector<8x64xf32>
    %310 = arith.mulf %290, %300 : vector<8x64xf32>
    %311 = arith.addf %309, %310 : vector<8x64xf32>
    %312 = math.tanh %311 : vector<8x64xf32>
    %313 = arith.mulf %308, %312 : vector<8x64xf32>
    %c8_i32 = arith.constant 8 : i32
    %c0_136 = arith.constant 0 : index
    %c0_137 = arith.constant 0 : index
    %314 = vector.load %arg4[%c0_136, %c0_137] : memref<64x128xf32, #tpu.memory_space<vmem>>, vector<64x128xf32>
    %cst_138 = arith.constant dense<0.000000e+00> : vector<8x128xf32>
    %315 = tpu.matmul %313, %314, %cst_138 {dimension_numbers = #tpu.dot_dimension_numbers<[1], [0], [0], [1], [0, 0, 1, 1], [], []>, precision = #tpu.contract_precision<fp32>} : vector<8x64xf32>, vector<64x128xf32>, vector<8x128xf32> -> vector<8x128xf32>
    %c0_139 = arith.constant 0 : index
    %c0_140 = arith.constant 0 : index
    %316 = vector.load %arg5[%c0_139, %c0_140] : memref<1x128xf32, #tpu.memory_space<vmem>>, vector<1x128xf32>
    %317 = vector.broadcast %316 : vector<1x128xf32> to vector<8x128xf32>
    %318 = arith.addf %315, %317 : vector<8x128xf32>
    %c0_141 = arith.constant 0 : index
    %c0_142 = arith.constant 0 : index
    %319 = vector.load %arg6[%c0_141, %c0_142] : memref<8x128xf32, #tpu.memory_space<vmem>>, vector<8x128xf32>
    tpu.vector_store %arg6[%c0_141, %c0_142], %318 {strides = array<i32>} : memref<8x128xf32, #tpu.memory_space<vmem>>, vector<8x128xf32>,
    return
  }
  func.func @transform_0(%arg0: i32) -> (i32, i32, i32) {
    %c0_i32 = arith.constant 0 : i32
    %c0_i32_0 = arith.constant 0 : i32
    %c0_i32_1 = arith.constant 0 : i32
    return %c0_i32, %arg0, %c0_i32_0 : i32, i32, i32
  }
  func.func @transform_1(%arg0: i32) -> (i32, i32) {
    %c0_i32 = arith.constant 0 : i32
    %c0_i32_0 = arith.constant 0 : i32
    %c0_i32_1 = arith.constant 0 : i32
    return %c0_i32, %c0_i32_0 : i32, i32
  }
  func.func @transform_2(%arg0: i32) -> (i32, i32) {
    %c0_i32 = arith.constant 0 : i32
    %c0_i32_0 = arith.constant 0 : i32
    %c0_i32_1 = arith.constant 0 : i32
    return %c0_i32, %c0_i32_0 : i32, i32
  }
  func.func @transform_3(%arg0: i32) -> (i32, i32) {
    %c0_i32 = arith.constant 0 : i32
    %c0_i32_0 = arith.constant 0 : i32
    %c0_i32_1 = arith.constant 0 : i32
    return %c0_i32, %c0_i32_0 : i32, i32
  }
  func.func @transform_4(%arg0: i32) -> (i32, i32) {
    %c0_i32 = arith.constant 0 : i32
    %c0_i32_0 = arith.constant 0 : i32
    %c0_i32_1 = arith.constant 0 : i32
    return %c0_i32, %c0_i32_0 : i32, i32
  }
  func.func @transform_5(%arg0: i32) -> (i32, i32) {
    %c0_i32 = arith.constant 0 : i32
    %c0_i32_0 = arith.constant 0 : i32
    return %arg0, %c0_i32 : i32, i32
  }
}

</mosaic_0001>

<llo_original>
// kernel: horse_race_lstm_forward.1
$region0: #{horse_race_lstm_forward.1}
  #allocation0 [shape = 'u32[]', space=smem, size = 0x4, offset = 0x4, fixed_abs, tag = 'smem constant byte address 0x4 - core index']
  #allocation1 [shape = 'u32[144,128]{1,0:T(1,128)}', space=vmem, size = 0x12000, scoped, tag = 'internal scratch']
  %s0 = inlined_call_operand.vmem [shape: f32[8,8,8], index: 0, kind: input, shape index: {}]
  %s1 = inlined_call_operand.vmem [shape: f32[64,256], index: 1, kind: input, shape index: {}]
  %s2 = inlined_call_operand.vmem [shape: f32[8,256], index: 2, kind: input, shape index: {}]
  %s3 = inlined_call_operand.vmem [shape: f32[64,128], index: 3, kind: input, shape index: {}]
  %s4 = inlined_call_operand.vmem [shape: f32[1,128], index: 4, kind: input, shape index: {}]
  %s5 = inlined_call_operand.vmem [shape: f32[8,128], index: 5, kind: output, shape index: {}]
  %s6 = sld [smem:[#allocation0]]
  $region30: #{horse_race_lstm_forward.1} parent=0
    _
  %s8 = ssub.s32 1, %s6
  %s9 = scalar_select 0, %s8, %s6
  // Predicated region
  $region2: #{horse_race_lstm_forward.1} parent=0 // pred_check
    _
  $region3: #{horse_race_lstm_forward.1} parent=0 // pred_check_branch
    %11 = sbr.rel (0) target = $region5
  $region4: #{horse_race_lstm_forward.1} parent=0 // pred_region
    _
  $region5: #{horse_race_lstm_forward.1} parent=0 // pred_fallthru
    _
  // Predicated region
  $region6: #{horse_race_lstm_forward.1} parent=0 // pred_check
    _
  $region7: #{horse_race_lstm_forward.1} parent=0 // pred_check_branch
    %13 = sbr.rel (0) target = $region9
  $region8: #{horse_race_lstm_forward.1} parent=0 // pred_region
    _
  $region9: #{horse_race_lstm_forward.1} parent=0 // pred_fallthru
    _
  // Predicated region
  $region10: #{horse_race_lstm_forward.1} parent=0 // pred_check
    _
  $region11: #{horse_race_lstm_forward.1} parent=0 // pred_check_branch
    %15 = sbr.rel (0) target = $region13
  $region12: #{horse_race_lstm_forward.1} parent=0 // pred_region
    _
  $region13: #{horse_race_lstm_forward.1} parent=0 // pred_fallthru
    _
  // Predicated region
  $region14: #{horse_race_lstm_forward.1} parent=0 // pred_check
    _
  $region15: #{horse_race_lstm_forward.1} parent=0 // pred_check_branch
    %17 = sbr.rel (0) target = $region17
  $region16: #{horse_race_lstm_forward.1} parent=0 // pred_region
    _
  $region17: #{horse_race_lstm_forward.1} parent=0 // pred_fallthru
    _
  // Predicated region
  $region18: #{horse_race_lstm_forward.1} parent=0 // pred_check
    _
  $region19: #{horse_race_lstm_forward.1} parent=0 // pred_check_branch
    %19 = sbr.rel (0) target = $region21
  $region20: #{horse_race_lstm_forward.1} parent=0 // pred_region
    _
  $region21: #{horse_race_lstm_forward.1} parent=0 // pred_fallthru
    _
  %v20 = vld [vmem:[%s1] sm:$0xff]
  %v21 = vld [vmem:[%s1 + $0x8] sm:$0xff]
  %v22 = vld [vmem:[%s1 + $0x10] sm:$0xff]
  %v23 = vld [vmem:[%s1 + $0x18] sm:$0xff]
  %v24 = vld [vmem:[%s1 + $0x20] sm:$0xff]
  %v25 = vld [vmem:[%s1 + $0x28] sm:$0xff]
  %v26 = vld [vmem:[%s1 + $0x30] sm:$0xff]
  %v27 = vld [vmem:[%s1 + $0x38] sm:$0xff]
  %v28 = vld [vmem:[%s1 + $0x40] sm:$0xff]
  %v29 = vld [vmem:[%s1 + $0x48] sm:$0xff]
  %v30 = vld [vmem:[%s1 + $0x50] sm:$0xff]
  %v31 = vld [vmem:[%s1 + $0x58] sm:$0xff]
  %v32 = vld [vmem:[%s1 + $0x60] sm:$0xff]
  %v33 = vld [vmem:[%s1 + $0x68] sm:$0xff]
  %v34 = vld [vmem:[%s1 + $0x70] sm:$0xff]
  %v35 = vld [vmem:[%s1 + $0x78] sm:$0xff]
  %v36 = vld [vmem:[%s0] sm:$0xff]
  %v37 = vld [vmem:[%s2] sm:$0xff]
  %v38 = vld [vmem:[%s2 + $0x8] sm:$0xff]
  %vm39 = vcmask 64512
  %v41 = vsel %vm39, %v36, 0
  %43 = vmatprep.subr.mxu0 0.0
  %44 = vmatpush1.msra.mxu0 0.0
  %45 = vmatprep.subr.mxu0 0.0
  %46 = vmatpush1.msra.mxu0 0.0
  %47 = vmatprep.subr.mxu0 0.0
  %48 = vmatpush1.msra.mxu0 0.0
  %49 = vmatprep.subr.mxu0 0.0
  %50 = vmatpush1.msra.mxu0 0.0
  %51 = vmatprep.subr.mxu0 0.0
  %52 = vmatpush1.msra.mxu0 0.0
  %53 = vmatprep.subr.mxu0 0.0
  %54 = vmatpush1.msra.mxu0 0.0
  %55 = vmatprep.subr.mxu0 0.0
  %56 = vmatpush1.msra.mxu0 0.0
  %57 = vmatprep.subr.mxu0 0.0
  %58 = vmatpush1.msra.mxu0 0.0
  %59 = vmatprep.subr.mxu0 0.0
  %60 = vmatpush1.msra.mxu0 0.0
  %61 = vmatprep.subr.mxu0 0.0
  %62 = vmatpush1.msra.mxu0 0.0
  %63 = vmatprep.subr.mxu0 0.0
  %64 = vmatpush1.msra.mxu0 0.0
  %65 = vmatprep.subr.mxu0 0.0
  %66 = vmatpush1.msra.mxu0 0.0
  %67 = vmatprep.subr.mxu0 0.0
  %68 = vmatpush1.msra.mxu0 0.0
  %69 = vmatprep.subr.mxu0 0.0
  %70 = vmatpush1.msra.mxu0 0.0
  %71 = vmatprep.subr.mxu0 0.0
  %72 = vmatpush1.msra.mxu0 0.0
  %v73 = vand.u32 %v38, 4294901760
  %74 = vmatprep.subr.mxu0 %v73
  %v75 = vand.u32 %v37, 4294901760
  %76 = vmatpush1.msra.mxu0 %v75
  %77 = vmatprep.subr.mxu0 0.0
  %78 = vmatpush2.msra.mxu0 0.0
  %79 = vmatprep.subr.mxu0 0.0
  %80 = vmatpush2.msra.mxu0 0.0
  %81 = vmatprep.subr.mxu0 0.0
  %82 = vmatpush2.msra.mxu0 0.0
  %83 = vmatprep.subr.mxu0 0.0
  %84 = vmatpush2.msra.mxu0 0.0
  %85 = vmatprep.subr.mxu0 0.0
  %86 = vmatpush2.msra.mxu0 0.0
  %87 = vmatprep.subr.mxu0 0.0
  %88 = vmatpush2.msra.mxu0 0.0
  %89 = vmatprep.subr.mxu0 0.0
  %90 = vmatpush2.msra.mxu0 0.0
  %91 = vmatprep.subr.mxu0 0.0
  %92 = vmatpush2.msra.mxu0 0.0
  %93 = vmatprep.subr.mxu0 0.0
  %94 = vmatpush2.msra.mxu0 0.0
  %95 = vmatprep.subr.mxu0 0.0
  %96 = vmatpush2.msra.mxu0 0.0
  %97 = vmatprep.subr.mxu0 0.0
  %98 = vmatpush2.msra.mxu0 0.0
  %99 = vmatprep.subr.mxu0 0.0
  %100 = vmatpush2.msra.mxu0 0.0
  %101 = vmatprep.subr.mxu0 0.0
  %102 = vmatpush2.msra.mxu0 0.0
  %103 = vmatprep.subr.mxu0 0.0
  %104 = vmatpush2.msra.mxu0 0.0
  %105 = vmatprep.subr.mxu0 0.0
  %106 = vmatpush2.msra.mxu0 0.0
  %107 = vmatprep.subr.mxu0 0.0
  %108 = vmatpush2.msra.mxu0 0.0
  %109 = vmatprep.mubr.f32.mxu0 0.0
  %v110 = vand.u32 %v41, 4294901760
  %v111 = vsub.f32 %v41, %v110
  %v112 = vand.u32 %v111, 4294901760
  %v113 = vsub.f32 %v111, %v112
  %v114 = vand.u32 %v113, 4294901760
  %115 = vmatmul.mubr.f32.gmra.mxu0 %v114
  %v116 = vpop.f32.mrf.mxu0
  %v117 = vadd.f32 0.0, %v116
  %v118 = vpop.f32.mrf.mxu0
  %v119 = vadd.f32 0.0, %v118
  %120 = vdwg.mxu0
  %121 = vmatprep.subr.mxu0 0.0
  %122 = vmatpush1.msra.mxu0 0.0
  %123 = vmatprep.subr.mxu0 0.0
  %124 = vmatpush1.msra.mxu0 0.0
  %125 = vmatprep.subr.mxu0 0.0
  %126 = vmatpush1.msra.mxu0 0.0
  %127 = vmatprep.subr.mxu0 0.0
  %128 = vmatpush1.msra.mxu0 0.0
  %129 = vmatprep.subr.mxu0 0.0
  %130 = vmatpush1.msra.mxu0 0.0
  %131 = vmatprep.subr.mxu0 0.0
  %132 = vmatpush1.msra.mxu0 0.0
  %133 = vmatprep.subr.mxu0 0.0
  %134 = vmatpush1.msra.mxu0 0.0
  %135 = vmatprep.subr.mxu0 0.0
  %136 = vmatpush1.msra.mxu0 0.0
  %137 = vmatprep.subr.mxu0 0.0
  %138 = vmatpush1.msra.mxu0 0.0
  %139 = vmatprep.subr.mxu0 0.0
  %140 = vmatpush1.msra.mxu0 0.0
  %141 = vmatprep.subr.mxu0 0.0
  %142 = vmatpush1.msra.mxu0 0.0
  %143 = vmatprep.subr.mxu0 0.0
  %144 = vmatpush1.msra.mxu0 0.0
  %145 = vmatprep.subr.mxu0 0.0
  %146 = vmatpush1.msra.mxu0 0.0
  %147 = vmatprep.subr.mxu0 0.0
  %148 = vmatpush1.msra.mxu0 0.0
  %149 = vmatprep.subr.mxu0 0.0
  %150 = vmatpush1.msra.mxu0 0.0
  %v151 = vand.u32 %v38, 4294901760
  %v152 = vsub.f32 %v38, %v151
  %v153 = vand.u32 %v152, 4294901760
  %v154 = vsub.f32 %v152, %v153
  %v155 = vand.u32 %v154, 4294901760
  %156 = vmatprep.subr.mxu0 %v155
  %v157 = vand.u32 %v37, 4294901760
  %v158 = vsub.f32 %v37, %v157
  %v159 = vand.u32 %v158, 4294901760
  %v160 = vsub.f32 %v158, %v159
  %v161 = vand.u32 %v160, 4294901760
  %162 = vmatpush1.msra.mxu0 %v161
  %163 = vmatprep.subr.mxu0 0.0
  %164 = vmatpush2.msra.mxu0 0.0
  %165 = vmatprep.subr.mxu0 0.0
  %166 = vmatpush2.msra.mxu0 0.0
  %167 = vmatprep.subr.mxu0 0.0
  %168 = vmatpush2.msra.mxu0 0.0
  %169 = vmatprep.subr.mxu0 0.0
  %170 = vmatpush2.msra.mxu0 0.0
  %171 = vmatprep.subr.mxu0 0.0
  %172 = vmatpush2.msra.mxu0 0.0
  %173 = vmatprep.subr.mxu0 0.0
  %174 = vmatpush2.msra.mxu0 0.0
  %175 = vmatprep.subr.mxu0 0.0
  %176 = vmatpush2.msra.mxu0 0.0
  %177 = vmatprep.subr.mxu0 0.0
  %178 = vmatpush2.msra.mxu0 0.0
  %179 = vmatprep.subr.mxu0 0.0
  %180 = vmatpush2.msra.mxu0 0.0
  %181 = vmatprep.subr.mxu0 0.0
  %182 = vmatpush2.msra.mxu0 0.0
  %183 = vmatprep.subr.mxu0 0.0
  %184 = vmatpush2.msra.mxu0 0.0
  %185 = vmatprep.subr.mxu0 0.0
  %186 = vmatpush2.msra.mxu0 0.0
  %187 = vmatprep.subr.mxu0 0.0
  %188 = vmatpush2.msra.mxu0 0.0
  %189 = vmatprep.subr.mxu0 0.0
  %190 = vmatpush2.msra.mxu0 0.0
  %191 = vmatprep.subr.mxu0 0.0
  %192 = vmatpush2.msra.mxu0 0.0
  %193 = vmatprep.subr.mxu0 0.0
  %194 = vmatpush2.msra.mxu0 0.0
  %195 = vmatprep.mubr.f32.mxu0 0.0
  %v196 = vand.u32 %v41, 4294901760
  %197 = vmatmul.mubr.f32.gmra.mxu0 %v196
  %v198 = vpop.f32.mrf.mxu0
  %v199 = vadd.f32 %v117, %v198
  %v200 = vpop.f32.mrf.mxu0
  %v201 = vadd.f32 %v119, %v200
  %202 = vdwg.mxu0
  %203 = vmatprep.subr.mxu0 0.0
  %204 = vmatpush1.msra.mxu0 0.0
  %205 = vmatprep.subr.mxu0 0.0
  %206 = vmatpush1.msra.mxu0 0.0
  %207 = vmatprep.subr.mxu0 0.0
  %208 = vmatpush1.msra.mxu0 0.0
  %209 = vmatprep.subr.mxu0 0.0
  %210 = vmatpush1.msra.mxu0 0.0
  %211 = vmatprep.subr.mxu0 0.0
  %212 = vmatpush1.msra.mxu0 0.0
  %213 = vmatprep.subr.mxu0 0.0
  %214 = vmatpush1.msra.mxu0 0.0
  %215 = vmatprep.subr.mxu0 0.0
  %216 = vmatpush1.msra.mxu0 0.0
  %217 = vmatprep.subr.mxu0 0.0
  %218 = vmatpush1.msra.mxu0 0.0
  %219 = vmatprep.subr.mxu0 0.0
  %220 = vmatpush1.msra.mxu0 0.0
  %221 = vmatprep.subr.mxu0 0.0
  %222 = vmatpush1.msra.mxu0 0.0
  %223 = vmatprep.subr.mxu0 0.0
  %224 = vmatpush1.msra.mxu0 0.0
  %225 = vmatprep.subr.mxu0 0.0
  %226 = vmatpush1.msra.mxu0 0.0
  %227 = vmatprep.subr.mxu0 0.0
  %228 = vmatpush1.msra.mxu0 0.0
  %229 = vmatprep.subr.mxu0 0.0
  %230 = vmatpush1.msra.mxu0 0.0
  %231 = vmatprep.subr.mxu0 0.0
  %232 = vmatpush1.msra.mxu0 0.0
  %v233 = vand.u32 %v38, 4294901760
  %v234 = vsub.f32 %v38, %v233
  %235 = vmatprep.subr.mxu0 %v234
  %v236 = vand.u32 %v37, 4294901760
  %v237 = vsub.f32 %v37, %v236
  %238 = vmatpush1.msra.mxu0 %v237
  %239 = vmatprep.subr.mxu0 0.0
  %240 = vmatpush2.msra.mxu0 0.0
  %241 = vmatprep.subr.mxu0 0.0
  %242 = vmatpush2.msra.mxu0 0.0
  %243 = vmatprep.subr.mxu0 0.0
  %244 = vmatpush2.msra.mxu0 0.0
  %245 = vmatprep.subr.mxu0 0.0
  %246 = vmatpush2.msra.mxu0 0.0
  %247 = vmatprep.subr.mxu0 0.0
  %248 = vmatpush2.msra.mxu0 0.0
  %249 = vmatprep.subr.mxu0 0.0
  %250 = vmatpush2.msra.mxu0 0.0
  %251 = vmatprep.subr.mxu0 0.0
  %252 = vmatpush2.msra.mxu0 0.0
  %253 = vmatprep.subr.mxu0 0.0
  %254 = vmatpush2.msra.mxu0 0.0
  %255 = vmatprep.subr.mxu0 0.0
  %256 = vmatpush2.msra.mxu0 0.0
  %257 = vmatprep.subr.mxu0 0.0
  %258 = vmatpush2.msra.mxu0 0.0
  %259 = vmatprep.subr.mxu0 0.0
  %260 = vmatpush2.msra.mxu0 0.0
  %261 = vmatprep.subr.mxu0 0.0
  %262 = vmatpush2.msra.mxu0 0.0
  %263 = vmatprep.subr.mxu0 0.0
  %264 = vmatpush2.msra.mxu0 0.0
  %265 = vmatprep.subr.mxu0 0.0
  %266 = vmatpush2.msra.mxu0 0.0
  %267 = vmatprep.subr.mxu0 0.0
  %268 = vmatpush2.msra.mxu0 0.0
  %269 = vmatprep.subr.mxu0 0.0
  %270 = vmatpush2.msra.mxu0 0.0
  %271 = vmatprep.mubr.f32.mxu0 0.0
  %v272 = vand.u32 %v41, 4294901760
  %v273 = vsub.f32 %v41, %v272
  %274 = vmatmul.mubr.f32.gmra.mxu0 %v273
  %v275 = vpop.f32.mrf.mxu0
  %v276 = vadd.f32 %v199, %v275
  %v277 = vpop.f32.mrf.mxu0
  %v278 = vadd.f32 %v201, %v277
  %279 = vdwg.mxu0
  %280 = vmatprep.subr.mxu0 0.0
  %281 = vmatpush1.msra.mxu0 0.0
  %282 = vmatprep.subr.mxu0 0.0
  %283 = vmatpush1.msra.mxu0 0.0
  %284 = vmatprep.subr.mxu0 0.0
  %285 = vmatpush1.msra.mxu0 0.0
  %286 = vmatprep.subr.mxu0 0.0
  %287 = vmatpush1.msra.mxu0 0.0
  %288 = vmatprep.subr.mxu0 0.0
  %289 = vmatpush1.msra.mxu0 0.0
  %290 = vmatprep.subr.mxu0 0.0
  %291 = vmatpush1.msra.mxu0 0.0
  %292 = vmatprep.subr.mxu0 0.0
  %293 = vmatpush1.msra.mxu0 0.0
  %294 = vmatprep.subr.mxu0 0.0
  %295 = vmatpush1.msra.mxu0 0.0
  %296 = vmatprep.subr.mxu0 0.0
  %297 = vmatpush1.msra.mxu0 0.0
  %298 = vmatprep.subr.mxu0 0.0
  %299 = vmatpush1.msra.mxu0 0.0
  %300 = vmatprep.subr.mxu0 0.0
  %301 = vmatpush1.msra.mxu0 0.0
  %302 = vmatprep.subr.mxu0 0.0
  %303 = vmatpush1.msra.mxu0 0.0
  %304 = vmatprep.subr.mxu0 0.0
  %305 = vmatpush1.msra.mxu0 0.0
  %306 = vmatprep.subr.mxu0 0.0
  %307 = vmatpush1.msra.mxu0 0.0
  %308 = vmatprep.subr.mxu0 0.0
  %309 = vmatpush1.msra.mxu0 0.0
  %v310 = vand.u32 %v38, 4294901760
  %311 = vmatprep.subr.mxu0 %v310
  %v312 = vand.u32 %v37, 4294901760
  %313 = vmatpush1.msra.mxu0 %v312
  %314 = vmatprep.subr.mxu0 0.0
  %315 = vmatpush2.msra.mxu0 0.0
  %316 = vmatprep.subr.mxu0 0.0
  %317 = vmatpush2.msra.mxu0 0.0
  %318 = vmatprep.subr.mxu0 0.0
  %319 = vmatpush2.msra.mxu0 0.0
  %320 = vmatprep.subr.mxu0 0.0
  %321 = vmatpush2.msra.mxu0 0.0
  %322 = vmatprep.subr.mxu0 0.0
  %323 = vmatpush2.msra.mxu0 0.0
  %324 = vmatprep.subr.mxu0 0.0
  %325 = vmatpush2.msra.mxu0 0.0
  %326 = vmatprep.subr.mxu0 0.0
  %327 = vmatpush2.msra.mxu0 0.0
  %328 = vmatprep.subr.mxu0 0.0
  %329 = vmatpush2.msra.mxu0 0.0
  %330 = vmatprep.subr.mxu0 0.0
  %331 = vmatpush2.msra.mxu0 0.0
  %332 = vmatprep.subr.mxu0 0.0
  %333 = vmatpush2.msra.mxu0 0.0
  %334 = vmatprep.subr.mxu0 0.0
  %335 = vmatpush2.msra.mxu0 0.0
  %336 = vmatprep.subr.mxu0 0.0
  %337 = vmatpush2.msra.mxu0 0.0
  %338 = vmatprep.subr.mxu0 0.0
  %339 = vmatpush2.msra.mxu0 0.0
  %340 = vmatprep.subr.mxu0 0.0
  %341 = vmatpush2.msra.mxu0 0.0
  %342 = vmatprep.subr.mxu0 0.0
  %343 = vmatpush2.msra.mxu0 0.0
  %344 = vmatprep.subr.mxu0 0.0
  %345 = vmatpush2.msra.mxu0 0.0
  %346 = vmatprep.mubr.f32.mxu0 0.0
  %v347 = vand.u32 %v41, 4294901760
  %v348 = vsub.f32 %v41, %v347
  %v349 = vand.u32 %v348, 4294901760
  %350 = vmatmul.mubr.f32.gmra.mxu0 %v349
  %v351 = vpop.f32.mrf.mxu0
  %v352 = vadd.f32 %v276, %v351
  %v353 = vpop.f32.mrf.mxu0
  %v354 = vadd.f32 %v278, %v353
  %355 = vdwg.mxu0
  %356 = vmatprep.subr.mxu0 0.0
  %357 = vmatpush1.msra.mxu0 0.0
  %358 = vmatprep.subr.mxu0 0.0
  %359 = vmatpush1.msra.mxu0 0.0
  %360 = vmatprep.subr.mxu0 0.0
  %361 = vmatpush1.msra.mxu0 0.0
  %362 = vmatprep.subr.mxu0 0.0
  %363 = vmatpush1.msra.mxu0 0.0
  %364 = vmatprep.subr.mxu0 0.0
  %365 = vmatpush1.msra.mxu0 0.0
  %366 = vmatprep.subr.mxu0 0.0
  %367 = vmatpush1.msra.mxu0 0.0
  %368 = vmatprep.subr.mxu0 0.0
  %369 = vmatpush1.msra.mxu0 0.0
  %370 = vmatprep.subr.mxu0 0.0
  %371 = vmatpush1.msra.mxu0 0.0
  %372 = vmatprep.subr.mxu0 0.0
  %373 = vmatpush1.msra.mxu0 0.0
  %374 = vmatprep.subr.mxu0 0.0
  %375 = vmatpush1.msra.mxu0 0.0
  %376 = vmatprep.subr.mxu0 0.0
  %377 = vmatpush1.msra.mxu0 0.0
  %378 = vmatprep.subr.mxu0 0.0
  %379 = vmatpush1.msra.mxu0 0.0
  %380 = vmatprep.subr.mxu0 0.0
  %381 = vmatpush1.msra.mxu0 0.0
  %382 = vmatprep.subr.mxu0 0.0
  %383 = vmatpush1.msra.mxu0 0.0
  %384 = vmatprep.subr.mxu0 0.0
  %385 = vmatpush1.msra.mxu0 0.0
  %v386 = vand.u32 %v38, 4294901760
  %v387 = vsub.f32 %v38, %v386
  %v388 = vand.u32 %v387, 4294901760
  %389 = vmatprep.subr.mxu0 %v388
  %v390 = vand.u32 %v37, 4294901760
  %v391 = vsub.f32 %v37, %v390
  %v392 = vand.u32 %v391, 4294901760
  %393 = vmatpush1.msra.mxu0 %v392
  %394 = vmatprep.subr.mxu0 0.0
  %395 = vmatpush2.msra.mxu0 0.0
  %396 = vmatprep.subr.mxu0 0.0
  %397 = vmatpush2.msra.mxu0 0.0
  %398 = vmatprep.subr.mxu0 0.0
  %399 = vmatpush2.msra.mxu0 0.0
  %400 = vmatprep.subr.mxu0 0.0
  %401 = vmatpush2.msra.mxu0 0.0
  %402 = vmatprep.subr.mxu0 0.0
  %403 = vmatpush2.msra.mxu0 0.0
  %404 = vmatprep.subr.mxu0 0.0
  %405 = vmatpush2.msra.mxu0 0.0
  %406 = vmatprep.subr.mxu0 0.0
  %407 = vmatpush2.msra.mxu0 0.0
  %408 = vmatprep.subr.mxu0 0.0
  %409 = vmatpush2.msra.mxu0 0.0
  %410 = vmatprep.subr.mxu0 0.0
  %411 = vmatpush2.msra.mxu0 0.0
  %412 = vmatprep.subr.mxu0 0.0
  %413 = vmatpush2.msra.mxu0 0.0
  %414 = vmatprep.subr.mxu0 0.0
  %415 = vmatpush2.msra.mxu0 0.0
  %416 = vmatprep.subr.mxu0 0.0
  %417 = vmatpush2.msra.mxu0 0.0
  %418 = vmatprep.subr.mxu0 0.0
  %419 = vmatpush2.msra.mxu0 0.0
  %420 = vmatprep.subr.mxu0 0.0
  %421 = vmatpush2.msra.mxu0 0.0
  %422 = vmatprep.subr.mxu0 0.0
  %423 = vmatpush2.msra.mxu0 0.0
  %424 = vmatprep.subr.mxu0 0.0
  %425 = vmatpush2.msra.mxu0 0.0
  %426 = vmatprep.mubr.f32.mxu0 0.0
  %v427 = vand.u32 %v41, 4294901760
  %428 = vmatmul.mubr.f32.gmra.mxu0 %v427
  %v429 = vpop.f32.mrf.mxu0
  %v430 = vadd.f32 %v352, %v429
  %v431 = vpop.f32.mrf.mxu0
  %v432 = vadd.f32 %v354, %v431
  %433 = vdwg.mxu0
  %434 = vmatprep.subr.mxu0 0.0
  %435 = vmatpush1.msra.mxu0 0.0
  %436 = vmatprep.subr.mxu0 0.0
  %437 = vmatpush1.msra.mxu0 0.0
  %438 = vmatprep.subr.mxu0 0.0
  %439 = vmatpush1.msra.mxu0 0.0
  %440 = vmatprep.subr.mxu0 0.0
  %441 = vmatpush1.msra.mxu0 0.0
  %442 = vmatprep.subr.mxu0 0.0
  %443 = vmatpush1.msra.mxu0 0.0
  %444 = vmatprep.subr.mxu0 0.0
  %445 = vmatpush1.msra.mxu0 0.0
  %446 = vmatprep.subr.mxu0 0.0
  %447 = vmatpush1.msra.mxu0 0.0
  %448 = vmatprep.subr.mxu0 0.0
  %449 = vmatpush1.msra.mxu0 0.0
  %450 = vmatprep.subr.mxu0 0.0
  %451 = vmatpush1.msra.mxu0 0.0
  %452 = vmatprep.subr.mxu0 0.0
  %453 = vmatpush1.msra.mxu0 0.0
  %454 = vmatprep.subr.mxu0 0.0
  %455 = vmatpush1.msra.mxu0 0.0
  %456 = vmatprep.subr.mxu0 0.0
  %457 = vmatpush1.msra.mxu0 0.0
  %458 = vmatprep.subr.mxu0 0.0
  %459 = vmatpush1.msra.mxu0 0.0
  %460 = vmatprep.subr.mxu0 0.0
  %461 = vmatpush1.msra.mxu0 0.0
  %462 = vmatprep.subr.mxu0 0.0
  %463 = vmatpush1.msra.mxu0 0.0
  %v464 = vand.u32 %v38, 4294901760
  %465 = vmatprep.subr.mxu0 %v464
  %v466 = vand.u32 %v37, 4294901760
  %467 = vmatpush1.msra.mxu0 %v466
  %468 = vmatprep.subr.mxu0 0.0
  %469 = vmatpush2.msra.mxu0 0.0
  %470 = vmatprep.subr.mxu0 0.0
  %471 = vmatpush2.msra.mxu0 0.0
  %472 = vmatprep.subr.mxu0 0.0
  %473 = vmatpush2.msra.mxu0 0.0
  %474 = vmatprep.subr.mxu0 0.0
  %475 = vmatpush2.msra.mxu0 0.0
  %476 = vmatprep.subr.mxu0 0.0
  %477 = vmatpush2.msra.mxu0 0.0
  %478 = vmatprep.subr.mxu0 0.0
  %479 = vmatpush2.msra.mxu0 0.0
  %480 = vmatprep.subr.mxu0 0.0
  %481 = vmatpush2.msra.mxu0 0.0
  %482 = vmatprep.subr.mxu0 0.0
  %483 = vmatpush2.msra.mxu0 0.0
  %484 = vmatprep.subr.mxu0 0.0
  %485 = vmatpush2.msra.mxu0 0.0
  %486 = vmatprep.subr.mxu0 0.0
  %487 = vmatpush2.msra.mxu0 0.0
  %488 = vmatprep.subr.mxu0 0.0
  %489 = vmatpush2.msra.mxu0 0.0
  %490 = vmatprep.subr.mxu0 0.0
  %491 = vmatpush2.msra.mxu0 0.0
  %492 = vmatprep.subr.mxu0 0.0
  %493 = vmatpush2.msra.mxu0 0.0
  %494 = vmatprep.subr.mxu0 0.0
  %495 = vmatpush2.msra.mxu0 0.0
  %496 = vmatprep.subr.mxu0 0.0
  %497 = vmatpush2.msra.mxu0 0.0
  %498 = vmatprep.subr.mxu0 0.0
  %499 = vmatpush2.msra.mxu0 0.0
  %500 = vmatprep.mubr.f32.mxu0 0.0
  %v501 = vand.u32 %v41, 4294901760
  %502 = vmatmul.mubr.f32.gmra.mxu0 %v501
  %v503 = vpop.f32.mrf.mxu0
  %v504 = vadd.f32 %v430, %v503
  %v505 = vpop.f32.mrf.mxu0
  %v506 = vadd.f32 %v432, %v505
  %507 = vdwg.mxu0
  %vm508 = vcmask 523264
  %v510 = vsel %vm508, 0.0, 0
  %512 = vmatprep.subr.mxu0 0.0
  %513 = vmatpush1.msra.mxu0 0.0
  %514 = vmatprep.subr.mxu0 0.0
  %515 = vmatpush1.msra.mxu0 0.0
  %516 = vmatprep.subr.mxu0 0.0
  %517 = vmatpush1.msra.mxu0 0.0
  %518 = vmatprep.subr.mxu0 0.0
  %519 = vmatpush1.msra.mxu0 0.0
  %520 = vmatprep.subr.mxu0 0.0
  %521 = vmatpush1.msra.mxu0 0.0
  %522 = vmatprep.subr.mxu0 0.0
  %523 = vmatpush1.msra.mxu0 0.0
  %524 = vmatprep.subr.mxu0 0.0
  %525 = vmatpush1.msra.mxu0 0.0
  %526 = vmatprep.subr.mxu0 0.0
  %527 = vmatpush1.msra.mxu0 0.0
  %v528 = vand.u32 %v35, 4294901760
  %529 = vmatprep.subr.mxu0 %v528
  %v530 = vand.u32 %v34, 4294901760
  %531 = vmatpush1.msra.mxu0 %v530
  %v532 = vand.u32 %v33, 4294901760
  %533 = vmatprep.subr.mxu0 %v532
  %v534 = vand.u32 %v32, 4294901760
  %535 = vmatpush1.msra.mxu0 %v534
  %v536 = vand.u32 %v31, 4294901760
  %537 = vmatprep.subr.mxu0 %v536
  %v538 = vand.u32 %v30, 4294901760
  %539 = vmatpush1.msra.mxu0 %v538
  %v540 = vand.u32 %v29, 4294901760
  %541 = vmatprep.subr.mxu0 %v540
  %v542 = vand.u32 %v28, 4294901760
  %543 = vmatpush1.msra.mxu0 %v542
  %v544 = vand.u32 %v27, 4294901760
  %545 = vmatprep.subr.mxu0 %v544
  %v546 = vand.u32 %v26, 4294901760
  %547 = vmatpush1.msra.mxu0 %v546
  %v548 = vand.u32 %v25, 4294901760
  %549 = vmatprep.subr.mxu0 %v548
  %v550 = vand.u32 %v24, 4294901760
  %551 = vmatpush1.msra.mxu0 %v550
  %v552 = vand.u32 %v23, 4294901760
  %553 = vmatprep.subr.mxu0 %v552
  %v554 = vand.u32 %v22, 4294901760
  %555 = vmatpush1.msra.mxu0 %v554
  %v556 = vand.u32 %v21, 4294901760
  %557 = vmatprep.subr.mxu0 %v556
  %v558 = vand.u32 %v20, 4294901760
  %559 = vmatpush1.msra.mxu0 %v558
  %560 = vmatprep.subr.mxu0 0.0
  %561 = vmatpush2.msra.mxu0 0.0
  %562 = vmatprep.subr.mxu0 0.0
  %563 = vmatpush2.msra.mxu0 0.0
  %564 = vmatprep.subr.mxu0 0.0
  %565 = vmatpush2.msra.mxu0 0.0
  %566 = vmatprep.subr.mxu0 0.0
  %567 = vmatpush2.msra.mxu0 0.0
  %568 = vmatprep.subr.mxu0 0.0
  %569 = vmatpush2.msra.mxu0 0.0
  %570 = vmatprep.subr.mxu0 0.0
  %571 = vmatpush2.msra.mxu0 0.0
  %572 = vmatprep.subr.mxu0 0.0
  %573 = vmatpush2.msra.mxu0 0.0
  %574 = vmatprep.subr.mxu0 0.0
  %575 = vmatpush2.msra.mxu0 0.0
  %576 = vmatprep.subr.mxu0 0.0
  %577 = vmatpush2.msra.mxu0 0.0
  %578 = vmatprep.subr.mxu0 0.0
  %579 = vmatpush2.msra.mxu0 0.0
  %580 = vmatprep.subr.mxu0 0.0
  %581 = vmatpush2.msra.mxu0 0.0
  %582 = vmatprep.subr.mxu0 0.0
  %583 = vmatpush2.msra.mxu0 0.0
  %584 = vmatprep.subr.mxu0 0.0
  %585 = vmatpush2.msra.mxu0 0.0
  %586 = vmatprep.subr.mxu0 0.0
  %587 = vmatpush2.msra.mxu0 0.0
  %588 = vmatprep.subr.mxu0 0.0
  %589 = vmatpush2.msra.mxu0 0.0
  %590 = vmatprep.subr.mxu0 0.0
  %591 = vmatpush2.msra.mxu0 0.0
  %592 = vmatprep.mubr.f32.mxu0 0.0
  %v593 = vand.u32 %v510, 4294901760
  %v594 = vsub.f32 %v510, %v593
  %v595 = vand.u32 %v594, 4294901760
  %v596 = vsub.f32 %v594, %v595
  %v597 = vand.u32 %v596, 4294901760
  %598 = vmatmul.mubr.f32.gmra.mxu0 %v597
  %v599 = vpop.f32.mrf.mxu0
  %v600 = vadd.f32 %v504, %v599
  %v601 = vpop.f32.mrf.mxu0
  %v602 = vadd.f32 %v506, %v601
  %603 = vdwg.mxu0
  %604 = vmatprep.subr.mxu0 0.0
  %605 = vmatpush1.msra.mxu0 0.0
  %606 = vmatprep.subr.mxu0 0.0
  %607 = vmatpush1.msra.mxu0 0.0
  %608 = vmatprep.subr.mxu0 0.0
  %609 = vmatpush1.msra.mxu0 0.0
  %610 = vmatprep.subr.mxu0 0.0
  %611 = vmatpush1.msra.mxu0 0.0
  %612 = vmatprep.subr.mxu0 0.0
  %613 = vmatpush1.msra.mxu0 0.0
  %614 = vmatprep.subr.mxu0 0.0
  %615 = vmatpush1.msra.mxu0 0.0
  %616 = vmatprep.subr.mxu0 0.0
  %617 = vmatpush1.msra.mxu0 0.0
  %618 = vmatprep.subr.mxu0 0.0
  %619 = vmatpush1.msra.mxu0 0.0
  %v620 = vand.u32 %v35, 4294901760
  %v621 = vsub.f32 %v35, %v620
  %v622 = vand.u32 %v621, 4294901760
  %v623 = vsub.f32 %v621, %v622
  %v624 = vand.u32 %v623, 4294901760
  %625 = vmatprep.subr.mxu0 %v624
  %v626 = vand.u32 %v34, 4294901760
  %v627 = vsub.f32 %v34, %v626
  %v628 = vand.u32 %v627, 4294901760
  %v629 = vsub.f32 %v627, %v628
  %v630 = vand.u32 %v629, 4294901760
  %631 = vmatpush1.msra.mxu0 %v630
  %v632 = vand.u32 %v33, 4294901760
  %v633 = vsub.f32 %v33, %v632
  %v634 = vand.u32 %v633, 4294901760
  %v635 = vsub.f32 %v633, %v634
  %v636 = vand.u32 %v635, 4294901760
  %637 = vmatprep.subr.mxu0 %v636
  %v638 = vand.u32 %v32, 4294901760
  %v639 = vsub.f32 %v32, %v638
  %v640 = vand.u32 %v639, 4294901760
  %v641 = vsub.f32 %v639, %v640
  %v642 = vand.u32 %v641, 4294901760
  %643 = vmatpush1.msra.mxu0 %v642
  %v644 = vand.u32 %v31, 4294901760
  %v645 = vsub.f32 %v31, %v644
  %v646 = vand.u32 %v645, 4294901760
  %v647 = vsub.f32 %v645, %v646
  %v648 = vand.u32 %v647, 4294901760
  %649 = vmatprep.subr.mxu0 %v648
  %v650 = vand.u32 %v30, 4294901760
  %v651 = vsub.f32 %v30, %v650
  %v652 = vand.u32 %v651, 4294901760
  %v653 = vsub.f32 %v651, %v652
  %v654 = vand.u32 %v653, 4294901760
  %655 = vmatpush1.msra.mxu0 %v654
  %v656 = vand.u32 %v29, 4294901760
  %v657 = vsub.f32 %v29, %v656
  %v658 = vand.u32 %v657, 4294901760
  %v659 = vsub.f32 %v657, %v658
  %v660 = vand.u32 %v659, 4294901760
  %661 = vmatprep.subr.mxu0 %v660
  %v662 = vand.u32 %v28, 4294901760
  %v663 = vsub.f32 %v28, %v662
  %v664 = vand.u32 %v663, 4294901760
  %v665 = vsub.f32 %v663, %v664
  %v666 = vand.u32 %v665, 4294901760
  %667 = vmatpush1.msra.mxu0 %v666
  %v668 = vand.u32 %v27, 4294901760
  %v669 = vsub.f32 %v27, %v668
  %v670 = vand.u32 %v669, 4294901760
  %v671 = vsub.f32 %v669, %v670
  %v672 = vand.u32 %v671, 4294901760
  %673 = vmatprep.subr.mxu0 %v672
  %v674 = vand.u32 %v26, 4294901760
  %v675 = vsub.f32 %v26, %v674
  %v676 = vand.u32 %v675, 4294901760
  %v677 = vsub.f32 %v675, %v676
  %v678 = vand.u32 %v677, 4294901760
  %679 = vmatpush1.msra.mxu0 %v678
  %v680 = vand.u32 %v25, 4294901760
  %v681 = vsub.f32 %v25, %v680
  %v682 = vand.u32 %v681, 4294901760
  %v683 = vsub.f32 %v681, %v682
  %v684 = vand.u32 %v683, 4294901760
  %685 = vmatprep.subr.mxu0 %v684
  %v686 = vand.u32 %v24, 4294901760
  %v687 = vsub.f32 %v24, %v686
  %v688 = vand.u32 %v687, 4294901760
  %v689 = vsub.f32 %v687, %v688
  %v690 = vand.u32 %v689, 4294901760
  %691 = vmatpush1.msra.mxu0 %v690
  %v692 = vand.u32 %v23, 4294901760
  %v693 = vsub.f32 %v23, %v692
  %v694 = vand.u32 %v693, 4294901760
  %v695 = vsub.f32 %v693, %v694
  %v696 = vand.u32 %v695, 4294901760
  %697 = vmatprep.subr.mxu0 %v696
  %v698 = vand.u32 %v22, 4294901760
  %v699 = vsub.f32 %v22, %v698
  %v700 = vand.u32 %v699, 4294901760
  %v701 = vsub.f32 %v699, %v700
  %v702 = vand.u32 %v701, 4294901760
  %703 = vmatpush1.msra.mxu0 %v702
  %v704 = vand.u32 %v21, 4294901760
  %v705 = vsub.f32 %v21, %v704
  %v706 = vand.u32 %v705, 4294901760
  %v707 = vsub.f32 %v705, %v706
  %v708 = vand.u32 %v707, 4294901760
  %709 = vmatprep.subr.mxu0 %v708
  %v710 = vand.u32 %v20, 4294901760
  %v711 = vsub.f32 %v20, %v710
  %v712 = vand.u32 %v711, 4294901760
  %v713 = vsub.f32 %v711, %v712
  %v714 = vand.u32 %v713, 4294901760
  %715 = vmatpush1.msra.mxu0 %v714
  %716 = vmatprep.subr.mxu0 0.0
  %717 = vmatpush2.msra.mxu0 0.0
  %718 = vmatprep.subr.mxu0 0.0
  %719 = vmatpush2.msra.mxu0 0.0
  %720 = vmatprep.subr.mxu0 0.0
  %721 = vmatpush2.msra.mxu0 0.0
  %722 = vmatprep.subr.mxu0 0.0
  %723 = vmatpush2.msra.mxu0 0.0
  %724 = vmatprep.subr.mxu0 0.0
  %725 = vmatpush2.msra.mxu0 0.0
  %726 = vmatprep.subr.mxu0 0.0
  %727 = vmatpush2.msra.mxu0 0.0
  %728 = vmatprep.subr.mxu0 0.0
  %729 = vmatpush2.msra.mxu0 0.0
  %730 = vmatprep.subr.mxu0 0.0
  %731 = vmatpush2.msra.mxu0 0.0
  %732 = vmatprep.subr.mxu0 0.0
  %733 = vmatpush2.msra.mxu0 0.0
  %734 = vmatprep.subr.mxu0 0.0
  %735 = vmatpush2.msra.mxu0 0.0
  %736 = vmatprep.subr.mxu0 0.0
  %737 = vmatpush2.msra.mxu0 0.0
  %738 = vmatprep.subr.mxu0 0.0
  %739 = vmatpush2.msra.mxu0 0.0
  %740 = vmatprep.subr.mxu0 0.0
  %741 = vmatpush2.msra.mxu0 0.0
  %742 = vmatprep.subr.mxu0 0.0
  %743 = vmatpush2.msra.mxu0 0.0
  %744 = vmatprep.subr.mxu0 0.0
  %745 = vmatpush2.msra.mxu0 0.0
  %746 = vmatprep.subr.mxu0 0.0
  %747 = vmatpush2.msra.mxu0 0.0
  %748 = vmatprep.mubr.f32.mxu0 0.0
  %v749 = vand.u32 %v510, 4294901760
  %750 = vmatmul.mubr.f32.gmra.mxu0 %v749
  %v751 = vpop.f32.mrf.mxu0
  %v752 = vadd.f32 %v600, %v751
  %v753 = vpop.f32.mrf.mxu0
  %v754 = vadd.f32 %v602, %v753
  %755 = vdwg.mxu0
  %756 = vmatprep.subr.mxu0 0.0
  %757 = vmatpush1.msra.mxu0 0.0
  %758 = vmatprep.subr.mxu0 0.0
  %759 = vmatpush1.msra.mxu0 0.0
  %760 = vmatprep.subr.mxu0 0.0
  %761 = vmatpush1.msra.mxu0 0.0
  %762 = vmatprep.subr.mxu0 0.0
  %763 = vmatpush1.msra.mxu0 0.0
  %764 = vmatprep.subr.mxu0 0.0
  %765 = vmatpush1.msra.mxu0 0.0
  %766 = vmatprep.subr.mxu0 0.0
  %767 = vmatpush1.msra.mxu0 0.0
  %768 = vmatprep.subr.mxu0 0.0
  %769 = vmatpush1.msra.mxu0 0.0
  %770 = vmatprep.subr.mxu0 0.0
  %771 = vmatpush1.msra.mxu0 0.0
  %v772 = vand.u32 %v35, 4294901760
  %v773 = vsub.f32 %v35, %v772
  %774 = vmatprep.subr.mxu0 %v773
  %v775 = vand.u32 %v34, 4294901760
  %v776 = vsub.f32 %v34, %v775
  %777 = vmatpush1.msra.mxu0 %v776
  %v778 = vand.u32 %v33, 4294901760
  %v779 = vsub.f32 %v33, %v778
  %780 = vmatprep.subr.mxu0 %v779
  %v781 = vand.u32 %v32, 4294901760
  %v782 = vsub.f32 %v32, %v781
  %783 = vmatpush1.msra.mxu0 %v782
  %v784 = vand.u32 %v31, 4294901760
  %v785 = vsub.f32 %v31, %v784
  %786 = vmatprep.subr.mxu0 %v785
  %v787 = vand.u32 %v30, 4294901760
  %v788 = vsub.f32 %v30, %v787
  %789 = vmatpush1.msra.mxu0 %v788
  %v790 = vand.u32 %v29, 4294901760
  %v791 = vsub.f32 %v29, %v790
  %792 = vmatprep.subr.mxu0 %v791
  %v793 = vand.u32 %v28, 4294901760
  %v794 = vsub.f32 %v28, %v793
  %795 = vmatpush1.msra.mxu0 %v794
  %v796 = vand.u32 %v27, 4294901760
  %v797 = vsub.f32 %v27, %v796
  %798 = vmatprep.subr.mxu0 %v797
  %v799 = vand.u32 %v26, 4294901760
  %v800 = vsub.f32 %v26, %v799
  %801 = vmatpush1.msra.mxu0 %v800
  %v802 = vand.u32 %v25, 4294901760
  %v803 = vsub.f32 %v25, %v802
  %804 = vmatprep.subr.mxu0 %v803
  %v805 = vand.u32 %v24, 4294901760
  %v806 = vsub.f32 %v24, %v805
  %807 = vmatpush1.msra.mxu0 %v806
  %v808 = vand.u32 %v23, 4294901760
  %v809 = vsub.f32 %v23, %v808
  %810 = vmatprep.subr.mxu0 %v809
  %v811 = vand.u32 %v22, 4294901760
  %v812 = vsub.f32 %v22, %v811
  %813 = vmatpush1.msra.mxu0 %v812
  %v814 = vand.u32 %v21, 4294901760
  %v815 = vsub.f32 %v21, %v814
  %816 = vmatprep.subr.mxu0 %v815
  %v817 = vand.u32 %v20, 4294901760
  %v818 = vsub.f32 %v20, %v817
  %819 = vmatpush1.msra.mxu0 %v818
  %820 = vmatprep.subr.mxu0 0.0
  %821 = vmatpush2.msra.mxu0 0.0
  %822 = vmatprep.subr.mxu0 0.0
  %823 = vmatpush2.msra.mxu0 0.0
  %824 = vmatprep.subr.mxu0 0.0
  %825 = vmatpush2.msra.mxu0 0.0
  %826 = vmatprep.subr.mxu0 0.0
  %827 = vmatpush2.msra.mxu0 0.0
  %828 = vmatprep.subr.mxu0 0.0
  %829 = vmatpush2.msra.mxu0 0.0
  %830 = vmatprep.subr.mxu0 0.0
  %831 = vmatpush2.msra.mxu0 0.0
  %832 = vmatprep.subr.mxu0 0.0
  %833 = vmatpush2.msra.mxu0 0.0
  %834 = vmatprep.subr.mxu0 0.0
  %835 = vmatpush2.msra.mxu0 0.0
  %836 = vmatprep.subr.mxu0 0.0
  %837 = vmatpush2.msra.mxu0 0.0
  %838 = vmatprep.subr.mxu0 0.0
  %839 = vmatpush2.msra.mxu0 0.0
  %840 = vmatprep.subr.mxu0 0.0
  %841 = vmatpush2.msra.mxu0 0.0
  %842 = vmatprep.subr.mxu0 0.0
  %843 = vmatpush2.msra.mxu0 0.0
  %844 = vmatprep.subr.mxu0 0.0
  %845 = vmatpush2.msra.mxu0 0.0
  %846 = vmatprep.subr.mxu0 0.0
  %847 = vmatpush2.msra.mxu0 0.0
  %848 = vmatprep.subr.mxu0 0.0
  %849 = vmatpush2.msra.mxu0 0.0
  %850 = vmatprep.subr.mxu0 0.0
  %851 = vmatpush2.msra.mxu0 0.0
  %852 = vmatprep.mubr.f32.mxu0 0.0
  %v853 = vand.u32 %v510, 4294901760
  %v854 = vsub.f32 %v510, %v853
  %855 = vmatmul.mubr.f32.gmra.mxu0 %v854
  %v856 = vpop.f32.mrf.mxu0
  %v857 = vadd.f32 %v752, %v856
  %v858 = vpop.f32.mrf.mxu0
  %v859 = vadd.f32 %v754, %v858
  %860 = vdwg.mxu0
  %861 = vmatprep.subr.mxu0 0.0
  %862 = vmatpush1.msra.mxu0 0.0
  %863 = vmatprep.subr.mxu0 0.0
  %864 = vmatpush1.msra.mxu0 0.0
  %865 = vmatprep.subr.mxu0 0.0
  %866 = vmatpush1.msra.mxu0 0.0
  %867 = vmatprep.subr.mxu0 0.0
  %868 = vmatpush1.msra.mxu0 0.0
  %869 = vmatprep.subr.mxu0 0.0
  %870 = vmatpush1.msra.mxu0 0.0
  %871 = vmatprep.subr.mxu0 0.0
  %872 = vmatpush1.msra.mxu0 0.0
  %873 = vmatprep.subr.mxu0 0.0
  %874 = vmatpush1.msra.mxu0 0.0
  %875 = vmatprep.subr.mxu0 0.0
  %876 = vmatpush1.msra.mxu0 0.0
  %v877 = vand.u32 %v35, 4294901760
  %878 = vmatprep.subr.mxu0 %v877
  %v879 = vand.u32 %v34, 4294901760
  %880 = vmatpush1.msra.mxu0 %v879
  %v881 = vand.u32 %v33, 4294901760
  %882 = vmatprep.subr.mxu0 %v881
  %v883 = vand.u32 %v32, 4294901760
  %884 = vmatpush1.msra.mxu0 %v883
  %v885 = vand.u32 %v31, 4294901760
  %886 = vmatprep.subr.mxu0 %v885
  %v887 = vand.u32 %v30, 4294901760
  %888 = vmatpush1.msra.mxu0 %v887
  %v889 = vand.u32 %v29, 4294901760
  %890 = vmatprep.subr.mxu0 %v889
  %v891 = vand.u32 %v28, 4294901760
  %892 = vmatpush1.msra.mxu0 %v891
  %v893 = vand.u32 %v27, 4294901760
  %894 = vmatprep.subr.mxu0 %v893
  %v895 = vand.u32 %v26, 4294901760
  %896 = vmatpush1.msra.mxu0 %v895
  %v897 = vand.u32 %v25, 4294901760
  %898 = vmatprep.subr.mxu0 %v897
  %v899 = vand.u32 %v24, 4294901760
  %900 = vmatpush1.msra.mxu0 %v899
  %v901 = vand.u32 %v23, 4294901760
  %902 = vmatprep.subr.mxu0 %v901
  %v903 = vand.u32 %v22, 4294901760
  %904 = vmatpush1.msra.mxu0 %v903
  %v905 = vand.u32 %v21, 4294901760
  %906 = vmatprep.subr.mxu0 %v905
  %v907 = vand.u32 %v20, 4294901760
  %908 = vmatpush1.msra.mxu0 %v907
  %909 = vmatprep.subr.mxu0 0.0
  %910 = vmatpush2.msra.mxu0 0.0
  %911 = vmatprep.subr.mxu0 0.0
  %912 = vmatpush2.msra.mxu0 0.0
  %913 = vmatprep.subr.mxu0 0.0
  %914 = vmatpush2.msra.mxu0 0.0
  %915 = vmatprep.subr.mxu0 0.0
  %916 = vmatpush2.msra.mxu0 0.0
  %917 = vmatprep.subr.mxu0 0.0
  %918 = vmatpush2.msra.mxu0 0.0
  %919 = vmatprep.subr.mxu0 0.0
  %920 = vmatpush2.msra.mxu0 0.0
  %921 = vmatprep.subr.mxu0 0.0
  %922 = vmatpush2.msra.mxu0 0.0
  %923 = vmatprep.subr.mxu0 0.0
  %924 = vmatpush2.msra.mxu0 0.0
  %925 = vmatprep.subr.mxu0 0.0
  %926 = vmatpush2.msra.mxu0 0.0
  %927 = vmatprep.subr.mxu0 0.0
  %928 = vmatpush2.msra.mxu0 0.0
  %929 = vmatprep.subr.mxu0 0.0
  %930 = vmatpush2.msra.mxu0 0.0
  %931 = vmatprep.subr.mxu0 0.0
  %932 = vmatpush2.msra.mxu0 0.0
  %933 = vmatprep.subr.mxu0 0.0
  %934 = vmatpush2.msra.mxu0 0.0
  %935 = vmatprep.subr.mxu0 0.0
  %936 = vmatpush2.msra.mxu0 0.0
  %937 = vmatprep.subr.mxu0 0.0
  %938 = vmatpush2.msra.mxu0 0.0
  %939 = vmatprep.subr.mxu0 0.0
  %940 = vmatpush2.msra.mxu0 0.0
  %941 = vmatprep.mubr.f32.mxu0 0.0
  %v942 = vand.u32 %v510, 4294901760
  %v943 = vsub.f32 %v510, %v942
  %v944 = vand.u32 %v943, 4294901760
  %945 = vmatmul.mubr.f32.gmra.mxu0 %v944
  %v946 = vpop.f32.mrf.mxu0
  %v947 = vadd.f32 %v857, %v946
  %v948 = vpop.f32.mrf.mxu0
  %v949 = vadd.f32 %v859, %v948
  %950 = vdwg.mxu0
  %951 = vmatprep.subr.mxu0 0.0
  %952 = vmatpush1.msra.mxu0 0.0
  %953 = vmatprep.subr.mxu0 0.0
  %954 = vmatpush1.msra.mxu0 0.0
  %955 = vmatprep.subr.mxu0 0.0
  %956 = vmatpush1.msra.mxu0 0.0
  %957 = vmatprep.subr.mxu0 0.0
  %958 = vmatpush1.msra.mxu0 0.0
  %959 = vmatprep.subr.mxu0 0.0
  %960 = vmatpush1.msra.mxu0 0.0
  %961 = vmatprep.subr.mxu0 0.0
  %962 = vmatpush1.msra.mxu0 0.0
  %963 = vmatprep.subr.mxu0 0.0
  %964 = vmatpush1.msra.mxu0 0.0
  %965 = vmatprep.subr.mxu0 0.0
  %966 = vmatpush1.msra.mxu0 0.0
  %v967 = vand.u32 %v35, 4294901760
  %v968 = vsub.f32 %v35, %v967
  %v969 = vand.u32 %v968, 4294901760
  %970 = vmatprep.subr.mxu0 %v969
  %v971 = vand.u32 %v34, 4294901760
  %v972 = vsub.f32 %v34, %v971
  %v973 = vand.u32 %v972, 4294901760
  %974 = vmatpush1.msra.mxu0 %v973
  %v975 = vand.u32 %v33, 4294901760
  %v976 = vsub.f32 %v33, %v975
  %v977 = vand.u32 %v976, 4294901760
  %978 = vmatprep.subr.mxu0 %v977
  %v979 = vand.u32 %v32, 4294901760
  %v980 = vsub.f32 %v32, %v979
  %v981 = vand.u32 %v980, 4294901760
  %982 = vmatpush1.msra.mxu0 %v981
  %v983 = vand.u32 %v31, 4294901760
  %v984 = vsub.f32 %v31, %v983
  %v985 = vand.u32 %v984, 4294901760
  %986 = vmatprep.subr.mxu0 %v985
  %v987 = vand.u32 %v30, 4294901760
  %v988 = vsub.f32 %v30, %v987
  %v989 = vand.u32 %v988, 4294901760
  %990 = vmatpush1.msra.mxu0 %v989
  %v991 = vand.u32 %v29, 4294901760
  %v992 = vsub.f32 %v29, %v991
  %v993 = vand.u32 %v992, 4294901760
  %994 = vmatprep.subr.mxu0 %v993
  %v995 = vand.u32 %v28, 4294901760
  %v996 = vsub.f32 %v28, %v995
  %v997 = vand.u32 %v996, 4294901760
  %998 = vmatpush1.msra.mxu0 %v997
  %v999 = vand.u32 %v27, 4294901760
  %v1000 = vsub.f32 %v27, %v999
  %v1001 = vand.u32 %v1000, 4294901760
  %1002 = vmatprep.subr.mxu0 %v1001
  %v1003 = vand.u32 %v26, 4294901760
  %v1004 = vsub.f32 %v26, %v1003
  %v1005 = vand.u32 %v1004, 4294901760
  %1006 = vmatpush1.msra.mxu0 %v1005
  %v1007 = vand.u32 %v25, 4294901760
  %v1008 = vsub.f32 %v25, %v1007
  %v1009 = vand.u32 %v1008, 4294901760
  %1010 = vmatprep.subr.mxu0 %v1009
  %v1011 = vand.u32 %v24, 4294901760
  %v1012 = vsub.f32 %v24, %v1011
  %v1013 = vand.u32 %v1012, 4294901760
  %1014 = vmatpush1.msra.mxu0 %v1013
  %v1015 = vand.u32 %v23, 4294901760
  %v1016 = vsub.f32 %v23, %v1015
  %v1017 = vand.u32 %v1016, 4294901760
  %1018 = vmatprep.subr.mxu0 %v1017
  %v1019 = vand.u32 %v22, 4294901760
  %v1020 = vsub.f32 %v22, %v1019
  %v1021 = vand.u32 %v1020, 4294901760
  %1022 = vmatpush1.msra.mxu0 %v1021
  %v1023 = vand.u32 %v21, 4294901760
  %v1024 = vsub.f32 %v21, %v1023
  %v1025 = vand.u32 %v1024, 4294901760
  %1026 = vmatprep.subr.mxu0 %v1025
  %v1027 = vand.u32 %v20, 4294901760
  %v1028 = vsub.f32 %v20, %v1027
  %v1029 = vand.u32 %v1028, 4294901760
  %1030 = vmatpush1.msra.mxu0 %v1029
  %1031 = vmatprep.subr.mxu0 0.0
  %1032 = vmatpush2.msra.mxu0 0.0
  %1033 = vmatprep.subr.mxu0 0.0
  %1034 = vmatpush2.msra.mxu0 0.0
  %1035 = vmatprep.subr.mxu0 0.0
  %1036 = vmatpush2.msra.mxu0 0.0
  %1037 = vmatprep.subr.mxu0 0.0
  %1038 = vmatpush2.msra.mxu0 0.0
  %1039 = vmatprep.subr.mxu0 0.0
  %1040 = vmatpush2.msra.mxu0 0.0
  %1041 = vmatprep.subr.mxu0 0.0
  %1042 = vmatpush2.msra.mxu0 0.0
  %1043 = vmatprep.subr.mxu0 0.0
  %1044 = vmatpush2.msra.mxu0 0.0
  %1045 = vmatprep.subr.mxu0 0.0
  %1046 = vmatpush2.msra.mxu0 0.0
  %1047 = vmatprep.subr.mxu0 0.0
  %1048 = vmatpush2.msra.mxu0 0.0
  %1049 = vmatprep.subr.mxu0 0.0
  %1050 = vmatpush2.msra.mxu0 0.0
  %1051 = vmatprep.subr.mxu0 0.0
  %1052 = vmatpush2.msra.mxu0 0.0
  %1053 = vmatprep.subr.mxu0 0.0
  %1054 = vmatpush2.msra.mxu0 0.0
  %1055 = vmatprep.subr.mxu0 0.0
  %1056 = vmatpush2.msra.mxu0 0.0
  %1057 = vmatprep.subr.mxu0 0.0
  %1058 = vmatpush2.msra.mxu0 0.0
  %1059 = vmatprep.subr.mxu0 0.0
  %1060 = vmatpush2.msra.mxu0 0.0
  %1061 = vmatprep.subr.mxu0 0.0
  %1062 = vmatpush2.msra.mxu0 0.0
  %1063 = vmatprep.mubr.f32.mxu0 0.0
  %v1064 = vand.u32 %v510, 4294901760
  %1065 = vmatmul.mubr.f32.gmra.mxu0 %v1064
  %v1066 = vpop.f32.mrf.mxu0
  %v1067 = vadd.f32 %v947, %v1066
  %v1068 = vpop.f32.mrf.mxu0
  %v1069 = vadd.f32 %v949, %v1068
  %1070 = vdwg.mxu0
  %1071 = vmatprep.subr.mxu0 0.0
  %1072 = vmatpush1.msra.mxu0 0.0
  %1073 = vmatprep.subr.mxu0 0.0
  %1074 = vmatpush1.msra.mxu0 0.0
  %1075 = vmatprep.subr.mxu0 0.0
  %1076 = vmatpush1.msra.mxu0 0.0
  %1077 = vmatprep.subr.mxu0 0.0
  %1078 = vmatpush1.msra.mxu0 0.0
  %1079 = vmatprep.subr.mxu0 0.0
  %1080 = vmatpush1.msra.mxu0 0.0
  %1081 = vmatprep.subr.mxu0 0.0
  %1082 = vmatpush1.msra.mxu0 0.0
  %1083 = vmatprep.subr.mxu0 0.0
  %1084 = vmatpush1.msra.mxu0 0.0
  %1085 = vmatprep.subr.mxu0 0.0
  %1086 = vmatpush1.msra.mxu0 0.0
  %v1087 = vand.u32 %v35, 4294901760
  %1088 = vmatprep.subr.mxu0 %v1087
  %v1089 = vand.u32 %v34, 4294901760
  %1090 = vmatpush1.msra.mxu0 %v1089
  %v1091 = vand.u32 %v33, 4294901760
  %1092 = vmatprep.subr.mxu0 %v1091
  %v1093 = vand.u32 %v32, 4294901760
  %1094 = vmatpush1.msra.mxu0 %v1093
  %v1095 = vand.u32 %v31, 4294901760
  %1096 = vmatprep.subr.mxu0 %v1095
  %v1097 = vand.u32 %v30, 4294901760
  %1098 = vmatpush1.msra.mxu0 %v1097
  %v1099 = vand.u32 %v29, 4294901760
  %1100 = vmatprep.subr.mxu0 %v1099
  %v1101 = vand.u32 %v28, 4294901760
  %1102 = vmatpush1.msra.mxu0 %v1101
  %v1103 = vand.u32 %v27, 4294901760
  %1104 = vmatprep.subr.mxu0 %v1103
  %v1105 = vand.u32 %v26, 4294901760
  %1106 = vmatpush1.msra.mxu0 %v1105
  %v1107 = vand.u32 %v25, 4294901760
  %1108 = vmatprep.subr.mxu0 %v1107
  %v1109 = vand.u32 %v24, 4294901760
  %1110 = vmatpush1.msra.mxu0 %v1109
  %v1111 = vand.u32 %v23, 4294901760
  %1112 = vmatprep.subr.mxu0 %v1111
  %v1113 = vand.u32 %v22, 4294901760
  %1114 = vmatpush1.msra.mxu0 %v1113
  %v1115 = vand.u32 %v21, 4294901760
  %1116 = vmatprep.subr.mxu0 %v1115
  %v1117 = vand.u32 %v20, 4294901760
  %1118 = vmatpush1.msra.mxu0 %v1117
  %1119 = vmatprep.subr.mxu0 0.0
  %1120 = vmatpush2.msra.mxu0 0.0
  %1121 = vmatprep.subr.mxu0 0.0
  %1122 = vmatpush2.msra.mxu0 0.0
  %1123 = vmatprep.subr.mxu0 0.0
  %1124 = vmatpush2.msra.mxu0 0.0
  %1125 = vmatprep.subr.mxu0 0.0
  %1126 = vmatpush2.msra.mxu0 0.0
  %1127 = vmatprep.subr.mxu0 0.0
  %1128 = vmatpush2.msra.mxu0 0.0
  %1129 = vmatprep.subr.mxu0 0.0
  %1130 = vmatpush2.msra.mxu0 0.0
  %1131 = vmatprep.subr.mxu0 0.0
  %1132 = vmatpush2.msra.mxu0 0.0
  %1133 = vmatprep.subr.mxu0 0.0
  %1134 = vmatpush2.msra.mxu0 0.0
  %1135 = vmatprep.subr.mxu0 0.0
  %1136 = vmatpush2.msra.mxu0 0.0
  %1137 = vmatprep.subr.mxu0 0.0
  %1138 = vmatpush2.msra.mxu0 0.0
  %1139 = vmatprep.subr.mxu0 0.0
  %1140 = vmatpush2.msra.mxu0 0.0
  %1141 = vmatprep.subr.mxu0 0.0
  %1142 = vmatpush2.msra.mxu0 0.0
  %1143 = vmatprep.subr.mxu0 0.0
  %1144 = vmatpush2.msra.mxu0 0.0
  %1145 = vmatprep.subr.mxu0 0.0
  %1146 = vmatpush2.msra.mxu0 0.0
  %1147 = vmatprep.subr.mxu0 0.0
  %1148 = vmatpush2.msra.mxu0 0.0
  %1149 = vmatprep.subr.mxu0 0.0
  %1150 = vmatpush2.msra.mxu0 0.0
  %1151 = vmatprep.mubr.f32.mxu0 0.0
  %v1152 = vand.u32 %v510, 4294901760
  %1153 = vmatmul.mubr.f32.gmra.mxu0 %v1152
  %v1154 = vpop.f32.mrf.mxu0
  %v1155 = vadd.f32 %v1067, %v1154
  %v1156 = vpop.f32.mrf.mxu0
  %v1157 = vadd.f32 %v1069, %v1156
  %1158 = vdwg.mxu0
  %v1159 = vmul.f32 %v1155, 0.5
  %v1160 = vtanh.pop %v1159
  %v1161 = vmul.f32 %v1160, 0.5
  %v1162 = vadd.f32 %v1161, 0.5
  %v1163 = vtanh.pop %v1157
  %v1164 = vmul.f32 %v1157, 0.5
  %v1165 = vtanh.pop %v1164
  %v1166 = vmul.f32 %v1165, 0.5
  %v1167 = vadd.f32 %v1166, 0.5
  %v1168 = vmul.f32 %v1162, 0.0
  %v1169 = vmul.f32 %v1162, %v1163
  %1171 = vrot.lane.b32.xlu0 %v1169, 64
  %v1172 = vpop.permute.xlu0 %1171
  %v1174 = vadd.f32 %v1168, %v1172
  %v1175 = vtanh.pop %v1174
  %v1176 = vmul.f32 %v1167, %v1175
  %s1177 = scalar_lea.vmem %s0, 8
  %v1178 = vld [vmem:[%s1177] sm:$0xff]
  %v1180 = vsel %vm39, %v1178, 0
  %1182 = vmatprep.subr.mxu0 0.0
  %1183 = vmatpush1.msra.mxu0 0.0
  %1184 = vmatprep.subr.mxu0 0.0
  %1185 = vmatpush1.msra.mxu0 0.0
  %1186 = vmatprep.subr.mxu0 0.0
  %1187 = vmatpush1.msra.mxu0 0.0
  %1188 = vmatprep.subr.mxu0 0.0
  %1189 = vmatpush1.msra.mxu0 0.0
  %1190 = vmatprep.subr.mxu0 0.0
  %1191 = vmatpush1.msra.mxu0 0.0
  %1192 = vmatprep.subr.mxu0 0.0
  %1193 = vmatpush1.msra.mxu0 0.0
  %1194 = vmatprep.subr.mxu0 0.0
  %1195 = vmatpush1.msra.mxu0 0.0
  %1196 = vmatprep.subr.mxu0 0.0
  %1197 = vmatpush1.msra.mxu0 0.0
  %1198 = vmatprep.subr.mxu0 0.0
  %1199 = vmatpush1.msra.mxu0 0.0
  %1200 = vmatprep.subr.mxu0 0.0
  %1201 = vmatpush1.msra.mxu0 0.0
  %1202 = vmatprep.subr.mxu0 0.0
  %1203 = vmatpush1.msra.mxu0 0.0
  %1204 = vmatprep.subr.mxu0 0.0
  %1205 = vmatpush1.msra.mxu0 0.0
  %1206 = vmatprep.subr.mxu0 0.0
  %1207 = vmatpush1.msra.mxu0 0.0
  %1208 = vmatprep.subr.mxu0 0.0
  %1209 = vmatpush1.msra.mxu0 0.0
  %1210 = vmatprep.subr.mxu0 0.0
  %1211 = vmatpush1.msra.mxu0 0.0
  %v1212 = vand.u32 %v38, 4294901760
  %1213 = vmatprep.subr.mxu0 %v1212
  %v1214 = vand.u32 %v37, 4294901760
  %1215 = vmatpush1.msra.mxu0 %v1214
  %1216 = vmatprep.subr.mxu0 0.0
  %1217 = vmatpush2.msra.mxu0 0.0
  %1218 = vmatprep.subr.mxu0 0.0
  %1219 = vmatpush2.msra.mxu0 0.0
  %1220 = vmatprep.subr.mxu0 0.0
  %1221 = vmatpush2.msra.mxu0 0.0
  %1222 = vmatprep.subr.mxu0 0.0
  %1223 = vmatpush2.msra.mxu0 0.0
  %1224 = vmatprep.subr.mxu0 0.0
  %1225 = vmatpush2.msra.mxu0 0.0
  %1226 = vmatprep.subr.mxu0 0.0
  %1227 = vmatpush2.msra.mxu0 0.0
  %1228 = vmatprep.subr.mxu0 0.0
  %1229 = vmatpush2.msra.mxu0 0.0
  %1230 = vmatprep.subr.mxu0 0.0
  %1231 = vmatpush2.msra.mxu0 0.0
  %1232 = vmatprep.subr.mxu0 0.0
  %1233 = vmatpush2.msra.mxu0 0.0
  %1234 = vmatprep.subr.mxu0 0.0
  %1235 = vmatpush2.msra.mxu0 0.0
  %1236 = vmatprep.subr.mxu0 0.0
  %1237 = vmatpush2.msra.mxu0 0.0
  %1238 = vmatprep.subr.mxu0 0.0
  %1239 = vmatpush2.msra.mxu0 0.0
  %1240 = vmatprep.subr.mxu0 0.0
  %1241 = vmatpush2.msra.mxu0 0.0
  %1242 = vmatprep.subr.mxu0 0.0
  %1243 = vmatpush2.msra.mxu0 0.0
  %1244 = vmatprep.subr.mxu0 0.0
  %1245 = vmatpush2.msra.mxu0 0.0
  %1246 = vmatprep.subr.mxu0 0.0
  %1247 = vmatpush2.msra.mxu0 0.0
  %1248 = vmatprep.mubr.f32.mxu0 0.0
  %v1249 = vand.u32 %v1180, 4294901760
  %v1250 = vsub.f32 %v1180, %v1249
  %v1251 = vand.u32 %v1250, 4294901760
  %v1252 = vsub.f32 %v1250, %v1251
  %v1253 = vand.u32 %v1252, 4294901760
  %1254 = vmatmul.mubr.f32.gmra.mxu0 %v1253
  %v1255 = vpop.f32.mrf.mxu0
  %v1256 = vadd.f32 0.0, %v1255
  %v1257 = vpop.f32.mrf.mxu0
  %v1258 = vadd.f32 0.0, %v1257
  %1259 = vdwg.mxu0
  %1260 = vmatprep.subr.mxu0 0.0
  %1261 = vmatpush1.msra.mxu0 0.0
  %1262 = vmatprep.subr.mxu0 0.0
  %1263 = vmatpush1.msra.mxu0 0.0
  %1264 = vmatprep.subr.mxu0 0.0
  %1265 = vmatpush1.msra.mxu0 0.0
  %1266 = vmatprep.subr.mxu0 0.0
  %1267 = vmatpush1.msra.mxu0 0.0
  %1268 = vmatprep.subr.mxu0 0.0
  %1269 = vmatpush1.msra.mxu0 0.0
  %1270 = vmatprep.subr.mxu0 0.0
  %1271 = vmatpush1.msra.mxu0 0.0
  %1272 = vmatprep.subr.mxu0 0.0
  %1273 = vmatpush1.msra.mxu0 0.0
  %1274 = vmatprep.subr.mxu0 0.0
  %1275 = vmatpush1.msra.mxu0 0.0
  %1276 = vmatprep.subr.mxu0 0.0
  %1277 = vmatpush1.msra.mxu0 0.0
  %1278 = vmatprep.subr.mxu0 0.0
  %1279 = vmatpush1.msra.mxu0 0.0
  %1280 = vmatprep.subr.mxu0 0.0
  %1281 = vmatpush1.msra.mxu0 0.0
  %1282 = vmatprep.subr.mxu0 0.0
  %1283 = vmatpush1.msra.mxu0 0.0
  %1284 = vmatprep.subr.mxu0 0.0
  %1285 = vmatpush1.msra.mxu0 0.0
  %1286 = vmatprep.subr.mxu0 0.0
  %1287 = vmatpush1.msra.mxu0 0.0
  %1288 = vmatprep.subr.mxu0 0.0
  %1289 = vmatpush1.msra.mxu0 0.0
  %v1290 = vand.u32 %v38, 4294901760
  %v1291 = vsub.f32 %v38, %v1290
  %v1292 = vand.u32 %v1291, 4294901760
  %v1293 = vsub.f32 %v1291, %v1292
  %v1294 = vand.u32 %v1293, 4294901760
  %1295 = vmatprep.subr.mxu0 %v1294
  %v1296 = vand.u32 %v37, 4294901760
  %v1297 = vsub.f32 %v37, %v1296
  %v1298 = vand.u32 %v1297, 4294901760
  %v1299 = vsub.f32 %v1297, %v1298
  %v1300 = vand.u32 %v1299, 4294901760
  %1301 = vmatpush1.msra.mxu0 %v1300
  %1302 = vmatprep.subr.mxu0 0.0
  %1303 = vmatpush2.msra.mxu0 0.0
  %1304 = vmatprep.subr.mxu0 0.0
  %1305 = vmatpush2.msra.mxu0 0.0
  %1306 = vmatprep.subr.mxu0 0.0
  %1307 = vmatpush2.msra.mxu0 0.0
  %1308 = vmatprep.subr.mxu0 0.0
  %1309 = vmatpush2.msra.mxu0 0.0
  %1310 = vmatprep.subr.mxu0 0.0
  %1311 = vmatpush2.msra.mxu0 0.0
  %1312 = vmatprep.subr.mxu0 0.0
  %1313 = vmatpush2.msra.mxu0 0.0
  %1314 = vmatprep.subr.mxu0 0.0
  %1315 = vmatpush2.msra.mxu0 0.0
  %1316 = vmatprep.subr.mxu0 0.0
  %1317 = vmatpush2.msra.mxu0 0.0
  %1318 = vmatprep.subr.mxu0 0.0
  %1319 = vmatpush2.msra.mxu0 0.0
  %1320 = vmatprep.subr.mxu0 0.0
  %1321 = vmatpush2.msra.mxu0 0.0
  %1322 = vmatprep.subr.mxu0 0.0
  %1323 = vmatpush2.msra.mxu0 0.0
  %1324 = vmatprep.subr.mxu0 0.0
  %1325 = vmatpush2.msra.mxu0 0.0
  %1326 = vmatprep.subr.mxu0 0.0
  %1327 = vmatpush2.msra.mxu0 0.0
  %1328 = vmatprep.subr.mxu0 0.0
  %1329 = vmatpush2.msra.mxu0 0.0
  %1330 = vmatprep.subr.mxu0 0.0
  %1331 = vmatpush2.msra.mxu0 0.0
  %1332 = vmatprep.subr.mxu0 0.0
  %1333 = vmatpush2.msra.mxu0 0.0
  %1334 = vmatprep.mubr.f32.mxu0 0.0
  %v1335 = vand.u32 %v1180, 4294901760
  %1336 = vmatmul.mubr.f32.gmra.mxu0 %v1335
  %v1337 = vpop.f32.mrf.mxu0
  %v1338 = vadd.f32 %v1256, %v1337
  %v1339 = vpop.f32.mrf.mxu0
  %v1340 = vadd.f32 %v1258, %v1339
  %1341 = vdwg.mxu0
  %1342 = vmatprep.subr.mxu0 0.0
  %1343 = vmatpush1.msra.mxu0 0.0
  %1344 = vmatprep.subr.mxu0 0.0
  %1345 = vmatpush1.msra.mxu0 0.0
  %1346 = vmatprep.subr.mxu0 0.0
  %1347 = vmatpush1.msra.mxu0 0.0
  %1348 = vmatprep.subr.mxu0 0.0
  %1349 = vmatpush1.msra.mxu0 0.0
  %1350 = vmatprep.subr.mxu0 0.0
  %1351 = vmatpush1.msra.mxu0 0.0
  %1352 = vmatprep.subr.mxu0 0.0
  %1353 = vmatpush1.msra.mxu0 0.0
  %1354 = vmatprep.subr.mxu0 0.0
  %1355 = vmatpush1.msra.mxu0 0.0
  %1356 = vmatprep.subr.mxu0 0.0
  %1357 = vmatpush1.msra.mxu0 0.0
  %1358 = vmatprep.subr.mxu0 0.0
  %1359 = vmatpush1.msra.mxu0 0.0
  %1360 = vmatprep.subr.mxu0 0.0
  %1361 = vmatpush1.msra.mxu0 0.0
  %1362 = vmatprep.subr.mxu0 0.0
  %1363 = vmatpush1.msra.mxu0 0.0
  %1364 = vmatprep.subr.mxu0 0.0
  %1365 = vmatpush1.msra.mxu0 0.0
  %1366 = vmatprep.subr.mxu0 0.0
  %1367 = vmatpush1.msra.mxu0 0.0
  %1368 = vmatprep.subr.mxu0 0.0
  %1369 = vmatpush1.msra.mxu0 0.0
  %1370 = vmatprep.subr.mxu0 0.0
  %1371 = vmatpush1.msra.mxu0 0.0
  %v1372 = vand.u32 %v38, 4294901760
  %v1373 = vsub.f32 %v38, %v1372
  %1374 = vmatprep.subr.mxu0 %v1373
  %v1375 = vand.u32 %v37, 4294901760
  %v1376 = vsub.f32 %v37, %v1375
  %1377 = vmatpush1.msra.mxu0 %v1376
  %1378 = vmatprep.subr.mxu0 0.0
  %1379 = vmatpush2.msra.mxu0 0.0
  %1380 = vmatprep.subr.mxu0 0.0
  %1381 = vmatpush2.msra.mxu0 0.0
  %1382 = vmatprep.subr.mxu0 0.0
  %1383 = vmatpush2.msra.mxu0 0.0
  %1384 = vmatprep.subr.mxu0 0.0
  %1385 = vmatpush2.msra.mxu0 0.0
  %1386 = vmatprep.subr.mxu0 0.0
  %1387 = vmatpush2.msra.mxu0 0.0
  %1388 = vmatprep.subr.mxu0 0.0
  %1389 = vmatpush2.msra.mxu0 0.0
  %1390 = vmatprep.subr.mxu0 0.0
  %1391 = vmatpush2.msra.mxu0 0.0
  %1392 = vmatprep.subr.mxu0 0.0
  %1393 = vmatpush2.msra.mxu0 0.0
  %1394 = vmatprep.subr.mxu0 0.0
  %1395 = vmatpush2.msra.mxu0 0.0
  %1396 = vmatprep.subr.mxu0 0.0
  %1397 = vmatpush2.msra.mxu0 0.0
  %1398 = vmatprep.subr.mxu0 0.0
  %1399 = vmatpush2.msra.mxu0 0.0
  %1400 = vmatprep.subr.mxu0 0.0
  %1401 = vmatpush2.msra.mxu0 0.0
  %1402 = vmatprep.subr.mxu0 0.0
  %1403 = vmatpush2.msra.mxu0 0.0
  %1404 = vmatprep.subr.mxu0 0.0
  %1405 = vmatpush2.msra.mxu0 0.0
  %1406 = vmatprep.subr.mxu0 0.0
  %1407 = vmatpush2.msra.mxu0 0.0
  %1408 = vmatprep.subr.mxu0 0.0
  %1409 = vmatpush2.msra.mxu0 0.0
  %1410 = vmatprep.mubr.f32.mxu0 0.0
  %v1411 = vand.u32 %v1180, 4294901760
  %v1412 = vsub.f32 %v1180, %v1411
  %1413 = vmatmul.mubr.f32.gmra.mxu0 %v1412
  %v1414 = vpop.f32.mrf.mxu0
  %v1415 = vadd.f32 %v1338, %v1414
  %v1416 = vpop.f32.mrf.mxu0
  %v1417 = vadd.f32 %v1340, %v1416
  %1418 = vdwg.mxu0
  %1419 = vmatprep.subr.mxu0 0.0
  %1420 = vmatpush1.msra.mxu0 0.0
  %1421 = vmatprep.subr.mxu0 0.0
  %1422 = vmatpush1.msra.mxu0 0.0
  %1423 = vmatprep.subr.mxu0 0.0
  %1424 = vmatpush1.msra.mxu0 0.0
  %1425 = vmatprep.subr.mxu0 0.0
  %1426 = vmatpush1.msra.mxu0 0.0
  %1427 = vmatprep.subr.mxu0 0.0
  %1428 = vmatpush1.msra.mxu0 0.0
  %1429 = vmatprep.subr.mxu0 0.0
  %1430 = vmatpush1.msra.mxu0 0.0
  %1431 = vmatprep.subr.mxu0 0.0
  %1432 = vmatpush1.msra.mxu0 0.0
  %1433 = vmatprep.subr.mxu0 0.0
  %1434 = vmatpush1.msra.mxu0 0.0
  %1435 = vmatprep.subr.mxu0 0.0
  %1436 = vmatpush1.msra.mxu0 0.0
  %1437 = vmatprep.subr.mxu0 0.0
  %1438 = vmatpush1.msra.mxu0 0.0
  %1439 = vmatprep.subr.mxu0 0.0
  %1440 = vmatpush1.msra.mxu0 0.0
  %1441 = vmatprep.subr.mxu0 0.0
  %1442 = vmatpush1.msra.mxu0 0.0
  %1443 = vmatprep.subr.mxu0 0.0
  %1444 = vmatpush1.msra.mxu0 0.0
  %1445 = vmatprep.subr.mxu0 0.0
  %1446 = vmatpush1.msra.mxu0 0.0
  %1447 = vmatprep.subr.mxu0 0.0
  %1448 = vmatpush1.msra.mxu0 0.0
  %v1449 = vand.u32 %v38, 4294901760
  %1450 = vmatprep.subr.mxu0 %v1449
  %v1451 = vand.u32 %v37, 4294901760
  %1452 = vmatpush1.msra.mxu0 %v1451
  %1453 = vmatprep.subr.mxu0 0.0
  %1454 = vmatpush2.msra.mxu0 0.0
  %1455 = vmatprep.subr.mxu0 0.0
  %1456 = vmatpush2.msra.mxu0 0.0
  %1457 = vmatprep.subr.mxu0 0.0
  %1458 = vmatpush2.msra.mxu0 0.0
  %1459 = vmatprep.subr.mxu0 0.0
  %1460 = vmatpush2.msra.mxu0 0.0
  %1461 = vmatprep.subr.mxu0 0.0
  %1462 = vmatpush2.msra.mxu0 0.0
  %1463 = vmatprep.subr.mxu0 0.0
  %1464 = vmatpush2.msra.mxu0 0.0
  %1465 = vmatprep.subr.mxu0 0.0
  %1466 = vmatpush2.msra.mxu0 0.0
  %1467 = vmatprep.subr.mxu0 0.0
  %1468 = vmatpush2.msra.mxu0 0.0
  %1469 = vmatprep.subr.mxu0 0.0
  %1470 = vmatpush2.msra.mxu0 0.0
  %1471 = vmatprep.subr.mxu0 0.0
  %1472 = vmatpush2.msra.mxu0 0.0
  %1473 = vmatprep.subr.mxu0 0.0
  %1474 = vmatpush2.msra.mxu0 0.0
  %1475 = vmatprep.subr.mxu0 0.0
  %1476 = vmatpush2.msra.mxu0 0.0
  %1477 = vmatprep.subr.mxu0 0.0
  %1478 = vmatpush2.msra.mxu0 0.0
  %1479 = vmatprep.subr.mxu0 0.0
  %1480 = vmatpush2.msra.mxu0 0.0
  %1481 = vmatprep.subr.mxu0 0.0
  %1482 = vmatpush2.msra.mxu0 0.0
  %1483 = vmatprep.subr.mxu0 0.0
  %1484 = vmatpush2.msra.mxu0 0.0
  %1485 = vmatprep.mubr.f32.mxu0 0.0
  %v1486 = vand.u32 %v1180, 4294901760
  %v1487 = vsub.f32 %v1180, %v1486
  %v1488 = vand.u32 %v1487, 4294901760
  %1489 = vmatmul.mubr.f32.gmra.mxu0 %v1488
  %v1490 = vpop.f32.mrf.mxu0
  %v1491 = vadd.f32 %v1415, %v1490
  %v1492 = vpop.f32.mrf.mxu0
  %v1493 = vadd.f32 %v1417, %v1492
  %1494 = vdwg.mxu0
  %1495 = vmatprep.subr.mxu0 0.0
  %1496 = vmatpush1.msra.mxu0 0.0
  %1497 = vmatprep.subr.mxu0 0.0
  %1498 = vmatpush1.msra.mxu0 0.0
  %1499 = vmatprep.subr.mxu0 0.0
  %1500 = vmatpush1.msra.mxu0 0.0
  %1501 = vmatprep.subr.mxu0 0.0
  %1502 = vmatpush1.msra.mxu0 0.0
  %1503 = vmatprep.subr.mxu0 0.0
  %1504 = vmatpush1.msra.mxu0 0.0
  %1505 = vmatprep.subr.mxu0 0.0
  %1506 = vmatpush1.msra.mxu0 0.0
  %1507 = vmatprep.subr.mxu0 0.0
  %1508 = vmatpush1.msra.mxu0 0.0
  %1509 = vmatprep.subr.mxu0 0.0
  %1510 = vmatpush1.msra.mxu0 0.0
  %1511 = vmatprep.subr.mxu0 0.0
  %1512 = vmatpush1.msra.mxu0 0.0
  %1513 = vmatprep.subr.mxu0 0.0
  %1514 = vmatpush1.msra.mxu0 0.0
  %1515 = vmatprep.subr.mxu0 0.0
  %1516 = vmatpush1.msra.mxu0 0.0
  %1517 = vmatprep.subr.mxu0 0.0
  %1518 = vmatpush1.msra.mxu0 0.0
  %1519 = vmatprep.subr.mxu0 0.0
  %1520 = vmatpush1.msra.mxu0 0.0
  %1521 = vmatprep.subr.mxu0 0.0
  %1522 = vmatpush1.msra.mxu0 0.0
  %1523 = vmatprep.subr.mxu0 0.0
  %1524 = vmatpush1.msra.mxu0 0.0
  %v1525 = vand.u32 %v38, 4294901760
  %v1526 = vsub.f32 %v38, %v1525
  %v1527 = vand.u32 %v1526, 4294901760
  %1528 = vmatprep.subr.mxu0 %v1527
  %v1529 = vand.u32 %v37, 4294901760
  %v1530 = vsub.f32 %v37, %v1529
  %v1531 = vand.u32 %v1530, 4294901760
  %1532 = vmatpush1.msra.mxu0 %v1531
  %1533 = vmatprep.subr.mxu0 0.0
  %1534 = vmatpush2.msra.mxu0 0.0
  %1535 = vmatprep.subr.mxu0 0.0
  %1536 = vmatpush2.msra.mxu0 0.0
  %1537 = vmatprep.subr.mxu0 0.0
  %1538 = vmatpush2.msra.mxu0 0.0
  %1539 = vmatprep.subr.mxu0 0.0
  %1540 = vmatpush2.msra.mxu0 0.0
  %1541 = vmatprep.subr.mxu0 0.0
  %1542 = vmatpush2.msra.mxu0 0.0
  %1543 = vmatprep.subr.mxu0 0.0
  %1544 = vmatpush2.msra.mxu0 0.0
  %1545 = vmatprep.subr.mxu0 0.0
  %1546 = vmatpush2.msra.mxu0 0.0
  %1547 = vmatprep.subr.mxu0 0.0
  %1548 = vmatpush2.msra.mxu0 0.0
  %1549 = vmatprep.subr.mxu0 0.0
  %1550 = vmatpush2.msra.mxu0 0.0
  %1551 = vmatprep.subr.mxu0 0.0
  %1552 = vmatpush2.msra.mxu0 0.0
  %1553 = vmatprep.subr.mxu0 0.0
  %1554 = vmatpush2.msra.mxu0 0.0
  %1555 = vmatprep.subr.mxu0 0.0
  %1556 = vmatpush2.msra.mxu0 0.0
  %1557 = vmatprep.subr.mxu0 0.0
  %1558 = vmatpush2.msra.mxu0 0.0
  %1559 = vmatprep.subr.mxu0 0.0
  %1560 = vmatpush2.msra.mxu0 0.0
  %1561 = vmatprep.subr.mxu0 0.0
  %1562 = vmatpush2.msra.mxu0 0.0
  %1563 = vmatprep.subr.mxu0 0.0
  %1564 = vmatpush2.msra.mxu0 0.0
  %1565 = vmatprep.mubr.f32.mxu0 0.0
  %v1566 = vand.u32 %v1180, 4294901760
  %1567 = vmatmul.mubr.f32.gmra.mxu0 %v1566
  %v1568 = vpop.f32.mrf.mxu0
  %v1569 = vadd.f32 %v1491, %v1568
  %v1570 = vpop.f32.mrf.mxu0
  %v1571 = vadd.f32 %v1493, %v1570
  %1572 = vdwg.mxu0
  %1573 = vmatprep.subr.mxu0 0.0
  %1574 = vmatpush1.msra.mxu0 0.0
  %1575 = vmatprep.subr.mxu0 0.0
  %1576 = vmatpush1.msra.mxu0 0.0
  %1577 = vmatprep.subr.mxu0 0.0
  %1578 = vmatpush1.msra.mxu0 0.0
  %1579 = vmatprep.subr.mxu0 0.0
  %1580 = vmatpush1.msra.mxu0 0.0
  %1581 = vmatprep.subr.mxu0 0.0
  %1582 = vmatpush1.msra.mxu0 0.0
  %1583 = vmatprep.subr.mxu0 0.0
  %1584 = vmatpush1.msra.mxu0 0.0
  %1585 = vmatprep.subr.mxu0 0.0
  %1586 = vmatpush1.msra.mxu0 0.0
  %1587 = vmatprep.subr.mxu0 0.0
  %1588 = vmatpush1.msra.mxu0 0.0
  %1589 = vmatprep.subr.mxu0 0.0
  %1590 = vmatpush1.msra.mxu0 0.0
  %1591 = vmatprep.subr.mxu0 0.0
  %1592 = vmatpush1.msra.mxu0 0.0
  %1593 = vmatprep.subr.mxu0 0.0
  %1594 = vmatpush1.msra.mxu0 0.0
  %1595 = vmatprep.subr.mxu0 0.0
  %1596 = vmatpush1.msra.mxu0 0.0
  %1597 = vmatprep.subr.mxu0 0.0
  %1598 = vmatpush1.msra.mxu0 0.0
  %1599 = vmatprep.subr.mxu0 0.0
  %1600 = vmatpush1.msra.mxu0 0.0
  %1601 = vmatprep.subr.mxu0 0.0
  %1602 = vmatpush1.msra.mxu0 0.0
  %v1603 = vand.u32 %v38, 4294901760
  %1604 = vmatprep.subr.mxu0 %v1603
  %v1605 = vand.u32 %v37, 4294901760
  %1606 = vmatpush1.msra.mxu0 %v1605
  %1607 = vmatprep.subr.mxu0 0.0
  %1608 = vmatpush2.msra.mxu0 0.0
  %1609 = vmatprep.subr.mxu0 0.0
  %1610 = vmatpush2.msra.mxu0 0.0
  %1611 = vmatprep.subr.mxu0 0.0
  %1612 = vmatpush2.msra.mxu0 0.0
  %1613 = vmatprep.subr.mxu0 0.0
  %1614 = vmatpush2.msra.mxu0 0.0
  %1615 = vmatprep.subr.mxu0 0.0
  %1616 = vmatpush2.msra.mxu0 0.0
  %1617 = vmatprep.subr.mxu0 0.0
  %1618 = vmatpush2.msra.mxu0 0.0
  %1619 = vmatprep.subr.mxu0 0.0
  %1620 = vmatpush2.msra.mxu0 0.0
  %1621 = vmatprep.subr.mxu0 0.0
  %1622 = vmatpush2.msra.mxu0 0.0
  %1623 = vmatprep.subr.mxu0 0.0
  %1624 = vmatpush2.msra.mxu0 0.0
  %1625 = vmatprep.subr.mxu0 0.0
  %1626 = vmatpush2.msra.mxu0 0.0
  %1627 = vmatprep.subr.mxu0 0.0
  %1628 = vmatpush2.msra.mxu0 0.0
  %1629 = vmatprep.subr.mxu0 0.0
  %1630 = vmatpush2.msra.mxu0 0.0
  %1631 = vmatprep.subr.mxu0 0.0
  %1632 = vmatpush2.msra.mxu0 0.0
  %1633 = vmatprep.subr.mxu0 0.0
  %1634 = vmatpush2.msra.mxu0 0.0
  %1635 = vmatprep.subr.mxu0 0.0
  %1636 = vmatpush2.msra.mxu0 0.0
  %1637 = vmatprep.subr.mxu0 0.0
  %1638 = vmatpush2.msra.mxu0 0.0
  %1639 = vmatprep.mubr.f32.mxu0 0.0
  %v1640 = vand.u32 %v1180, 4294901760
  %1641 = vmatmul.mubr.f32.gmra.mxu0 %v1640
  %v1642 = vpop.f32.mrf.mxu0
  %v1643 = vadd.f32 %v1569, %v1642
  %v1644 = vpop.f32.mrf.mxu0
  %v1645 = vadd.f32 %v1571, %v1644
  %1646 = vdwg.mxu0
  %1648 = vrot.lane.b32.xlu0 %v1176, 64
  %v1649 = vpop.permute.xlu0 %1648
  %v1650 = vsel %vm508, %v1649, 0
  %1652 = vmatprep.subr.mxu0 0.0
  %1653 = vmatpush1.msra.mxu0 0.0
  %1654 = vmatprep.subr.mxu0 0.0
  %1655 = vmatpush1.msra.mxu0 0.0
  %1656 = vmatprep.subr.mxu0 0.0
  %1657 = vmatpush1.msra.mxu0 0.0
  %1658 = vmatprep.subr.mxu0 0.0
  %1659 = vmatpush1.msra.mxu0 0.0
  %1660 = vmatprep.subr.mxu0 0.0
  %1661 = vmatpush1.msra.mxu0 0.0
  %1662 = vmatprep.subr.mxu0 0.0
  %1663 = vmatpush1.msra.mxu0 0.0
  %1664 = vmatprep.subr.mxu0 0.0
  %1665 = vmatpush1.msra.mxu0 0.0
  %1666 = vmatprep.subr.mxu0 0.0
  %1667 = vmatpush1.msra.mxu0 0.0
  %v1668 = vand.u32 %v35, 4294901760
  %1669 = vmatprep.subr.mxu0 %v1668
  %v1670 = vand.u32 %v34, 4294901760
  %1671 = vmatpush1.msra.mxu0 %v1670
  %v1672 = vand.u32 %v33, 4294901760
  %1673 = vmatprep.subr.mxu0 %v1672
  %v1674 = vand.u32 %v32, 4294901760
  %1675 = vmatpush1.msra.mxu0 %v1674
  %v1676 = vand.u32 %v31, 4294901760
  %1677 = vmatprep.subr.mxu0 %v1676
  %v1678 = vand.u32 %v30, 4294901760
  %1679 = vmatpush1.msra.mxu0 %v1678
  %v1680 = vand.u32 %v29, 4294901760
  %1681 = vmatprep.subr.mxu0 %v1680
  %v1682 = vand.u32 %v28, 4294901760
  %1683 = vmatpush1.msra.mxu0 %v1682
  %v1684 = vand.u32 %v27, 4294901760
  %1685 = vmatprep.subr.mxu0 %v1684
  %v1686 = vand.u32 %v26, 4294901760
  %1687 = vmatpush1.msra.mxu0 %v1686
  %v1688 = vand.u32 %v25, 4294901760
  %1689 = vmatprep.subr.mxu0 %v1688
  %v1690 = vand.u32 %v24, 4294901760
  %1691 = vmatpush1.msra.mxu0 %v1690
  %v1692 = vand.u32 %v23, 4294901760
  %1693 = vmatprep.subr.mxu0 %v1692
  %v1694 = vand.u32 %v22, 4294901760
  %1695 = vmatpush1.msra.mxu0 %v1694
  %v1696 = vand.u32 %v21, 4294901760
  %1697 = vmatprep.subr.mxu0 %v1696
  %v1698 = vand.u32 %v20, 4294901760
  %1699 = vmatpush1.msra.mxu0 %v1698
  %1700 = vmatprep.subr.mxu0 0.0
  %1701 = vmatpush2.msra.mxu0 0.0
  %1702 = vmatprep.subr.mxu0 0.0
  %1703 = vmatpush2.msra.mxu0 0.0
  %1704 = vmatprep.subr.mxu0 0.0
  %1705 = vmatpush2.msra.mxu0 0.0
  %1706 = vmatprep.subr.mxu0 0.0
  %1707 = vmatpush2.msra.mxu0 0.0
  %1708 = vmatprep.subr.mxu0 0.0
  %1709 = vmatpush2.msra.mxu0 0.0
  %1710 = vmatprep.subr.mxu0 0.0
  %1711 = vmatpush2.msra.mxu0 0.0
  %1712 = vmatprep.subr.mxu0 0.0
  %1713 = vmatpush2.msra.mxu0 0.0
  %1714 = vmatprep.subr.mxu0 0.0
  %1715 = vmatpush2.msra.mxu0 0.0
  %1716 = vmatprep.subr.mxu0 0.0
  %1717 = vmatpush2.msra.mxu0 0.0
  %1718 = vmatprep.subr.mxu0 0.0
  %1719 = vmatpush2.msra.mxu0 0.0
  %1720 = vmatprep.subr.mxu0 0.0
  %1721 = vmatpush2.msra.mxu0 0.0
  %1722 = vmatprep.subr.mxu0 0.0
  %1723 = vmatpush2.msra.mxu0 0.0
  %1724 = vmatprep.subr.mxu0 0.0
  %1725 = vmatpush2.msra.mxu0 0.0
  %1726 = vmatprep.subr.mxu0 0.0
  %1727 = vmatpush2.msra.mxu0 0.0
  %1728 = vmatprep.subr.mxu0 0.0
  %1729 = vmatpush2.msra.mxu0 0.0
  %1730 = vmatprep.subr.mxu0 0.0
  %1731 = vmatpush2.msra.mxu0 0.0
  %1732 = vmatprep.mubr.f32.mxu0 0.0
  %v1733 = vand.u32 %v1650, 4294901760
  %v1734 = vsub.f32 %v1650, %v1733
  %v1735 = vand.u32 %v1734, 4294901760
  %v1736 = vsub.f32 %v1734, %v1735
  %v1737 = vand.u32 %v1736, 4294901760
  %1738 = vmatmul.mubr.f32.gmra.mxu0 %v1737
  %v1739 = vpop.f32.mrf.mxu0
  %v1740 = vadd.f32 %v1643, %v1739
  %v1741 = vpop.f32.mrf.mxu0
  %v1742 = vadd.f32 %v1645, %v1741
  %1743 = vdwg.mxu0
  %1744 = vmatprep.subr.mxu0 0.0
  %1745 = vmatpush1.msra.mxu0 0.0
  %1746 = vmatprep.subr.mxu0 0.0
  %1747 = vmatpush1.msra.mxu0 0.0
  %1748 = vmatprep.subr.mxu0 0.0
  %1749 = vmatpush1.msra.mxu0 0.0
  %1750 = vmatprep.subr.mxu0 0.0
  %1751 = vmatpush1.msra.mxu0 0.0
  %1752 = vmatprep.subr.mxu0 0.0
  %1753 = vmatpush1.msra.mxu0 0.0
  %1754 = vmatprep.subr.mxu0 0.0
  %1755 = vmatpush1.msra.mxu0 0.0
  %1756 = vmatprep.subr.mxu0 0.0
  %1757 = vmatpush1.msra.mxu0 0.0
  %1758 = vmatprep.subr.mxu0 0.0
  %1759 = vmatpush1.msra.mxu0 0.0
  %v1760 = vand.u32 %v35, 4294901760
  %v1761 = vsub.f32 %v35, %v1760
  %v1762 = vand.u32 %v1761, 4294901760
  %v1763 = vsub.f32 %v1761, %v1762
  %v1764 = vand.u32 %v1763, 4294901760
  %1765 = vmatprep.subr.mxu0 %v1764
  %v1766 = vand.u32 %v34, 4294901760
  %v1767 = vsub.f32 %v34, %v1766
  %v1768 = vand.u32 %v1767, 4294901760
  %v1769 = vsub.f32 %v1767, %v1768
  %v1770 = vand.u32 %v1769, 4294901760
  %1771 = vmatpush1.msra.mxu0 %v1770
  %v1772 = vand.u32 %v33, 4294901760
  %v1773 = vsub.f32 %v33, %v1772
  %v1774 = vand.u32 %v1773, 4294901760
  %v1775 = vsub.f32 %v1773, %v1774
  %v1776 = vand.u32 %v1775, 4294901760
  %1777 = vmatprep.subr.mxu0 %v1776
  %v1778 = vand.u32 %v32, 4294901760
  %v1779 = vsub.f32 %v32, %v1778
  %v1780 = vand.u32 %v1779, 4294901760
  %v1781 = vsub.f32 %v1779, %v1780
  %v1782 = vand.u32 %v1781, 4294901760
  %1783 = vmatpush1.msra.mxu0 %v1782
  %v1784 = vand.u32 %v31, 4294901760
  %v1785 = vsub.f32 %v31, %v1784
  %v1786 = vand.u32 %v1785, 4294901760
  %v1787 = vsub.f32 %v1785, %v1786
  %v1788 = vand.u32 %v1787, 4294901760
  %1789 = vmatprep.subr.mxu0 %v1788
  %v1790 = vand.u32 %v30, 4294901760
  %v1791 = vsub.f32 %v30, %v1790
  %v1792 = vand.u32 %v1791, 4294901760
  %v1793 = vsub.f32 %v1791, %v1792
  %v1794 = vand.u32 %v1793, 4294901760
  %1795 = vmatpush1.msra.mxu0 %v1794
  %v1796 = vand.u32 %v29, 4294901760
  %v1797 = vsub.f32 %v29, %v1796
  %v1798 = vand.u32 %v1797, 4294901760
  %v1799 = vsub.f32 %v1797, %v1798
  %v1800 = vand.u32 %v1799, 4294901760
  %1801 = vmatprep.subr.mxu0 %v1800
  %v1802 = vand.u32 %v28, 4294901760
  %v1803 = vsub.f32 %v28, %v1802
  %v1804 = vand.u32 %v1803, 4294901760
  %v1805 = vsub.f32 %v1803, %v1804
  %v1806 = vand.u32 %v1805, 4294901760
  %1807 = vmatpush1.msra.mxu0 %v1806
  %v1808 = vand.u32 %v27, 4294901760
  %v1809 = vsub.f32 %v27, %v1808
  %v1810 = vand.u32 %v1809, 4294901760
  %v1811 = vsub.f32 %v1809, %v1810
  %v1812 = vand.u32 %v1811, 4294901760
  %1813 = vmatprep.subr.mxu0 %v1812
  %v1814 = vand.u32 %v26, 4294901760
  %v1815 = vsub.f32 %v26, %v1814
  %v1816 = vand.u32 %v1815, 4294901760
  %v1817 = vsub.f32 %v1815, %v1816
  %v1818 = vand.u32 %v1817, 4294901760
  %1819 = vmatpush1.msra.mxu0 %v1818
  %v1820 = vand.u32 %v25, 4294901760
  %v1821 = vsub.f32 %v25, %v1820
  %v1822 = vand.u32 %v1821, 4294901760
  %v1823 = vsub.f32 %v1821, %v1822
  %v1824 = vand.u32 %v1823, 4294901760
  %1825 = vmatprep.subr.mxu0 %v1824
  %v1826 = vand.u32 %v24, 4294901760
  %v1827 = vsub.f32 %v24, %v1826
  %v1828 = vand.u32 %v1827, 4294901760
  %v1829 = vsub.f32 %v1827, %v1828
  %v1830 = vand.u32 %v1829, 4294901760
  %1831 = vmatpush1.msra.mxu0 %v1830
  %v1832 = vand.u32 %v23, 4294901760
  %v1833 = vsub.f32 %v23, %v1832
  %v1834 = vand.u32 %v1833, 4294901760
  %v1835 = vsub.f32 %v1833, %v1834
  %v1836 = vand.u32 %v1835, 4294901760
  %1837 = vmatprep.subr.mxu0 %v1836
  %v1838 = vand.u32 %v22, 4294901760
  %v1839 = vsub.f32 %v22, %v1838
  %v1840 = vand.u32 %v1839, 4294901760
  %v1841 = vsub.f32 %v1839, %v1840
  %v1842 = vand.u32 %v1841, 4294901760
  %1843 = vmatpush1.msra.mxu0 %v1842
  %v1844 = vand.u32 %v21, 4294901760
  %v1845 = vsub.f32 %v21, %v1844
  %v1846 = vand.u32 %v1845, 4294901760
  %v1847 = vsub.f32 %v1845, %v1846
  %v1848 = vand.u32 %v1847, 4294901760
  %1849 = vmatprep.subr.mxu0 %v1848
  %v1850 = vand.u32 %v20, 4294901760
  %v1851 = vsub.f32 %v20, %v1850
  %v1852 = vand.u32 %v1851, 4294901760
  %v1853 = vsub.f32 %v1851, %v1852
  %v1854 = vand.u32 %v1853, 4294901760
  %1855 = vmatpush1.msra.mxu0 %v1854
  %1856 = vmatprep.subr.mxu0 0.0
  %1857 = vmatpush2.msra.mxu0 0.0
  %1858 = vmatprep.subr.mxu0 0.0
  %1859 = vmatpush2.msra.mxu0 0.0
  %1860 = vmatprep.subr.mxu0 0.0
  %1861 = vmatpush2.msra.mxu0 0.0
  %1862 = vmatprep.subr.mxu0 0.0
  %1863 = vmatpush2.msra.mxu0 0.0
  %1864 = vmatprep.subr.mxu0 0.0
  %1865 = vmatpush2.msra.mxu0 0.0
  %1866 = vmatprep.subr.mxu0 0.0
  %1867 = vmatpush2.msra.mxu0 0.0
  %1868 = vmatprep.subr.mxu0 0.0
  %1869 = vmatpush2.msra.mxu0 0.0
  %1870 = vmatprep.subr.mxu0 0.0
  %1871 = vmatpush2.msra.mxu0 0.0
  %1872 = vmatprep.subr.mxu0 0.0
  %1873 = vmatpush2.msra.mxu0 0.0
  %1874 = vmatprep.subr.mxu0 0.0
  %1875 = vmatpush2.msra.mxu0 0.0
  %1876 = vmatprep.subr.mxu0 0.0
  %1877 = vmatpush2.msra.mxu0 0.0
  %1878 = vmatprep.subr.mxu0 0.0
  %1879 = vmatpush2.msra.mxu0 0.0
  %1880 = vmatprep.subr.mxu0 0.0
  %1881 = vmatpush2.msra.mxu0 0.0
  %1882 = vmatprep.subr.mxu0 0.0
  %1883 = vmatpush2.msra.mxu0 0.0
  %1884 = vmatprep.subr.mxu0 0.0
  %1885 = vmatpush2.msra.mxu0 0.0
  %1886 = vmatprep.subr.mxu0 0.0
  %1887 = vmatpush2.msra.mxu0 0.0
  %1888 = vmatprep.mubr.f32.mxu0 0.0
  %v1889 = vand.u32 %v1650, 4294901760
  %1890 = vmatmul.mubr.f32.gmra.mxu0 %v1889
  %v1891 = vpop.f32.mrf.mxu0
  %v1892 = vadd.f32 %v1740, %v1891
  %v1893 = vpop.f32.mrf.mxu0
  %v1894 = vadd.f32 %v1742, %v1893
  %1895 = vdwg.mxu0
  %1896 = vmatprep.subr.mxu0 0.0
  %1897 = vmatpush1.msra.mxu0 0.0
  %1898 = vmatprep.subr.mxu0 0.0
  %1899 = vmatpush1.msra.mxu0 0.0
  %1900 = vmatprep.subr.mxu0 0.0
  %1901 = vmatpush1.msra.mxu0 0.0
  %1902 = vmatprep.subr.mxu0 0.0
  %1903 = vmatpush1.msra.mxu0 0.0
  %1904 = vmatprep.subr.mxu0 0.0
  %1905 = vmatpush1.msra.mxu0 0.0
  %1906 = vmatprep.subr.mxu0 0.0
  %1907 = vmatpush1.msra.mxu0 0.0
  %1908 = vmatprep.subr.mxu0 0.0
  %1909 = vmatpush1.msra.mxu0 0.0
  %1910 = vmatprep.subr.mxu0 0.0
  %1911 = vmatpush1.msra.mxu0 0.0
  %v1912 = vand.u32 %v35, 4294901760
  %v1913 = vsub.f32 %v35, %v1912
  %1914 = vmatprep.subr.mxu0 %v1913
  %v1915 = vand.u32 %v34, 4294901760
  %v1916 = vsub.f32 %v34, %v1915
  %1917 = vmatpush1.msra.mxu0 %v1916
  %v1918 = vand.u32 %v33, 4294901760
  %v1919 = vsub.f32 %v33, %v1918
  %1920 = vmatprep.subr.mxu0 %v1919
  %v1921 = vand.u32 %v32, 4294901760
  %v1922 = vsub.f32 %v32, %v1921
  %1923 = vmatpush1.msra.mxu0 %v1922
  %v1924 = vand.u32 %v31, 4294901760
  %v1925 = vsub.f32 %v31, %v1924
  %1926 = vmatprep.subr.mxu0 %v1925
  %v1927 = vand.u32 %v30, 4294901760
  %v1928 = vsub.f32 %v30, %v1927
  %1929 = vmatpush1.msra.mxu0 %v1928
  %v1930 = vand.u32 %v29, 4294901760
  %v1931 = vsub.f32 %v29, %v1930
  %1932 = vmatprep.subr.mxu0 %v1931
  %v1933 = vand.u32 %v28, 4294901760
  %v1934 = vsub.f32 %v28, %v1933
  %1935 = vmatpush1.msra.mxu0 %v1934
  %v1936 = vand.u32 %v27, 4294901760
  %v1937 = vsub.f32 %v27, %v1936
  %1938 = vmatprep.subr.mxu0 %v1937
  %v1939 = vand.u32 %v26, 4294901760
  %v1940 = vsub.f32 %v26, %v1939
  %1941 = vmatpush1.msra.mxu0 %v1940
  %v1942 = vand.u32 %v25, 4294901760
  %v1943 = vsub.f32 %v25, %v1942
  %1944 = vmatprep.subr.mxu0 %v1943
  %v1945 = vand.u32 %v24, 4294901760
  %v1946 = vsub.f32 %v24, %v1945
  %1947 = vmatpush1.msra.mxu0 %v1946
  %v1948 = vand.u32 %v23, 4294901760
  %v1949 = vsub.f32 %v23, %v1948
  %1950 = vmatprep.subr.mxu0 %v1949
  %v1951 = vand.u32 %v22, 4294901760
  %v1952 = vsub.f32 %v22, %v1951
  %1953 = vmatpush1.msra.mxu0 %v1952
  %v1954 = vand.u32 %v21, 4294901760
  %v1955 = vsub.f32 %v21, %v1954
  %1956 = vmatprep.subr.mxu0 %v1955
  %v1957 = vand.u32 %v20, 4294901760
  %v1958 = vsub.f32 %v20, %v1957
  %1959 = vmatpush1.msra.mxu0 %v1958
  %1960 = vmatprep.subr.mxu0 0.0
  %1961 = vmatpush2.msra.mxu0 0.0
  %1962 = vmatprep.subr.mxu0 0.0
  %1963 = vmatpush2.msra.mxu0 0.0
  %1964 = vmatprep.subr.mxu0 0.0
  %1965 = vmatpush2.msra.mxu0 0.0
  %1966 = vmatprep.subr.mxu0 0.0
  %1967 = vmatpush2.msra.mxu0 0.0
  %1968 = vmatprep.subr.mxu0 0.0
  %1969 = vmatpush2.msra.mxu0 0.0
  %1970 = vmatprep.subr.mxu0 0.0
  %1971 = vmatpush2.msra.mxu0 0.0
  %1972 = vmatprep.subr.mxu0 0.0
  %1973 = vmatpush2.msra.mxu0 0.0
  %1974 = vmatprep.subr.mxu0 0.0
  %1975 = vmatpush2.msra.mxu0 0.0
  %1976 = vmatprep.subr.mxu0 0.0
  %1977 = vmatpush2.msra.mxu0 0.0
  %1978 = vmatprep.subr.mxu0 0.0
  %1979 = vmatpush2.msra.mxu0 0.0
  %1980 = vmatprep.subr.mxu0 0.0
  %1981 = vmatpush2.msra.mxu0 0.0
  %1982 = vmatprep.subr.mxu0 0.0
  %1983 = vmatpush2.msra.mxu0 0.0
  %1984 = vmatprep.subr.mxu0 0.0
  %1985 = vmatpush2.msra.mxu0 0.0
  %1986 = vmatprep.subr.mxu0 0.0
  %1987 = vmatpush2.msra.mxu0 0.0
  %1988 = vmatprep.subr.mxu0 0.0
  %1989 = vmatpush2.msra.mxu0 0.0
  %1990 = vmatprep.subr.mxu0 0.0
  %1991 = vmatpush2.msra.mxu0 0.0
  %1992 = vmatprep.mubr.f32.mxu0 0.0
  %v1993 = vand.u32 %v1650, 4294901760
  %v1994 = vsub.f32 %v1650, %v1993
  %1995 = vmatmul.mubr.f32.gmra.mxu0 %v1994
  %v1996 = vpop.f32.mrf.mxu0
  %v1997 = vadd.f32 %v1892, %v1996
  %v1998 = vpop.f32.mrf.mxu0
  %v1999 = vadd.f32 %v1894, %v1998
  %2000 = vdwg.mxu0
  %2001 = vmatprep.subr.mxu0 0.0
  %2002 = vmatpush1.msra.mxu0 0.0
  %2003 = vmatprep.subr.mxu0 0.0
  %2004 = vmatpush1.msra.mxu0 0.0
  %2005 = vmatprep.subr.mxu0 0.0
  %2006 = vmatpush1.msra.mxu0 0.0
  %2007 = vmatprep.subr.mxu0 0.0
  %2008 = vmatpush1.msra.mxu0 0.0
  %2009 = vmatprep.subr.mxu0 0.0
  %2010 = vmatpush1.msra.mxu0 0.0
  %2011 = vmatprep.subr.mxu0 0.0
  %2012 = vmatpush1.msra.mxu0 0.0
  %2013 = vmatprep.subr.mxu0 0.0
  %2014 = vmatpush1.msra.mxu0 0.0
  %2015 = vmatprep.subr.mxu0 0.0
  %2016 = vmatpush1.msra.mxu0 0.0
  %v2017 = vand.u32 %v35, 4294901760
  %2018 = vmatprep.subr.mxu0 %v2017
  %v2019 = vand.u32 %v34, 4294901760
  %2020 = vmatpush1.msra.mxu0 %v2019
  %v2021 = vand.u32 %v33, 4294901760
  %2022 = vmatprep.subr.mxu0 %v2021
  %v2023 = vand.u32 %v32, 4294901760
  %2024 = vmatpush1.msra.mxu0 %v2023
  %v2025 = vand.u32 %v31, 4294901760
  %2026 = vmatprep.subr.mxu0 %v2025
  %v2027 = vand.u32 %v30, 4294901760
  %2028 = vmatpush1.msra.mxu0 %v2027
  %v2029 = vand.u32 %v29, 4294901760
  %2030 = vmatprep.subr.mxu0 %v2029
  %v2031 = vand.u32 %v28, 4294901760
  %2032 = vmatpush1.msra.mxu0 %v2031
  %v2033 = vand.u32 %v27, 4294901760
  %2034 = vmatprep.subr.mxu0 %v2033
  %v2035 = vand.u32 %v26, 4294901760
  %2036 = vmatpush1.msra.mxu0 %v2035
  %v2037 = vand.u32 %v25, 4294901760
  %2038 = vmatprep.subr.mxu0 %v2037
  %v2039 = vand.u32 %v24, 4294901760
  %2040 = vmatpush1.msra.mxu0 %v2039
  %v2041 = vand.u32 %v23, 4294901760
  %2042 = vmatprep.subr.mxu0 %v2041
  %v2043 = vand.u32 %v22, 4294901760
  %2044 = vmatpush1.msra.mxu0 %v2043
  %v2045 = vand.u32 %v21, 4294901760
  %2046 = vmatprep.subr.mxu0 %v2045
  %v2047 = vand.u32 %v20, 4294901760
  %2048 = vmatpush1.msra.mxu0 %v2047
  %2049 = vmatprep.subr.mxu0 0.0
  %2050 = vmatpush2.msra.mxu0 0.0
  %2051 = vmatprep.subr.mxu0 0.0
  %2052 = vmatpush2.msra.mxu0 0.0
  %2053 = vmatprep.subr.mxu0 0.0
  %2054 = vmatpush2.msra.mxu0 0.0
  %2055 = vmatprep.subr.mxu0 0.0
  %2056 = vmatpush2.msra.mxu0 0.0
  %2057 = vmatprep.subr.mxu0 0.0
  %2058 = vmatpush2.msra.mxu0 0.0
  %2059 = vmatprep.subr.mxu0 0.0
  %2060 = vmatpush2.msra.mxu0 0.0
  %2061 = vmatprep.subr.mxu0 0.0
  %2062 = vmatpush2.msra.mxu0 0.0
  %2063 = vmatprep.subr.mxu0 0.0
  %2064 = vmatpush2.msra.mxu0 0.0
  %2065 = vmatprep.subr.mxu0 0.0
  %2066 = vmatpush2.msra.mxu0 0.0
  %2067 = vmatprep.subr.mxu0 0.0
  %2068 = vmatpush2.msra.mxu0 0.0
  %2069 = vmatprep.subr.mxu0 0.0
  %2070 = vmatpush2.msra.mxu0 0.0
  %2071 = vmatprep.subr.mxu0 0.0
  %2072 = vmatpush2.msra.mxu0 0.0
  %2073 = vmatprep.subr.mxu0 0.0
  %2074 = vmatpush2.msra.mxu0 0.0
  %2075 = vmatprep.subr.mxu0 0.0
  %2076 = vmatpush2.msra.mxu0 0.0
  %2077 = vmatprep.subr.mxu0 0.0
  %2078 = vmatpush2.msra.mxu0 0.0
  %2079 = vmatprep.subr.mxu0 0.0
  %2080 = vmatpush2.msra.mxu0 0.0
  %2081 = vmatprep.mubr.f32.mxu0 0.0
  %v2082 = vand.u32 %v1650, 4294901760
  %v2083 = vsub.f32 %v1650, %v2082
  %v2084 = vand.u32 %v2083, 4294901760
  %2085 = vmatmul.mubr.f32.gmra.mxu0 %v2084
  %v2086 = vpop.f32.mrf.mxu0
  %v2087 = vadd.f32 %v1997, %v2086
  %v2088 = vpop.f32.mrf.mxu0
  %v2089 = vadd.f32 %v1999, %v2088
  %2090 = vdwg.mxu0
  %2091 = vmatprep.subr.mxu0 0.0
  %2092 = vmatpush1.msra.mxu0 0.0
  %2093 = vmatprep.subr.mxu0 0.0
  %2094 = vmatpush1.msra.mxu0 0.0
  %2095 = vmatprep.subr.mxu0 0.0
  %2096 = vmatpush1.msra.mxu0 0.0
  %2097 = vmatprep.subr.mxu0 0.0
  %2098 = vmatpush1.msra.mxu0 0.0
  %2099 = vmatprep.subr.mxu0 0.0
  %2100 = vmatpush1.msra.mxu0 0.0
  %2101 = vmatprep.subr.mxu0 0.0
  %2102 = vmatpush1.msra.mxu0 0.0
  %2103 = vmatprep.subr.mxu0 0.0
  %2104 = vmatpush1.msra.mxu0 0.0
  %2105 = vmatprep.subr.mxu0 0.0
  %2106 = vmatpush1.msra.mxu0 0.0
  %v2107 = vand.u32 %v35, 4294901760
  %v2108 = vsub.f32 %v35, %v2107
  %v2109 = vand.u32 %v2108, 4294901760
  %2110 = vmatprep.subr.mxu0 %v2109
  %v2111 = vand.u32 %v34, 4294901760
  %v2112 = vsub.f32 %v34, %v2111
  %v2113 = vand.u32 %v2112, 4294901760
  %2114 = vmatpush1.msra.mxu0 %v2113
  %v2115 = vand.u32 %v33, 4294901760
  %v2116 = vsub.f32 %v33, %v2115
  %v2117 = vand.u32 %v2116, 4294901760
  %2118 = vmatprep.subr.mxu0 %v2117
  %v2119 = vand.u32 %v32, 4294901760
  %v2120 = vsub.f32 %v32, %v2119
  %v2121 = vand.u32 %v2120, 4294901760
  %2122 = vmatpush1.msra.mxu0 %v2121
  %v2123 = vand.u32 %v31, 4294901760
  %v2124 = vsub.f32 %v31, %v2123
  %v2125 = vand.u32 %v2124, 4294901760
  %2126 = vmatprep.subr.mxu0 %v2125
  %v2127 = vand.u32 %v30, 4294901760
  %v2128 = vsub.f32 %v30, %v2127
  %v2129 = vand.u32 %v2128, 4294901760
  %2130 = vmatpush1.msra.mxu0 %v2129
  %v2131 = vand.u32 %v29, 4294901760
  %v2132 = vsub.f32 %v29, %v2131
  %v2133 = vand.u32 %v2132, 4294901760
  %2134 = vmatprep.subr.mxu0 %v2133
  %v2135 = vand.u32 %v28, 4294901760
  %v2136 = vsub.f32 %v28, %v2135
  %v2137 = vand.u32 %v2136, 4294901760
  %2138 = vmatpush1.msra.mxu0 %v2137
  %v2139 = vand.u32 %v27, 4294901760
  %v2140 = vsub.f32 %v27, %v2139
  %v2141 = vand.u32 %v2140, 4294901760
  %2142 = vmatprep.subr.mxu0 %v2141
  %v2143 = vand.u32 %v26, 4294901760
  %v2144 = vsub.f32 %v26, %v2143
  %v2145 = vand.u32 %v2144, 4294901760
  %2146 = vmatpush1.msra.mxu0 %v2145
  %v2147 = vand.u32 %v25, 4294901760
  %v2148 = vsub.f32 %v25, %v2147
  %v2149 = vand.u32 %v2148, 4294901760
  %2150 = vmatprep.subr.mxu0 %v2149
  %v2151 = vand.u32 %v24, 4294901760
  %v2152 = vsub.f32 %v24, %v2151
  %v2153 = vand.u32 %v2152, 4294901760
  %2154 = vmatpush1.msra.mxu0 %v2153
  %v2155 = vand.u32 %v23, 4294901760
  %v2156 = vsub.f32 %v23, %v2155
  %v2157 = vand.u32 %v2156, 4294901760
  %2158 = vmatprep.subr.mxu0 %v2157
  %v2159 = vand.u32 %v22, 4294901760
  %v2160 = vsub.f32 %v22, %v2159
  %v2161 = vand.u32 %v2160, 4294901760
  %2162 = vmatpush1.msra.mxu0 %v2161
  %v2163 = vand.u32 %v21, 4294901760
  %v2164 = vsub.f32 %v21, %v2163
  %v2165 = vand.u32 %v2164, 4294901760
  %2166 = vmatprep.subr.mxu0 %v2165
  %v2167 = vand.u32 %v20, 4294901760
  %v2168 = vsub.f32 %v20, %v2167
  %v2169 = vand.u32 %v2168, 4294901760
  %2170 = vmatpush1.msra.mxu0 %v2169
  %2171 = vmatprep.subr.mxu0 0.0
  %2172 = vmatpush2.msra.mxu0 0.0
  %2173 = vmatprep.subr.mxu0 0.0
  %2174 = vmatpush2.msra.mxu0 0.0
  %2175 = vmatprep.subr.mxu0 0.0
  %2176 = vmatpush2.msra.mxu0 0.0
  %2177 = vmatprep.subr.mxu0 0.0
  %2178 = vmatpush2.msra.mxu0 0.0
  %2179 = vmatprep.subr.mxu0 0.0
  %2180 = vmatpush2.msra.mxu0 0.0
  %2181 = vmatprep.subr.mxu0 0.0
  %2182 = vmatpush2.msra.mxu0 0.0
  %2183 = vmatprep.subr.mxu0 0.0
  %2184 = vmatpush2.msra.mxu0 0.0
  %2185 = vmatprep.subr.mxu0 0.0
  %2186 = vmatpush2.msra.mxu0 0.0
  %2187 = vmatprep.subr.mxu0 0.0
  %2188 = vmatpush2.msra.mxu0 0.0
  %2189 = vmatprep.subr.mxu0 0.0
  %2190 = vmatpush2.msra.mxu0 0.0
  %2191 = vmatprep.subr.mxu0 0.0
  %2192 = vmatpush2.msra.mxu0 0.0
  %2193 = vmatprep.subr.mxu0 0.0
  %2194 = vmatpush2.msra.mxu0 0.0
  %2195 = vmatprep.subr.mxu0 0.0
  %2196 = vmatpush2.msra.mxu0 0.0
  %2197 = vmatprep.subr.mxu0 0.0
  %2198 = vmatpush2.msra.mxu0 0.0
  %2199 = vmatprep.subr.mxu0 0.0
  %2200 = vmatpush2.msra.mxu0 0.0
  %2201 = vmatprep.subr.mxu0 0.0
  %2202 = vmatpush2.msra.mxu0 0.0
  %2203 = vmatprep.mubr.f32.mxu0 0.0
  %v2204 = vand.u32 %v1650, 4294901760
  %2205 = vmatmul.mubr.f32.gmra.mxu0 %v2204
  %v2206 = vpop.f32.mrf.mxu0
  %v2207 = vadd.f32 %v2087, %v2206
  %v2208 = vpop.f32.mrf.mxu0
  %v2209 = vadd.f32 %v2089, %v2208
  %2210 = vdwg.mxu0
  %2211 = vmatprep.subr.mxu0 0.0
  %2212 = vmatpush1.msra.mxu0 0.0
  %2213 = vmatprep.subr.mxu0 0.0
  %2214 = vmatpush1.msra.mxu0 0.0
  %2215 = vmatprep.subr.mxu0 0.0
  %2216 = vmatpush1.msra.mxu0 0.0
  %2217 = vmatprep.subr.mxu0 0.0
  %2218 = vmatpush1.msra.mxu0 0.0
  %2219 = vmatprep.subr.mxu0 0.0
  %2220 = vmatpush1.msra.mxu0 0.0
  %2221 = vmatprep.subr.mxu0 0.0
  %2222 = vmatpush1.msra.mxu0 0.0
  %2223 = vmatprep.subr.mxu0 0.0
  %2224 = vmatpush1.msra.mxu0 0.0
  %2225 = vmatprep.subr.mxu0 0.0
  %2226 = vmatpush1.msra.mxu0 0.0
  %v2227 = vand.u32 %v35, 4294901760
  %2228 = vmatprep.subr.mxu0 %v2227
  %v2229 = vand.u32 %v34, 4294901760
  %2230 = vmatpush1.msra.mxu0 %v2229
  %v2231 = vand.u32 %v33, 4294901760
  %2232 = vmatprep.subr.mxu0 %v2231
  %v2233 = vand.u32 %v32, 4294901760
  %2234 = vmatpush1.msra.mxu0 %v2233
  %v2235 = vand.u32 %v31, 4294901760
  %2236 = vmatprep.subr.mxu0 %v2235
  %v2237 = vand.u32 %v30, 4294901760
  %2238 = vmatpush1.msra.mxu0 %v2237
  %v2239 = vand.u32 %v29, 4294901760
  %2240 = vmatprep.subr.mxu0 %v2239
  %v2241 = vand.u32 %v28, 4294901760
  %2242 = vmatpush1.msra.mxu0 %v2241
  %v2243 = vand.u32 %v27, 4294901760
  %2244 = vmatprep.subr.mxu0 %v2243
  %v2245 = vand.u32 %v26, 4294901760
  %2246 = vmatpush1.msra.mxu0 %v2245
  %v2247 = vand.u32 %v25, 4294901760
  %2248 = vmatprep.subr.mxu0 %v2247
  %v2249 = vand.u32 %v24, 4294901760
  %2250 = vmatpush1.msra.mxu0 %v2249
  %v2251 = vand.u32 %v23, 4294901760
  %2252 = vmatprep.subr.mxu0 %v2251
  %v2253 = vand.u32 %v22, 4294901760
  %2254 = vmatpush1.msra.mxu0 %v2253
  %v2255 = vand.u32 %v21, 4294901760
  %2256 = vmatprep.subr.mxu0 %v2255
  %v2257 = vand.u32 %v20, 4294901760
  %2258 = vmatpush1.msra.mxu0 %v2257
  %2259 = vmatprep.subr.mxu0 0.0
  %2260 = vmatpush2.msra.mxu0 0.0
  %2261 = vmatprep.subr.mxu0 0.0
  %2262 = vmatpush2.msra.mxu0 0.0
  %2263 = vmatprep.subr.mxu0 0.0
  %2264 = vmatpush2.msra.mxu0 0.0
  %2265 = vmatprep.subr.mxu0 0.0
  %2266 = vmatpush2.msra.mxu0 0.0
  %2267 = vmatprep.subr.mxu0 0.0
  %2268 = vmatpush2.msra.mxu0 0.0
  %2269 = vmatprep.subr.mxu0 0.0
  %2270 = vmatpush2.msra.mxu0 0.0
  %2271 = vmatprep.subr.mxu0 0.0
  %2272 = vmatpush2.msra.mxu0 0.0
  %2273 = vmatprep.subr.mxu0 0.0
  %2274 = vmatpush2.msra.mxu0 0.0
  %2275 = vmatprep.subr.mxu0 0.0
  %2276 = vmatpush2.msra.mxu0 0.0
  %2277 = vmatprep.subr.mxu0 0.0
  %2278 = vmatpush2.msra.mxu0 0.0
  %2279 = vmatprep.subr.mxu0 0.0
  %2280 = vmatpush2.msra.mxu0 0.0
  %2281 = vmatprep.subr.mxu0 0.0
  %2282 = vmatpush2.msra.mxu0 0.0
  %2283 = vmatprep.subr.mxu0 0.0
  %2284 = vmatpush2.msra.mxu0 0.0
  %2285 = vmatprep.subr.mxu0 0.0
  %2286 = vmatpush2.msra.mxu0 0.0
  %2287 = vmatprep.subr.mxu0 0.0
  %2288 = vmatpush2.msra.mxu0 0.0
  %2289 = vmatprep.subr.mxu0 0.0
  %2290 = vmatpush2.msra.mxu0 0.0
  %2291 = vmatprep.mubr.f32.mxu0 0.0
  %v2292 = vand.u32 %v1650, 4294901760
  %2293 = vmatmul.mubr.f32.gmra.mxu0 %v2292
  %v2294 = vpop.f32.mrf.mxu0
  %v2295 = vadd.f32 %v2207, %v2294
  %v2296 = vpop.f32.mrf.mxu0
  %v2297 = vadd.f32 %v2209, %v2296
  %2298 = vdwg.mxu0
  %v2299 = vmul.f32 %v2295, 0.5
  %v2300 = vtanh.pop %v2299
  %v2301 = vmul.f32 %v2300, 0.5
  %v2302 = vadd.f32 %v2301, 0.5
  %v2303 = vtanh.pop %v2297
  %v2304 = vmul.f32 %v2297, 0.5
  %v2305 = vtanh.pop %v2304
  %v2306 = vmul.f32 %v2305, 0.5
  %v2307 = vadd.f32 %v2306, 0.5
  %v2308 = vmul.f32 %v2302, %v1174
  %v2309 = vmul.f32 %v2302, %v2303
  %2311 = vrot.lane.b32.xlu0 %v2309, 64
  %v2312 = vpop.permute.xlu0 %2311
  %v2314 = vadd.f32 %v2308, %v2312
  %v2315 = vtanh.pop %v2314
  %v2316 = vmul.f32 %v2307, %v2315
  %s2317 = scalar_lea.vmem %s0, 16
  %v2318 = vld [vmem:[%s2317] sm:$0xff]
  %v2320 = vsel %vm39, %v2318, 0
  %2322 = vmatprep.subr.mxu0 0.0
  %2323 = vmatpush1.msra.mxu0 0.0
  %2324 = vmatprep.subr.mxu0 0.0
  %2325 = vmatpush1.msra.mxu0 0.0
  %2326 = vmatprep.subr.mxu0 0.0
  %2327 = vmatpush1.msra.mxu0 0.0
  %2328 = vmatprep.subr.mxu0 0.0
  %2329 = vmatpush1.msra.mxu0 0.0
  %2330 = vmatprep.subr.mxu0 0.0
  %2331 = vmatpush1.msra.mxu0 0.0
  %2332 = vmatprep.subr.mxu0 0.0
  %2333 = vmatpush1.msra.mxu0 0.0
  %2334 = vmatprep.subr.mxu0 0.0
  %2335 = vmatpush1.msra.mxu0 0.0
  %2336 = vmatprep.subr.mxu0 0.0
  %2337 = vmatpush1.msra.mxu0 0.0
  %2338 = vmatprep.subr.mxu0 0.0
  %2339 = vmatpush1.msra.mxu0 0.0
  %2340 = vmatprep.subr.mxu0 0.0
  %2341 = vmatpush1.msra.mxu0 0.0
  %2342 = vmatprep.subr.mxu0 0.0
  %2343 = vmatpush1.msra.mxu0 0.0
  %2344 = vmatprep.subr.mxu0 0.0
  %2345 = vmatpush1.msra.mxu0 0.0
  %2346 = vmatprep.subr.mxu0 0.0
  %2347 = vmatpush1.msra.mxu0 0.0
  %2348 = vmatprep.subr.mxu0 0.0
  %2349 = vmatpush1.msra.mxu0 0.0
  %2350 = vmatprep.subr.mxu0 0.0
  %2351 = vmatpush1.msra.mxu0 0.0
  %v2352 = vand.u32 %v38, 4294901760
  %2353 = vmatprep.subr.mxu0 %v2352
  %v2354 = vand.u32 %v37, 4294901760
  %2355 = vmatpush1.msra.mxu0 %v2354
  %2356 = vmatprep.subr.mxu0 0.0
  %2357 = vmatpush2.msra.mxu0 0.0
  %2358 = vmatprep.subr.mxu0 0.0
  %2359 = vmatpush2.msra.mxu0 0.0
  %2360 = vmatprep.subr.mxu0 0.0
  %2361 = vmatpush2.msra.mxu0 0.0
  %2362 = vmatprep.subr.mxu0 0.0
  %2363 = vmatpush2.msra.mxu0 0.0
  %2364 = vmatprep.subr.mxu0 0.0
  %2365 = vmatpush2.msra.mxu0 0.0
  %2366 = vmatprep.subr.mxu0 0.0
  %2367 = vmatpush2.msra.mxu0 0.0
  %2368 = vmatprep.subr.mxu0 0.0
  %2369 = vmatpush2.msra.mxu0 0.0
  %2370 = vmatprep.subr.mxu0 0.0
  %2371 = vmatpush2.msra.mxu0 0.0
  %2372 = vmatprep.subr.mxu0 0.0
  %2373 = vmatpush2.msra.mxu0 0.0
  %2374 = vmatprep.subr.mxu0 0.0
  %2375 = vmatpush2.msra.mxu0 0.0
  %2376 = vmatprep.subr.mxu0 0.0
  %2377 = vmatpush2.msra.mxu0 0.0
  %2378 = vmatprep.subr.mxu0 0.0
  %2379 = vmatpush2.msra.mxu0 0.0
  %2380 = vmatprep.subr.mxu0 0.0
  %2381 = vmatpush2.msra.mxu0 0.0
  %2382 = vmatprep.subr.mxu0 0.0
  %2383 = vmatpush2.msra.mxu0 0.0
  %2384 = vmatprep.subr.mxu0 0.0
  %2385 = vmatpush2.msra.mxu0 0.0
  %2386 = vmatprep.subr.mxu0 0.0
  %2387 = vmatpush2.msra.mxu0 0.0
  %2388 = vmatprep.mubr.f32.mxu0 0.0
  %v2389 = vand.u32 %v2320, 4294901760
  %v2390 = vsub.f32 %v2320, %v2389
  %v2391 = vand.u32 %v2390, 4294901760
  %v2392 = vsub.f32 %v2390, %v2391
  %v2393 = vand.u32 %v2392, 4294901760
  %2394 = vmatmul.mubr.f32.gmra.mxu0 %v2393
  %v2395 = vpop.f32.mrf.mxu0
  %v2396 = vadd.f32 0.0, %v2395
  %v2397 = vpop.f32.mrf.mxu0
  %v2398 = vadd.f32 0.0, %v2397
  %2399 = vdwg.mxu0
  %2400 = vmatprep.subr.mxu0 0.0
  %2401 = vmatpush1.msra.mxu0 0.0
  %2402 = vmatprep.subr.mxu0 0.0
  %2403 = vmatpush1.msra.mxu0 0.0
  %2404 = vmatprep.subr.mxu0 0.0
  %2405 = vmatpush1.msra.mxu0 0.0
  %2406 = vmatprep.subr.mxu0 0.0
  %2407 = vmatpush1.msra.mxu0 0.0
  %2408 = vmatprep.subr.mxu0 0.0
  %2409 = vmatpush1.msra.mxu0 0.0
  %2410 = vmatprep.subr.mxu0 0.0
  %2411 = vmatpush1.msra.mxu0 0.0
  %2412 = vmatprep.subr.mxu0 0.0
  %2413 = vmatpush1.msra.mxu0 0.0
  %2414 = vmatprep.subr.mxu0 0.0
  %2415 = vmatpush1.msra.mxu0 0.0
  %2416 = vmatprep.subr.mxu0 0.0
  %2417 = vmatpush1.msra.mxu0 0.0
  %2418 = vmatprep.subr.mxu0 0.0
  %2419 = vmatpush1.msra.mxu0 0.0
  %2420 = vmatprep.subr.mxu0 0.0
  %2421 = vmatpush1.msra.mxu0 0.0
  %2422 = vmatprep.subr.mxu0 0.0
  %2423 = vmatpush1.msra.mxu0 0.0
  %2424 = vmatprep.subr.mxu0 0.0
  %2425 = vmatpush1.msra.mxu0 0.0
  %2426 = vmatprep.subr.mxu0 0.0
  %2427 = vmatpush1.msra.mxu0 0.0
  %2428 = vmatprep.subr.mxu0 0.0
  %2429 = vmatpush1.msra.mxu0 0.0
  %v2430 = vand.u32 %v38, 4294901760
  %v2431 = vsub.f32 %v38, %v2430
  %v2432 = vand.u32 %v2431, 4294901760
  %v2433 = vsub.f32 %v2431, %v2432
  %v2434 = vand.u32 %v2433, 4294901760
  %2435 = vmatprep.subr.mxu0 %v2434
  %v2436 = vand.u32 %v37, 4294901760
  %v2437 = vsub.f32 %v37, %v2436
  %v2438 = vand.u32 %v2437, 4294901760
  %v2439 = vsub.f32 %v2437, %v2438
  %v2440 = vand.u32 %v2439, 4294901760
  %2441 = vmatpush1.msra.mxu0 %v2440
  %2442 = vmatprep.subr.mxu0 0.0
  %2443 = vmatpush2.msra.mxu0 0.0
  %2444 = vmatprep.subr.mxu0 0.0
  %2445 = vmatpush2.msra.mxu0 0.0
  %2446 = vmatprep.subr.mxu0 0.0
  %2447 = vmatpush2.msra.mxu0 0.0
  %2448 = vmatprep.subr.mxu0 0.0
  %2449 = vmatpush2.msra.mxu0 0.0
  %2450 = vmatprep.subr.mxu0 0.0
  %2451 = vmatpush2.msra.mxu0 0.0
  %2452 = vmatprep.subr.mxu0 0.0
  %2453 = vmatpush2.msra.mxu0 0.0
  %2454 = vmatprep.subr.mxu0 0.0
  %2455 = vmatpush2.msra.mxu0 0.0
  %2456 = vmatprep.subr.mxu0 0.0
  %2457 = vmatpush2.msra.mxu0 0.0
  %2458 = vmatprep.subr.mxu0 0.0
  %2459 = vmatpush2.msra.mxu0 0.0
  %2460 = vmatprep.subr.mxu0 0.0
  %2461 = vmatpush2.msra.mxu0 0.0
  %2462 = vmatprep.subr.mxu0 0.0
  %2463 = vmatpush2.msra.mxu0 0.0
  %2464 = vmatprep.subr.mxu0 0.0
  %2465 = vmatpush2.msra.mxu0 0.0
  %2466 = vmatprep.subr.mxu0 0.0
  %2467 = vmatpush2.msra.mxu0 0.0
  %2468 = vmatprep.subr.mxu0 0.0
  %2469 = vmatpush2.msra.mxu0 0.0
  %2470 = vmatprep.subr.mxu0 0.0
  %2471 = vmatpush2.msra.mxu0 0.0
  %2472 = vmatprep.subr.mxu0 0.0
  %2473 = vmatpush2.msra.mxu0 0.0
  %2474 = vmatprep.mubr.f32.mxu0 0.0
  %v2475 = vand.u32 %v2320, 4294901760
  %2476 = vmatmul.mubr.f32.gmra.mxu0 %v2475
  %v2477 = vpop.f32.mrf.mxu0
  %v2478 = vadd.f32 %v2396, %v2477
  %v2479 = vpop.f32.mrf.mxu0
  %v2480 = vadd.f32 %v2398, %v2479
  %2481 = vdwg.mxu0
  %2482 = vmatprep.subr.mxu0 0.0
  %2483 = vmatpush1.msra.mxu0 0.0
  %2484 = vmatprep.subr.mxu0 0.0
  %2485 = vmatpush1.msra.mxu0 0.0
  %2486 = vmatprep.subr.mxu0 0.0
  %2487 = vmatpush1.msra.mxu0 0.0
  %2488 = vmatprep.subr.mxu0 0.0
  %2489 = vmatpush1.msra.mxu0 0.0
  %2490 = vmatprep.subr.mxu0 0.0
  %2491 = vmatpush1.msra.mxu0 0.0
  %2492 = vmatprep.subr.mxu0 0.0
  %2493 = vmatpush1.msra.mxu0 0.0
  %2494 = vmatprep.subr.mxu0 0.0
  %2495 = vmatpush1.msra.mxu0 0.0
  %2496 = vmatprep.subr.mxu0 0.0
  %2497 = vmatpush1.msra.mxu0 0.0
  %2498 = vmatprep.subr.mxu0 0.0
  %2499 = vmatpush1.msra.mxu0 0.0
  %2500 = vmatprep.subr.mxu0 0.0
  %2501 = vmatpush1.msra.mxu0 0.0
  %2502 = vmatprep.subr.mxu0 0.0
  %2503 = vmatpush1.msra.mxu0 0.0
  %2504 = vmatprep.subr.mxu0 0.0
  %2505 = vmatpush1.msra.mxu0 0.0
  %2506 = vmatprep.subr.mxu0 0.0
  %2507 = vmatpush1.msra.mxu0 0.0
  %2508 = vmatprep.subr.mxu0 0.0
  %2509 = vmatpush1.msra.mxu0 0.0
  %2510 = vmatprep.subr.mxu0 0.0
  %2511 = vmatpush1.msra.mxu0 0.0
  %v2512 = vand.u32 %v38, 4294901760
  %v2513 = vsub.f32 %v38, %v2512
  %2514 = vmatprep.subr.mxu0 %v2513
  %v2515 = vand.u32 %v37, 4294901760
  %v2516 = vsub.f32 %v37, %v2515
  %2517 = vmatpush1.msra.mxu0 %v2516
  %2518 = vmatprep.subr.mxu0 0.0
  %2519 = vmatpush2.msra.mxu0 0.0
  %2520 = vmatprep.subr.mxu0 0.0
  %2521 = vmatpush2.msra.mxu0 0.0
  %2522 = vmatprep.subr.mxu0 0.0
  %2523 = vmatpush2.msra.mxu0 0.0
  %2524 = vmatprep.subr.mxu0 0.0
  %2525 = vmatpush2.msra.mxu0 0.0
  %2526 = vmatprep.subr.mxu0 0.0
  %2527 = vmatpush2.msra.mxu0 0.0
  %2528 = vmatprep.subr.mxu0 0.0
  %2529 = vmatpush2.msra.mxu0 0.0
  %2530 = vmatprep.subr.mxu0 0.0
  %2531 = vmatpush2.msra.mxu0 0.0
  %2532 = vmatprep.subr.mxu0 0.0
  %2533 = vmatpush2.msra.mxu0 0.0
  %2534 = vmatprep.subr.mxu0 0.0
  %2535 = vmatpush2.msra.mxu0 0.0
  %2536 = vmatprep.subr.mxu0 0.0
  %2537 = vmatpush2.msra.mxu0 0.0
  %2538 = vmatprep.subr.mxu0 0.0
  %2539 = vmatpush2.msra.mxu0 0.0
  %2540 = vmatprep.subr.mxu0 0.0
  %2541 = vmatpush2.msra.mxu0 0.0
  %2542 = vmatprep.subr.mxu0 0.0
  %2543 = vmatpush2.msra.mxu0 0.0
  %2544 = vmatprep.subr.mxu0 0.0
  %2545 = vmatpush2.msra.mxu0 0.0
  %2546 = vmatprep.subr.mxu0 0.0
  %2547 = vmatpush2.msra.mxu0 0.0
  %2548 = vmatprep.subr.mxu0 0.0
  %2549 = vmatpush2.msra.mxu0 0.0
  %2550 = vmatprep.mubr.f32.mxu0 0.0
  %v2551 = vand.u32 %v2320, 4294901760
  %v2552 = vsub.f32 %v2320, %v2551
  %2553 = vmatmul.mubr.f32.gmra.mxu0 %v2552
  %v2554 = vpop.f32.mrf.mxu0
  %v2555 = vadd.f32 %v2478, %v2554
  %v2556 = vpop.f32.mrf.mxu0
  %v2557 = vadd.f32 %v2480, %v2556
  %2558 = vdwg.mxu0
  %2559 = vmatprep.subr.mxu0 0.0
  %2560 = vmatpush1.msra.mxu0 0.0
  %2561 = vmatprep.subr.mxu0 0.0
  %2562 = vmatpush1.msra.mxu0 0.0
  %2563 = vmatprep.subr.mxu0 0.0
  %2564 = vmatpush1.msra.mxu0 0.0
  %2565 = vmatprep.subr.mxu0 0.0
  %2566 = vmatpush1.msra.mxu0 0.0
  %2567 = vmatprep.subr.mxu0 0.0
  %2568 = vmatpush1.msra.mxu0 0.0
  %2569 = vmatprep.subr.mxu0 0.0
  %2570 = vmatpush1.msra.mxu0 0.0
  %2571 = vmatprep.subr.mxu0 0.0
  %2572 = vmatpush1.msra.mxu0 0.0
  %2573 = vmatprep.subr.mxu0 0.0
  %2574 = vmatpush1.msra.mxu0 0.0
  %2575 = vmatprep.subr.mxu0 0.0
  %2576 = vmatpush1.msra.mxu0 0.0
  %2577 = vmatprep.subr.mxu0 0.0
  %2578 = vmatpush1.msra.mxu0 0.0
  %2579 = vmatprep.subr.mxu0 0.0
  %2580 = vmatpush1.msra.mxu0 0.0
  %2581 = vmatprep.subr.mxu0 0.0
  %2582 = vmatpush1.msra.mxu0 0.0
  %2583 = vmatprep.subr.mxu0 0.0
  %2584 = vmatpush1.msra.mxu0 0.0
  %2585 = vmatprep.subr.mxu0 0.0
  %2586 = vmatpush1.msra.mxu0 0.0
  %2587 = vmatprep.subr.mxu0 0.0
  %2588 = vmatpush1.msra.mxu0 0.0
  %v2589 = vand.u32 %v38, 4294901760
  %2590 = vmatprep.subr.mxu0 %v2589
  %v2591 = vand.u32 %v37, 4294901760
  %2592 = vmatpush1.msra.mxu0 %v2591
  %2593 = vmatprep.subr.mxu0 0.0
  %2594 = vmatpush2.msra.mxu0 0.0
  %2595 = vmatprep.subr.mxu0 0.0
  %2596 = vmatpush2.msra.mxu0 0.0
  %2597 = vmatprep.subr.mxu0 0.0
  %2598 = vmatpush2.msra.mxu0 0.0
  %2599 = vmatprep.subr.mxu0 0.0
  %2600 = vmatpush2.msra.mxu0 0.0
  %2601 = vmatprep.subr.mxu0 0.0
  %2602 = vmatpush2.msra.mxu0 0.0
  %2603 = vmatprep.subr.mxu0 0.0
  %2604 = vmatpush2.msra.mxu0 0.0
  %2605 = vmatprep.subr.mxu0 0.0
  %2606 = vmatpush2.msra.mxu0 0.0
  %2607 = vmatprep.subr.mxu0 0.0
  %2608 = vmatpush2.msra.mxu0 0.0
  %2609 = vmatprep.subr.mxu0 0.0
  %2610 = vmatpush2.msra.mxu0 0.0
  %2611 = vmatprep.subr.mxu0 0.0
  %2612 = vmatpush2.msra.mxu0 0.0
  %2613 = vmatprep.subr.mxu0 0.0
  %2614 = vmatpush2.msra.mxu0 0.0
  %2615 = vmatprep.subr.mxu0 0.0
  %2616 = vmatpush2.msra.mxu0 0.0
  %2617 = vmatprep.subr.mxu0 0.0
  %2618 = vmatpush2.msra.mxu0 0.0
  %2619 = vmatprep.subr.mxu0 0.0
  %2620 = vmatpush2.msra.mxu0 0.0
  %2621 = vmatprep.subr.mxu0 0.0
  %2622 = vmatpush2.msra.mxu0 0.0
  %2623 = vmatprep.subr.mxu0 0.0
  %2624 = vmatpush2.msra.mxu0 0.0
  %2625 = vmatprep.mubr.f32.mxu0 0.0
  %v2626 = vand.u32 %v2320, 4294901760
  %v2627 = vsub.f32 %v2320, %v2626
  %v2628 = vand.u32 %v2627, 4294901760
  %2629 = vmatmul.mubr.f32.gmra.mxu0 %v2628
  %v2630 = vpop.f32.mrf.mxu0
  %v2631 = vadd.f32 %v2555, %v2630
  %v2632 = vpop.f32.mrf.mxu0
  %v2633 = vadd.f32 %v2557, %v2632
  %2634 = vdwg.mxu0
  %2635 = vmatprep.subr.mxu0 0.0
  %2636 = vmatpush1.msra.mxu0 0.0
  %2637 = vmatprep.subr.mxu0 0.0
  %2638 = vmatpush1.msra.mxu0 0.0
  %2639 = vmatprep.subr.mxu0 0.0
  %2640 = vmatpush1.msra.mxu0 0.0
  %2641 = vmatprep.subr.mxu0 0.0
  %2642 = vmatpush1.msra.mxu0 0.0
  %2643 = vmatprep.subr.mxu0 0.0
  %2644 = vmatpush1.msra.mxu0 0.0
  %2645 = vmatprep.subr.mxu0 0.0
  %2646 = vmatpush1.msra.mxu0 0.0
  %2647 = vmatprep.subr.mxu0 0.0
  %2648 = vmatpush1.msra.mxu0 0.0
  %2649 = vmatprep.subr.mxu0 0.0
  %2650 = vmatpush1.msra.mxu0 0.0
  %2651 = vmatprep.subr.mxu0 0.0
  %2652 = vmatpush1.msra.mxu0 0.0
  %2653 = vmatprep.subr.mxu0 0.0
  %2654 = vmatpush1.msra.mxu0 0.0
  %2655 = vmatprep.subr.mxu0 0.0
  %2656 = vmatpush1.msra.mxu0 0.0
  %2657 = vmatprep.subr.mxu0 0.0
  %2658 = vmatpush1.msra.mxu0 0.0
  %2659 = vmatprep.subr.mxu0 0.0
  %2660 = vmatpush1.msra.mxu0 0.0
  %2661 = vmatprep.subr.mxu0 0.0
  %2662 = vmatpush1.msra.mxu0 0.0
  %2663 = vmatprep.subr.mxu0 0.0
  %2664 = vmatpush1.msra.mxu0 0.0
  %v2665 = vand.u32 %v38, 4294901760
  %v2666 = vsub.f32 %v38, %v2665
  %v2667 = vand.u32 %v2666, 4294901760
  %2668 = vmatprep.subr.mxu0 %v2667
  %v2669 = vand.u32 %v37, 4294901760
  %v2670 = vsub.f32 %v37, %v2669
  %v2671 = vand.u32 %v2670, 4294901760
  %2672 = vmatpush1.msra.mxu0 %v2671
  %2673 = vmatprep.subr.mxu0 0.0
  %2674 = vmatpush2.msra.mxu0 0.0
  %2675 = vmatprep.subr.mxu0 0.0
  %2676 = vmatpush2.msra.mxu0 0.0
  %2677 = vmatprep.subr.mxu0 0.0
  %2678 = vmatpush2.msra.mxu0 0.0
  %2679 = vmatprep.subr.mxu0 0.0
  %2680 = vmatpush2.msra.mxu0 0.0
  %2681 = vmatprep.subr.mxu0 0.0
  %2682 = vmatpush2.msra.mxu0 0.0
  %2683 = vmatprep.subr.mxu0 0.0
  %2684 = vmatpush2.msra.mxu0 0.0
  %2685 = vmatprep.subr.mxu0 0.0
  %2686 = vmatpush2.msra.mxu0 0.0
  %2687 = vmatprep.subr.mxu0 0.0
  %2688 = vmatpush2.msra.mxu0 0.0
  %2689 = vmatprep.subr.mxu0 0.0
  %2690 = vmatpush2.msra.mxu0 0.0
  %2691 = vmatprep.subr.mxu0 0.0
  %2692 = vmatpush2.msra.mxu0 0.0
  %2693 = vmatprep.subr.mxu0 0.0
  %2694 = vmatpush2.msra.mxu0 0.0
  %2695 = vmatprep.subr.mxu0 0.0
  %2696 = vmatpush2.msra.mxu0 0.0
  %2697 = vmatprep.subr.mxu0 0.0
  %2698 = vmatpush2.msra.mxu0 0.0
  %2699 = vmatprep.subr.mxu0 0.0
  %2700 = vmatpush2.msra.mxu0 0.0
  %2701 = vmatprep.subr.mxu0 0.0
  %2702 = vmatpush2.msra.mxu0 0.0
  %2703 = vmatprep.subr.mxu0 0.0
  %2704 = vmatpush2.msra.mxu0 0.0
  %2705 = vmatprep.mubr.f32.mxu0 0.0
  %v2706 = vand.u32 %v2320, 4294901760
  %2707 = vmatmul.mubr.f32.gmra.mxu0 %v2706
  %v2708 = vpop.f32.mrf.mxu0
  %v2709 = vadd.f32 %v2631, %v2708
  %v2710 = vpop.f32.mrf.mxu0
  %v2711 = vadd.f32 %v2633, %v2710
  %2712 = vdwg.mxu0
  %2713 = vmatprep.subr.mxu0 0.0
  %2714 = vmatpush1.msra.mxu0 0.0
  %2715 = vmatprep.subr.mxu0 0.0
  %2716 = vmatpush1.msra.mxu0 0.0
  %2717 = vmatprep.subr.mxu0 0.0
  %2718 = vmatpush1.msra.mxu0 0.0
  %2719 = vmatprep.subr.mxu0 0.0
  %2720 = vmatpush1.msra.mxu0 0.0
  %2721 = vmatprep.subr.mxu0 0.0
  %2722 = vmatpush1.msra.mxu0 0.0
  %2723 = vmatprep.subr.mxu0 0.0
  %2724 = vmatpush1.msra.mxu0 0.0
  %2725 = vmatprep.subr.mxu0 0.0
  %2726 = vmatpush1.msra.mxu0 0.0
  %2727 = vmatprep.subr.mxu0 0.0
  %2728 = vmatpush1.msra.mxu0 0.0
  %2729 = vmatprep.subr.mxu0 0.0
  %2730 = vmatpush1.msra.mxu0 0.0
  %2731 = vmatprep.subr.mxu0 0.0
  %2732 = vmatpush1.msra.mxu0 0.0
  %2733 = vmatprep.subr.mxu0 0.0
  %2734 = vmatpush1.msra.mxu0 0.0
  %2735 = vmatprep.subr.mxu0 0.0
  %2736 = vmatpush1.msra.mxu0 0.0
  %2737 = vmatprep.subr.mxu0 0.0
  %2738 = vmatpush1.msra.mxu0 0.0
  %2739 = vmatprep.subr.mxu0 0.0
  %2740 = vmatpush1.msra.mxu0 0.0
  %2741 = vmatprep.subr.mxu0 0.0
  %2742 = vmatpush1.msra.mxu0 0.0
  %v2743 = vand.u32 %v38, 4294901760
  %2744 = vmatprep.subr.mxu0 %v2743
  %v2745 = vand.u32 %v37, 4294901760
  %2746 = vmatpush1.msra.mxu0 %v2745
  %2747 = vmatprep.subr.mxu0 0.0
  %2748 = vmatpush2.msra.mxu0 0.0
  %2749 = vmatprep.subr.mxu0 0.0
  %2750 = vmatpush2.msra.mxu0 0.0
  %2751 = vmatprep.subr.mxu0 0.0
  %2752 = vmatpush2.msra.mxu0 0.0
  %2753 = vmatprep.subr.mxu0 0.0
  %2754 = vmatpush2.msra.mxu0 0.0
  %2755 = vmatprep.subr.mxu0 0.0
  %2756 = vmatpush2.msra.mxu0 0.0
  %2757 = vmatprep.subr.mxu0 0.0
  %2758 = vmatpush2.msra.mxu0 0.0
  %2759 = vmatprep.subr.mxu0 0.0
  %2760 = vmatpush2.msra.mxu0 0.0
  %2761 = vmatprep.subr.mxu0 0.0
  %2762 = vmatpush2.msra.mxu0 0.0
  %2763 = vmatprep.subr.mxu0 0.0
  %2764 = vmatpush2.msra.mxu0 0.0
  %2765 = vmatprep.subr.mxu0 0.0
  %2766 = vmatpush2.msra.mxu0 0.0
  %2767 = vmatprep.subr.mxu0 0.0
  %2768 = vmatpush2.msra.mxu0 0.0
  %2769 = vmatprep.subr.mxu0 0.0
  %2770 = vmatpush2.msra.mxu0 0.0
  %2771 = vmatprep.subr.mxu0 0.0
  %2772 = vmatpush2.msra.mxu0 0.0
  %2773 = vmatprep.subr.mxu0 0.0
  %2774 = vmatpush2.msra.mxu0 0.0
  %2775 = vmatprep.subr.mxu0 0.0
  %2776 = vmatpush2.msra.mxu0 0.0
  %2777 = vmatprep.subr.mxu0 0.0
  %2778 = vmatpush2.msra.mxu0 0.0
  %2779 = vmatprep.mubr.f32.mxu0 0.0
  %v2780 = vand.u32 %v2320, 4294901760
  %2781 = vmatmul.mubr.f32.gmra.mxu0 %v2780
  %v2782 = vpop.f32.mrf.mxu0
  %v2783 = vadd.f32 %v2709, %v2782
  %v2784 = vpop.f32.mrf.mxu0
  %v2785 = vadd.f32 %v2711, %v2784
  %2786 = vdwg.mxu0
  %2788 = vrot.lane.b32.xlu0 %v2316, 64
  %v2789 = vpop.permute.xlu0 %2788
  %v2790 = vsel %vm508, %v2789, 0
  %2792 = vmatprep.subr.mxu0 0.0
  %2793 = vmatpush1.msra.mxu0 0.0
  %2794 = vmatprep.subr.mxu0 0.0
  %2795 = vmatpush1.msra.mxu0 0.0
  %2796 = vmatprep.subr.mxu0 0.0
  %2797 = vmatpush1.msra.mxu0 0.0
  %2798 = vmatprep.subr.mxu0 0.0
  %2799 = vmatpush1.msra.mxu0 0.0
  %2800 = vmatprep.subr.mxu0 0.0
  %2801 = vmatpush1.msra.mxu0 0.0
  %2802 = vmatprep.subr.mxu0 0.0
  %2803 = vmatpush1.msra.mxu0 0.0
  %2804 = vmatprep.subr.mxu0 0.0
  %2805 = vmatpush1.msra.mxu0 0.0
  %2806 = vmatprep.subr.mxu0 0.0
  %2807 = vmatpush1.msra.mxu0 0.0
  %v2808 = vand.u32 %v35, 4294901760
  %2809 = vmatprep.subr.mxu0 %v2808
  %v2810 = vand.u32 %v34, 4294901760
  %2811 = vmatpush1.msra.mxu0 %v2810
  %v2812 = vand.u32 %v33, 4294901760
  %2813 = vmatprep.subr.mxu0 %v2812
  %v2814 = vand.u32 %v32, 4294901760
  %2815 = vmatpush1.msra.mxu0 %v2814
  %v2816 = vand.u32 %v31, 4294901760
  %2817 = vmatprep.subr.mxu0 %v2816
  %v2818 = vand.u32 %v30, 4294901760
  %2819 = vmatpush1.msra.mxu0 %v2818
  %v2820 = vand.u32 %v29, 4294901760
  %2821 = vmatprep.subr.mxu0 %v2820
  %v2822 = vand.u32 %v28, 4294901760
  %2823 = vmatpush1.msra.mxu0 %v2822
  %v2824 = vand.u32 %v27, 4294901760
  %2825 = vmatprep.subr.mxu0 %v2824
  %v2826 = vand.u32 %v26, 4294901760
  %2827 = vmatpush1.msra.mxu0 %v2826
  %v2828 = vand.u32 %v25, 4294901760
  %2829 = vmatprep.subr.mxu0 %v2828
  %v2830 = vand.u32 %v24, 4294901760
  %2831 = vmatpush1.msra.mxu0 %v2830
  %v2832 = vand.u32 %v23, 4294901760
  %2833 = vmatprep.subr.mxu0 %v2832
  %v2834 = vand.u32 %v22, 4294901760
  %2835 = vmatpush1.msra.mxu0 %v2834
  %v2836 = vand.u32 %v21, 4294901760
  %2837 = vmatprep.subr.mxu0 %v2836
  %v2838 = vand.u32 %v20, 4294901760
  %2839 = vmatpush1.msra.mxu0 %v2838
  %2840 = vmatprep.subr.mxu0 0.0
  %2841 = vmatpush2.msra.mxu0 0.0
  %2842 = vmatprep.subr.mxu0 0.0
  %2843 = vmatpush2.msra.mxu0 0.0
  %2844 = vmatprep.subr.mxu0 0.0
  %2845 = vmatpush2.msra.mxu0 0.0
  %2846 = vmatprep.subr.mxu0 0.0
  %2847 = vmatpush2.msra.mxu0 0.0
  %2848 = vmatprep.subr.mxu0 0.0
  %2849 = vmatpush2.msra.mxu0 0.0
  %2850 = vmatprep.subr.mxu0 0.0
  %2851 = vmatpush2.msra.mxu0 0.0
  %2852 = vmatprep.subr.mxu0 0.0
  %2853 = vmatpush2.msra.mxu0 0.0
  %2854 = vmatprep.subr.mxu0 0.0
  %2855 = vmatpush2.msra.mxu0 0.0
  %2856 = vmatprep.subr.mxu0 0.0
  %2857 = vmatpush2.msra.mxu0 0.0
  %2858 = vmatprep.subr.mxu0 0.0
  %2859 = vmatpush2.msra.mxu0 0.0
  %2860 = vmatprep.subr.mxu0 0.0
  %2861 = vmatpush2.msra.mxu0 0.0
  %2862 = vmatprep.subr.mxu0 0.0
  %2863 = vmatpush2.msra.mxu0 0.0
  %2864 = vmatprep.subr.mxu0 0.0
  %2865 = vmatpush2.msra.mxu0 0.0
  %2866 = vmatprep.subr.mxu0 0.0
  %2867 = vmatpush2.msra.mxu0 0.0
  %2868 = vmatprep.subr.mxu0 0.0
  %2869 = vmatpush2.msra.mxu0 0.0
  %2870 = vmatprep.subr.mxu0 0.0
  %2871 = vmatpush2.msra.mxu0 0.0
  %2872 = vmatprep.mubr.f32.mxu0 0.0
  %v2873 = vand.u32 %v2790, 4294901760
  %v2874 = vsub.f32 %v2790, %v2873
  %v2875 = vand.u32 %v2874, 4294901760
  %v2876 = vsub.f32 %v2874, %v2875
  %v2877 = vand.u32 %v2876, 4294901760
  %2878 = vmatmul.mubr.f32.gmra.mxu0 %v2877
  %v2879 = vpop.f32.mrf.mxu0
  %v2880 = vadd.f32 %v2783, %v2879
  %v2881 = vpop.f32.mrf.mxu0
  %v2882 = vadd.f32 %v2785, %v2881
  %2883 = vdwg.mxu0
  %2884 = vmatprep.subr.mxu0 0.0
  %2885 = vmatpush1.msra.mxu0 0.0
  %2886 = vmatprep.subr.mxu0 0.0
  %2887 = vmatpush1.msra.mxu0 0.0
  %2888 = vmatprep.subr.mxu0 0.0
  %2889 = vmatpush1.msra.mxu0 0.0
  %2890 = vmatprep.subr.mxu0 0.0
  %2891 = vmatpush1.msra.mxu0 0.0
  %2892 = vmatprep.subr.mxu0 0.0
  %2893 = vmatpush1.msra.mxu0 0.0
  %2894 = vmatprep.subr.mxu0 0.0
  %2895 = vmatpush1.msra.mxu0 0.0
  %2896 = vmatprep.subr.mxu0 0.0
  %2897 = vmatpush1.msra.mxu0 0.0
  %2898 = vmatprep.subr.mxu0 0.0
  %2899 = vmatpush1.msra.mxu0 0.0
  %v2900 = vand.u32 %v35, 4294901760
  %v2901 = vsub.f32 %v35, %v2900
  %v2902 = vand.u32 %v2901, 4294901760
  %v2903 = vsub.f32 %v2901, %v2902
  %v2904 = vand.u32 %v2903, 4294901760
  %2905 = vmatprep.subr.mxu0 %v2904
  %v2906 = vand.u32 %v34, 4294901760
  %v2907 = vsub.f32 %v34, %v2906
  %v2908 = vand.u32 %v2907, 4294901760
  %v2909 = vsub.f32 %v2907, %v2908
  %v2910 = vand.u32 %v2909, 4294901760
  %2911 = vmatpush1.msra.mxu0 %v2910
  %v2912 = vand.u32 %v33, 4294901760
  %v2913 = vsub.f32 %v33, %v2912
  %v2914 = vand.u32 %v2913, 4294901760
  %v2915 = vsub.f32 %v2913, %v2914
  %v2916 = vand.u32 %v2915, 4294901760
  %2917 = vmatprep.subr.mxu0 %v2916
  %v2918 = vand.u32 %v32, 4294901760
  %v2919 = vsub.f32 %v32, %v2918
  %v2920 = vand.u32 %v2919, 4294901760
  %v2921 = vsub.f32 %v2919, %v2920
  %v2922 = vand.u32 %v2921, 4294901760
  %2923 = vmatpush1.msra.mxu0 %v2922
  %v2924 = vand.u32 %v31, 4294901760
  %v2925 = vsub.f32 %v31, %v2924
  %v2926 = vand.u32 %v2925, 4294901760
  %v2927 = vsub.f32 %v2925, %v2926
  %v2928 = vand.u32 %v2927, 4294901760
  %2929 = vmatprep.subr.mxu0 %v2928
  %v2930 = vand.u32 %v30, 4294901760
  %v2931 = vsub.f32 %v30, %v2930
  %v2932 = vand.u32 %v2931, 4294901760
  %v2933 = vsub.f32 %v2931, %v2932
  %v2934 = vand.u32 %v2933, 4294901760
  %2935 = vmatpush1.msra.mxu0 %v2934
  %v2936 = vand.u32 %v29, 4294901760
  %v2937 = vsub.f32 %v29, %v2936
  %v2938 = vand.u32 %v2937, 4294901760
  %v2939 = vsub.f32 %v2937, %v2938
  %v2940 = vand.u32 %v2939, 4294901760
  %2941 = vmatprep.subr.mxu0 %v2940
  %v2942 = vand.u32 %v28, 4294901760
  %v2943 = vsub.f32 %v28, %v2942
  %v2944 = vand.u32 %v2943, 4294901760
  %v2945 = vsub.f32 %v2943, %v2944
  %v2946 = vand.u32 %v2945, 4294901760
  %2947 = vmatpush1.msra.mxu0 %v2946
  %v2948 = vand.u32 %v27, 4294901760
  %v2949 = vsub.f32 %v27, %v2948
  %v2950 = vand.u32 %v2949, 4294901760
  %v2951 = vsub.f32 %v2949, %v2950
  %v2952 = vand.u32 %v2951, 4294901760
  %2953 = vmatprep.subr.mxu0 %v2952
  %v2954 = vand.u32 %v26, 4294901760
  %v2955 = vsub.f32 %v26, %v2954
  %v2956 = vand.u32 %v2955, 4294901760
  %v2957 = vsub.f32 %v2955, %v2956
  %v2958 = vand.u32 %v2957, 4294901760
  %2959 = vmatpush1.msra.mxu0 %v2958
  %v2960 = vand.u32 %v25, 4294901760
  %v2961 = vsub.f32 %v25, %v2960
  %v2962 = vand.u32 %v2961, 4294901760
  %v2963 = vsub.f32 %v2961, %v2962
  %v2964 = vand.u32 %v2963, 4294901760
  %2965 = vmatprep.subr.mxu0 %v2964
  %v2966 = vand.u32 %v24, 4294901760
  %v2967 = vsub.f32 %v24, %v2966
  %v2968 = vand.u32 %v2967, 4294901760
  %v2969 = vsub.f32 %v2967, %v2968
  %v2970 = vand.u32 %v2969, 4294901760
  %2971 = vmatpush1.msra.mxu0 %v2970
  %v2972 = vand.u32 %v23, 4294901760
  %v2973 = vsub.f32 %v23, %v2972
  %v2974 = vand.u32 %v2973, 4294901760
  %v2975 = vsub.f32 %v2973, %v2974
  %v2976 = vand.u32 %v2975, 4294901760
  %2977 = vmatprep.subr.mxu0 %v2976
  %v2978 = vand.u32 %v22, 4294901760
  %v2979 = vsub.f32 %v22, %v2978
  %v2980 = vand.u32 %v2979, 4294901760
  %v2981 = vsub.f32 %v2979, %v2980
  %v2982 = vand.u32 %v2981, 4294901760
  %2983 = vmatpush1.msra.mxu0 %v2982
  %v2984 = vand.u32 %v21, 4294901760
  %v2985 = vsub.f32 %v21, %v2984
  %v2986 = vand.u32 %v2985, 4294901760
  %v2987 = vsub.f32 %v2985, %v2986
  %v2988 = vand.u32 %v2987, 4294901760
  %2989 = vmatprep.subr.mxu0 %v2988
  %v2990 = vand.u32 %v20, 4294901760
  %v2991 = vsub.f32 %v20, %v2990
  %v2992 = vand.u32 %v2991, 4294901760
  %v2993 = vsub.f32 %v2991, %v2992
  %v2994 = vand.u32 %v2993, 4294901760
  %2995 = vmatpush1.msra.mxu0 %v2994
  %2996 = vmatprep.subr.mxu0 0.0
  %2997 = vmatpush2.msra.mxu0 0.0
  %2998 = vmatprep.subr.mxu0 0.0
  %2999 = vmatpush2.msra.mxu0 0.0
  %3000 = vmatprep.subr.mxu0 0.0
  %3001 = vmatpush2.msra.mxu0 0.0
  %3002 = vmatprep.subr.mxu0 0.0
  %3003 = vmatpush2.msra.mxu0 0.0
  %3004 = vmatprep.subr.mxu0 0.0
  %3005 = vmatpush2.msra.mxu0 0.0
  %3006 = vmatprep.subr.mxu0 0.0
  %3007 = vmatpush2.msra.mxu0 0.0
  %3008 = vmatprep.subr.mxu0 0.0
  %3009 = vmatpush2.msra.mxu0 0.0
  %3010 = vmatprep.subr.mxu0 0.0
  %3011 = vmatpush2.msra.mxu0 0.0
  %3012 = vmatprep.subr.mxu0 0.0
  %3013 = vmatpush2.msra.mxu0 0.0
  %3014 = vmatprep.subr.mxu0 0.0
  %3015 = vmatpush2.msra.mxu0 0.0
  %3016 = vmatprep.subr.mxu0 0.0
  %3017 = vmatpush2.msra.mxu0 0.0
  %3018 = vmatprep.subr.mxu0 0.0
  %3019 = vmatpush2.msra.mxu0 0.0
  %3020 = vmatprep.subr.mxu0 0.0
  %3021 = vmatpush2.msra.mxu0 0.0
  %3022 = vmatprep.subr.mxu0 0.0
  %3023 = vmatpush2.msra.mxu0 0.0
  %3024 = vmatprep.subr.mxu0 0.0
  %3025 = vmatpush2.msra.mxu0 0.0
  %3026 = vmatprep.subr.mxu0 0.0
  %3027 = vmatpush2.msra.mxu0 0.0
  %3028 = vmatprep.mubr.f32.mxu0 0.0
  %v3029 = vand.u32 %v2790, 4294901760
  %3030 = vmatmul.mubr.f32.gmra.mxu0 %v3029
  %v3031 = vpop.f32.mrf.mxu0
  %v3032 = vadd.f32 %v2880, %v3031
  %v3033 = vpop.f32.mrf.mxu0
  %v3034 = vadd.f32 %v2882, %v3033
  %3035 = vdwg.mxu0
  %3036 = vmatprep.subr.mxu0 0.0
  %3037 = vmatpush1.msra.mxu0 0.0
  %3038 = vmatprep.subr.mxu0 0.0
  %3039 = vmatpush1.msra.mxu0 0.0
  %3040 = vmatprep.subr.mxu0 0.0
  %3041 = vmatpush1.msra.mxu0 0.0
  %3042 = vmatprep.subr.mxu0 0.0
  %3043 = vmatpush1.msra.mxu0 0.0
  %3044 = vmatprep.subr.mxu0 0.0
  %3045 = vmatpush1.msra.mxu0 0.0
  %3046 = vmatprep.subr.mxu0 0.0
  %3047 = vmatpush1.msra.mxu0 0.0
  %3048 = vmatprep.subr.mxu0 0.0
  %3049 = vmatpush1.msra.mxu0 0.0
  %3050 = vmatprep.subr.mxu0 0.0
  %3051 = vmatpush1.msra.mxu0 0.0
  %v3052 = vand.u32 %v35, 4294901760
  %v3053 = vsub.f32 %v35, %v3052
  %3054 = vmatprep.subr.mxu0 %v3053
  %v3055 = vand.u32 %v34, 4294901760
  %v3056 = vsub.f32 %v34, %v3055
  %3057 = vmatpush1.msra.mxu0 %v3056
  %v3058 = vand.u32 %v33, 4294901760
  %v3059 = vsub.f32 %v33, %v3058
  %3060 = vmatprep.subr.mxu0 %v3059
  %v3061 = vand.u32 %v32, 4294901760
  %v3062 = vsub.f32 %v32, %v3061
  %3063 = vmatpush1.msra.mxu0 %v3062
  %v3064 = vand.u32 %v31, 4294901760
  %v3065 = vsub.f32 %v31, %v3064
  %3066 = vmatprep.subr.mxu0 %v3065
  %v3067 = vand.u32 %v30, 4294901760
  %v3068 = vsub.f32 %v30, %v3067
  %3069 = vmatpush1.msra.mxu0 %v3068
  %v3070 = vand.u32 %v29, 4294901760
  %v3071 = vsub.f32 %v29, %v3070
  %3072 = vmatprep.subr.mxu0 %v3071
  %v3073 = vand.u32 %v28, 4294901760
  %v3074 = vsub.f32 %v28, %v3073
  %3075 = vmatpush1.msra.mxu0 %v3074
  %v3076 = vand.u32 %v27, 4294901760
  %v3077 = vsub.f32 %v27, %v3076
  %3078 = vmatprep.subr.mxu0 %v3077
  %v3079 = vand.u32 %v26, 4294901760
  %v3080 = vsub.f32 %v26, %v3079
  %3081 = vmatpush1.msra.mxu0 %v3080
  %v3082 = vand.u32 %v25, 4294901760
  %v3083 = vsub.f32 %v25, %v3082
  %3084 = vmatprep.subr.mxu0 %v3083
  %v3085 = vand.u32 %v24, 4294901760
  %v3086 = vsub.f32 %v24, %v3085
  %3087 = vmatpush1.msra.mxu0 %v3086
  %v3088 = vand.u32 %v23, 4294901760
  %v3089 = vsub.f32 %v23, %v3088
  %3090 = vmatprep.subr.mxu0 %v3089
  %v3091 = vand.u32 %v22, 4294901760
  %v3092 = vsub.f32 %v22, %v3091
  %3093 = vmatpush1.msra.mxu0 %v3092
  %v3094 = vand.u32 %v21, 4294901760
  %v3095 = vsub.f32 %v21, %v3094
  %3096 = vmatprep.subr.mxu0 %v3095
  %v3097 = vand.u32 %v20, 4294901760
  %v3098 = vsub.f32 %v20, %v3097
  %3099 = vmatpush1.msra.mxu0 %v3098
  %3100 = vmatprep.subr.mxu0 0.0
  %3101 = vmatpush2.msra.mxu0 0.0
  %3102 = vmatprep.subr.mxu0 0.0
  %3103 = vmatpush2.msra.mxu0 0.0
  %3104 = vmatprep.subr.mxu0 0.0
  %3105 = vmatpush2.msra.mxu0 0.0
  %3106 = vmatprep.subr.mxu0 0.0
  %3107 = vmatpush2.msra.mxu0 0.0
  %3108 = vmatprep.subr.mxu0 0.0
  %3109 = vmatpush2.msra.mxu0 0.0
  %3110 = vmatprep.subr.mxu0 0.0
  %3111 = vmatpush2.msra.mxu0 0.0
  %3112 = vmatprep.subr.mxu0 0.0
  %3113 = vmatpush2.msra.mxu0 0.0
  %3114 = vmatprep.subr.mxu0 0.0
  %3115 = vmatpush2.msra.mxu0 0.0
  %3116 = vmatprep.subr.mxu0 0.0
  %3117 = vmatpush2.msra.mxu0 0.0
  %3118 = vmatprep.subr.mxu0 0.0
  %3119 = vmatpush2.msra.mxu0 0.0
  %3120 = vmatprep.subr.mxu0 0.0
  %3121 = vmatpush2.msra.mxu0 0.0
  %3122 = vmatprep.subr.mxu0 0.0
  %3123 = vmatpush2.msra.mxu0 0.0
  %3124 = vmatprep.subr.mxu0 0.0
  %3125 = vmatpush2.msra.mxu0 0.0
  %3126 = vmatprep.subr.mxu0 0.0
  %3127 = vmatpush2.msra.mxu0 0.0
  %3128 = vmatprep.subr.mxu0 0.0
  %3129 = vmatpush2.msra.mxu0 0.0
  %3130 = vmatprep.subr.mxu0 0.0
  %3131 = vmatpush2.msra.mxu0 0.0
  %3132 = vmatprep.mubr.f32.mxu0 0.0
  %v3133 = vand.u32 %v2790, 4294901760
  %v3134 = vsub.f32 %v2790, %v3133
  %3135 = vmatmul.mubr.f32.gmra.mxu0 %v3134
  %v3136 = vpop.f32.mrf.mxu0
  %v3137 = vadd.f32 %v3032, %v3136
  %v3138 = vpop.f32.mrf.mxu0
  %v3139 = vadd.f32 %v3034, %v3138
  %3140 = vdwg.mxu0
  %3141 = vmatprep.subr.mxu0 0.0
  %3142 = vmatpush1.msra.mxu0 0.0
  %3143 = vmatprep.subr.mxu0 0.0
  %3144 = vmatpush1.msra.mxu0 0.0
  %3145 = vmatprep.subr.mxu0 0.0
  %3146 = vmatpush1.msra.mxu0 0.0
  %3147 = vmatprep.subr.mxu0 0.0
  %3148 = vmatpush1.msra.mxu0 0.0
  %3149 = vmatprep.subr.mxu0 0.0
  %3150 = vmatpush1.msra.mxu0 0.0
  %3151 = vmatprep.subr.mxu0 0.0
  %3152 = vmatpush1.msra.mxu0 0.0
  %3153 = vmatprep.subr.mxu0 0.0
  %3154 = vmatpush1.msra.mxu0 0.0
  %3155 = vmatprep.subr.mxu0 0.0
  %3156 = vmatpush1.msra.mxu0 0.0
  %v3157 = vand.u32 %v35, 4294901760
  %3158 = vmatprep.subr.mxu0 %v3157
  %v3159 = vand.u32 %v34, 4294901760
  %3160 = vmatpush1.msra.mxu0 %v3159
  %v3161 = vand.u32 %v33, 4294901760
  %3162 = vmatprep.subr.mxu0 %v3161
  %v3163 = vand.u32 %v32, 4294901760
  %3164 = vmatpush1.msra.mxu0 %v3163
  %v3165 = vand.u32 %v31, 4294901760
  %3166 = vmatprep.subr.mxu0 %v3165
  %v3167 = vand.u32 %v30, 4294901760
  %3168 = vmatpush1.msra.mxu0 %v3167
  %v3169 = vand.u32 %v29, 4294901760
  %3170 = vmatprep.subr.mxu0 %v3169
  %v3171 = vand.u32 %v28, 4294901760
  %3172 = vmatpush1.msra.mxu0 %v3171
  %v3173 = vand.u32 %v27, 4294901760
  %3174 = vmatprep.subr.mxu0 %v3173
  %v3175 = vand.u32 %v26, 4294901760
  %3176 = vmatpush1.msra.mxu0 %v3175
  %v3177 = vand.u32 %v25, 4294901760
  %3178 = vmatprep.subr.mxu0 %v3177
  %v3179 = vand.u32 %v24, 4294901760
  %3180 = vmatpush1.msra.mxu0 %v3179
  %v3181 = vand.u32 %v23, 4294901760
  %3182 = vmatprep.subr.mxu0 %v3181
  %v3183 = vand.u32 %v22, 4294901760
  %3184 = vmatpush1.msra.mxu0 %v3183
  %v3185 = vand.u32 %v21, 4294901760
  %3186 = vmatprep.subr.mxu0 %v3185
  %v3187 = vand.u32 %v20, 4294901760
  %3188 = vmatpush1.msra.mxu0 %v3187
  %3189 = vmatprep.subr.mxu0 0.0
  %3190 = vmatpush2.msra.mxu0 0.0
  %3191 = vmatprep.subr.mxu0 0.0
  %3192 = vmatpush2.msra.mxu0 0.0
  %3193 = vmatprep.subr.mxu0 0.0
  %3194 = vmatpush2.msra.mxu0 0.0
  %3195 = vmatprep.subr.mxu0 0.0
  %3196 = vmatpush2.msra.mxu0 0.0
  %3197 = vmatprep.subr.mxu0 0.0
  %3198 = vmatpush2.msra.mxu0 0.0
  %3199 = vmatprep.subr.mxu0 0.0
  %3200 = vmatpush2.msra.mxu0 0.0
  %3201 = vmatprep.subr.mxu0 0.0
  %3202 = vmatpush2.msra.mxu0 0.0
  %3203 = vmatprep.subr.mxu0 0.0
  %3204 = vmatpush2.msra.mxu0 0.0
  %3205 = vmatprep.subr.mxu0 0.0
  %3206 = vmatpush2.msra.mxu0 0.0
  %3207 = vmatprep.subr.mxu0 0.0
  %3208 = vmatpush2.msra.mxu0 0.0
  %3209 = vmatprep.subr.mxu0 0.0
  %3210 = vmatpush2.msra.mxu0 0.0
  %3211 = vmatprep.subr.mxu0 0.0
  %3212 = vmatpush2.msra.mxu0 0.0
  %3213 = vmatprep.subr.mxu0 0.0
  %3214 = vmatpush2.msra.mxu0 0.0
  %3215 = vmatprep.subr.mxu0 0.0
  %3216 = vmatpush2.msra.mxu0 0.0
  %3217 = vmatprep.subr.mxu0 0.0
  %3218 = vmatpush2.msra.mxu0 0.0
  %3219 = vmatprep.subr.mxu0 0.0
  %3220 = vmatpush2.msra.mxu0 0.0
  %3221 = vmatprep.mubr.f32.mxu0 0.0
  %v3222 = vand.u32 %v2790, 4294901760
  %v3223 = vsub.f32 %v2790, %v3222
  %v3224 = vand.u32 %v3223, 4294901760
  %3225 = vmatmul.mubr.f32.gmra.mxu0 %v3224
  %v3226 = vpop.f32.mrf.mxu0
  %v3227 = vadd.f32 %v3137, %v3226
  %v3228 = vpop.f32.mrf.mxu0
  %v3229 = vadd.f32 %v3139, %v3228
  %3230 = vdwg.mxu0
  %3231 = vmatprep.subr.mxu0 0.0
  %3232 = vmatpush1.msra.mxu0 0.0
  %3233 = vmatprep.subr.mxu0 0.0
  %3234 = vmatpush1.msra.mxu0 0.0
  %3235 = vmatprep.subr.mxu0 0.0
  %3236 = vmatpush1.msra.mxu0 0.0
  %3237 = vmatprep.subr.mxu0 0.0
  %3238 = vmatpush1.msra.mxu0 0.0
  %3239 = vmatprep.subr.mxu0 0.0
  %3240 = vmatpush1.msra.mxu0 0.0
  %3241 = vmatprep.subr.mxu0 0.0
  %3242 = vmatpush1.msra.mxu0 0.0
  %3243 = vmatprep.subr.mxu0 0.0
  %3244 = vmatpush1.msra.mxu0 0.0
  %3245 = vmatprep.subr.mxu0 0.0
  %3246 = vmatpush1.msra.mxu0 0.0
  %v3247 = vand.u32 %v35, 4294901760
  %v3248 = vsub.f32 %v35, %v3247
  %v3249 = vand.u32 %v3248, 4294901760
  %3250 = vmatprep.subr.mxu0 %v3249
  %v3251 = vand.u32 %v34, 4294901760
  %v3252 = vsub.f32 %v34, %v3251
  %v3253 = vand.u32 %v3252, 4294901760
  %3254 = vmatpush1.msra.mxu0 %v3253
  %v3255 = vand.u32 %v33, 4294901760
  %v3256 = vsub.f32 %v33, %v3255
  %v3257 = vand.u32 %v3256, 4294901760
  %3258 = vmatprep.subr.mxu0 %v3257
  %v3259 = vand.u32 %v32, 4294901760
  %v3260 = vsub.f32 %v32, %v3259
  %v3261 = vand.u32 %v3260, 4294901760
  %3262 = vmatpush1.msra.mxu0 %v3261
  %v3263 = vand.u32 %v31, 4294901760
  %v3264 = vsub.f32 %v31, %v3263
  %v3265 = vand.u32 %v3264, 4294901760
  %3266 = vmatprep.subr.mxu0 %v3265
  %v3267 = vand.u32 %v30, 4294901760
  %v3268 = vsub.f32 %v30, %v3267
  %v3269 = vand.u32 %v3268, 4294901760
  %3270 = vmatpush1.msra.mxu0 %v3269
  %v3271 = vand.u32 %v29, 4294901760
  %v3272 = vsub.f32 %v29, %v3271
  %v3273 = vand.u32 %v3272, 4294901760
  %3274 = vmatprep.subr.mxu0 %v3273
  %v3275 = vand.u32 %v28, 4294901760
  %v3276 = vsub.f32 %v28, %v3275
  %v3277 = vand.u32 %v3276, 4294901760
  %3278 = vmatpush1.msra.mxu0 %v3277
  %v3279 = vand.u32 %v27, 4294901760
  %v3280 = vsub.f32 %v27, %v3279
  %v3281 = vand.u32 %v3280, 4294901760
  %3282 = vmatprep.subr.mxu0 %v3281
  %v3283 = vand.u32 %v26, 4294901760
  %v3284 = vsub.f32 %v26, %v3283
  %v3285 = vand.u32 %v3284, 4294901760
  %3286 = vmatpush1.msra.mxu0 %v3285
  %v3287 = vand.u32 %v25, 4294901760
  %v3288 = vsub.f32 %v25, %v3287
  %v3289 = vand.u32 %v3288, 4294901760
  %3290 = vmatprep.subr.mxu0 %v3289
  %v3291 = vand.u32 %v24, 4294901760
  %v3292 = vsub.f32 %v24, %v3291
  %v3293 = vand.u32 %v3292, 4294901760
  %3294 = vmatpush1.msra.mxu0 %v3293
  %v3295 = vand.u32 %v23, 4294901760
  %v3296 = vsub.f32 %v23, %v3295
  %v3297 = vand.u32 %v3296, 4294901760
  %3298 = vmatprep.subr.mxu0 %v3297
  %v3299 = vand.u32 %v22, 4294901760
  %v3300 = vsub.f32 %v22, %v3299
  %v3301 = vand.u32 %v3300, 4294901760
  %3302 = vmatpush1.msra.mxu0 %v3301
  %v3303 = vand.u32 %v21, 4294901760
  %v3304 = vsub.f32 %v21, %v3303
  %v3305 = vand.u32 %v3304, 4294901760
  %3306 = vmatprep.subr.mxu0 %v3305
  %v3307 = vand.u32 %v20, 4294901760
  %v3308 = vsub.f32 %v20, %v3307
  %v3309 = vand.u32 %v3308, 4294901760
  %3310 = vmatpush1.msra.mxu0 %v3309
  %3311 = vmatprep.subr.mxu0 0.0
  %3312 = vmatpush2.msra.mxu0 0.0
  %3313 = vmatprep.subr.mxu0 0.0
  %3314 = vmatpush2.msra.mxu0 0.0
  %3315 = vmatprep.subr.mxu0 0.0
  %3316 = vmatpush2.msra.mxu0 0.0
  %3317 = vmatprep.subr.mxu0 0.0
  %3318 = vmatpush2.msra.mxu0 0.0
  %3319 = vmatprep.subr.mxu0 0.0
  %3320 = vmatpush2.msra.mxu0 0.0
  %3321 = vmatprep.subr.mxu0 0.0
  %3322 = vmatpush2.msra.mxu0 0.0
  %3323 = vmatprep.subr.mxu0 0.0
  %3324 = vmatpush2.msra.mxu0 0.0
  %3325 = vmatprep.subr.mxu0 0.0
  %3326 = vmatpush2.msra.mxu0 0.0
  %3327 = vmatprep.subr.mxu0 0.0
  %3328 = vmatpush2.msra.mxu0 0.0
  %3329 = vmatprep.subr.mxu0 0.0
  %3330 = vmatpush2.msra.mxu0 0.0
  %3331 = vmatprep.subr.mxu0 0.0
  %3332 = vmatpush2.msra.mxu0 0.0
  %3333 = vmatprep.subr.mxu0 0.0
  %3334 = vmatpush2.msra.mxu0 0.0
  %3335 = vmatprep.subr.mxu0 0.0
  %3336 = vmatpush2.msra.mxu0 0.0
  %3337 = vmatprep.subr.mxu0 0.0
  %3338 = vmatpush2.msra.mxu0 0.0
  %3339 = vmatprep.subr.mxu0 0.0
  %3340 = vmatpush2.msra.mxu0 0.0
  %3341 = vmatprep.subr.mxu0 0.0
  %3342 = vmatpush2.msra.mxu0 0.0
  %3343 = vmatprep.mubr.f32.mxu0 0.0
  %v3344 = vand.u32 %v2790, 4294901760
  %3345 = vmatmul.mubr.f32.gmra.mxu0 %v3344
  %v3346 = vpop.f32.mrf.mxu0
  %v3347 = vadd.f32 %v3227, %v3346
  %v3348 = vpop.f32.mrf.mxu0
  %v3349 = vadd.f32 %v3229, %v3348
  %3350 = vdwg.mxu0
  %3351 = vmatprep.subr.mxu0 0.0
  %3352 = vmatpush1.msra.mxu0 0.0
  %3353 = vmatprep.subr.mxu0 0.0
  %3354 = vmatpush1.msra.mxu0 0.0
  %3355 = vmatprep.subr.mxu0 0.0
  %3356 = vmatpush1.msra.mxu0 0.0
  %3357 = vmatprep.subr.mxu0 0.0
  %3358 = vmatpush1.msra.mxu0 0.0
  %3359 = vmatprep.subr.mxu0 0.0
  %3360 = vmatpush1.msra.mxu0 0.0
  %3361 = vmatprep.subr.mxu0 0.0
  %3362 = vmatpush1.msra.mxu0 0.0
  %3363 = vmatprep.subr.mxu0 0.0
  %3364 = vmatpush1.msra.mxu0 0.0
  %3365 = vmatprep.subr.mxu0 0.0
  %3366 = vmatpush1.msra.mxu0 0.0
  %v3367 = vand.u32 %v35, 4294901760
  %3368 = vmatprep.subr.mxu0 %v3367
  %v3369 = vand.u32 %v34, 4294901760
  %3370 = vmatpush1.msra.mxu0 %v3369
  %v3371 = vand.u32 %v33, 4294901760
  %3372 = vmatprep.subr.mxu0 %v3371
  %v3373 = vand.u32 %v32, 4294901760
  %3374 = vmatpush1.msra.mxu0 %v3373
  %v3375 = vand.u32 %v31, 4294901760
  %3376 = vmatprep.subr.mxu0 %v3375
  %v3377 = vand.u32 %v30, 4294901760
  %3378 = vmatpush1.msra.mxu0 %v3377
  %v3379 = vand.u32 %v29, 4294901760
  %3380 = vmatprep.subr.mxu0 %v3379
  %v3381 = vand.u32 %v28, 4294901760
  %3382 = vmatpush1.msra.mxu0 %v3381
  %v3383 = vand.u32 %v27, 4294901760
  %3384 = vmatprep.subr.mxu0 %v3383
  %v3385 = vand.u32 %v26, 4294901760
  %3386 = vmatpush1.msra.mxu0 %v3385
  %v3387 = vand.u32 %v25, 4294901760
  %3388 = vmatprep.subr.mxu0 %v3387
  %v3389 = vand.u32 %v24, 4294901760
  %3390 = vmatpush1.msra.mxu0 %v3389
  %v3391 = vand.u32 %v23, 4294901760
  %3392 = vmatprep.subr.mxu0 %v3391
  %v3393 = vand.u32 %v22, 4294901760
  %3394 = vmatpush1.msra.mxu0 %v3393
  %v3395 = vand.u32 %v21, 4294901760
  %3396 = vmatprep.subr.mxu0 %v3395
  %v3397 = vand.u32 %v20, 4294901760
  %3398 = vmatpush1.msra.mxu0 %v3397
  %3399 = vmatprep.subr.mxu0 0.0
  %3400 = vmatpush2.msra.mxu0 0.0
  %3401 = vmatprep.subr.mxu0 0.0
  %3402 = vmatpush2.msra.mxu0 0.0
  %3403 = vmatprep.subr.mxu0 0.0
  %3404 = vmatpush2.msra.mxu0 0.0
  %3405 = vmatprep.subr.mxu0 0.0
  %3406 = vmatpush2.msra.mxu0 0.0
  %3407 = vmatprep.subr.mxu0 0.0
  %3408 = vmatpush2.msra.mxu0 0.0
  %3409 = vmatprep.subr.mxu0 0.0
  %3410 = vmatpush2.msra.mxu0 0.0
  %3411 = vmatprep.subr.mxu0 0.0
  %3412 = vmatpush2.msra.mxu0 0.0
  %3413 = vmatprep.subr.mxu0 0.0
  %3414 = vmatpush2.msra.mxu0 0.0
  %3415 = vmatprep.subr.mxu0 0.0
  %3416 = vmatpush2.msra.mxu0 0.0
  %3417 = vmatprep.subr.mxu0 0.0
  %3418 = vmatpush2.msra.mxu0 0.0
  %3419 = vmatprep.subr.mxu0 0.0
  %3420 = vmatpush2.msra.mxu0 0.0
  %3421 = vmatprep.subr.mxu0 0.0
  %3422 = vmatpush2.msra.mxu0 0.0
  %3423 = vmatprep.subr.mxu0 0.0
  %3424 = vmatpush2.msra.mxu0 0.0
  %3425 = vmatprep.subr.mxu0 0.0
  %3426 = vmatpush2.msra.mxu0 0.0
  %3427 = vmatprep.subr.mxu0 0.0
  %3428 = vmatpush2.msra.mxu0 0.0
  %3429 = vmatprep.subr.mxu0 0.0
  %3430 = vmatpush2.msra.mxu0 0.0
  %3431 = vmatprep.mubr.f32.mxu0 0.0
  %v3432 = vand.u32 %v2790, 4294901760
  %3433 = vmatmul.mubr.f32.gmra.mxu0 %v3432
  %v3434 = vpop.f32.mrf.mxu0
  %v3435 = vadd.f32 %v3347, %v3434
  %v3436 = vpop.f32.mrf.mxu0
  %v3437 = vadd.f32 %v3349, %v3436
  %3438 = vdwg.mxu0
  %v3439 = vmul.f32 %v3435, 0.5
  %v3440 = vtanh.pop %v3439
  %v3441 = vmul.f32 %v3440, 0.5
  %v3442 = vadd.f32 %v3441, 0.5
  %v3443 = vtanh.pop %v3437
  %v3444 = vmul.f32 %v3437, 0.5
  %v3445 = vtanh.pop %v3444
  %v3446 = vmul.f32 %v3445, 0.5
  %v3447 = vadd.f32 %v3446, 0.5
  %v3448 = vmul.f32 %v3442, %v2314
  %v3449 = vmul.f32 %v3442, %v3443
  %3451 = vrot.lane.b32.xlu0 %v3449, 64
  %v3452 = vpop.permute.xlu0 %3451
  %v3454 = vadd.f32 %v3448, %v3452
  %v3455 = vtanh.pop %v3454
  %v3456 = vmul.f32 %v3447, %v3455
  %s3457 = scalar_lea.vmem %s0, 24
  %v3458 = vld [vmem:[%s3457] sm:$0xff]
  %v3460 = vsel %vm39, %v3458, 0
  %3462 = vmatprep.subr.mxu0 0.0
  %3463 = vmatpush1.msra.mxu0 0.0
  %3464 = vmatprep.subr.mxu0 0.0
  %3465 = vmatpush1.msra.mxu0 0.0
  %3466 = vmatprep.subr.mxu0 0.0
  %3467 = vmatpush1.msra.mxu0 0.0
  %3468 = vmatprep.subr.mxu0 0.0
  %3469 = vmatpush1.msra.mxu0 0.0
  %3470 = vmatprep.subr.mxu0 0.0
  %3471 = vmatpush1.msra.mxu0 0.0
  %3472 = vmatprep.subr.mxu0 0.0
  %3473 = vmatpush1.msra.mxu0 0.0
  %3474 = vmatprep.subr.mxu0 0.0
  %3475 = vmatpush1.msra.mxu0 0.0
  %3476 = vmatprep.subr.mxu0 0.0
  %3477 = vmatpush1.msra.mxu0 0.0
  %3478 = vmatprep.subr.mxu0 0.0
  %3479 = vmatpush1.msra.mxu0 0.0
  %3480 = vmatprep.subr.mxu0 0.0
  %3481 = vmatpush1.msra.mxu0 0.0
  %3482 = vmatprep.subr.mxu0 0.0
  %3483 = vmatpush1.msra.mxu0 0.0
  %3484 = vmatprep.subr.mxu0 0.0
  %3485 = vmatpush1.msra.mxu0 0.0
  %3486 = vmatprep.subr.mxu0 0.0
  %3487 = vmatpush1.msra.mxu0 0.0
  %3488 = vmatprep.subr.mxu0 0.0
  %3489 = vmatpush1.msra.mxu0 0.0
  %3490 = vmatprep.subr.mxu0 0.0
  %3491 = vmatpush1.msra.mxu0 0.0
  %v3492 = vand.u32 %v38, 4294901760
  %3493 = vmatprep.subr.mxu0 %v3492
  %v3494 = vand.u32 %v37, 4294901760
  %3495 = vmatpush1.msra.mxu0 %v3494
  %3496 = vmatprep.subr.mxu0 0.0
  %3497 = vmatpush2.msra.mxu0 0.0
  %3498 = vmatprep.subr.mxu0 0.0
  %3499 = vmatpush2.msra.mxu0 0.0
  %3500 = vmatprep.subr.mxu0 0.0
  %3501 = vmatpush2.msra.mxu0 0.0
  %3502 = vmatprep.subr.mxu0 0.0
  %3503 = vmatpush2.msra.mxu0 0.0
  %3504 = vmatprep.subr.mxu0 0.0
  %3505 = vmatpush2.msra.mxu0 0.0
  %3506 = vmatprep.subr.mxu0 0.0
  %3507 = vmatpush2.msra.mxu0 0.0
  %3508 = vmatprep.subr.mxu0 0.0
  %3509 = vmatpush2.msra.mxu0 0.0
  %3510 = vmatprep.subr.mxu0 0.0
  %3511 = vmatpush2.msra.mxu0 0.0
  %3512 = vmatprep.subr.mxu0 0.0
  %3513 = vmatpush2.msra.mxu0 0.0
  %3514 = vmatprep.subr.mxu0 0.0
  %3515 = vmatpush2.msra.mxu0 0.0
  %3516 = vmatprep.subr.mxu0 0.0
  %3517 = vmatpush2.msra.mxu0 0.0
  %3518 = vmatprep.subr.mxu0 0.0
  %3519 = vmatpush2.msra.mxu0 0.0
  %3520 = vmatprep.subr.mxu0 0.0
  %3521 = vmatpush2.msra.mxu0 0.0
  %3522 = vmatprep.subr.mxu0 0.0
  %3523 = vmatpush2.msra.mxu0 0.0
  %3524 = vmatprep.subr.mxu0 0.0
  %3525 = vmatpush2.msra.mxu0 0.0
  %3526 = vmatprep.subr.mxu0 0.0
  %3527 = vmatpush2.msra.mxu0 0.0
  %3528 = vmatprep.mubr.f32.mxu0 0.0
  %v3529 = vand.u32 %v3460, 4294901760
  %v3530 = vsub.f32 %v3460, %v3529
  %v3531 = vand.u32 %v3530, 4294901760
  %v3532 = vsub.f32 %v3530, %v3531
  %v3533 = vand.u32 %v3532, 4294901760
  %3534 = vmatmul.mubr.f32.gmra.mxu0 %v3533
  %v3535 = vpop.f32.mrf.mxu0
  %v3536 = vadd.f32 0.0, %v3535
  %v3537 = vpop.f32.mrf.mxu0
  %v3538 = vadd.f32 0.0, %v3537
  %3539 = vdwg.mxu0
  %3540 = vmatprep.subr.mxu0 0.0
  %3541 = vmatpush1.msra.mxu0 0.0
  %3542 = vmatprep.subr.mxu0 0.0
  %3543 = vmatpush1.msra.mxu0 0.0
  %3544 = vmatprep.subr.mxu0 0.0
  %3545 = vmatpush1.msra.mxu0 0.0
  %3546 = vmatprep.subr.mxu0 0.0
  %3547 = vmatpush1.msra.mxu0 0.0
  %3548 = vmatprep.subr.mxu0 0.0
  %3549 = vmatpush1.msra.mxu0 0.0
  %3550 = vmatprep.subr.mxu0 0.0
  %3551 = vmatpush1.msra.mxu0 0.0
  %3552 = vmatprep.subr.mxu0 0.0
  %3553 = vmatpush1.msra.mxu0 0.0
  %3554 = vmatprep.subr.mxu0 0.0
  %3555 = vmatpush1.msra.mxu0 0.0
  %3556 = vmatprep.subr.mxu0 0.0
  %3557 = vmatpush1.msra.mxu0 0.0
  %3558 = vmatprep.subr.mxu0 0.0
  %3559 = vmatpush1.msra.mxu0 0.0
  %3560 = vmatprep.subr.mxu0 0.0
  %3561 = vmatpush1.msra.mxu0 0.0
  %3562 = vmatprep.subr.mxu0 0.0
  %3563 = vmatpush1.msra.mxu0 0.0
  %3564 = vmatprep.subr.mxu0 0.0
  %3565 = vmatpush1.msra.mxu0 0.0
  %3566 = vmatprep.subr.mxu0 0.0
  %3567 = vmatpush1.msra.mxu0 0.0
  %3568 = vmatprep.subr.mxu0 0.0
  %3569 = vmatpush1.msra.mxu0 0.0
  %v3570 = vand.u32 %v38, 4294901760
  %v3571 = vsub.f32 %v38, %v3570
  %v3572 = vand.u32 %v3571, 4294901760
  %v3573 = vsub.f32 %v3571, %v3572
  %v3574 = vand.u32 %v3573, 4294901760
  %3575 = vmatprep.subr.mxu0 %v3574
  %v3576 = vand.u32 %v37, 4294901760
  %v3577 = vsub.f32 %v37, %v3576
  %v3578 = vand.u32 %v3577, 4294901760
  %v3579 = vsub.f32 %v3577, %v3578
  %v3580 = vand.u32 %v3579, 4294901760
  %3581 = vmatpush1.msra.mxu0 %v3580
  %3582 = vmatprep.subr.mxu0 0.0
  %3583 = vmatpush2.msra.mxu0 0.0
  %3584 = vmatprep.subr.mxu0 0.0
  %3585 = vmatpush2.msra.mxu0 0.0
  %3586 = vmatprep.subr.mxu0 0.0
  %3587 = vmatpush2.msra.mxu0 0.0
  %3588 = vmatprep.subr.mxu0 0.0
  %3589 = vmatpush2.msra.mxu0 0.0
  %3590 = vmatprep.subr.mxu0 0.0
  %3591 = vmatpush2.msra.mxu0 0.0
  %3592 = vmatprep.subr.mxu0 0.0
  %3593 = vmatpush2.msra.mxu0 0.0
  %3594 = vmatprep.subr.mxu0 0.0
  %3595 = vmatpush2.msra.mxu0 0.0
  %3596 = vmatprep.subr.mxu0 0.0
  %3597 = vmatpush2.msra.mxu0 0.0
  %3598 = vmatprep.subr.mxu0 0.0
  %3599 = vmatpush2.msra.mxu0 0.0
  %3600 = vmatprep.subr.mxu0 0.0
  %3601 = vmatpush2.msra.mxu0 0.0
  %3602 = vmatprep.subr.mxu0 0.0
  %3603 = vmatpush2.msra.mxu0 0.0
  %3604 = vmatprep.subr.mxu0 0.0
  %3605 = vmatpush2.msra.mxu0 0.0
  %3606 = vmatprep.subr.mxu0 0.0
  %3607 = vmatpush2.msra.mxu0 0.0
  %3608 = vmatprep.subr.mxu0 0.0
  %3609 = vmatpush2.msra.mxu0 0.0
  %3610 = vmatprep.subr.mxu0 0.0
  %3611 = vmatpush2.msra.mxu0 0.0
  %3612 = vmatprep.subr.mxu0 0.0
  %3613 = vmatpush2.msra.mxu0 0.0
  %3614 = vmatprep.mubr.f32.mxu0 0.0
  %v3615 = vand.u32 %v3460, 4294901760
  %3616 = vmatmul.mubr.f32.gmra.mxu0 %v3615
  %v3617 = vpop.f32.mrf.mxu0
  %v3618 = vadd.f32 %v3536, %v3617
  %v3619 = vpop.f32.mrf.mxu0
  %v3620 = vadd.f32 %v3538, %v3619
  %3621 = vdwg.mxu0
  %3622 = vmatprep.subr.mxu0 0.0
  %3623 = vmatpush1.msra.mxu0 0.0
  %3624 = vmatprep.subr.mxu0 0.0
  %3625 = vmatpush1.msra.mxu0 0.0
  %3626 = vmatprep.subr.mxu0 0.0
  %3627 = vmatpush1.msra.mxu0 0.0
  %3628 = vmatprep.subr.mxu0 0.0
  %3629 = vmatpush1.msra.mxu0 0.0
  %3630 = vmatprep.subr.mxu0 0.0
  %3631 = vmatpush1.msra.mxu0 0.0
  %3632 = vmatprep.subr.mxu0 0.0
  %3633 = vmatpush1.msra.mxu0 0.0
  %3634 = vmatprep.subr.mxu0 0.0
  %3635 = vmatpush1.msra.mxu0 0.0
  %3636 = vmatprep.subr.mxu0 0.0
  %3637 = vmatpush1.msra.mxu0 0.0
  %3638 = vmatprep.subr.mxu0 0.0
  %3639 = vmatpush1.msra.mxu0 0.0
  %3640 = vmatprep.subr.mxu0 0.0
  %3641 = vmatpush1.msra.mxu0 0.0
  %3642 = vmatprep.subr.mxu0 0.0
  %3643 = vmatpush1.msra.mxu0 0.0
  %3644 = vmatprep.subr.mxu0 0.0
  %3645 = vmatpush1.msra.mxu0 0.0
  %3646 = vmatprep.subr.mxu0 0.0
  %3647 = vmatpush1.msra.mxu0 0.0
  %3648 = vmatprep.subr.mxu0 0.0
  %3649 = vmatpush1.msra.mxu0 0.0
  %3650 = vmatprep.subr.mxu0 0.0
  %3651 = vmatpush1.msra.mxu0 0.0
  %v3652 = vand.u32 %v38, 4294901760
  %v3653 = vsub.f32 %v38, %v3652
  %3654 = vmatprep.subr.mxu0 %v3653
  %v3655 = vand.u32 %v37, 4294901760
  %v3656 = vsub.f32 %v37, %v3655
  %3657 = vmatpush1.msra.mxu0 %v3656
  %3658 = vmatprep.subr.mxu0 0.0
  %3659 = vmatpush2.msra.mxu0 0.0
  %3660 = vmatprep.subr.mxu0 0.0
  %3661 = vmatpush2.msra.mxu0 0.0
  %3662 = vmatprep.subr.mxu0 0.0
  %3663 = vmatpush2.msra.mxu0 0.0
  %3664 = vmatprep.subr.mxu0 0.0
  %3665 = vmatpush2.msra.mxu0 0.0
  %3666 = vmatprep.subr.mxu0 0.0
  %3667 = vmatpush2.msra.mxu0 0.0
  %3668 = vmatprep.subr.mxu0 0.0
  %3669 = vmatpush2.msra.mxu0 0.0
  %3670 = vmatprep.subr.mxu0 0.0
  %3671 = vmatpush2.msra.mxu0 0.0
  %3672 = vmatprep.subr.mxu0 0.0
  %3673 = vmatpush2.msra.mxu0 0.0
  %3674 = vmatprep.subr.mxu0 0.0
  %3675 = vmatpush2.msra.mxu0 0.0
  %3676 = vmatprep.subr.mxu0 0.0
  %3677 = vmatpush2.msra.mxu0 0.0
  %3678 = vmatprep.subr.mxu0 0.0
  %3679 = vmatpush2.msra.mxu0 0.0
  %3680 = vmatprep.subr.mxu0 0.0
  %3681 = vmatpush2.msra.mxu0 0.0
  %3682 = vmatprep.subr.mxu0 0.0
  %3683 = vmatpush2.msra.mxu0 0.0
  %3684 = vmatprep.subr.mxu0 0.0
  %3685 = vmatpush2.msra.mxu0 0.0
  %3686 = vmatprep.subr.mxu0 0.0
  %3687 = vmatpush2.msra.mxu0 0.0
  %3688 = vmatprep.subr.mxu0 0.0
  %3689 = vmatpush2.msra.mxu0 0.0
  %3690 = vmatprep.mubr.f32.mxu0 0.0
  %v3691 = vand.u32 %v3460, 4294901760
  %v3692 = vsub.f32 %v3460, %v3691
  %3693 = vmatmul.mubr.f32.gmra.mxu0 %v3692
  %v3694 = vpop.f32.mrf.mxu0
  %v3695 = vadd.f32 %v3618, %v3694
  %v3696 = vpop.f32.mrf.mxu0
  %v3697 = vadd.f32 %v3620, %v3696
  %3698 = vdwg.mxu0
  %3699 = vmatprep.subr.mxu0 0.0
  %3700 = vmatpush1.msra.mxu0 0.0
  %3701 = vmatprep.subr.mxu0 0.0
  %3702 = vmatpush1.msra.mxu0 0.0
  %3703 = vmatprep.subr.mxu0 0.0
  %3704 = vmatpush1.msra.mxu0 0.0
  %3705 = vmatprep.subr.mxu0 0.0
  %3706 = vmatpush1.msra.mxu0 0.0
  %3707 = vmatprep.subr.mxu0 0.0
  %3708 = vmatpush1.msra.mxu0 0.0
  %3709 = vmatprep.subr.mxu0 0.0
  %3710 = vmatpush1.msra.mxu0 0.0
  %3711 = vmatprep.subr.mxu0 0.0
  %3712 = vmatpush1.msra.mxu0 0.0
  %3713 = vmatprep.subr.mxu0 0.0
  %3714 = vmatpush1.msra.mxu0 0.0
  %3715 = vmatprep.subr.mxu0 0.0
  %3716 = vmatpush1.msra.mxu0 0.0
  %3717 = vmatprep.subr.mxu0 0.0
  %3718 = vmatpush1.msra.mxu0 0.0
  %3719 = vmatprep.subr.mxu0 0.0
  %3720 = vmatpush1.msra.mxu0 0.0
  %3721 = vmatprep.subr.mxu0 0.0
  %3722 = vmatpush1.msra.mxu0 0.0
  %3723 = vmatprep.subr.mxu0 0.0
  %3724 = vmatpush1.msra.mxu0 0.0
  %3725 = vmatprep.subr.mxu0 0.0
  %3726 = vmatpush1.msra.mxu0 0.0
  %3727 = vmatprep.subr.mxu0 0.0
  %3728 = vmatpush1.msra.mxu0 0.0
  %v3729 = vand.u32 %v38, 4294901760
  %3730 = vmatprep.subr.mxu0 %v3729
  %v3731 = vand.u32 %v37, 4294901760
  %3732 = vmatpush1.msra.mxu0 %v3731
  %3733 = vmatprep.subr.mxu0 0.0
  %3734 = vmatpush2.msra.mxu0 0.0
  %3735 = vmatprep.subr.mxu0 0.0
  %3736 = vmatpush2.msra.mxu0 0.0
  %3737 = vmatprep.subr.mxu0 0.0
  %3738 = vmatpush2.msra.mxu0 0.0
  %3739 = vmatprep.subr.mxu0 0.0
  %3740 = vmatpush2.msra.mxu0 0.0
  %3741 = vmatprep.subr.mxu0 0.0
  %3742 = vmatpush2.msra.mxu0 0.0
  %3743 = vmatprep.subr.mxu0 0.0
  %3744 = vmatpush2.msra.mxu0 0.0
  %3745 = vmatprep.subr.mxu0 0.0
  %3746 = vmatpush2.msra.mxu0 0.0
  %3747 = vmatprep.subr.mxu0 0.0
  %3748 = vmatpush2.msra.mxu0 0.0
  %3749 = vmatprep.subr.mxu0 0.0
  %3750 = vmatpush2.msra.mxu0 0.0
  %3751 = vmatprep.subr.mxu0 0.0
  %3752 = vmatpush2.msra.mxu0 0.0
  %3753 = vmatprep.subr.mxu0 0.0
  %3754 = vmatpush2.msra.mxu0 0.0
  %3755 = vmatprep.subr.mxu0 0.0
  %3756 = vmatpush2.msra.mxu0 0.0
  %3757 = vmatprep.subr.mxu0 0.0
  %3758 = vmatpush2.msra.mxu0 0.0
  %3759 = vmatprep.subr.mxu0 0.0
  %3760 = vmatpush2.msra.mxu0 0.0
  %3761 = vmatprep.subr.mxu0 0.0
  %3762 = vmatpush2.msra.mxu0 0.0
  %3763 = vmatprep.subr.mxu0 0.0
  %3764 = vmatpush2.msra.mxu0 0.0
  %3765 = vmatprep.mubr.f32.mxu0 0.0
  %v3766 = vand.u32 %v3460, 4294901760
  %v3767 = vsub.f32 %v3460, %v3766
  %v3768 = vand.u32 %v3767, 4294901760
  %3769 = vmatmul.mubr.f32.gmra.mxu0 %v3768
  %v3770 = vpop.f32.mrf.mxu0
  %v3771 = vadd.f32 %v3695, %v3770
  %v3772 = vpop.f32.mrf.mxu0
  %v3773 = vadd.f32 %v3697, %v3772
  %3774 = vdwg.mxu0
  %3775 = vmatprep.subr.mxu0 0.0
  %3776 = vmatpush1.msra.mxu0 0.0
  %3777 = vmatprep.subr.mxu0 0.0
  %3778 = vmatpush1.msra.mxu0 0.0
  %3779 = vmatprep.subr.mxu0 0.0
  %3780 = vmatpush1.msra.mxu0 0.0
  %3781 = vmatprep.subr.mxu0 0.0
  %3782 = vmatpush1.msra.mxu0 0.0
  %3783 = vmatprep.subr.mxu0 0.0
  %3784 = vmatpush1.msra.mxu0 0.0
  %3785 = vmatprep.subr.mxu0 0.0
  %3786 = vmatpush1.msra.mxu0 0.0
  %3787 = vmatprep.subr.mxu0 0.0
  %3788 = vmatpush1.msra.mxu0 0.0
  %3789 = vmatprep.subr.mxu0 0.0
  %3790 = vmatpush1.msra.mxu0 0.0
  %3791 = vmatprep.subr.mxu0 0.0
  %3792 = vmatpush1.msra.mxu0 0.0
  %3793 = vmatprep.subr.mxu0 0.0
  %3794 = vmatpush1.msra.mxu0 0.0
  %3795 = vmatprep.subr.mxu0 0.0
  %3796 = vmatpush1.msra.mxu0 0.0
  %3797 = vmatprep.subr.mxu0 0.0
  %3798 = vmatpush1.msra.mxu0 0.0
  %3799 = vmatprep.subr.mxu0 0.0
  %3800 = vmatpush1.msra.mxu0 0.0
  %3801 = vmatprep.subr.mxu0 0.0
  %3802 = vmatpush1.msra.mxu0 0.0
  %3803 = vmatprep.subr.mxu0 0.0
  %3804 = vmatpush1.msra.mxu0 0.0
  %v3805 = vand.u32 %v38, 4294901760
  %v3806 = vsub.f32 %v38, %v3805
  %v3807 = vand.u32 %v3806, 4294901760
  %3808 = vmatprep.subr.mxu0 %v3807
  %v3809 = vand.u32 %v37, 4294901760
  %v3810 = vsub.f32 %v37, %v3809
  %v3811 = vand.u32 %v3810, 4294901760
  %3812 = vmatpush1.msra.mxu0 %v3811
  %3813 = vmatprep.subr.mxu0 0.0
  %3814 = vmatpush2.msra.mxu0 0.0
  %3815 = vmatprep.subr.mxu0 0.0
  %3816 = vmatpush2.msra.mxu0 0.0
  %3817 = vmatprep.subr.mxu0 0.0
  %3818 = vmatpush2.msra.mxu0 0.0
  %3819 = vmatprep.subr.mxu0 0.0
  %3820 = vmatpush2.msra.mxu0 0.0
  %3821 = vmatprep.subr.mxu0 0.0
  %3822 = vmatpush2.msra.mxu0 0.0
  %3823 = vmatprep.subr.mxu0 0.0
  %3824 = vmatpush2.msra.mxu0 0.0
  %3825 = vmatprep.subr.mxu0 0.0
  %3826 = vmatpush2.msra.mxu0 0.0
  %3827 = vmatprep.subr.mxu0 0.0
  %3828 = vmatpush2.msra.mxu0 0.0
  %3829 = vmatprep.subr.mxu0 0.0
  %3830 = vmatpush2.msra.mxu0 0.0
  %3831 = vmatprep.subr.mxu0 0.0
  %3832 = vmatpush2.msra.mxu0 0.0
  %3833 = vmatprep.subr.mxu0 0.0
  %3834 = vmatpush2.msra.mxu0 0.0
  %3835 = vmatprep.subr.mxu0 0.0
  %3836 = vmatpush2.msra.mxu0 0.0
  %3837 = vmatprep.subr.mxu0 0.0
  %3838 = vmatpush2.msra.mxu0 0.0
  %3839 = vmatprep.subr.mxu0 0.0
  %3840 = vmatpush2.msra.mxu0 0.0
  %3841 = vmatprep.subr.mxu0 0.0
  %3842 = vmatpush2.msra.mxu0 0.0
  %3843 = vmatprep.subr.mxu0 0.0
  %3844 = vmatpush2.msra.mxu0 0.0
  %3845 = vmatprep.mubr.f32.mxu0 0.0
  %v3846 = vand.u32 %v3460, 4294901760
  %3847 = vmatmul.mubr.f32.gmra.mxu0 %v3846
  %v3848 = vpop.f32.mrf.mxu0
  %v3849 = vadd.f32 %v3771, %v3848
  %v3850 = vpop.f32.mrf.mxu0
  %v3851 = vadd.f32 %v3773, %v3850
  %3852 = vdwg.mxu0
  %3853 = vmatprep.subr.mxu0 0.0
  %3854 = vmatpush1.msra.mxu0 0.0
  %3855 = vmatprep.subr.mxu0 0.0
  %3856 = vmatpush1.msra.mxu0 0.0
  %3857 = vmatprep.subr.mxu0 0.0
  %3858 = vmatpush1.msra.mxu0 0.0
  %3859 = vmatprep.subr.mxu0 0.0
  %3860 = vmatpush1.msra.mxu0 0.0
  %3861 = vmatprep.subr.mxu0 0.0
  %3862 = vmatpush1.msra.mxu0 0.0
  %3863 = vmatprep.subr.mxu0 0.0
  %3864 = vmatpush1.msra.mxu0 0.0
  %3865 = vmatprep.subr.mxu0 0.0
  %3866 = vmatpush1.msra.mxu0 0.0
  %3867 = vmatprep.subr.mxu0 0.0
  %3868 = vmatpush1.msra.mxu0 0.0
  %3869 = vmatprep.subr.mxu0 0.0
  %3870 = vmatpush1.msra.mxu0 0.0
  %3871 = vmatprep.subr.mxu0 0.0
  %3872 = vmatpush1.msra.mxu0 0.0
  %3873 = vmatprep.subr.mxu0 0.0
  %3874 = vmatpush1.msra.mxu0 0.0
  %3875 = vmatprep.subr.mxu0 0.0
  %3876 = vmatpush1.msra.mxu0 0.0
  %3877 = vmatprep.subr.mxu0 0.0
  %3878 = vmatpush1.msra.mxu0 0.0
  %3879 = vmatprep.subr.mxu0 0.0
  %3880 = vmatpush1.msra.mxu0 0.0
  %3881 = vmatprep.subr.mxu0 0.0
  %3882 = vmatpush1.msra.mxu0 0.0
  %v3883 = vand.u32 %v38, 4294901760
  %3884 = vmatprep.subr.mxu0 %v3883
  %v3885 = vand.u32 %v37, 4294901760
  %3886 = vmatpush1.msra.mxu0 %v3885
  %3887 = vmatprep.subr.mxu0 0.0
  %3888 = vmatpush2.msra.mxu0 0.0
  %3889 = vmatprep.subr.mxu0 0.0
  %3890 = vmatpush2.msra.mxu0 0.0
  %3891 = vmatprep.subr.mxu0 0.0
  %3892 = vmatpush2.msra.mxu0 0.0
  %3893 = vmatprep.subr.mxu0 0.0
  %3894 = vmatpush2.msra.mxu0 0.0
  %3895 = vmatprep.subr.mxu0 0.0
  %3896 = vmatpush2.msra.mxu0 0.0
  %3897 = vmatprep.subr.mxu0 0.0
  %3898 = vmatpush2.msra.mxu0 0.0
  %3899 = vmatprep.subr.mxu0 0.0
  %3900 = vmatpush2.msra.mxu0 0.0
  %3901 = vmatprep.subr.mxu0 0.0
  %3902 = vmatpush2.msra.mxu0 0.0
  %3903 = vmatprep.subr.mxu0 0.0
  %3904 = vmatpush2.msra.mxu0 0.0
  %3905 = vmatprep.subr.mxu0 0.0
  %3906 = vmatpush2.msra.mxu0 0.0
  %3907 = vmatprep.subr.mxu0 0.0
  %3908 = vmatpush2.msra.mxu0 0.0
  %3909 = vmatprep.subr.mxu0 0.0
  %3910 = vmatpush2.msra.mxu0 0.0
  %3911 = vmatprep.subr.mxu0 0.0
  %3912 = vmatpush2.msra.mxu0 0.0
  %3913 = vmatprep.subr.mxu0 0.0
  %3914 = vmatpush2.msra.mxu0 0.0
  %3915 = vmatprep.subr.mxu0 0.0
  %3916 = vmatpush2.msra.mxu0 0.0
  %3917 = vmatprep.subr.mxu0 0.0
  %3918 = vmatpush2.msra.mxu0 0.0
  %3919 = vmatprep.mubr.f32.mxu0 0.0
  %v3920 = vand.u32 %v3460, 4294901760
  %3921 = vmatmul.mubr.f32.gmra.mxu0 %v3920
  %v3922 = vpop.f32.mrf.mxu0
  %v3923 = vadd.f32 %v3849, %v3922
  %v3924 = vpop.f32.mrf.mxu0
  %v3925 = vadd.f32 %v3851, %v3924
  %3926 = vdwg.mxu0
  %3928 = vrot.lane.b32.xlu0 %v3456, 64
  %v3929 = vpop.permute.xlu0 %3928
  %v3930 = vsel %vm508, %v3929, 0
  %3932 = vmatprep.subr.mxu0 0.0
  %3933 = vmatpush1.msra.mxu0 0.0
  %3934 = vmatprep.subr.mxu0 0.0
  %3935 = vmatpush1.msra.mxu0 0.0
  %3936 = vmatprep.subr.mxu0 0.0
  %3937 = vmatpush1.msra.mxu0 0.0
  %3938 = vmatprep.subr.mxu0 0.0
  %3939 = vmatpush1.msra.mxu0 0.0
  %3940 = vmatprep.subr.mxu0 0.0
  %3941 = vmatpush1.msra.mxu0 0.0
  %3942 = vmatprep.subr.mxu0 0.0
  %3943 = vmatpush1.msra.mxu0 0.0
  %3944 = vmatprep.subr.mxu0 0.0
  %3945 = vmatpush1.msra.mxu0 0.0
  %3946 = vmatprep.subr.mxu0 0.0
  %3947 = vmatpush1.msra.mxu0 0.0
  %v3948 = vand.u32 %v35, 4294901760
  %3949 = vmatprep.subr.mxu0 %v3948
  %v3950 = vand.u32 %v34, 4294901760
  %3951 = vmatpush1.msra.mxu0 %v3950
  %v3952 = vand.u32 %v33, 4294901760
  %3953 = vmatprep.subr.mxu0 %v3952
  %v3954 = vand.u32 %v32, 4294901760
  %3955 = vmatpush1.msra.mxu0 %v3954
  %v3956 = vand.u32 %v31, 4294901760
  %3957 = vmatprep.subr.mxu0 %v3956
  %v3958 = vand.u32 %v30, 4294901760
  %3959 = vmatpush1.msra.mxu0 %v3958
  %v3960 = vand.u32 %v29, 4294901760
  %3961 = vmatprep.subr.mxu0 %v3960
  %v3962 = vand.u32 %v28, 4294901760
  %3963 = vmatpush1.msra.mxu0 %v3962
  %v3964 = vand.u32 %v27, 4294901760
  %3965 = vmatprep.subr.mxu0 %v3964
  %v3966 = vand.u32 %v26, 4294901760
  %3967 = vmatpush1.msra.mxu0 %v3966
  %v3968 = vand.u32 %v25, 4294901760
  %3969 = vmatprep.subr.mxu0 %v3968
  %v3970 = vand.u32 %v24, 4294901760
  %3971 = vmatpush1.msra.mxu0 %v3970
  %v3972 = vand.u32 %v23, 4294901760
  %3973 = vmatprep.subr.mxu0 %v3972
  %v3974 = vand.u32 %v22, 4294901760
  %3975 = vmatpush1.msra.mxu0 %v3974
  %v3976 = vand.u32 %v21, 4294901760
  %3977 = vmatprep.subr.mxu0 %v3976
  %v3978 = vand.u32 %v20, 4294901760
  %3979 = vmatpush1.msra.mxu0 %v3978
  %3980 = vmatprep.subr.mxu0 0.0
  %3981 = vmatpush2.msra.mxu0 0.0
  %3982 = vmatprep.subr.mxu0 0.0
  %3983 = vmatpush2.msra.mxu0 0.0
  %3984 = vmatprep.subr.mxu0 0.0
  %3985 = vmatpush2.msra.mxu0 0.0
  %3986 = vmatprep.subr.mxu0 0.0
  %3987 = vmatpush2.msra.mxu0 0.0
  %3988 = vmatprep.subr.mxu0 0.0
  %3989 = vmatpush2.msra.mxu0 0.0
  %3990 = vmatprep.subr.mxu0 0.0
  %3991 = vmatpush2.msra.mxu0 0.0
  %3992 = vmatprep.subr.mxu0 0.0
  %3993 = vmatpush2.msra.mxu0 0.0
  %3994 = vmatprep.subr.mxu0 0.0
  %3995 = vmatpush2.msra.mxu0 0.0
  %3996 = vmatprep.subr.mxu0 0.0
  %3997 = vmatpush2.msra.mxu0 0.0
  %3998 = vmatprep.subr.mxu0 0.0
  %3999 = vmatpush2.msra.mxu0 0.0
  %4000 = vmatprep.subr.mxu0 0.0
  %4001 = vmatpush2.msra.mxu0 0.0
  %4002 = vmatprep.subr.mxu0 0.0
  %4003 = vmatpush2.msra.mxu0 0.0
  %4004 = vmatprep.subr.mxu0 0.0
  %4005 = vmatpush2.msra.mxu0 0.0
  %4006 = vmatprep.subr.mxu0 0.0
  %4007 = vmatpush2.msra.mxu0 0.0
  %4008 = vmatprep.subr.mxu0 0.0
  %4009 = vmatpush2.msra.mxu0 0.0
  %4010 = vmatprep.subr.mxu0 0.0
  %4011 = vmatpush2.msra.mxu0 0.0
  %4012 = vmatprep.mubr.f32.mxu0 0.0
  %v4013 = vand.u32 %v3930, 4294901760
  %v4014 = vsub.f32 %v3930, %v4013
  %v4015 = vand.u32 %v4014, 4294901760
  %v4016 = vsub.f32 %v4014, %v4015
  %v4017 = vand.u32 %v4016, 4294901760
  %4018 = vmatmul.mubr.f32.gmra.mxu0 %v4017
  %v4019 = vpop.f32.mrf.mxu0
  %v4020 = vadd.f32 %v3923, %v4019
  %v4021 = vpop.f32.mrf.mxu0
  %v4022 = vadd.f32 %v3925, %v4021
  %4023 = vdwg.mxu0
  %4024 = vmatprep.subr.mxu0 0.0
  %4025 = vmatpush1.msra.mxu0 0.0
  %4026 = vmatprep.subr.mxu0 0.0
  %4027 = vmatpush1.msra.mxu0 0.0
  %4028 = vmatprep.subr.mxu0 0.0
  %4029 = vmatpush1.msra.mxu0 0.0
  %4030 = vmatprep.subr.mxu0 0.0
  %4031 = vmatpush1.msra.mxu0 0.0
  %4032 = vmatprep.subr.mxu0 0.0
  %4033 = vmatpush1.msra.mxu0 0.0
  %4034 = vmatprep.subr.mxu0 0.0
  %4035 = vmatpush1.msra.mxu0 0.0
  %4036 = vmatprep.subr.mxu0 0.0
  %4037 = vmatpush1.msra.mxu0 0.0
  %4038 = vmatprep.subr.mxu0 0.0
  %4039 = vmatpush1.msra.mxu0 0.0
  %v4040 = vand.u32 %v35, 4294901760
  %v4041 = vsub.f32 %v35, %v4040
  %v4042 = vand.u32 %v4041, 4294901760
  %v4043 = vsub.f32 %v4041, %v4042
  %v4044 = vand.u32 %v4043, 4294901760
  %4045 = vmatprep.subr.mxu0 %v4044
  %v4046 = vand.u32 %v34, 4294901760
  %v4047 = vsub.f32 %v34, %v4046
  %v4048 = vand.u32 %v4047, 4294901760
  %v4049 = vsub.f32 %v4047, %v4048
  %v4050 = vand.u32 %v4049, 4294901760
  %4051 = vmatpush1.msra.mxu0 %v4050
  %v4052 = vand.u32 %v33, 4294901760
  %v4053 = vsub.f32 %v33, %v4052
  %v4054 = vand.u32 %v4053, 4294901760
  %v4055 = vsub.f32 %v4053, %v4054
  %v4056 = vand.u32 %v4055, 4294901760
  %4057 = vmatprep.subr.mxu0 %v4056
  %v4058 = vand.u32 %v32, 4294901760
  %v4059 = vsub.f32 %v32, %v4058
  %v4060 = vand.u32 %v4059, 4294901760
  %v4061 = vsub.f32 %v4059, %v4060
  %v4062 = vand.u32 %v4061, 4294901760
  %4063 = vmatpush1.msra.mxu0 %v4062
  %v4064 = vand.u32 %v31, 4294901760
  %v4065 = vsub.f32 %v31, %v4064
  %v4066 = vand.u32 %v4065, 4294901760
  %v4067 = vsub.f32 %v4065, %v4066
  %v4068 = vand.u32 %v4067, 4294901760
  %4069 = vmatprep.subr.mxu0 %v4068
  %v4070 = vand.u32 %v30, 4294901760
  %v4071 = vsub.f32 %v30, %v4070
  %v4072 = vand.u32 %v4071, 4294901760
  %v4073 = vsub.f32 %v4071, %v4072
  %v4074 = vand.u32 %v4073, 4294901760
  %4075 = vmatpush1.msra.mxu0 %v4074
  %v4076 = vand.u32 %v29, 4294901760
  %v4077 = vsub.f32 %v29, %v4076
  %v4078 = vand.u32 %v4077, 4294901760
  %v4079 = vsub.f32 %v4077, %v4078
  %v4080 = vand.u32 %v4079, 4294901760
  %4081 = vmatprep.subr.mxu0 %v4080
  %v4082 = vand.u32 %v28, 4294901760
  %v4083 = vsub.f32 %v28, %v4082
  %v4084 = vand.u32 %v4083, 4294901760
  %v4085 = vsub.f32 %v4083, %v4084
  %v4086 = vand.u32 %v4085, 4294901760
  %4087 = vmatpush1.msra.mxu0 %v4086
  %v4088 = vand.u32 %v27, 4294901760
  %v4089 = vsub.f32 %v27, %v4088
  %v4090 = vand.u32 %v4089, 4294901760
  %v4091 = vsub.f32 %v4089, %v4090
  %v4092 = vand.u32 %v4091, 4294901760
  %4093 = vmatprep.subr.mxu0 %v4092
  %v4094 = vand.u32 %v26, 4294901760
  %v4095 = vsub.f32 %v26, %v4094
  %v4096 = vand.u32 %v4095, 4294901760
  %v4097 = vsub.f32 %v4095, %v4096
  %v4098 = vand.u32 %v4097, 4294901760
  %4099 = vmatpush1.msra.mxu0 %v4098
  %v4100 = vand.u32 %v25, 4294901760
  %v4101 = vsub.f32 %v25, %v4100
  %v4102 = vand.u32 %v4101, 4294901760
  %v4103 = vsub.f32 %v4101, %v4102
  %v4104 = vand.u32 %v4103, 4294901760
  %4105 = vmatprep.subr.mxu0 %v4104
  %v4106 = vand.u32 %v24, 4294901760
  %v4107 = vsub.f32 %v24, %v4106
  %v4108 = vand.u32 %v4107, 4294901760
  %v4109 = vsub.f32 %v4107, %v4108
  %v4110 = vand.u32 %v4109, 4294901760
  %4111 = vmatpush1.msra.mxu0 %v4110
  %v4112 = vand.u32 %v23, 4294901760
  %v4113 = vsub.f32 %v23, %v4112
  %v4114 = vand.u32 %v4113, 4294901760
  %v4115 = vsub.f32 %v4113, %v4114
  %v4116 = vand.u32 %v4115, 4294901760
  %4117 = vmatprep.subr.mxu0 %v4116
  %v4118 = vand.u32 %v22, 4294901760
  %v4119 = vsub.f32 %v22, %v4118
  %v4120 = vand.u32 %v4119, 4294901760
  %v4121 = vsub.f32 %v4119, %v4120
  %v4122 = vand.u32 %v4121, 4294901760
  %4123 = vmatpush1.msra.mxu0 %v4122
  %v4124 = vand.u32 %v21, 4294901760
  %v4125 = vsub.f32 %v21, %v4124
  %v4126 = vand.u32 %v4125, 4294901760
  %v4127 = vsub.f32 %v4125, %v4126
  %v4128 = vand.u32 %v4127, 4294901760
  %4129 = vmatprep.subr.mxu0 %v4128
  %v4130 = vand.u32 %v20, 4294901760
  %v4131 = vsub.f32 %v20, %v4130
  %v4132 = vand.u32 %v4131, 4294901760
  %v4133 = vsub.f32 %v4131, %v4132
  %v4134 = vand.u32 %v4133, 4294901760
  %4135 = vmatpush1.msra.mxu0 %v4134
  %4136 = vmatprep.subr.mxu0 0.0
  %4137 = vmatpush2.msra.mxu0 0.0
  %4138 = vmatprep.subr.mxu0 0.0
  %4139 = vmatpush2.msra.mxu0 0.0
  %4140 = vmatprep.subr.mxu0 0.0
  %4141 = vmatpush2.msra.mxu0 0.0
  %4142 = vmatprep.subr.mxu0 0.0
  %4143 = vmatpush2.msra.mxu0 0.0
  %4144 = vmatprep.subr.mxu0 0.0
  %4145 = vmatpush2.msra.mxu0 0.0
  %4146 = vmatprep.subr.mxu0 0.0
  %4147 = vmatpush2.msra.mxu0 0.0
  %4148 = vmatprep.subr.mxu0 0.0
  %4149 = vmatpush2.msra.mxu0 0.0
  %4150 = vmatprep.subr.mxu0 0.0
  %4151 = vmatpush2.msra.mxu0 0.0
  %4152 = vmatprep.subr.mxu0 0.0
  %4153 = vmatpush2.msra.mxu0 0.0
  %4154 = vmatprep.subr.mxu0 0.0
  %4155 = vmatpush2.msra.mxu0 0.0
  %4156 = vmatprep.subr.mxu0 0.0
  %4157 = vmatpush2.msra.mxu0 0.0
  %4158 = vmatprep.subr.mxu0 0.0
  %4159 = vmatpush2.msra.mxu0 0.0
  %4160 = vmatprep.subr.mxu0 0.0
  %4161 = vmatpush2.msra.mxu0 0.0
  %4162 = vmatprep.subr.mxu0 0.0
  %4163 = vmatpush2.msra.mxu0 0.0
  %4164 = vmatprep.subr.mxu0 0.0
  %4165 = vmatpush2.msra.mxu0 0.0
  %4166 = vmatprep.subr.mxu0 0.0
  %4167 = vmatpush2.msra.mxu0 0.0
  %4168 = vmatprep.mubr.f32.mxu0 0.0
  %v4169 = vand.u32 %v3930, 4294901760
  %4170 = vmatmul.mubr.f32.gmra.mxu0 %v4169
  %v4171 = vpop.f32.mrf.mxu0
  %v4172 = vadd.f32 %v4020, %v4171
  %v4173 = vpop.f32.mrf.mxu0
  %v4174 = vadd.f32 %v4022, %v4173
  %4175 = vdwg.mxu0
  %4176 = vmatprep.subr.mxu0 0.0
  %4177 = vmatpush1.msra.mxu0 0.0
  %4178 = vmatprep.subr.mxu0 0.0
  %4179 = vmatpush1.msra.mxu0 0.0
  %4180 = vmatprep.subr.mxu0 0.0
  %4181 = vmatpush1.msra.mxu0 0.0
  %4182 = vmatprep.subr.mxu0 0.0
  %4183 = vmatpush1.msra.mxu0 0.0
  %4184 = vmatprep.subr.mxu0 0.0
  %4185 = vmatpush1.msra.mxu0 0.0
  %4186 = vmatprep.subr.mxu0 0.0
  %4187 = vmatpush1.msra.mxu0 0.0
  %4188 = vmatprep.subr.mxu0 0.0
  %4189 = vmatpush1.msra.mxu0 0.0
  %4190 = vmatprep.subr.mxu0 0.0
  %4191 = vmatpush1.msra.mxu0 0.0
  %v4192 = vand.u32 %v35, 4294901760
  %v4193 = vsub.f32 %v35, %v4192
  %4194 = vmatprep.subr.mxu0 %v4193
  %v4195 = vand.u32 %v34, 4294901760
  %v4196 = vsub.f32 %v34, %v4195
  %4197 = vmatpush1.msra.mxu0 %v4196
  %v4198 = vand.u32 %v33, 4294901760
  %v4199 = vsub.f32 %v33, %v4198
  %4200 = vmatprep.subr.mxu0 %v4199
  %v4201 = vand.u32 %v32, 4294901760
  %v4202 = vsub.f32 %v32, %v4201
  %4203 = vmatpush1.msra.mxu0 %v4202
  %v4204 = vand.u32 %v31, 4294901760
  %v4205 = vsub.f32 %v31, %v4204
  %4206 = vmatprep.subr.mxu0 %v4205
  %v4207 = vand.u32 %v30, 4294901760
  %v4208 = vsub.f32 %v30, %v4207
  %4209 = vmatpush1.msra.mxu0 %v4208
  %v4210 = vand.u32 %v29, 4294901760
  %v4211 = vsub.f32 %v29, %v4210
  %4212 = vmatprep.subr.mxu0 %v4211
  %v4213 = vand.u32 %v28, 4294901760
  %v4214 = vsub.f32 %v28, %v4213
  %4215 = vmatpush1.msra.mxu0 %v4214
  %v4216 = vand.u32 %v27, 4294901760
  %v4217 = vsub.f32 %v27, %v4216
  %4218 = vmatprep.subr.mxu0 %v4217
  %v4219 = vand.u32 %v26, 4294901760
  %v4220 = vsub.f32 %v26, %v4219
  %4221 = vmatpush1.msra.mxu0 %v4220
  %v4222 = vand.u32 %v25, 4294901760
  %v4223 = vsub.f32 %v25, %v4222
  %4224 = vmatprep.subr.mxu0 %v4223
  %v4225 = vand.u32 %v24, 4294901760
  %v4226 = vsub.f32 %v24, %v4225
  %4227 = vmatpush1.msra.mxu0 %v4226
  %v4228 = vand.u32 %v23, 4294901760
  %v4229 = vsub.f32 %v23, %v4228
  %4230 = vmatprep.subr.mxu0 %v4229
  %v4231 = vand.u32 %v22, 4294901760
  %v4232 = vsub.f32 %v22, %v4231
  %4233 = vmatpush1.msra.mxu0 %v4232
  %v4234 = vand.u32 %v21, 4294901760
  %v4235 = vsub.f32 %v21, %v4234
  %4236 = vmatprep.subr.mxu0 %v4235
  %v4237 = vand.u32 %v20, 4294901760
  %v4238 = vsub.f32 %v20, %v4237
  %4239 = vmatpush1.msra.mxu0 %v4238
  %4240 = vmatprep.subr.mxu0 0.0
  %4241 = vmatpush2.msra.mxu0 0.0
  %4242 = vmatprep.subr.mxu0 0.0
  %4243 = vmatpush2.msra.mxu0 0.0
  %4244 = vmatprep.subr.mxu0 0.0
  %4245 = vmatpush2.msra.mxu0 0.0
  %4246 = vmatprep.subr.mxu0 0.0
  %4247 = vmatpush2.msra.mxu0 0.0
  %4248 = vmatprep.subr.mxu0 0.0
  %4249 = vmatpush2.msra.mxu0 0.0
  %4250 = vmatprep.subr.mxu0 0.0
  %4251 = vmatpush2.msra.mxu0 0.0
  %4252 = vmatprep.subr.mxu0 0.0
  %4253 = vmatpush2.msra.mxu0 0.0
  %4254 = vmatprep.subr.mxu0 0.0
  %4255 = vmatpush2.msra.mxu0 0.0
  %4256 = vmatprep.subr.mxu0 0.0
  %4257 = vmatpush2.msra.mxu0 0.0
  %4258 = vmatprep.subr.mxu0 0.0
  %4259 = vmatpush2.msra.mxu0 0.0
  %4260 = vmatprep.subr.mxu0 0.0
  %4261 = vmatpush2.msra.mxu0 0.0
  %4262 = vmatprep.subr.mxu0 0.0
  %4263 = vmatpush2.msra.mxu0 0.0
  %4264 = vmatprep.subr.mxu0 0.0
  %4265 = vmatpush2.msra.mxu0 0.0
  %4266 = vmatprep.subr.mxu0 0.0
  %4267 = vmatpush2.msra.mxu0 0.0
  %4268 = vmatprep.subr.mxu0 0.0
  %4269 = vmatpush2.msra.mxu0 0.0
  %4270 = vmatprep.subr.mxu0 0.0
  %4271 = vmatpush2.msra.mxu0 0.0
  %4272 = vmatprep.mubr.f32.mxu0 0.0
  %v4273 = vand.u32 %v3930, 4294901760
  %v4274 = vsub.f32 %v3930, %v4273
  %4275 = vmatmul.mubr.f32.gmra.mxu0 %v4274
  %v4276 = vpop.f32.mrf.mxu0
  %v4277 = vadd.f32 %v4172, %v4276
  %v4278 = vpop.f32.mrf.mxu0
  %v4279 = vadd.f32 %v4174, %v4278
  %4280 = vdwg.mxu0
  %4281 = vmatprep.subr.mxu0 0.0
  %4282 = vmatpush1.msra.mxu0 0.0
  %4283 = vmatprep.subr.mxu0 0.0
  %4284 = vmatpush1.msra.mxu0 0.0
  %4285 = vmatprep.subr.mxu0 0.0
  %4286 = vmatpush1.msra.mxu0 0.0
  %4287 = vmatprep.subr.mxu0 0.0
  %4288 = vmatpush1.msra.mxu0 0.0
  %4289 = vmatprep.subr.mxu0 0.0
  %4290 = vmatpush1.msra.mxu0 0.0
  %4291 = vmatprep.subr.mxu0 0.0
  %4292 = vmatpush1.msra.mxu0 0.0
  %4293 = vmatprep.subr.mxu0 0.0
  %4294 = vmatpush1.msra.mxu0 0.0
  %4295 = vmatprep.subr.mxu0 0.0
  %4296 = vmatpush1.msra.mxu0 0.0
  %v4297 = vand.u32 %v35, 4294901760
  %4298 = vmatprep.subr.mxu0 %v4297
  %v4299 = vand.u32 %v34, 4294901760
  %4300 = vmatpush1.msra.mxu0 %v4299
  %v4301 = vand.u32 %v33, 4294901760
  %4302 = vmatprep.subr.mxu0 %v4301
  %v4303 = vand.u32 %v32, 4294901760
  %4304 = vmatpush1.msra.mxu0 %v4303
  %v4305 = vand.u32 %v31, 4294901760
  %4306 = vmatprep.subr.mxu0 %v4305
  %v4307 = vand.u32 %v30, 4294901760
  %4308 = vmatpush1.msra.mxu0 %v4307
  %v4309 = vand.u32 %v29, 4294901760
  %4310 = vmatprep.subr.mxu0 %v4309
  %v4311 = vand.u32 %v28, 4294901760
  %4312 = vmatpush1.msra.mxu0 %v4311
  %v4313 = vand.u32 %v27, 4294901760
  %4314 = vmatprep.subr.mxu0 %v4313
  %v4315 = vand.u32 %v26, 4294901760
  %4316 = vmatpush1.msra.mxu0 %v4315
  %v4317 = vand.u32 %v25, 4294901760
  %4318 = vmatprep.subr.mxu0 %v4317
  %v4319 = vand.u32 %v24, 4294901760
  %4320 = vmatpush1.msra.mxu0 %v4319
  %v4321 = vand.u32 %v23, 4294901760
  %4322 = vmatprep.subr.mxu0 %v4321
  %v4323 = vand.u32 %v22, 4294901760
  %4324 = vmatpush1.msra.mxu0 %v4323
  %v4325 = vand.u32 %v21, 4294901760
  %4326 = vmatprep.subr.mxu0 %v4325
  %v4327 = vand.u32 %v20, 4294901760
  %4328 = vmatpush1.msra.mxu0 %v4327
  %4329 = vmatprep.subr.mxu0 0.0
  %4330 = vmatpush2.msra.mxu0 0.0
  %4331 = vmatprep.subr.mxu0 0.0
  %4332 = vmatpush2.msra.mxu0 0.0
  %4333 = vmatprep.subr.mxu0 0.0
  %4334 = vmatpush2.msra.mxu0 0.0
  %4335 = vmatprep.subr.mxu0 0.0
  %4336 = vmatpush2.msra.mxu0 0.0
  %4337 = vmatprep.subr.mxu0 0.0
  %4338 = vmatpush2.msra.mxu0 0.0
  %4339 = vmatprep.subr.mxu0 0.0
  %4340 = vmatpush2.msra.mxu0 0.0
  %4341 = vmatprep.subr.mxu0 0.0
  %4342 = vmatpush2.msra.mxu0 0.0
  %4343 = vmatprep.subr.mxu0 0.0
  %4344 = vmatpush2.msra.mxu0 0.0
  %4345 = vmatprep.subr.mxu0 0.0
  %4346 = vmatpush2.msra.mxu0 0.0
  %4347 = vmatprep.subr.mxu0 0.0
  %4348 = vmatpush2.msra.mxu0 0.0
  %4349 = vmatprep.subr.mxu0 0.0
  %4350 = vmatpush2.msra.mxu0 0.0
  %4351 = vmatprep.subr.mxu0 0.0
  %4352 = vmatpush2.msra.mxu0 0.0
  %4353 = vmatprep.subr.mxu0 0.0
  %4354 = vmatpush2.msra.mxu0 0.0
  %4355 = vmatprep.subr.mxu0 0.0
  %4356 = vmatpush2.msra.mxu0 0.0
  %4357 = vmatprep.subr.mxu0 0.0
  %4358 = vmatpush2.msra.mxu0 0.0
  %4359 = vmatprep.subr.mxu0 0.0
  %4360 = vmatpush2.msra.mxu0 0.0
  %4361 = vmatprep.mubr.f32.mxu0 0.0
  %v4362 = vand.u32 %v3930, 4294901760
  %v4363 = vsub.f32 %v3930, %v4362
  %v4364 = vand.u32 %v4363, 4294901760
  %4365 = vmatmul.mubr.f32.gmra.mxu0 %v4364
  %v4366 = vpop.f32.mrf.mxu0
  %v4367 = vadd.f32 %v4277, %v4366
  %v4368 = vpop.f32.mrf.mxu0
  %v4369 = vadd.f32 %v4279, %v4368
  %4370 = vdwg.mxu0
  %4371 = vmatprep.subr.mxu0 0.0
  %4372 = vmatpush1.msra.mxu0 0.0
  %4373 = vmatprep.subr.mxu0 0.0
  %4374 = vmatpush1.msra.mxu0 0.0
  %4375 = vmatprep.subr.mxu0 0.0
  %4376 = vmatpush1.msra.mxu0 0.0
  %4377 = vmatprep.subr.mxu0 0.0
  %4378 = vmatpush1.msra.mxu0 0.0
  %4379 = vmatprep.subr.mxu0 0.0
  %4380 = vmatpush1.msra.mxu0 0.0
  %4381 = vmatprep.subr.mxu0 0.0
  %4382 = vmatpush1.msra.mxu0 0.0
  %4383 = vmatprep.subr.mxu0 0.0
  %4384 = vmatpush1.msra.mxu0 0.0
  %4385 = vmatprep.subr.mxu0 0.0
  %4386 = vmatpush1.msra.mxu0 0.0
  %v4387 = vand.u32 %v35, 4294901760
  %v4388 = vsub.f32 %v35, %v4387
  %v4389 = vand.u32 %v4388, 4294901760
  %4390 = vmatprep.subr.mxu0 %v4389
  %v4391 = vand.u32 %v34, 4294901760
  %v4392 = vsub.f32 %v34, %v4391
  %v4393 = vand.u32 %v4392, 4294901760
  %4394 = vmatpush1.msra.mxu0 %v4393
  %v4395 = vand.u32 %v33, 4294901760
  %v4396 = vsub.f32 %v33, %v4395
  %v4397 = vand.u32 %v4396, 4294901760
  %4398 = vmatprep.subr.mxu0 %v4397
  %v4399 = vand.u32 %v32, 4294901760
  %v4400 = vsub.f32 %v32, %v4399
  %v4401 = vand.u32 %v4400, 4294901760
  %4402 = vmatpush1.msra.mxu0 %v4401
  %v4403 = vand.u32 %v31, 4294901760
  %v4404 = vsub.f32 %v31, %v4403
  %v4405 = vand.u32 %v4404, 4294901760
  %4406 = vmatprep.subr.mxu0 %v4405
  %v4407 = vand.u32 %v30, 4294901760
  %v4408 = vsub.f32 %v30, %v4407
  %v4409 = vand.u32 %v4408, 4294901760
  %4410 = vmatpush1.msra.mxu0 %v4409
  %v4411 = vand.u32 %v29, 4294901760
  %v4412 = vsub.f32 %v29, %v4411
  %v4413 = vand.u32 %v4412, 4294901760
  %4414 = vmatprep.subr.mxu0 %v4413
  %v4415 = vand.u32 %v28, 4294901760
  %v4416 = vsub.f32 %v28, %v4415
  %v4417 = vand.u32 %v4416, 4294901760
  %4418 = vmatpush1.msra.mxu0 %v4417
  %v4419 = vand.u32 %v27, 4294901760
  %v4420 = vsub.f32 %v27, %v4419
  %v4421 = vand.u32 %v4420, 4294901760
  %4422 = vmatprep.subr.mxu0 %v4421
  %v4423 = vand.u32 %v26, 4294901760
  %v4424 = vsub.f32 %v26, %v4423
  %v4425 = vand.u32 %v4424, 4294901760
  %4426 = vmatpush1.msra.mxu0 %v4425
  %v4427 = vand.u32 %v25, 4294901760
  %v4428 = vsub.f32 %v25, %v4427
  %v4429 = vand.u32 %v4428, 4294901760
  %4430 = vmatprep.subr.mxu0 %v4429
  %v4431 = vand.u32 %v24, 4294901760
  %v4432 = vsub.f32 %v24, %v4431
  %v4433 = vand.u32 %v4432, 4294901760
  %4434 = vmatpush1.msra.mxu0 %v4433
  %v4435 = vand.u32 %v23, 4294901760
  %v4436 = vsub.f32 %v23, %v4435
  %v4437 = vand.u32 %v4436, 4294901760
  %4438 = vmatprep.subr.mxu0 %v4437
  %v4439 = vand.u32 %v22, 4294901760
  %v4440 = vsub.f32 %v22, %v4439
  %v4441 = vand.u32 %v4440, 4294901760
  %4442 = vmatpush1.msra.mxu0 %v4441
  %v4443 = vand.u32 %v21, 4294901760
  %v4444 = vsub.f32 %v21, %v4443
  %v4445 = vand.u32 %v4444, 4294901760
  %4446 = vmatprep.subr.mxu0 %v4445
  %v4447 = vand.u32 %v20, 4294901760
  %v4448 = vsub.f32 %v20, %v4447
  %v4449 = vand.u32 %v4448, 4294901760
  %4450 = vmatpush1.msra.mxu0 %v4449
  %4451 = vmatprep.subr.mxu0 0.0
  %4452 = vmatpush2.msra.mxu0 0.0
  %4453 = vmatprep.subr.mxu0 0.0
  %4454 = vmatpush2.msra.mxu0 0.0
  %4455 = vmatprep.subr.mxu0 0.0
  %4456 = vmatpush2.msra.mxu0 0.0
  %4457 = vmatprep.subr.mxu0 0.0
  %4458 = vmatpush2.msra.mxu0 0.0
  %4459 = vmatprep.subr.mxu0 0.0
  %4460 = vmatpush2.msra.mxu0 0.0
  %4461 = vmatprep.subr.mxu0 0.0
  %4462 = vmatpush2.msra.mxu0 0.0
  %4463 = vmatprep.subr.mxu0 0.0
  %4464 = vmatpush2.msra.mxu0 0.0
  %4465 = vmatprep.subr.mxu0 0.0
  %4466 = vmatpush2.msra.mxu0 0.0
  %4467 = vmatprep.subr.mxu0 0.0
  %4468 = vmatpush2.msra.mxu0 0.0
  %4469 = vmatprep.subr.mxu0 0.0
  %4470 = vmatpush2.msra.mxu0 0.0
  %4471 = vmatprep.subr.mxu0 0.0
  %4472 = vmatpush2.msra.mxu0 0.0
  %4473 = vmatprep.subr.mxu0 0.0
  %4474 = vmatpush2.msra.mxu0 0.0
  %4475 = vmatprep.subr.mxu0 0.0
  %4476 = vmatpush2.msra.mxu0 0.0
  %4477 = vmatprep.subr.mxu0 0.0
  %4478 = vmatpush2.msra.mxu0 0.0
  %4479 = vmatprep.subr.mxu0 0.0
  %4480 = vmatpush2.msra.mxu0 0.0
  %4481 = vmatprep.subr.mxu0 0.0
  %4482 = vmatpush2.msra.mxu0 0.0
  %4483 = vmatprep.mubr.f32.mxu0 0.0
  %v4484 = vand.u32 %v3930, 4294901760
  %4485 = vmatmul.mubr.f32.gmra.mxu0 %v4484
  %v4486 = vpop.f32.mrf.mxu0
  %v4487 = vadd.f32 %v4367, %v4486
  %v4488 = vpop.f32.mrf.mxu0
  %v4489 = vadd.f32 %v4369, %v4488
  %4490 = vdwg.mxu0
  %4491 = vmatprep.subr.mxu0 0.0
  %4492 = vmatpush1.msra.mxu0 0.0
  %4493 = vmatprep.subr.mxu0 0.0
  %4494 = vmatpush1.msra.mxu0 0.0
  %4495 = vmatprep.subr.mxu0 0.0
  %4496 = vmatpush1.msra.mxu0 0.0
  %4497 = vmatprep.subr.mxu0 0.0
  %4498 = vmatpush1.msra.mxu0 0.0
  %4499 = vmatprep.subr.mxu0 0.0
  %4500 = vmatpush1.msra.mxu0 0.0
  %4501 = vmatprep.subr.mxu0 0.0
  %4502 = vmatpush1.msra.mxu0 0.0
  %4503 = vmatprep.subr.mxu0 0.0
  %4504 = vmatpush1.msra.mxu0 0.0
  %4505 = vmatprep.subr.mxu0 0.0
  %4506 = vmatpush1.msra.mxu0 0.0
  %v4507 = vand.u32 %v35, 4294901760
  %4508 = vmatprep.subr.mxu0 %v4507
  %v4509 = vand.u32 %v34, 4294901760
  %4510 = vmatpush1.msra.mxu0 %v4509
  %v4511 = vand.u32 %v33, 4294901760
  %4512 = vmatprep.subr.mxu0 %v4511
  %v4513 = vand.u32 %v32, 4294901760
  %4514 = vmatpush1.msra.mxu0 %v4513
  %v4515 = vand.u32 %v31, 4294901760
  %4516 = vmatprep.subr.mxu0 %v4515
  %v4517 = vand.u32 %v30, 4294901760
  %4518 = vmatpush1.msra.mxu0 %v4517
  %v4519 = vand.u32 %v29, 4294901760
  %4520 = vmatprep.subr.mxu0 %v4519
  %v4521 = vand.u32 %v28, 4294901760
  %4522 = vmatpush1.msra.mxu0 %v4521
  %v4523 = vand.u32 %v27, 4294901760
  %4524 = vmatprep.subr.mxu0 %v4523
  %v4525 = vand.u32 %v26, 4294901760
  %4526 = vmatpush1.msra.mxu0 %v4525
  %v4527 = vand.u32 %v25, 4294901760
  %4528 = vmatprep.subr.mxu0 %v4527
  %v4529 = vand.u32 %v24, 4294901760
  %4530 = vmatpush1.msra.mxu0 %v4529
  %v4531 = vand.u32 %v23, 4294901760
  %4532 = vmatprep.subr.mxu0 %v4531
  %v4533 = vand.u32 %v22, 4294901760
  %4534 = vmatpush1.msra.mxu0 %v4533
  %v4535 = vand.u32 %v21, 4294901760
  %4536 = vmatprep.subr.mxu0 %v4535
  %v4537 = vand.u32 %v20, 4294901760
  %4538 = vmatpush1.msra.mxu0 %v4537
  %4539 = vmatprep.subr.mxu0 0.0
  %4540 = vmatpush2.msra.mxu0 0.0
  %4541 = vmatprep.subr.mxu0 0.0
  %4542 = vmatpush2.msra.mxu0 0.0
  %4543 = vmatprep.subr.mxu0 0.0
  %4544 = vmatpush2.msra.mxu0 0.0
  %4545 = vmatprep.subr.mxu0 0.0
  %4546 = vmatpush2.msra.mxu0 0.0
  %4547 = vmatprep.subr.mxu0 0.0
  %4548 = vmatpush2.msra.mxu0 0.0
  %4549 = vmatprep.subr.mxu0 0.0
  %4550 = vmatpush2.msra.mxu0 0.0
  %4551 = vmatprep.subr.mxu0 0.0
  %4552 = vmatpush2.msra.mxu0 0.0
  %4553 = vmatprep.subr.mxu0 0.0
  %4554 = vmatpush2.msra.mxu0 0.0
  %4555 = vmatprep.subr.mxu0 0.0
  %4556 = vmatpush2.msra.mxu0 0.0
  %4557 = vmatprep.subr.mxu0 0.0
  %4558 = vmatpush2.msra.mxu0 0.0
  %4559 = vmatprep.subr.mxu0 0.0
  %4560 = vmatpush2.msra.mxu0 0.0
  %4561 = vmatprep.subr.mxu0 0.0
  %4562 = vmatpush2.msra.mxu0 0.0
  %4563 = vmatprep.subr.mxu0 0.0
  %4564 = vmatpush2.msra.mxu0 0.0
  %4565 = vmatprep.subr.mxu0 0.0
  %4566 = vmatpush2.msra.mxu0 0.0
  %4567 = vmatprep.subr.mxu0 0.0
  %4568 = vmatpush2.msra.mxu0 0.0
  %4569 = vmatprep.subr.mxu0 0.0
  %4570 = vmatpush2.msra.mxu0 0.0
  %4571 = vmatprep.mubr.f32.mxu0 0.0
  %v4572 = vand.u32 %v3930, 4294901760
  %4573 = vmatmul.mubr.f32.gmra.mxu0 %v4572
  %v4574 = vpop.f32.mrf.mxu0
  %v4575 = vadd.f32 %v4487, %v4574
  %v4576 = vpop.f32.mrf.mxu0
  %v4577 = vadd.f32 %v4489, %v4576
  %4578 = vdwg.mxu0
  %v4579 = vmul.f32 %v4575, 0.5
  %v4580 = vtanh.pop %v4579
  %v4581 = vmul.f32 %v4580, 0.5
  %v4582 = vadd.f32 %v4581, 0.5
  %v4583 = vtanh.pop %v4577
  %v4584 = vmul.f32 %v4577, 0.5
  %v4585 = vtanh.pop %v4584
  %v4586 = vmul.f32 %v4585, 0.5
  %v4587 = vadd.f32 %v4586, 0.5
  %v4588 = vmul.f32 %v4582, %v3454
  %v4589 = vmul.f32 %v4582, %v4583
  %4591 = vrot.lane.b32.xlu0 %v4589, 64
  %v4592 = vpop.permute.xlu0 %4591
  %v4594 = vadd.f32 %v4588, %v4592
  %v4595 = vtanh.pop %v4594
  %v4596 = vmul.f32 %v4587, %v4595
  %s4597 = scalar_lea.vmem %s0, 32
  %v4598 = vld [vmem:[%s4597] sm:$0xff]
  %v4600 = vsel %vm39, %v4598, 0
  %4602 = vmatprep.subr.mxu0 0.0
  %4603 = vmatpush1.msra.mxu0 0.0
  %4604 = vmatprep.subr.mxu0 0.0
  %4605 = vmatpush1.msra.mxu0 0.0
  %4606 = vmatprep.subr.mxu0 0.0
  %4607 = vmatpush1.msra.mxu0 0.0
  %4608 = vmatprep.subr.mxu0 0.0
  %4609 = vmatpush1.msra.mxu0 0.0
  %4610 = vmatprep.subr.mxu0 0.0
  %4611 = vmatpush1.msra.mxu0 0.0
  %4612 = vmatprep.subr.mxu0 0.0
  %4613 = vmatpush1.msra.mxu0 0.0
  %4614 = vmatprep.subr.mxu0 0.0
  %4615 = vmatpush1.msra.mxu0 0.0
  %4616 = vmatprep.subr.mxu0 0.0
  %4617 = vmatpush1.msra.mxu0 0.0
  %4618 = vmatprep.subr.mxu0 0.0
  %4619 = vmatpush1.msra.mxu0 0.0
  %4620 = vmatprep.subr.mxu0 0.0
  %4621 = vmatpush1.msra.mxu0 0.0
  %4622 = vmatprep.subr.mxu0 0.0
  %4623 = vmatpush1.msra.mxu0 0.0
  %4624 = vmatprep.subr.mxu0 0.0
  %4625 = vmatpush1.msra.mxu0 0.0
  %4626 = vmatprep.subr.mxu0 0.0
  %4627 = vmatpush1.msra.mxu0 0.0
  %4628 = vmatprep.subr.mxu0 0.0
  %4629 = vmatpush1.msra.mxu0 0.0
  %4630 = vmatprep.subr.mxu0 0.0
  %4631 = vmatpush1.msra.mxu0 0.0
  %v4632 = vand.u32 %v38, 4294901760
  %4633 = vmatprep.subr.mxu0 %v4632
  %v4634 = vand.u32 %v37, 4294901760
  %4635 = vmatpush1.msra.mxu0 %v4634
  %4636 = vmatprep.subr.mxu0 0.0
  %4637 = vmatpush2.msra.mxu0 0.0
  %4638 = vmatprep.subr.mxu0 0.0
  %4639 = vmatpush2.msra.mxu0 0.0
  %4640 = vmatprep.subr.mxu0 0.0
  %4641 = vmatpush2.msra.mxu0 0.0
  %4642 = vmatprep.subr.mxu0 0.0
  %4643 = vmatpush2.msra.mxu0 0.0
  %4644 = vmatprep.subr.mxu0 0.0
  %4645 = vmatpush2.msra.mxu0 0.0
  %4646 = vmatprep.subr.mxu0 0.0
  %4647 = vmatpush2.msra.mxu0 0.0
  %4648 = vmatprep.subr.mxu0 0.0
  %4649 = vmatpush2.msra.mxu0 0.0
  %4650 = vmatprep.subr.mxu0 0.0
  %4651 = vmatpush2.msra.mxu0 0.0
  %4652 = vmatprep.subr.mxu0 0.0
  %4653 = vmatpush2.msra.mxu0 0.0
  %4654 = vmatprep.subr.mxu0 0.0
  %4655 = vmatpush2.msra.mxu0 0.0
  %4656 = vmatprep.subr.mxu0 0.0
  %4657 = vmatpush2.msra.mxu0 0.0
  %4658 = vmatprep.subr.mxu0 0.0
  %4659 = vmatpush2.msra.mxu0 0.0
  %4660 = vmatprep.subr.mxu0 0.0
  %4661 = vmatpush2.msra.mxu0 0.0
  %4662 = vmatprep.subr.mxu0 0.0
  %4663 = vmatpush2.msra.mxu0 0.0
  %4664 = vmatprep.subr.mxu0 0.0
  %4665 = vmatpush2.msra.mxu0 0.0
  %4666 = vmatprep.subr.mxu0 0.0
  %4667 = vmatpush2.msra.mxu0 0.0
  %4668 = vmatprep.mubr.f32.mxu0 0.0
  %v4669 = vand.u32 %v4600, 4294901760
  %v4670 = vsub.f32 %v4600, %v4669
  %v4671 = vand.u32 %v4670, 4294901760
  %v4672 = vsub.f32 %v4670, %v4671
  %v4673 = vand.u32 %v4672, 4294901760
  %4674 = vmatmul.mubr.f32.gmra.mxu0 %v4673
  %v4675 = vpop.f32.mrf.mxu0
  %v4676 = vadd.f32 0.0, %v4675
  %v4677 = vpop.f32.mrf.mxu0
  %v4678 = vadd.f32 0.0, %v4677
  %4679 = vdwg.mxu0
  %4680 = vmatprep.subr.mxu0 0.0
  %4681 = vmatpush1.msra.mxu0 0.0
  %4682 = vmatprep.subr.mxu0 0.0
  %4683 = vmatpush1.msra.mxu0 0.0
  %4684 = vmatprep.subr.mxu0 0.0
  %4685 = vmatpush1.msra.mxu0 0.0
  %4686 = vmatprep.subr.mxu0 0.0
  %4687 = vmatpush1.msra.mxu0 0.0
  %4688 = vmatprep.subr.mxu0 0.0
  %4689 = vmatpush1.msra.mxu0 0.0
  %4690 = vmatprep.subr.mxu0 0.0
  %4691 = vmatpush1.msra.mxu0 0.0
  %4692 = vmatprep.subr.mxu0 0.0
  %4693 = vmatpush1.msra.mxu0 0.0
  %4694 = vmatprep.subr.mxu0 0.0
  %4695 = vmatpush1.msra.mxu0 0.0
  %4696 = vmatprep.subr.mxu0 0.0
  %4697 = vmatpush1.msra.mxu0 0.0
  %4698 = vmatprep.subr.mxu0 0.0
  %4699 = vmatpush1.msra.mxu0 0.0
  %4700 = vmatprep.subr.mxu0 0.0
  %4701 = vmatpush1.msra.mxu0 0.0
  %4702 = vmatprep.subr.mxu0 0.0
  %4703 = vmatpush1.msra.mxu0 0.0
  %4704 = vmatprep.subr.mxu0 0.0
  %4705 = vmatpush1.msra.mxu0 0.0
  %4706 = vmatprep.subr.mxu0 0.0
  %4707 = vmatpush1.msra.mxu0 0.0
  %4708 = vmatprep.subr.mxu0 0.0
  %4709 = vmatpush1.msra.mxu0 0.0
  %v4710 = vand.u32 %v38, 4294901760
  %v4711 = vsub.f32 %v38, %v4710
  %v4712 = vand.u32 %v4711, 4294901760
  %v4713 = vsub.f32 %v4711, %v4712
  %v4714 = vand.u32 %v4713, 4294901760
  %4715 = vmatprep.subr.mxu0 %v4714
  %v4716 = vand.u32 %v37, 4294901760
  %v4717 = vsub.f32 %v37, %v4716
  %v4718 = vand.u32 %v4717, 4294901760
  %v4719 = vsub.f32 %v4717, %v4718
  %v4720 = vand.u32 %v4719, 4294901760
  %4721 = vmatpush1.msra.mxu0 %v4720
  %4722 = vmatprep.subr.mxu0 0.0
  %4723 = vmatpush2.msra.mxu0 0.0
  %4724 = vmatprep.subr.mxu0 0.0
  %4725 = vmatpush2.msra.mxu0 0.0
  %4726 = vmatprep.subr.mxu0 0.0
  %4727 = vmatpush2.msra.mxu0 0.0
  %4728 = vmatprep.subr.mxu0 0.0
  %4729 = vmatpush2.msra.mxu0 0.0
  %4730 = vmatprep.subr.mxu0 0.0
  %4731 = vmatpush2.msra.mxu0 0.0
  %4732 = vmatprep.subr.mxu0 0.0
  %4733 = vmatpush2.msra.mxu0 0.0
  %4734 = vmatprep.subr.mxu0 0.0
  %4735 = vmatpush2.msra.mxu0 0.0
  %4736 = vmatprep.subr.mxu0 0.0
  %4737 = vmatpush2.msra.mxu0 0.0
  %4738 = vmatprep.subr.mxu0 0.0
  %4739 = vmatpush2.msra.mxu0 0.0
  %4740 = vmatprep.subr.mxu0 0.0
  %4741 = vmatpush2.msra.mxu0 0.0
  %4742 = vmatprep.subr.mxu0 0.0
  %4743 = vmatpush2.msra.mxu0 0.0
  %4744 = vmatprep.subr.mxu0 0.0
  %4745 = vmatpush2.msra.mxu0 0.0
  %4746 = vmatprep.subr.mxu0 0.0
  %4747 = vmatpush2.msra.mxu0 0.0
  %4748 = vmatprep.subr.mxu0 0.0
  %4749 = vmatpush2.msra.mxu0 0.0
  %4750 = vmatprep.subr.mxu0 0.0
  %4751 = vmatpush2.msra.mxu0 0.0
  %4752 = vmatprep.subr.mxu0 0.0
  %4753 = vmatpush2.msra.mxu0 0.0
  %4754 = vmatprep.mubr.f32.mxu0 0.0
  %v4755 = vand.u32 %v4600, 4294901760
  %4756 = vmatmul.mubr.f32.gmra.mxu0 %v4755
  %v4757 = vpop.f32.mrf.mxu0
  %v4758 = vadd.f32 %v4676, %v4757
  %v4759 = vpop.f32.mrf.mxu0
  %v4760 = vadd.f32 %v4678, %v4759
  %4761 = vdwg.mxu0
  %4762 = vmatprep.subr.mxu0 0.0
  %4763 = vmatpush1.msra.mxu0 0.0
  %4764 = vmatprep.subr.mxu0 0.0
  %4765 = vmatpush1.msra.mxu0 0.0
  %4766 = vmatprep.subr.mxu0 0.0
  %4767 = vmatpush1.msra.mxu0 0.0
  %4768 = vmatprep.subr.mxu0 0.0
  %4769 = vmatpush1.msra.mxu0 0.0
  %4770 = vmatprep.subr.mxu0 0.0
  %4771 = vmatpush1.msra.mxu0 0.0
  %4772 = vmatprep.subr.mxu0 0.0
  %4773 = vmatpush1.msra.mxu0 0.0
  %4774 = vmatprep.subr.mxu0 0.0
  %4775 = vmatpush1.msra.mxu0 0.0
  %4776 = vmatprep.subr.mxu0 0.0
  %4777 = vmatpush1.msra.mxu0 0.0
  %4778 = vmatprep.subr.mxu0 0.0
  %4779 = vmatpush1.msra.mxu0 0.0
  %4780 = vmatprep.subr.mxu0 0.0
  %4781 = vmatpush1.msra.mxu0 0.0
  %4782 = vmatprep.subr.mxu0 0.0
  %4783 = vmatpush1.msra.mxu0 0.0
  %4784 = vmatprep.subr.mxu0 0.0
  %4785 = vmatpush1.msra.mxu0 0.0
  %4786 = vmatprep.subr.mxu0 0.0
  %4787 = vmatpush1.msra.mxu0 0.0
  %4788 = vmatprep.subr.mxu0 0.0
  %4789 = vmatpush1.msra.mxu0 0.0
  %4790 = vmatprep.subr.mxu0 0.0
  %4791 = vmatpush1.msra.mxu0 0.0
  %v4792 = vand.u32 %v38, 4294901760
  %v4793 = vsub.f32 %v38, %v4792
  %4794 = vmatprep.subr.mxu0 %v4793
  %v4795 = vand.u32 %v37, 4294901760
  %v4796 = vsub.f32 %v37, %v4795
  %4797 = vmatpush1.msra.mxu0 %v4796
  %4798 = vmatprep.subr.mxu0 0.0
  %4799 = vmatpush2.msra.mxu0 0.0
  %4800 = vmatprep.subr.mxu0 0.0
  %4801 = vmatpush2.msra.mxu0 0.0
  %4802 = vmatprep.subr.mxu0 0.0
  %4803 = vmatpush2.msra.mxu0 0.0
  %4804 = vmatprep.subr.mxu0 0.0
  %4805 = vmatpush2.msra.mxu0 0.0
  %4806 = vmatprep.subr.mxu0 0.0
  %4807 = vmatpush2.msra.mxu0 0.0
  %4808 = vmatprep.subr.mxu0 0.0
  %4809 = vmatpush2.msra.mxu0 0.0
  %4810 = vmatprep.subr.mxu0 0.0
  %4811 = vmatpush2.msra.mxu0 0.0
  %4812 = vmatprep.subr.mxu0 0.0
  %4813 = vmatpush2.msra.mxu0 0.0
  %4814 = vmatprep.subr.mxu0 0.0
  %4815 = vmatpush2.msra.mxu0 0.0
  %4816 = vmatprep.subr.mxu0 0.0
  %4817 = vmatpush2.msra.mxu0 0.0
  %4818 = vmatprep.subr.mxu0 0.0
  %4819 = vmatpush2.msra.mxu0 0.0
  %4820 = vmatprep.subr.mxu0 0.0
  %4821 = vmatpush2.msra.mxu0 0.0
  %4822 = vmatprep.subr.mxu0 0.0
  %4823 = vmatpush2.msra.mxu0 0.0
  %4824 = vmatprep.subr.mxu0 0.0
  %4825 = vmatpush2.msra.mxu0 0.0
  %4826 = vmatprep.subr.mxu0 0.0
  %4827 = vmatpush2.msra.mxu0 0.0
  %4828 = vmatprep.subr.mxu0 0.0
  %4829 = vmatpush2.msra.mxu0 0.0
  %4830 = vmatprep.mubr.f32.mxu0 0.0
  %v4831 = vand.u32 %v4600, 4294901760
  %v4832 = vsub.f32 %v4600, %v4831
  %4833 = vmatmul.mubr.f32.gmra.mxu0 %v4832
  %v4834 = vpop.f32.mrf.mxu0
  %v4835 = vadd.f32 %v4758, %v4834
  %v4836 = vpop.f32.mrf.mxu0
  %v4837 = vadd.f32 %v4760, %v4836
  %4838 = vdwg.mxu0
  %4839 = vmatprep.subr.mxu0 0.0
  %4840 = vmatpush1.msra.mxu0 0.0
  %4841 = vmatprep.subr.mxu0 0.0
  %4842 = vmatpush1.msra.mxu0 0.0
  %4843 = vmatprep.subr.mxu0 0.0
  %4844 = vmatpush1.msra.mxu0 0.0
  %4845 = vmatprep.subr.mxu0 0.0
  %4846 = vmatpush1.msra.mxu0 0.0
  %4847 = vmatprep.subr.mxu0 0.0
  %4848 = vmatpush1.msra.mxu0 0.0
  %4849 = vmatprep.subr.mxu0 0.0
  %4850 = vmatpush1.msra.mxu0 0.0
  %4851 = vmatprep.subr.mxu0 0.0
  %4852 = vmatpush1.msra.mxu0 0.0
  %4853 = vmatprep.subr.mxu0 0.0
  %4854 = vmatpush1.msra.mxu0 0.0
  %4855 = vmatprep.subr.mxu0 0.0
  %4856 = vmatpush1.msra.mxu0 0.0
  %4857 = vmatprep.subr.mxu0 0.0
  %4858 = vmatpush1.msra.mxu0 0.0
  %4859 = vmatprep.subr.mxu0 0.0
  %4860 = vmatpush1.msra.mxu0 0.0
  %4861 = vmatprep.subr.mxu0 0.0
  %4862 = vmatpush1.msra.mxu0 0.0
  %4863 = vmatprep.subr.mxu0 0.0
  %4864 = vmatpush1.msra.mxu0 0.0
  %4865 = vmatprep.subr.mxu0 0.0
  %4866 = vmatpush1.msra.mxu0 0.0
  %4867 = vmatprep.subr.mxu0 0.0
  %4868 = vmatpush1.msra.mxu0 0.0
  %v4869 = vand.u32 %v38, 4294901760
  %4870 = vmatprep.subr.mxu0 %v4869
  %v4871 = vand.u32 %v37, 4294901760
  %4872 = vmatpush1.msra.mxu0 %v4871
  %4873 = vmatprep.subr.mxu0 0.0
  %4874 = vmatpush2.msra.mxu0 0.0
  %4875 = vmatprep.subr.mxu0 0.0
  %4876 = vmatpush2.msra.mxu0 0.0
  %4877 = vmatprep.subr.mxu0 0.0
  %4878 = vmatpush2.msra.mxu0 0.0
  %4879 = vmatprep.subr.mxu0 0.0
  %4880 = vmatpush2.msra.mxu0 0.0
  %4881 = vmatprep.subr.mxu0 0.0
  %4882 = vmatpush2.msra.mxu0 0.0
  %4883 = vmatprep.subr.mxu0 0.0
  %4884 = vmatpush2.msra.mxu0 0.0
  %4885 = vmatprep.subr.mxu0 0.0
  %4886 = vmatpush2.msra.mxu0 0.0
  %4887 = vmatprep.subr.mxu0 0.0
  %4888 = vmatpush2.msra.mxu0 0.0
  %4889 = vmatprep.subr.mxu0 0.0
  %4890 = vmatpush2.msra.mxu0 0.0
  %4891 = vmatprep.subr.mxu0 0.0
  %4892 = vmatpush2.msra.mxu0 0.0
  %4893 = vmatprep.subr.mxu0 0.0
  %4894 = vmatpush2.msra.mxu0 0.0
  %4895 = vmatprep.subr.mxu0 0.0
  %4896 = vmatpush2.msra.mxu0 0.0
  %4897 = vmatprep.subr.mxu0 0.0
  %4898 = vmatpush2.msra.mxu0 0.0
  %4899 = vmatprep.subr.mxu0 0.0
  %4900 = vmatpush2.msra.mxu0 0.0
  %4901 = vmatprep.subr.mxu0 0.0
  %4902 = vmatpush2.msra.mxu0 0.0
  %4903 = vmatprep.subr.mxu0 0.0
  %4904 = vmatpush2.msra.mxu0 0.0
  %4905 = vmatprep.mubr.f32.mxu0 0.0
  %v4906 = vand.u32 %v4600, 4294901760
  %v4907 = vsub.f32 %v4600, %v4906
  %v4908 = vand.u32 %v4907, 4294901760
  %4909 = vmatmul.mubr.f32.gmra.mxu0 %v4908
  %v4910 = vpop.f32.mrf.mxu0
  %v4911 = vadd.f32 %v4835, %v4910
  %v4912 = vpop.f32.mrf.mxu0
  %v4913 = vadd.f32 %v4837, %v4912
  %4914 = vdwg.mxu0
  %4915 = vmatprep.subr.mxu0 0.0
  %4916 = vmatpush1.msra.mxu0 0.0
  %4917 = vmatprep.subr.mxu0 0.0
  %4918 = vmatpush1.msra.mxu0 0.0
  %4919 = vmatprep.subr.mxu0 0.0
  %4920 = vmatpush1.msra.mxu0 0.0
  %4921 = vmatprep.subr.mxu0 0.0
  %4922 = vmatpush1.msra.mxu0 0.0
  %4923 = vmatprep.subr.mxu0 0.0
  %4924 = vmatpush1.msra.mxu0 0.0
  %4925 = vmatprep.subr.mxu0 0.0
  %4926 = vmatpush1.msra.mxu0 0.0
  %4927 = vmatprep.subr.mxu0 0.0
  %4928 = vmatpush1.msra.mxu0 0.0
  %4929 = vmatprep.subr.mxu0 0.0
  %4930 = vmatpush1.msra.mxu0 0.0
  %4931 = vmatprep.subr.mxu0 0.0
  %4932 = vmatpush1.msra.mxu0 0.0
  %4933 = vmatprep.subr.mxu0 0.0
  %4934 = vmatpush1.msra.mxu0 0.0
  %4935 = vmatprep.subr.mxu0 0.0
  %4936 = vmatpush1.msra.mxu0 0.0
  %4937 = vmatprep.subr.mxu0 0.0
  %4938 = vmatpush1.msra.mxu0 0.0
  %4939 = vmatprep.subr.mxu0 0.0
  %4940 = vmatpush1.msra.mxu0 0.0
  %4941 = vmatprep.subr.mxu0 0.0
  %4942 = vmatpush1.msra.mxu0 0.0
  %4943 = vmatprep.subr.mxu0 0.0
  %4944 = vmatpush1.msra.mxu0 0.0
  %v4945 = vand.u32 %v38, 4294901760
  %v4946 = vsub.f32 %v38, %v4945
  %v4947 = vand.u32 %v4946, 4294901760
  %4948 = vmatprep.subr.mxu0 %v4947
  %v4949 = vand.u32 %v37, 4294901760
  %v4950 = vsub.f32 %v37, %v4949
  %v4951 = vand.u32 %v4950, 4294901760
  %4952 = vmatpush1.msra.mxu0 %v4951
  %4953 = vmatprep.subr.mxu0 0.0
  %4954 = vmatpush2.msra.mxu0 0.0
  %4955 = vmatprep.subr.mxu0 0.0
  %4956 = vmatpush2.msra.mxu0 0.0
  %4957 = vmatprep.subr.mxu0 0.0
  %4958 = vmatpush2.msra.mxu0 0.0
  %4959 = vmatprep.subr.mxu0 0.0
  %4960 = vmatpush2.msra.mxu0 0.0
  %4961 = vmatprep.subr.mxu0 0.0
  %4962 = vmatpush2.msra.mxu0 0.0
  %4963 = vmatprep.subr.mxu0 0.0
  %4964 = vmatpush2.msra.mxu0 0.0
  %4965 = vmatprep.subr.mxu0 0.0
  %4966 = vmatpush2.msra.mxu0 0.0
  %4967 = vmatprep.subr.mxu0 0.0
  %4968 = vmatpush2.msra.mxu0 0.0
  %4969 = vmatprep.subr.mxu0 0.0
  %4970 = vmatpush2.msra.mxu0 0.0
  %4971 = vmatprep.subr.mxu0 0.0
  %4972 = vmatpush2.msra.mxu0 0.0
  %4973 = vmatprep.subr.mxu0 0.0
  %4974 = vmatpush2.msra.mxu0 0.0
  %4975 = vmatprep.subr.mxu0 0.0
  %4976 = vmatpush2.msra.mxu0 0.0
  %4977 = vmatprep.subr.mxu0 0.0
  %4978 = vmatpush2.msra.mxu0 0.0
  %4979 = vmatprep.subr.mxu0 0.0
  %4980 = vmatpush2.msra.mxu0 0.0
  %4981 = vmatprep.subr.mxu0 0.0
  %4982 = vmatpush2.msra.mxu0 0.0
  %4983 = vmatprep.subr.mxu0 0.0
  %4984 = vmatpush2.msra.mxu0 0.0
  %4985 = vmatprep.mubr.f32.mxu0 0.0
  %v4986 = vand.u32 %v4600, 4294901760
  %4987 = vmatmul.mubr.f32.gmra.mxu0 %v4986
  %v4988 = vpop.f32.mrf.mxu0
  %v4989 = vadd.f32 %v4911, %v4988
  %v4990 = vpop.f32.mrf.mxu0
  %v4991 = vadd.f32 %v4913, %v4990
  %4992 = vdwg.mxu0
  %4993 = vmatprep.subr.mxu0 0.0
  %4994 = vmatpush1.msra.mxu0 0.0
  %4995 = vmatprep.subr.mxu0 0.0
  %4996 = vmatpush1.msra.mxu0 0.0
  %4997 = vmatprep.subr.mxu0 0.0
  %4998 = vmatpush1.msra.mxu0 0.0
  %4999 = vmatprep.subr.mxu0 0.0
  %5000 = vmatpush1.msra.mxu0 0.0
  %5001 = vmatprep.subr.mxu0 0.0
  %5002 = vmatpush1.msra.mxu0 0.0
  %5003 = vmatprep.subr.mxu0 0.0
  %5004 = vmatpush1.msra.mxu0 0.0
  %5005 = vmatprep.subr.mxu0 0.0
  %5006 = vmatpush1.msra.mxu0 0.0
  %5007 = vmatprep.subr.mxu0 0.0
  %5008 = vmatpush1.msra.mxu0 0.0
  %5009 = vmatprep.subr.mxu0 0.0
  %5010 = vmatpush1.msra.mxu0 0.0
  %5011 = vmatprep.subr.mxu0 0.0
  %5012 = vmatpush1.msra.mxu0 0.0
  %5013 = vmatprep.subr.mxu0 0.0
  %5014 = vmatpush1.msra.mxu0 0.0
  %5015 = vmatprep.subr.mxu0 0.0
  %5016 = vmatpush1.msra.mxu0 0.0
  %5017 = vmatprep.subr.mxu0 0.0
  %5018 = vmatpush1.msra.mxu0 0.0
  %5019 = vmatprep.subr.mxu0 0.0
  %5020 = vmatpush1.msra.mxu0 0.0
  %5021 = vmatprep.subr.mxu0 0.0
  %5022 = vmatpush1.msra.mxu0 0.0
  %v5023 = vand.u32 %v38, 4294901760
  %5024 = vmatprep.subr.mxu0 %v5023
  %v5025 = vand.u32 %v37, 4294901760
  %5026 = vmatpush1.msra.mxu0 %v5025
  %5027 = vmatprep.subr.mxu0 0.0
  %5028 = vmatpush2.msra.mxu0 0.0
  %5029 = vmatprep.subr.mxu0 0.0
  %5030 = vmatpush2.msra.mxu0 0.0
  %5031 = vmatprep.subr.mxu0 0.0
  %5032 = vmatpush2.msra.mxu0 0.0
  %5033 = vmatprep.subr.mxu0 0.0
  %5034 = vmatpush2.msra.mxu0 0.0
  %5035 = vmatprep.subr.mxu0 0.0
  %5036 = vmatpush2.msra.mxu0 0.0
  %5037 = vmatprep.subr.mxu0 0.0
  %5038 = vmatpush2.msra.mxu0 0.0
  %5039 = vmatprep.subr.mxu0 0.0
  %5040 = vmatpush2.msra.mxu0 0.0
  %5041 = vmatprep.subr.mxu0 0.0
  %5042 = vmatpush2.msra.mxu0 0.0
  %5043 = vmatprep.subr.mxu0 0.0
  %5044 = vmatpush2.msra.mxu0 0.0
  %5045 = vmatprep.subr.mxu0 0.0
  %5046 = vmatpush2.msra.mxu0 0.0
  %5047 = vmatprep.subr.mxu0 0.0
  %5048 = vmatpush2.msra.mxu0 0.0
  %5049 = vmatprep.subr.mxu0 0.0
  %5050 = vmatpush2.msra.mxu0 0.0
  %5051 = vmatprep.subr.mxu0 0.0
  %5052 = vmatpush2.msra.mxu0 0.0
  %5053 = vmatprep.subr.mxu0 0.0
  %5054 = vmatpush2.msra.mxu0 0.0
  %5055 = vmatprep.subr.mxu0 0.0
  %5056 = vmatpush2.msra.mxu0 0.0
  %5057 = vmatprep.subr.mxu0 0.0
  %5058 = vmatpush2.msra.mxu0 0.0
  %5059 = vmatprep.mubr.f32.mxu0 0.0
  %v5060 = vand.u32 %v4600, 4294901760
  %5061 = vmatmul.mubr.f32.gmra.mxu0 %v5060
  %v5062 = vpop.f32.mrf.mxu0
  %v5063 = vadd.f32 %v4989, %v5062
  %v5064 = vpop.f32.mrf.mxu0
  %v5065 = vadd.f32 %v4991, %v5064
  %5066 = vdwg.mxu0
  %5068 = vrot.lane.b32.xlu0 %v4596, 64
  %v5069 = vpop.permute.xlu0 %5068
  %v5070 = vsel %vm508, %v5069, 0
  %5072 = vmatprep.subr.mxu0 0.0
  %5073 = vmatpush1.msra.mxu0 0.0
  %5074 = vmatprep.subr.mxu0 0.0
  %5075 = vmatpush1.msra.mxu0 0.0
  %5076 = vmatprep.subr.mxu0 0.0
  %5077 = vmatpush1.msra.mxu0 0.0
  %5078 = vmatprep.subr.mxu0 0.0
  %5079 = vmatpush1.msra.mxu0 0.0
  %5080 = vmatprep.subr.mxu0 0.0
  %5081 = vmatpush1.msra.mxu0 0.0
  %5082 = vmatprep.subr.mxu0 0.0
  %5083 = vmatpush1.msra.mxu0 0.0
  %5084 = vmatprep.subr.mxu0 0.0
  %5085 = vmatpush1.msra.mxu0 0.0
  %5086 = vmatprep.subr.mxu0 0.0
  %5087 = vmatpush1.msra.mxu0 0.0
  %v5088 = vand.u32 %v35, 4294901760
  %5089 = vmatprep.subr.mxu0 %v5088
  %v5090 = vand.u32 %v34, 4294901760
  %5091 = vmatpush1.msra.mxu0 %v5090
  %v5092 = vand.u32 %v33, 4294901760
  %5093 = vmatprep.subr.mxu0 %v5092
  %v5094 = vand.u32 %v32, 4294901760
  %5095 = vmatpush1.msra.mxu0 %v5094
  %v5096 = vand.u32 %v31, 4294901760
  %5097 = vmatprep.subr.mxu0 %v5096
  %v5098 = vand.u32 %v30, 4294901760
  %5099 = vmatpush1.msra.mxu0 %v5098
  %v5100 = vand.u32 %v29, 4294901760
  %5101 = vmatprep.subr.mxu0 %v5100
  %v5102 = vand.u32 %v28, 4294901760
  %5103 = vmatpush1.msra.mxu0 %v5102
  %v5104 = vand.u32 %v27, 4294901760
  %5105 = vmatprep.subr.mxu0 %v5104
  %v5106 = vand.u32 %v26, 4294901760
  %5107 = vmatpush1.msra.mxu0 %v5106
  %v5108 = vand.u32 %v25, 4294901760
  %5109 = vmatprep.subr.mxu0 %v5108
  %v5110 = vand.u32 %v24, 4294901760
  %5111 = vmatpush1.msra.mxu0 %v5110
  %v5112 = vand.u32 %v23, 4294901760
  %5113 = vmatprep.subr.mxu0 %v5112
  %v5114 = vand.u32 %v22, 4294901760
  %5115 = vmatpush1.msra.mxu0 %v5114
  %v5116 = vand.u32 %v21, 4294901760
  %5117 = vmatprep.subr.mxu0 %v5116
  %v5118 = vand.u32 %v20, 4294901760
  %5119 = vmatpush1.msra.mxu0 %v5118
  %5120 = vmatprep.subr.mxu0 0.0
  %5121 = vmatpush2.msra.mxu0 0.0
  %5122 = vmatprep.subr.mxu0 0.0
  %5123 = vmatpush2.msra.mxu0 0.0
  %5124 = vmatprep.subr.mxu0 0.0
  %5125 = vmatpush2.msra.mxu0 0.0
  %5126 = vmatprep.subr.mxu0 0.0
  %5127 = vmatpush2.msra.mxu0 0.0
  %5128 = vmatprep.subr.mxu0 0.0
  %5129 = vmatpush2.msra.mxu0 0.0
  %5130 = vmatprep.subr.mxu0 0.0
  %5131 = vmatpush2.msra.mxu0 0.0
  %5132 = vmatprep.subr.mxu0 0.0
  %5133 = vmatpush2.msra.mxu0 0.0
  %5134 = vmatprep.subr.mxu0 0.0
  %5135 = vmatpush2.msra.mxu0 0.0
  %5136 = vmatprep.subr.mxu0 0.0
  %5137 = vmatpush2.msra.mxu0 0.0
  %5138 = vmatprep.subr.mxu0 0.0
  %5139 = vmatpush2.msra.mxu0 0.0
  %5140 = vmatprep.subr.mxu0 0.0
  %5141 = vmatpush2.msra.mxu0 0.0
  %5142 = vmatprep.subr.mxu0 0.0
  %5143 = vmatpush2.msra.mxu0 0.0
  %5144 = vmatprep.subr.mxu0 0.0
  %5145 = vmatpush2.msra.mxu0 0.0
  %5146 = vmatprep.subr.mxu0 0.0
  %5147 = vmatpush2.msra.mxu0 0.0
  %5148 = vmatprep.subr.mxu0 0.0
  %5149 = vmatpush2.msra.mxu0 0.0
  %5150 = vmatprep.subr.mxu0 0.0
  %5151 = vmatpush2.msra.mxu0 0.0
  %5152 = vmatprep.mubr.f32.mxu0 0.0
  %v5153 = vand.u32 %v5070, 4294901760
  %v5154 = vsub.f32 %v5070, %v5153
  %v5155 = vand.u32 %v5154, 4294901760
  %v5156 = vsub.f32 %v5154, %v5155
  %v5157 = vand.u32 %v5156, 4294901760
  %5158 = vmatmul.mubr.f32.gmra.mxu0 %v5157
  %v5159 = vpop.f32.mrf.mxu0
  %v5160 = vadd.f32 %v5063, %v5159
  %v5161 = vpop.f32.mrf.mxu0
  %v5162 = vadd.f32 %v5065, %v5161
  %5163 = vdwg.mxu0
  %5164 = vmatprep.subr.mxu0 0.0
  %5165 = vmatpush1.msra.mxu0 0.0
  %5166 = vmatprep.subr.mxu0 0.0
  %5167 = vmatpush1.msra.mxu0 0.0
  %5168 = vmatprep.subr.mxu0 0.0
  %5169 = vmatpush1.msra.mxu0 0.0
  %5170 = vmatprep.subr.mxu0 0.0
  %5171 = vmatpush1.msra.mxu0 0.0
  %5172 = vmatprep.subr.mxu0 0.0
  %5173 = vmatpush1.msra.mxu0 0.0
  %5174 = vmatprep.subr.mxu0 0.0
  %5175 = vmatpush1.msra.mxu0 0.0
  %5176 = vmatprep.subr.mxu0 0.0
  %5177 = vmatpush1.msra.mxu0 0.0
  %5178 = vmatprep.subr.mxu0 0.0
  %5179 = vmatpush1.msra.mxu0 0.0
  %v5180 = vand.u32 %v35, 4294901760
  %v5181 = vsub.f32 %v35, %v5180
  %v5182 = vand.u32 %v5181, 4294901760
  %v5183 = vsub.f32 %v5181, %v5182
  %v5184 = vand.u32 %v5183, 4294901760
  %5185 = vmatprep.subr.mxu0 %v5184
  %v5186 = vand.u32 %v34, 4294901760
  %v5187 = vsub.f32 %v34, %v5186
  %v5188 = vand.u32 %v5187, 4294901760
  %v5189 = vsub.f32 %v5187, %v5188
  %v5190 = vand.u32 %v5189, 4294901760
  %5191 = vmatpush1.msra.mxu0 %v5190
  %v5192 = vand.u32 %v33, 4294901760
  %v5193 = vsub.f32 %v33, %v5192
  %v5194 = vand.u32 %v5193, 4294901760
  %v5195 = vsub.f32 %v5193, %v5194
  %v5196 = vand.u32 %v5195, 4294901760
  %5197 = vmatprep.subr.mxu0 %v5196
  %v5198 = vand.u32 %v32, 4294901760
  %v5199 = vsub.f32 %v32, %v5198
  %v5200 = vand.u32 %v5199, 4294901760
  %v5201 = vsub.f32 %v5199, %v5200
  %v5202 = vand.u32 %v5201, 4294901760
  %5203 = vmatpush1.msra.mxu0 %v5202
  %v5204 = vand.u32 %v31, 4294901760
  %v5205 = vsub.f32 %v31, %v5204
  %v5206 = vand.u32 %v5205, 4294901760
  %v5207 = vsub.f32 %v5205, %v5206
  %v5208 = vand.u32 %v5207, 4294901760
  %5209 = vmatprep.subr.mxu0 %v5208
  %v5210 = vand.u32 %v30, 4294901760
  %v5211 = vsub.f32 %v30, %v5210
  %v5212 = vand.u32 %v5211, 4294901760
  %v5213 = vsub.f32 %v5211, %v5212
  %v5214 = vand.u32 %v5213, 4294901760
  %5215 = vmatpush1.msra.mxu0 %v5214
  %v5216 = vand.u32 %v29, 4294901760
  %v5217 = vsub.f32 %v29, %v5216
  %v5218 = vand.u32 %v5217, 4294901760
  %v5219 = vsub.f32 %v5217, %v5218
  %v5220 = vand.u32 %v5219, 4294901760
  %5221 = vmatprep.subr.mxu0 %v5220
  %v5222 = vand.u32 %v28, 4294901760
  %v5223 = vsub.f32 %v28, %v5222
  %v5224 = vand.u32 %v5223, 4294901760
  %v5225 = vsub.f32 %v5223, %v5224
  %v5226 = vand.u32 %v5225, 4294901760
  %5227 = vmatpush1.msra.mxu0 %v5226
  %v5228 = vand.u32 %v27, 4294901760
  %v5229 = vsub.f32 %v27, %v5228
  %v5230 = vand.u32 %v5229, 4294901760
  %v5231 = vsub.f32 %v5229, %v5230
  %v5232 = vand.u32 %v5231, 4294901760
  %5233 = vmatprep.subr.mxu0 %v5232
  %v5234 = vand.u32 %v26, 4294901760
  %v5235 = vsub.f32 %v26, %v5234
  %v5236 = vand.u32 %v5235, 4294901760
  %v5237 = vsub.f32 %v5235, %v5236
  %v5238 = vand.u32 %v5237, 4294901760
  %5239 = vmatpush1.msra.mxu0 %v5238
  %v5240 = vand.u32 %v25, 4294901760
  %v5241 = vsub.f32 %v25, %v5240
  %v5242 = vand.u32 %v5241, 4294901760
  %v5243 = vsub.f32 %v5241, %v5242
  %v5244 = vand.u32 %v5243, 4294901760
  %5245 = vmatprep.subr.mxu0 %v5244
  %v5246 = vand.u32 %v24, 4294901760
  %v5247 = vsub.f32 %v24, %v5246
  %v5248 = vand.u32 %v5247, 4294901760
  %v5249 = vsub.f32 %v5247, %v5248
  %v5250 = vand.u32 %v5249, 4294901760
  %5251 = vmatpush1.msra.mxu0 %v5250
  %v5252 = vand.u32 %v23, 4294901760
  %v5253 = vsub.f32 %v23, %v5252
  %v5254 = vand.u32 %v5253, 4294901760
  %v5255 = vsub.f32 %v5253, %v5254
  %v5256 = vand.u32 %v5255, 4294901760
  %5257 = vmatprep.subr.mxu0 %v5256
  %v5258 = vand.u32 %v22, 4294901760
  %v5259 = vsub.f32 %v22, %v5258
  %v5260 = vand.u32 %v5259, 4294901760
  %v5261 = vsub.f32 %v5259, %v5260
  %v5262 = vand.u32 %v5261, 4294901760
  %5263 = vmatpush1.msra.mxu0 %v5262
  %v5264 = vand.u32 %v21, 4294901760
  %v5265 = vsub.f32 %v21, %v5264
  %v5266 = vand.u32 %v5265, 4294901760
  %v5267 = vsub.f32 %v5265, %v5266
  %v5268 = vand.u32 %v5267, 4294901760
  %5269 = vmatprep.subr.mxu0 %v5268
  %v5270 = vand.u32 %v20, 4294901760
  %v5271 = vsub.f32 %v20, %v5270
  %v5272 = vand.u32 %v5271, 4294901760
  %v5273 = vsub.f32 %v5271, %v5272
  %v5274 = vand.u32 %v5273, 4294901760
  %5275 = vmatpush1.msra.mxu0 %v5274
  %5276 = vmatprep.subr.mxu0 0.0
  %5277 = vmatpush2.msra.mxu0 0.0
  %5278 = vmatprep.subr.mxu0 0.0
  %5279 = vmatpush2.msra.mxu0 0.0
  %5280 = vmatprep.subr.mxu0 0.0
  %5281 = vmatpush2.msra.mxu0 0.0
  %5282 = vmatprep.subr.mxu0 0.0
  %5283 = vmatpush2.msra.mxu0 0.0
  %5284 = vmatprep.subr.mxu0 0.0
  %5285 = vmatpush2.msra.mxu0 0.0
  %5286 = vmatprep.subr.mxu0 0.0
  %5287 = vmatpush2.msra.mxu0 0.0
  %5288 = vmatprep.subr.mxu0 0.0
  %5289 = vmatpush2.msra.mxu0 0.0
  %5290 = vmatprep.subr.mxu0 0.0
  %5291 = vmatpush2.msra.mxu0 0.0
  %5292 = vmatprep.subr.mxu0 0.0
  %5293 = vmatpush2.msra.mxu0 0.0
  %5294 = vmatprep.subr.mxu0 0.0
  %5295 = vmatpush2.msra.mxu0 0.0
  %5296 = vmatprep.subr.mxu0 0.0
  %5297 = vmatpush2.msra.mxu0 0.0
  %5298 = vmatprep.subr.mxu0 0.0
  %5299 = vmatpush2.msra.mxu0 0.0
  %5300 = vmatprep.subr.mxu0 0.0
  %5301 = vmatpush2.msra.mxu0 0.0
  %5302 = vmatprep.subr.mxu0 0.0
  %5303 = vmatpush2.msra.mxu0 0.0
  %5304 = vmatprep.subr.mxu0 0.0
  %5305 = vmatpush2.msra.mxu0 0.0
  %5306 = vmatprep.subr.mxu0 0.0
  %5307 = vmatpush2.msra.mxu0 0.0
  %5308 = vmatprep.mubr.f32.mxu0 0.0
  %v5309 = vand.u32 %v5070, 4294901760
  %5310 = vmatmul.mubr.f32.gmra.mxu0 %v5309
  %v5311 = vpop.f32.mrf.mxu0
  %v5312 = vadd.f32 %v5160, %v5311
  %v5313 = vpop.f32.mrf.mxu0
  %v5314 = vadd.f32 %v5162, %v5313
  %5315 = vdwg.mxu0
  %5316 = vmatprep.subr.mxu0 0.0
  %5317 = vmatpush1.msra.mxu0 0.0
  %5318 = vmatprep.subr.mxu0 0.0
  %5319 = vmatpush1.msra.mxu0 0.0
  %5320 = vmatprep.subr.mxu0 0.0
  %5321 = vmatpush1.msra.mxu0 0.0
  %5322 = vmatprep.subr.mxu0 0.0
  %5323 = vmatpush1.msra.mxu0 0.0
  %5324 = vmatprep.subr.mxu0 0.0
  %5325 = vmatpush1.msra.mxu0 0.0
  %5326 = vmatprep.subr.mxu0 0.0
  %5327 = vmatpush1.msra.mxu0 0.0
  %5328 = vmatprep.subr.mxu0 0.0
  %5329 = vmatpush1.msra.mxu0 0.0
  %5330 = vmatprep.subr.mxu0 0.0
  %5331 = vmatpush1.msra.mxu0 0.0
  %v5332 = vand.u32 %v35, 4294901760
  %v5333 = vsub.f32 %v35, %v5332
  %5334 = vmatprep.subr.mxu0 %v5333
  %v5335 = vand.u32 %v34, 4294901760
  %v5336 = vsub.f32 %v34, %v5335
  %5337 = vmatpush1.msra.mxu0 %v5336
  %v5338 = vand.u32 %v33, 4294901760
  %v5339 = vsub.f32 %v33, %v5338
  %5340 = vmatprep.subr.mxu0 %v5339
  %v5341 = vand.u32 %v32, 4294901760
  %v5342 = vsub.f32 %v32, %v5341
  %5343 = vmatpush1.msra.mxu0 %v5342
  %v5344 = vand.u32 %v31, 4294901760
  %v5345 = vsub.f32 %v31, %v5344
  %5346 = vmatprep.subr.mxu0 %v5345
  %v5347 = vand.u32 %v30, 4294901760
  %v5348 = vsub.f32 %v30, %v5347
  %5349 = vmatpush1.msra.mxu0 %v5348
  %v5350 = vand.u32 %v29, 4294901760
  %v5351 = vsub.f32 %v29, %v5350
  %5352 = vmatprep.subr.mxu0 %v5351
  %v5353 = vand.u32 %v28, 4294901760
  %v5354 = vsub.f32 %v28, %v5353
  %5355 = vmatpush1.msra.mxu0 %v5354
  %v5356 = vand.u32 %v27, 4294901760
  %v5357 = vsub.f32 %v27, %v5356
  %5358 = vmatprep.subr.mxu0 %v5357
  %v5359 = vand.u32 %v26, 4294901760
  %v5360 = vsub.f32 %v26, %v5359
  %5361 = vmatpush1.msra.mxu0 %v5360
  %v5362 = vand.u32 %v25, 4294901760
  %v5363 = vsub.f32 %v25, %v5362
  %5364 = vmatprep.subr.mxu0 %v5363
  %v5365 = vand.u32 %v24, 4294901760
  %v5366 = vsub.f32 %v24, %v5365
  %5367 = vmatpush1.msra.mxu0 %v5366
  %v5368 = vand.u32 %v23, 4294901760
  %v5369 = vsub.f32 %v23, %v5368
  %5370 = vmatprep.subr.mxu0 %v5369
  %v5371 = vand.u32 %v22, 4294901760
  %v5372 = vsub.f32 %v22, %v5371
  %5373 = vmatpush1.msra.mxu0 %v5372
  %v5374 = vand.u32 %v21, 4294901760
  %v5375 = vsub.f32 %v21, %v5374
  %5376 = vmatprep.subr.mxu0 %v5375
  %v5377 = vand.u32 %v20, 4294901760
  %v5378 = vsub.f32 %v20, %v5377
  %5379 = vmatpush1.msra.mxu0 %v5378
  %5380 = vmatprep.subr.mxu0 0.0
  %5381 = vmatpush2.msra.mxu0 0.0
  %5382 = vmatprep.subr.mxu0 0.0
  %5383 = vmatpush2.msra.mxu0 0.0
  %5384 = vmatprep.subr.mxu0 0.0
  %5385 = vmatpush2.msra.mxu0 0.0
  %5386 = vmatprep.subr.mxu0 0.0
  %5387 = vmatpush2.msra.mxu0 0.0
  %5388 = vmatprep.subr.mxu0 0.0
  %5389 = vmatpush2.msra.mxu0 0.0
  %5390 = vmatprep.subr.mxu0 0.0
  %5391 = vmatpush2.msra.mxu0 0.0
  %5392 = vmatprep.subr.mxu0 0.0
  %5393 = vmatpush2.msra.mxu0 0.0
  %5394 = vmatprep.subr.mxu0 0.0
  %5395 = vmatpush2.msra.mxu0 0.0
  %5396 = vmatprep.subr.mxu0 0.0
  %5397 = vmatpush2.msra.mxu0 0.0
  %5398 = vmatprep.subr.mxu0 0.0
  %5399 = vmatpush2.msra.mxu0 0.0
  %5400 = vmatprep.subr.mxu0 0.0
  %5401 = vmatpush2.msra.mxu0 0.0
  %5402 = vmatprep.subr.mxu0 0.0
  %5403 = vmatpush2.msra.mxu0 0.0
  %5404 = vmatprep.subr.mxu0 0.0
  %5405 = vmatpush2.msra.mxu0 0.0
  %5406 = vmatprep.subr.mxu0 0.0
  %5407 = vmatpush2.msra.mxu0 0.0
  %5408 = vmatprep.subr.mxu0 0.0
  %5409 = vmatpush2.msra.mxu0 0.0
  %5410 = vmatprep.subr.mxu0 0.0
  %5411 = vmatpush2.msra.mxu0 0.0
  %5412 = vmatprep.mubr.f32.mxu0 0.0
  %v5413 = vand.u32 %v5070, 4294901760
  %v5414 = vsub.f32 %v5070, %v5413
  %5415 = vmatmul.mubr.f32.gmra.mxu0 %v5414
  %v5416 = vpop.f32.mrf.mxu0
  %v5417 = vadd.f32 %v5312, %v5416
  %v5418 = vpop.f32.mrf.mxu0
  %v5419 = vadd.f32 %v5314, %v5418
  %5420 = vdwg.mxu0
  %5421 = vmatprep.subr.mxu0 0.0
  %5422 = vmatpush1.msra.mxu0 0.0
  %5423 = vmatprep.subr.mxu0 0.0
  %5424 = vmatpush1.msra.mxu0 0.0
  %5425 = vmatprep.subr.mxu0 0.0
  %5426 = vmatpush1.msra.mxu0 0.0
  %5427 = vmatprep.subr.mxu0 0.0
  %5428 = vmatpush1.msra.mxu0 0.0
  %5429 = vmatprep.subr.mxu0 0.0
  %5430 = vmatpush1.msra.mxu0 0.0
  %5431 = vmatprep.subr.mxu0 0.0
  %5432 = vmatpush1.msra.mxu0 0.0
  %5433 = vmatprep.subr.mxu0 0.0
  %5434 = vmatpush1.msra.mxu0 0.0
  %5435 = vmatprep.subr.mxu0 0.0
  %5436 = vmatpush1.msra.mxu0 0.0
  %v5437 = vand.u32 %v35, 4294901760
  %5438 = vmatprep.subr.mxu0 %v5437
  %v5439 = vand.u32 %v34, 4294901760
  %5440 = vmatpush1.msra.mxu0 %v5439
  %v5441 = vand.u32 %v33, 4294901760
  %5442 = vmatprep.subr.mxu0 %v5441
  %v5443 = vand.u32 %v32, 4294901760
  %5444 = vmatpush1.msra.mxu0 %v5443
  %v5445 = vand.u32 %v31, 4294901760
  %5446 = vmatprep.subr.mxu0 %v5445
  %v5447 = vand.u32 %v30, 4294901760
  %5448 = vmatpush1.msra.mxu0 %v5447
  %v5449 = vand.u32 %v29, 4294901760
  %5450 = vmatprep.subr.mxu0 %v5449
  %v5451 = vand.u32 %v28, 4294901760
  %5452 = vmatpush1.msra.mxu0 %v5451
  %v5453 = vand.u32 %v27, 4294901760
  %5454 = vmatprep.subr.mxu0 %v5453
  %v5455 = vand.u32 %v26, 4294901760
  %5456 = vmatpush1.msra.mxu0 %v5455
  %v5457 = vand.u32 %v25, 4294901760
  %5458 = vmatprep.subr.mxu0 %v5457
  %v5459 = vand.u32 %v24, 4294901760
  %5460 = vmatpush1.msra.mxu0 %v5459
  %v5461 = vand.u32 %v23, 4294901760
  %5462 = vmatprep.subr.mxu0 %v5461
  %v5463 = vand.u32 %v22, 4294901760
  %5464 = vmatpush1.msra.mxu0 %v5463
  %v5465 = vand.u32 %v21, 4294901760
  %5466 = vmatprep.subr.mxu0 %v5465
  %v5467 = vand.u32 %v20, 4294901760
  %5468 = vmatpush1.msra.mxu0 %v5467
  %5469 = vmatprep.subr.mxu0 0.0
  %5470 = vmatpush2.msra.mxu0 0.0
  %5471 = vmatprep.subr.mxu0 0.0
  %5472 = vmatpush2.msra.mxu0 0.0
  %5473 = vmatprep.subr.mxu0 0.0
  %5474 = vmatpush2.msra.mxu0 0.0
  %5475 = vmatprep.subr.mxu0 0.0
  %5476 = vmatpush2.msra.mxu0 0.0
  %5477 = vmatprep.subr.mxu0 0.0
  %5478 = vmatpush2.msra.mxu0 0.0
  %5479 = vmatprep.subr.mxu0 0.0
  %5480 = vmatpush2.msra.mxu0 0.0
  %5481 = vmatprep.subr.mxu0 0.0
  %5482 = vmatpush2.msra.mxu0 0.0
  %5483 = vmatprep.subr.mxu0 0.0
  %5484 = vmatpush2.msra.mxu0 0.0
  %5485 = vmatprep.subr.mxu0 0.0
  %5486 = vmatpush2.msra.mxu0 0.0
  %5487 = vmatprep.subr.mxu0 0.0
  %5488 = vmatpush2.msra.mxu0 0.0
  %5489 = vmatprep.subr.mxu0 0.0
  %5490 = vmatpush2.msra.mxu0 0.0
  %5491 = vmatprep.subr.mxu0 0.0
  %5492 = vmatpush2.msra.mxu0 0.0
  %5493 = vmatprep.subr.mxu0 0.0
  %5494 = vmatpush2.msra.mxu0 0.0
  %5495 = vmatprep.subr.mxu0 0.0
  %5496 = vmatpush2.msra.mxu0 0.0
  %5497 = vmatprep.subr.mxu0 0.0
  %5498 = vmatpush2.msra.mxu0 0.0
  %5499 = vmatprep.subr.mxu0 0.0
  %5500 = vmatpush2.msra.mxu0 0.0
  %5501 = vmatprep.mubr.f32.mxu0 0.0
  %v5502 = vand.u32 %v5070, 4294901760
  %v5503 = vsub.f32 %v5070, %v5502
  %v5504 = vand.u32 %v5503, 4294901760
  %5505 = vmatmul.mubr.f32.gmra.mxu0 %v5504
  %v5506 = vpop.f32.mrf.mxu0
  %v5507 = vadd.f32 %v5417, %v5506
  %v5508 = vpop.f32.mrf.mxu0
  %v5509 = vadd.f32 %v5419, %v5508
  %5510 = vdwg.mxu0
  %5511 = vmatprep.subr.mxu0 0.0
  %5512 = vmatpush1.msra.mxu0 0.0
  %5513 = vmatprep.subr.mxu0 0.0
  %5514 = vmatpush1.msra.mxu0 0.0
  %5515 = vmatprep.subr.mxu0 0.0
  %5516 = vmatpush1.msra.mxu0 0.0
  %5517 = vmatprep.subr.mxu0 0.0
  %5518 = vmatpush1.msra.mxu0 0.0
  %5519 = vmatprep.subr.mxu0 0.0
  %5520 = vmatpush1.msra.mxu0 0.0
  %5521 = vmatprep.subr.mxu0 0.0
  %5522 = vmatpush1.msra.mxu0 0.0
  %5523 = vmatprep.subr.mxu0 0.0
  %5524 = vmatpush1.msra.mxu0 0.0
  %5525 = vmatprep.subr.mxu0 0.0
  %5526 = vmatpush1.msra.mxu0 0.0
  %v5527 = vand.u32 %v35, 4294901760
  %v5528 = vsub.f32 %v35, %v5527
  %v5529 = vand.u32 %v5528, 4294901760
  %5530 = vmatprep.subr.mxu0 %v5529
  %v5531 = vand.u32 %v34, 4294901760
  %v5532 = vsub.f32 %v34, %v5531
  %v5533 = vand.u32 %v5532, 4294901760
  %5534 = vmatpush1.msra.mxu0 %v5533
  %v5535 = vand.u32 %v33, 4294901760
  %v5536 = vsub.f32 %v33, %v5535
  %v5537 = vand.u32 %v5536, 4294901760
  %5538 = vmatprep.subr.mxu0 %v5537
  %v5539 = vand.u32 %v32, 4294901760
  %v5540 = vsub.f32 %v32, %v5539
  %v5541 = vand.u32 %v5540, 4294901760
  %5542 = vmatpush1.msra.mxu0 %v5541
  %v5543 = vand.u32 %v31, 4294901760
  %v5544 = vsub.f32 %v31, %v5543
  %v5545 = vand.u32 %v5544, 4294901760
  %5546 = vmatprep.subr.mxu0 %v5545
  %v5547 = vand.u32 %v30, 4294901760
  %v5548 = vsub.f32 %v30, %v5547
  %v5549 = vand.u32 %v5548, 4294901760
  %5550 = vmatpush1.msra.mxu0 %v5549
  %v5551 = vand.u32 %v29, 4294901760
  %v5552 = vsub.f32 %v29, %v5551
  %v5553 = vand.u32 %v5552, 4294901760
  %5554 = vmatprep.subr.mxu0 %v5553
  %v5555 = vand.u32 %v28, 4294901760
  %v5556 = vsub.f32 %v28, %v5555
  %v5557 = vand.u32 %v5556, 4294901760
  %5558 = vmatpush1.msra.mxu0 %v5557
  %v5559 = vand.u32 %v27, 4294901760
  %v5560 = vsub.f32 %v27, %v5559
  %v5561 = vand.u32 %v5560, 4294901760
  %5562 = vmatprep.subr.mxu0 %v5561
  %v5563 = vand.u32 %v26, 4294901760
  %v5564 = vsub.f32 %v26, %v5563
  %v5565 = vand.u32 %v5564, 4294901760
  %5566 = vmatpush1.msra.mxu0 %v5565
  %v5567 = vand.u32 %v25, 4294901760
  %v5568 = vsub.f32 %v25, %v5567
  %v5569 = vand.u32 %v5568, 4294901760
  %5570 = vmatprep.subr.mxu0 %v5569
  %v5571 = vand.u32 %v24, 4294901760
  %v5572 = vsub.f32 %v24, %v5571
  %v5573 = vand.u32 %v5572, 4294901760
  %5574 = vmatpush1.msra.mxu0 %v5573
  %v5575 = vand.u32 %v23, 4294901760
  %v5576 = vsub.f32 %v23, %v5575
  %v5577 = vand.u32 %v5576, 4294901760
  %5578 = vmatprep.subr.mxu0 %v5577
  %v5579 = vand.u32 %v22, 4294901760
  %v5580 = vsub.f32 %v22, %v5579
  %v5581 = vand.u32 %v5580, 4294901760
  %5582 = vmatpush1.msra.mxu0 %v5581
  %v5583 = vand.u32 %v21, 4294901760
  %v5584 = vsub.f32 %v21, %v5583
  %v5585 = vand.u32 %v5584, 4294901760
  %5586 = vmatprep.subr.mxu0 %v5585
  %v5587 = vand.u32 %v20, 4294901760
  %v5588 = vsub.f32 %v20, %v5587
  %v5589 = vand.u32 %v5588, 4294901760
  %5590 = vmatpush1.msra.mxu0 %v5589
  %5591 = vmatprep.subr.mxu0 0.0
  %5592 = vmatpush2.msra.mxu0 0.0
  %5593 = vmatprep.subr.mxu0 0.0
  %5594 = vmatpush2.msra.mxu0 0.0
  %5595 = vmatprep.subr.mxu0 0.0
  %5596 = vmatpush2.msra.mxu0 0.0
  %5597 = vmatprep.subr.mxu0 0.0
  %5598 = vmatpush2.msra.mxu0 0.0
  %5599 = vmatprep.subr.mxu0 0.0
  %5600 = vmatpush2.msra.mxu0 0.0
  %5601 = vmatprep.subr.mxu0 0.0
  %5602 = vmatpush2.msra.mxu0 0.0
  %5603 = vmatprep.subr.mxu0 0.0
  %5604 = vmatpush2.msra.mxu0 0.0
  %5605 = vmatprep.subr.mxu0 0.0
  %5606 = vmatpush2.msra.mxu0 0.0
  %5607 = vmatprep.subr.mxu0 0.0
  %5608 = vmatpush2.msra.mxu0 0.0
  %5609 = vmatprep.subr.mxu0 0.0
  %5610 = vmatpush2.msra.mxu0 0.0
  %5611 = vmatprep.subr.mxu0 0.0
  %5612 = vmatpush2.msra.mxu0 0.0
  %5613 = vmatprep.subr.mxu0 0.0
  %5614 = vmatpush2.msra.mxu0 0.0
  %5615 = vmatprep.subr.mxu0 0.0
  %5616 = vmatpush2.msra.mxu0 0.0
  %5617 = vmatprep.subr.mxu0 0.0
  %5618 = vmatpush2.msra.mxu0 0.0
  %5619 = vmatprep.subr.mxu0 0.0
  %5620 = vmatpush2.msra.mxu0 0.0
  %5621 = vmatprep.subr.mxu0 0.0
  %5622 = vmatpush2.msra.mxu0 0.0
  %5623 = vmatprep.mubr.f32.mxu0 0.0
  %v5624 = vand.u32 %v5070, 4294901760
  %5625 = vmatmul.mubr.f32.gmra.mxu0 %v5624
  %v5626 = vpop.f32.mrf.mxu0
  %v5627 = vadd.f32 %v5507, %v5626
  %v5628 = vpop.f32.mrf.mxu0
  %v5629 = vadd.f32 %v5509, %v5628
  %5630 = vdwg.mxu0
  %5631 = vmatprep.subr.mxu0 0.0
  %5632 = vmatpush1.msra.mxu0 0.0
  %5633 = vmatprep.subr.mxu0 0.0
  %5634 = vmatpush1.msra.mxu0 0.0
  %5635 = vmatprep.subr.mxu0 0.0
  %5636 = vmatpush1.msra.mxu0 0.0
  %5637 = vmatprep.subr.mxu0 0.0
  %5638 = vmatpush1.msra.mxu0 0.0
  %5639 = vmatprep.subr.mxu0 0.0
  %5640 = vmatpush1.msra.mxu0 0.0
  %5641 = vmatprep.subr.mxu0 0.0
  %5642 = vmatpush1.msra.mxu0 0.0
  %5643 = vmatprep.subr.mxu0 0.0
  %5644 = vmatpush1.msra.mxu0 0.0
  %5645 = vmatprep.subr.mxu0 0.0
  %5646 = vmatpush1.msra.mxu0 0.0
  %v5647 = vand.u32 %v35, 4294901760
  %5648 = vmatprep.subr.mxu0 %v5647
  %v5649 = vand.u32 %v34, 4294901760
  %5650 = vmatpush1.msra.mxu0 %v5649
  %v5651 = vand.u32 %v33, 4294901760
  %5652 = vmatprep.subr.mxu0 %v5651
  %v5653 = vand.u32 %v32, 4294901760
  %5654 = vmatpush1.msra.mxu0 %v5653
  %v5655 = vand.u32 %v31, 4294901760
  %5656 = vmatprep.subr.mxu0 %v5655
  %v5657 = vand.u32 %v30, 4294901760
  %5658 = vmatpush1.msra.mxu0 %v5657
  %v5659 = vand.u32 %v29, 4294901760
  %5660 = vmatprep.subr.mxu0 %v5659
  %v5661 = vand.u32 %v28, 4294901760
  %5662 = vmatpush1.msra.mxu0 %v5661
  %v5663 = vand.u32 %v27, 4294901760
  %5664 = vmatprep.subr.mxu0 %v5663
  %v5665 = vand.u32 %v26, 4294901760
  %5666 = vmatpush1.msra.mxu0 %v5665
  %v5667 = vand.u32 %v25, 4294901760
  %5668 = vmatprep.subr.mxu0 %v5667
  %v5669 = vand.u32 %v24, 4294901760
  %5670 = vmatpush1.msra.mxu0 %v5669
  %v5671 = vand.u32 %v23, 4294901760
  %5672 = vmatprep.subr.mxu0 %v5671
  %v5673 = vand.u32 %v22, 4294901760
  %5674 = vmatpush1.msra.mxu0 %v5673
  %v5675 = vand.u32 %v21, 4294901760
  %5676 = vmatprep.subr.mxu0 %v5675
  %v5677 = vand.u32 %v20, 4294901760
  %5678 = vmatpush1.msra.mxu0 %v5677
  %5679 = vmatprep.subr.mxu0 0.0
  %5680 = vmatpush2.msra.mxu0 0.0
  %5681 = vmatprep.subr.mxu0 0.0
  %5682 = vmatpush2.msra.mxu0 0.0
  %5683 = vmatprep.subr.mxu0 0.0
  %5684 = vmatpush2.msra.mxu0 0.0
  %5685 = vmatprep.subr.mxu0 0.0
  %5686 = vmatpush2.msra.mxu0 0.0
  %5687 = vmatprep.subr.mxu0 0.0
  %5688 = vmatpush2.msra.mxu0 0.0
  %5689 = vmatprep.subr.mxu0 0.0
  %5690 = vmatpush2.msra.mxu0 0.0
  %5691 = vmatprep.subr.mxu0 0.0
  %5692 = vmatpush2.msra.mxu0 0.0
  %5693 = vmatprep.subr.mxu0 0.0
  %5694 = vmatpush2.msra.mxu0 0.0
  %5695 = vmatprep.subr.mxu0 0.0
  %5696 = vmatpush2.msra.mxu0 0.0
  %5697 = vmatprep.subr.mxu0 0.0
  %5698 = vmatpush2.msra.mxu0 0.0
  %5699 = vmatprep.subr.mxu0 0.0
  %5700 = vmatpush2.msra.mxu0 0.0
  %5701 = vmatprep.subr.mxu0 0.0
  %5702 = vmatpush2.msra.mxu0 0.0
  %5703 = vmatprep.subr.mxu0 0.0
  %5704 = vmatpush2.msra.mxu0 0.0
  %5705 = vmatprep.subr.mxu0 0.0
  %5706 = vmatpush2.msra.mxu0 0.0
  %5707 = vmatprep.subr.mxu0 0.0
  %5708 = vmatpush2.msra.mxu0 0.0
  %5709 = vmatprep.subr.mxu0 0.0
  %5710 = vmatpush2.msra.mxu0 0.0
  %5711 = vmatprep.mubr.f32.mxu0 0.0
  %v5712 = vand.u32 %v5070, 4294901760
  %5713 = vmatmul.mubr.f32.gmra.mxu0 %v5712
  %v5714 = vpop.f32.mrf.mxu0
  %v5715 = vadd.f32 %v5627, %v5714
  %v5716 = vpop.f32.mrf.mxu0
  %v5717 = vadd.f32 %v5629, %v5716
  %5718 = vdwg.mxu0
  %v5719 = vmul.f32 %v5715, 0.5
  %v5720 = vtanh.pop %v5719
  %v5721 = vmul.f32 %v5720, 0.5
  %v5722 = vadd.f32 %v5721, 0.5
  %v5723 = vtanh.pop %v5717
  %v5724 = vmul.f32 %v5717, 0.5
  %v5725 = vtanh.pop %v5724
  %v5726 = vmul.f32 %v5725, 0.5
  %v5727 = vadd.f32 %v5726, 0.5
  %v5728 = vmul.f32 %v5722, %v4594
  %v5729 = vmul.f32 %v5722, %v5723
  %5731 = vrot.lane.b32.xlu0 %v5729, 64
  %v5732 = vpop.permute.xlu0 %5731
  %v5734 = vadd.f32 %v5728, %v5732
  %v5735 = vtanh.pop %v5734
  %v5736 = vmul.f32 %v5727, %v5735
  %s5737 = scalar_lea.vmem %s0, 40
  %v5738 = vld [vmem:[%s5737] sm:$0xff]
  %v5740 = vsel %vm39, %v5738, 0
  %5742 = vmatprep.subr.mxu0 0.0
  %5743 = vmatpush1.msra.mxu0 0.0
  %5744 = vmatprep.subr.mxu0 0.0
  %5745 = vmatpush1.msra.mxu0 0.0
  %5746 = vmatprep.subr.mxu0 0.0
  %5747 = vmatpush1.msra.mxu0 0.0
  %5748 = vmatprep.subr.mxu0 0.0
  %5749 = vmatpush1.msra.mxu0 0.0
  %5750 = vmatprep.subr.mxu0 0.0
  %5751 = vmatpush1.msra.mxu0 0.0
  %5752 = vmatprep.subr.mxu0 0.0
  %5753 = vmatpush1.msra.mxu0 0.0
  %5754 = vmatprep.subr.mxu0 0.0
  %5755 = vmatpush1.msra.mxu0 0.0
  %5756 = vmatprep.subr.mxu0 0.0
  %5757 = vmatpush1.msra.mxu0 0.0
  %5758 = vmatprep.subr.mxu0 0.0
  %5759 = vmatpush1.msra.mxu0 0.0
  %5760 = vmatprep.subr.mxu0 0.0
  %5761 = vmatpush1.msra.mxu0 0.0
  %5762 = vmatprep.subr.mxu0 0.0
  %5763 = vmatpush1.msra.mxu0 0.0
  %5764 = vmatprep.subr.mxu0 0.0
  %5765 = vmatpush1.msra.mxu0 0.0
  %5766 = vmatprep.subr.mxu0 0.0
  %5767 = vmatpush1.msra.mxu0 0.0
  %5768 = vmatprep.subr.mxu0 0.0
  %5769 = vmatpush1.msra.mxu0 0.0
  %5770 = vmatprep.subr.mxu0 0.0
  %5771 = vmatpush1.msra.mxu0 0.0
  %v5772 = vand.u32 %v38, 4294901760
  %5773 = vmatprep.subr.mxu0 %v5772
  %v5774 = vand.u32 %v37, 4294901760
  %5775 = vmatpush1.msra.mxu0 %v5774
  %5776 = vmatprep.subr.mxu0 0.0
  %5777 = vmatpush2.msra.mxu0 0.0
  %5778 = vmatprep.subr.mxu0 0.0
  %5779 = vmatpush2.msra.mxu0 0.0
  %5780 = vmatprep.subr.mxu0 0.0
  %5781 = vmatpush2.msra.mxu0 0.0
  %5782 = vmatprep.subr.mxu0 0.0
  %5783 = vmatpush2.msra.mxu0 0.0
  %5784 = vmatprep.subr.mxu0 0.0
  %5785 = vmatpush2.msra.mxu0 0.0
  %5786 = vmatprep.subr.mxu0 0.0
  %5787 = vmatpush2.msra.mxu0 0.0
  %5788 = vmatprep.subr.mxu0 0.0
  %5789 = vmatpush2.msra.mxu0 0.0
  %5790 = vmatprep.subr.mxu0 0.0
  %5791 = vmatpush2.msra.mxu0 0.0
  %5792 = vmatprep.subr.mxu0 0.0
  %5793 = vmatpush2.msra.mxu0 0.0
  %5794 = vmatprep.subr.mxu0 0.0
  %5795 = vmatpush2.msra.mxu0 0.0
  %5796 = vmatprep.subr.mxu0 0.0
  %5797 = vmatpush2.msra.mxu0 0.0
  %5798 = vmatprep.subr.mxu0 0.0
  %5799 = vmatpush2.msra.mxu0 0.0
  %5800 = vmatprep.subr.mxu0 0.0
  %5801 = vmatpush2.msra.mxu0 0.0
  %5802 = vmatprep.subr.mxu0 0.0
  %5803 = vmatpush2.msra.mxu0 0.0
  %5804 = vmatprep.subr.mxu0 0.0
  %5805 = vmatpush2.msra.mxu0 0.0
  %5806 = vmatprep.subr.mxu0 0.0
  %5807 = vmatpush2.msra.mxu0 0.0
  %5808 = vmatprep.mubr.f32.mxu0 0.0
  %v5809 = vand.u32 %v5740, 4294901760
  %v5810 = vsub.f32 %v5740, %v5809
  %v5811 = vand.u32 %v5810, 4294901760
  %v5812 = vsub.f32 %v5810, %v5811
  %v5813 = vand.u32 %v5812, 4294901760
  %5814 = vmatmul.mubr.f32.gmra.mxu0 %v5813
  %v5815 = vpop.f32.mrf.mxu0
  %v5816 = vadd.f32 0.0, %v5815
  %v5817 = vpop.f32.mrf.mxu0
  %v5818 = vadd.f32 0.0, %v5817
  %5819 = vdwg.mxu0
  %5820 = vmatprep.subr.mxu0 0.0
  %5821 = vmatpush1.msra.mxu0 0.0
  %5822 = vmatprep.subr.mxu0 0.0
  %5823 = vmatpush1.msra.mxu0 0.0
  %5824 = vmatprep.subr.mxu0 0.0
  %5825 = vmatpush1.msra.mxu0 0.0
  %5826 = vmatprep.subr.mxu0 0.0
  %5827 = vmatpush1.msra.mxu0 0.0
  %5828 = vmatprep.subr.mxu0 0.0
  %5829 = vmatpush1.msra.mxu0 0.0
  %5830 = vmatprep.subr.mxu0 0.0
  %5831 = vmatpush1.msra.mxu0 0.0
  %5832 = vmatprep.subr.mxu0 0.0
  %5833 = vmatpush1.msra.mxu0 0.0
  %5834 = vmatprep.subr.mxu0 0.0
  %5835 = vmatpush1.msra.mxu0 0.0
  %5836 = vmatprep.subr.mxu0 0.0
  %5837 = vmatpush1.msra.mxu0 0.0
  %5838 = vmatprep.subr.mxu0 0.0
  %5839 = vmatpush1.msra.mxu0 0.0
  %5840 = vmatprep.subr.mxu0 0.0
  %5841 = vmatpush1.msra.mxu0 0.0
  %5842 = vmatprep.subr.mxu0 0.0
  %5843 = vmatpush1.msra.mxu0 0.0
  %5844 = vmatprep.subr.mxu0 0.0
  %5845 = vmatpush1.msra.mxu0 0.0
  %5846 = vmatprep.subr.mxu0 0.0
  %5847 = vmatpush1.msra.mxu0 0.0
  %5848 = vmatprep.subr.mxu0 0.0
  %5849 = vmatpush1.msra.mxu0 0.0
  %v5850 = vand.u32 %v38, 4294901760
  %v5851 = vsub.f32 %v38, %v5850
  %v5852 = vand.u32 %v5851, 4294901760
  %v5853 = vsub.f32 %v5851, %v5852
  %v5854 = vand.u32 %v5853, 4294901760
  %5855 = vmatprep.subr.mxu0 %v5854
  %v5856 = vand.u32 %v37, 4294901760
  %v5857 = vsub.f32 %v37, %v5856
  %v5858 = vand.u32 %v5857, 4294901760
  %v5859 = vsub.f32 %v5857, %v5858
  %v5860 = vand.u32 %v5859, 4294901760
  %5861 = vmatpush1.msra.mxu0 %v5860
  %5862 = vmatprep.subr.mxu0 0.0
  %5863 = vmatpush2.msra.mxu0 0.0
  %5864 = vmatprep.subr.mxu0 0.0
  %5865 = vmatpush2.msra.mxu0 0.0
  %5866 = vmatprep.subr.mxu0 0.0
  %5867 = vmatpush2.msra.mxu0 0.0
  %5868 = vmatprep.subr.mxu0 0.0
  %5869 = vmatpush2.msra.mxu0 0.0
  %5870 = vmatprep.subr.mxu0 0.0
  %5871 = vmatpush2.msra.mxu0 0.0
  %5872 = vmatprep.subr.mxu0 0.0
  %5873 = vmatpush2.msra.mxu0 0.0
  %5874 = vmatprep.subr.mxu0 0.0
  %5875 = vmatpush2.msra.mxu0 0.0
  %5876 = vmatprep.subr.mxu0 0.0
  %5877 = vmatpush2.msra.mxu0 0.0
  %5878 = vmatprep.subr.mxu0 0.0
  %5879 = vmatpush2.msra.mxu0 0.0
  %5880 = vmatprep.subr.mxu0 0.0
  %5881 = vmatpush2.msra.mxu0 0.0
  %5882 = vmatprep.subr.mxu0 0.0
  %5883 = vmatpush2.msra.mxu0 0.0
  %5884 = vmatprep.subr.mxu0 0.0
  %5885 = vmatpush2.msra.mxu0 0.0
  %5886 = vmatprep.subr.mxu0 0.0
  %5887 = vmatpush2.msra.mxu0 0.0
  %5888 = vmatprep.subr.mxu0 0.0
  %5889 = vmatpush2.msra.mxu0 0.0
  %5890 = vmatprep.subr.mxu0 0.0
  %5891 = vmatpush2.msra.mxu0 0.0
  %5892 = vmatprep.subr.mxu0 0.0
  %5893 = vmatpush2.msra.mxu0 0.0
  %5894 = vmatprep.mubr.f32.mxu0 0.0
  %v5895 = vand.u32 %v5740, 4294901760
  %5896 = vmatmul.mubr.f32.gmra.mxu0 %v5895
  %v5897 = vpop.f32.mrf.mxu0
  %v5898 = vadd.f32 %v5816, %v5897
  %v5899 = vpop.f32.mrf.mxu0
  %v5900 = vadd.f32 %v5818, %v5899
  %5901 = vdwg.mxu0
  %5902 = vmatprep.subr.mxu0 0.0
  %5903 = vmatpush1.msra.mxu0 0.0
  %5904 = vmatprep.subr.mxu0 0.0
  %5905 = vmatpush1.msra.mxu0 0.0
  %5906 = vmatprep.subr.mxu0 0.0
  %5907 = vmatpush1.msra.mxu0 0.0
  %5908 = vmatprep.subr.mxu0 0.0
  %5909 = vmatpush1.msra.mxu0 0.0
  %5910 = vmatprep.subr.mxu0 0.0
  %5911 = vmatpush1.msra.mxu0 0.0
  %5912 = vmatprep.subr.mxu0 0.0
  %5913 = vmatpush1.msra.mxu0 0.0
  %5914 = vmatprep.subr.mxu0 0.0
  %5915 = vmatpush1.msra.mxu0 0.0
  %5916 = vmatprep.subr.mxu0 0.0
  %5917 = vmatpush1.msra.mxu0 0.0
  %5918 = vmatprep.subr.mxu0 0.0
  %5919 = vmatpush1.msra.mxu0 0.0
  %5920 = vmatprep.subr.mxu0 0.0
  %5921 = vmatpush1.msra.mxu0 0.0
  %5922 = vmatprep.subr.mxu0 0.0
  %5923 = vmatpush1.msra.mxu0 0.0
  %5924 = vmatprep.subr.mxu0 0.0
  %5925 = vmatpush1.msra.mxu0 0.0
  %5926 = vmatprep.subr.mxu0 0.0
  %5927 = vmatpush1.msra.mxu0 0.0
  %5928 = vmatprep.subr.mxu0 0.0
  %5929 = vmatpush1.msra.mxu0 0.0
  %5930 = vmatprep.subr.mxu0 0.0
  %5931 = vmatpush1.msra.mxu0 0.0
  %v5932 = vand.u32 %v38, 4294901760
  %v5933 = vsub.f32 %v38, %v5932
  %5934 = vmatprep.subr.mxu0 %v5933
  %v5935 = vand.u32 %v37, 4294901760
  %v5936 = vsub.f32 %v37, %v5935
  %5937 = vmatpush1.msra.mxu0 %v5936
  %5938 = vmatprep.subr.mxu0 0.0
  %5939 = vmatpush2.msra.mxu0 0.0
  %5940 = vmatprep.subr.mxu0 0.0
  %5941 = vmatpush2.msra.mxu0 0.0
  %5942 = vmatprep.subr.mxu0 0.0
  %5943 = vmatpush2.msra.mxu0 0.0
  %5944 = vmatprep.subr.mxu0 0.0
  %5945 = vmatpush2.msra.mxu0 0.0
  %5946 = vmatprep.subr.mxu0 0.0
  %5947 = vmatpush2.msra.mxu0 0.0
  %5948 = vmatprep.subr.mxu0 0.0
  %5949 = vmatpush2.msra.mxu0 0.0
  %5950 = vmatprep.subr.mxu0 0.0
  %5951 = vmatpush2.msra.mxu0 0.0
  %5952 = vmatprep.subr.mxu0 0.0
  %5953 = vmatpush2.msra.mxu0 0.0
  %5954 = vmatprep.subr.mxu0 0.0
  %5955 = vmatpush2.msra.mxu0 0.0
  %5956 = vmatprep.subr.mxu0 0.0
  %5957 = vmatpush2.msra.mxu0 0.0
  %5958 = vmatprep.subr.mxu0 0.0
  %5959 = vmatpush2.msra.mxu0 0.0
  %5960 = vmatprep.subr.mxu0 0.0
  %5961 = vmatpush2.msra.mxu0 0.0
  %5962 = vmatprep.subr.mxu0 0.0
  %5963 = vmatpush2.msra.mxu0 0.0
  %5964 = vmatprep.subr.mxu0 0.0
  %5965 = vmatpush2.msra.mxu0 0.0
  %5966 = vmatprep.subr.mxu0 0.0
  %5967 = vmatpush2.msra.mxu0 0.0
  %5968 = vmatprep.subr.mxu0 0.0
  %5969 = vmatpush2.msra.mxu0 0.0
  %5970 = vmatprep.mubr.f32.mxu0 0.0
  %v5971 = vand.u32 %v5740, 4294901760
  %v5972 = vsub.f32 %v5740, %v5971
  %5973 = vmatmul.mubr.f32.gmra.mxu0 %v5972
  %v5974 = vpop.f32.mrf.mxu0
  %v5975 = vadd.f32 %v5898, %v5974
  %v5976 = vpop.f32.mrf.mxu0
  %v5977 = vadd.f32 %v5900, %v5976
  %5978 = vdwg.mxu0
  %5979 = vmatprep.subr.mxu0 0.0
  %5980 = vmatpush1.msra.mxu0 0.0
  %5981 = vmatprep.subr.mxu0 0.0
  %5982 = vmatpush1.msra.mxu0 0.0
  %5983 = vmatprep.subr.mxu0 0.0
  %5984 = vmatpush1.msra.mxu0 0.0
  %5985 = vmatprep.subr.mxu0 0.0
  %5986 = vmatpush1.msra.mxu0 0.0
  %5987 = vmatprep.subr.mxu0 0.0
  %5988 = vmatpush1.msra.mxu0 0.0
  %5989 = vmatprep.subr.mxu0 0.0
  %5990 = vmatpush1.msra.mxu0 0.0
  %5991 = vmatprep.subr.mxu0 0.0
  %5992 = vmatpush1.msra.mxu0 0.0
  %5993 = vmatprep.subr.mxu0 0.0
  %5994 = vmatpush1.msra.mxu0 0.0
  %5995 = vmatprep.subr.mxu0 0.0
  %5996 = vmatpush1.msra.mxu0 0.0
  %5997 = vmatprep.subr.mxu0 0.0
  %5998 = vmatpush1.msra.mxu0 0.0
  %5999 = vmatprep.subr.mxu0 0.0
  %6000 = vmatpush1.msra.mxu0 0.0
  %6001 = vmatprep.subr.mxu0 0.0
  %6002 = vmatpush1.msra.mxu0 0.0
  %6003 = vmatprep.subr.mxu0 0.0
  %6004 = vmatpush1.msra.mxu0 0.0
  %6005 = vmatprep.subr.mxu0 0.0
  %6006 = vmatpush1.msra.mxu0 0.0
  %6007 = vmatprep.subr.mxu0 0.0
  %6008 = vmatpush1.msra.mxu0 0.0
  %v6009 = vand.u32 %v38, 4294901760
  %6010 = vmatprep.subr.mxu0 %v6009
  %v6011 = vand.u32 %v37, 4294901760
  %6012 = vmatpush1.msra.mxu0 %v6011
  %6013 = vmatprep.subr.mxu0 0.0
  %6014 = vmatpush2.msra.mxu0 0.0
  %6015 = vmatprep.subr.mxu0 0.0
  %6016 = vmatpush2.msra.mxu0 0.0
  %6017 = vmatprep.subr.mxu0 0.0
  %6018 = vmatpush2.msra.mxu0 0.0
  %6019 = vmatprep.subr.mxu0 0.0
  %6020 = vmatpush2.msra.mxu0 0.0
  %6021 = vmatprep.subr.mxu0 0.0
  %6022 = vmatpush2.msra.mxu0 0.0
  %6023 = vmatprep.subr.mxu0 0.0
  %6024 = vmatpush2.msra.mxu0 0.0
  %6025 = vmatprep.subr.mxu0 0.0
  %6026 = vmatpush2.msra.mxu0 0.0
  %6027 = vmatprep.subr.mxu0 0.0
  %6028 = vmatpush2.msra.mxu0 0.0
  %6029 = vmatprep.subr.mxu0 0.0
  %6030 = vmatpush2.msra.mxu0 0.0
  %6031 = vmatprep.subr.mxu0 0.0
  %6032 = vmatpush2.msra.mxu0 0.0
  %6033 = vmatprep.subr.mxu0 0.0
  %6034 = vmatpush2.msra.mxu0 0.0
  %6035 = vmatprep.subr.mxu0 0.0
  %6036 = vmatpush2.msra.mxu0 0.0
  %6037 = vmatprep.subr.mxu0 0.0
  %6038 = vmatpush2.msra.mxu0 0.0
  %6039 = vmatprep.subr.mxu0 0.0
  %6040 = vmatpush2.msra.mxu0 0.0
  %6041 = vmatprep.subr.mxu0 0.0
  %6042 = vmatpush2.msra.mxu0 0.0
  %6043 = vmatprep.subr.mxu0 0.0
  %6044 = vmatpush2.msra.mxu0 0.0
  %6045 = vmatprep.mubr.f32.mxu0 0.0
  %v6046 = vand.u32 %v5740, 4294901760
  %v6047 = vsub.f32 %v5740, %v6046
  %v6048 = vand.u32 %v6047, 4294901760
  %6049 = vmatmul.mubr.f32.gmra.mxu0 %v6048
  %v6050 = vpop.f32.mrf.mxu0
  %v6051 = vadd.f32 %v5975, %v6050
  %v6052 = vpop.f32.mrf.mxu0
  %v6053 = vadd.f32 %v5977, %v6052
  %6054 = vdwg.mxu0
  %6055 = vmatprep.subr.mxu0 0.0
  %6056 = vmatpush1.msra.mxu0 0.0
  %6057 = vmatprep.subr.mxu0 0.0
  %6058 = vmatpush1.msra.mxu0 0.0
  %6059 = vmatprep.subr.mxu0 0.0
  %6060 = vmatpush1.msra.mxu0 0.0
  %6061 = vmatprep.subr.mxu0 0.0
  %6062 = vmatpush1.msra.mxu0 0.0
  %6063 = vmatprep.subr.mxu0 0.0
  %6064 = vmatpush1.msra.mxu0 0.0
  %6065 = vmatprep.subr.mxu0 0.0
  %6066 = vmatpush1.msra.mxu0 0.0
  %6067 = vmatprep.subr.mxu0 0.0
  %6068 = vmatpush1.msra.mxu0 0.0
  %6069 = vmatprep.subr.mxu0 0.0
  %6070 = vmatpush1.msra.mxu0 0.0
  %6071 = vmatprep.subr.mxu0 0.0
  %6072 = vmatpush1.msra.mxu0 0.0
  %6073 = vmatprep.subr.mxu0 0.0
  %6074 = vmatpush1.msra.mxu0 0.0
  %6075 = vmatprep.subr.mxu0 0.0
  %6076 = vmatpush1.msra.mxu0 0.0
  %6077 = vmatprep.subr.mxu0 0.0
  %6078 = vmatpush1.msra.mxu0 0.0
  %6079 = vmatprep.subr.mxu0 0.0
  %6080 = vmatpush1.msra.mxu0 0.0
  %6081 = vmatprep.subr.mxu0 0.0
  %6082 = vmatpush1.msra.mxu0 0.0
  %6083 = vmatprep.subr.mxu0 0.0
  %6084 = vmatpush1.msra.mxu0 0.0
  %v6085 = vand.u32 %v38, 4294901760
  %v6086 = vsub.f32 %v38, %v6085
  %v6087 = vand.u32 %v6086, 4294901760
  %6088 = vmatprep.subr.mxu0 %v6087
  %v6089 = vand.u32 %v37, 4294901760
  %v6090 = vsub.f32 %v37, %v6089
  %v6091 = vand.u32 %v6090, 4294901760
  %6092 = vmatpush1.msra.mxu0 %v6091
  %6093 = vmatprep.subr.mxu0 0.0
  %6094 = vmatpush2.msra.mxu0 0.0
  %6095 = vmatprep.subr.mxu0 0.0
  %6096 = vmatpush2.msra.mxu0 0.0
  %6097 = vmatprep.subr.mxu0 0.0
  %6098 = vmatpush2.msra.mxu0 0.0
  %6099 = vmatprep.subr.mxu0 0.0
  %6100 = vmatpush2.msra.mxu0 0.0
  %6101 = vmatprep.subr.mxu0 0.0
  %6102 = vmatpush2.msra.mxu0 0.0
  %6103 = vmatprep.subr.mxu0 0.0
  %6104 = vmatpush2.msra.mxu0 0.0
  %6105 = vmatprep.subr.mxu0 0.0
  %6106 = vmatpush2.msra.mxu0 0.0
  %6107 = vmatprep.subr.mxu0 0.0
  %6108 = vmatpush2.msra.mxu0 0.0
  %6109 = vmatprep.subr.mxu0 0.0
  %6110 = vmatpush2.msra.mxu0 0.0
  %6111 = vmatprep.subr.mxu0 0.0
  %6112 = vmatpush2.msra.mxu0 0.0
  %6113 = vmatprep.subr.mxu0 0.0
  %6114 = vmatpush2.msra.mxu0 0.0
  %6115 = vmatprep.subr.mxu0 0.0
  %6116 = vmatpush2.msra.mxu0 0.0
  %6117 = vmatprep.subr.mxu0 0.0
  %6118 = vmatpush2.msra.mxu0 0.0
  %6119 = vmatprep.subr.mxu0 0.0
  %6120 = vmatpush2.msra.mxu0 0.0
  %6121 = vmatprep.subr.mxu0 0.0
  %6122 = vmatpush2.msra.mxu0 0.0
  %6123 = vmatprep.subr.mxu0 0.0
  %6124 = vmatpush2.msra.mxu0 0.0
  %6125 = vmatprep.mubr.f32.mxu0 0.0
  %v6126 = vand.u32 %v5740, 4294901760
  %6127 = vmatmul.mubr.f32.gmra.mxu0 %v6126
  %v6128 = vpop.f32.mrf.mxu0
  %v6129 = vadd.f32 %v6051, %v6128
  %v6130 = vpop.f32.mrf.mxu0
  %v6131 = vadd.f32 %v6053, %v6130
  %6132 = vdwg.mxu0
  %6133 = vmatprep.subr.mxu0 0.0
  %6134 = vmatpush1.msra.mxu0 0.0
  %6135 = vmatprep.subr.mxu0 0.0
  %6136 = vmatpush1.msra.mxu0 0.0
  %6137 = vmatprep.subr.mxu0 0.0
  %6138 = vmatpush1.msra.mxu0 0.0
  %6139 = vmatprep.subr.mxu0 0.0
  %6140 = vmatpush1.msra.mxu0 0.0
  %6141 = vmatprep.subr.mxu0 0.0
  %6142 = vmatpush1.msra.mxu0 0.0
  %6143 = vmatprep.subr.mxu0 0.0
  %6144 = vmatpush1.msra.mxu0 0.0
  %6145 = vmatprep.subr.mxu0 0.0
  %6146 = vmatpush1.msra.mxu0 0.0
  %6147 = vmatprep.subr.mxu0 0.0
  %6148 = vmatpush1.msra.mxu0 0.0
  %6149 = vmatprep.subr.mxu0 0.0
  %6150 = vmatpush1.msra.mxu0 0.0
  %6151 = vmatprep.subr.mxu0 0.0
  %6152 = vmatpush1.msra.mxu0 0.0
  %6153 = vmatprep.subr.mxu0 0.0
  %6154 = vmatpush1.msra.mxu0 0.0
  %6155 = vmatprep.subr.mxu0 0.0
  %6156 = vmatpush1.msra.mxu0 0.0
  %6157 = vmatprep.subr.mxu0 0.0
  %6158 = vmatpush1.msra.mxu0 0.0
  %6159 = vmatprep.subr.mxu0 0.0
  %6160 = vmatpush1.msra.mxu0 0.0
  %6161 = vmatprep.subr.mxu0 0.0
  %6162 = vmatpush1.msra.mxu0 0.0
  %v6163 = vand.u32 %v38, 4294901760
  %6164 = vmatprep.subr.mxu0 %v6163
  %v6165 = vand.u32 %v37, 4294901760
  %6166 = vmatpush1.msra.mxu0 %v6165
  %6167 = vmatprep.subr.mxu0 0.0
  %6168 = vmatpush2.msra.mxu0 0.0
  %6169 = vmatprep.subr.mxu0 0.0
  %6170 = vmatpush2.msra.mxu0 0.0
  %6171 = vmatprep.subr.mxu0 0.0
  %6172 = vmatpush2.msra.mxu0 0.0
  %6173 = vmatprep.subr.mxu0 0.0
  %6174 = vmatpush2.msra.mxu0 0.0
  %6175 = vmatprep.subr.mxu0 0.0
  %6176 = vmatpush2.msra.mxu0 0.0
  %6177 = vmatprep.subr.mxu0 0.0
  %6178 = vmatpush2.msra.mxu0 0.0
  %6179 = vmatprep.subr.mxu0 0.0
  %6180 = vmatpush2.msra.mxu0 0.0
  %6181 = vmatprep.subr.mxu0 0.0
  %6182 = vmatpush2.msra.mxu0 0.0
  %6183 = vmatprep.subr.mxu0 0.0
  %6184 = vmatpush2.msra.mxu0 0.0
  %6185 = vmatprep.subr.mxu0 0.0
  %6186 = vmatpush2.msra.mxu0 0.0
  %6187 = vmatprep.subr.mxu0 0.0
  %6188 = vmatpush2.msra.mxu0 0.0
  %6189 = vmatprep.subr.mxu0 0.0
  %6190 = vmatpush2.msra.mxu0 0.0
  %6191 = vmatprep.subr.mxu0 0.0
  %6192 = vmatpush2.msra.mxu0 0.0
  %6193 = vmatprep.subr.mxu0 0.0
  %6194 = vmatpush2.msra.mxu0 0.0
  %6195 = vmatprep.subr.mxu0 0.0
  %6196 = vmatpush2.msra.mxu0 0.0
  %6197 = vmatprep.subr.mxu0 0.0
  %6198 = vmatpush2.msra.mxu0 0.0
  %6199 = vmatprep.mubr.f32.mxu0 0.0
  %v6200 = vand.u32 %v5740, 4294901760
  %6201 = vmatmul.mubr.f32.gmra.mxu0 %v6200
  %v6202 = vpop.f32.mrf.mxu0
  %v6203 = vadd.f32 %v6129, %v6202
  %v6204 = vpop.f32.mrf.mxu0
  %v6205 = vadd.f32 %v6131, %v6204
  %6206 = vdwg.mxu0
  %6208 = vrot.lane.b32.xlu0 %v5736, 64
  %v6209 = vpop.permute.xlu0 %6208
  %v6210 = vsel %vm508, %v6209, 0
  %6212 = vmatprep.subr.mxu0 0.0
  %6213 = vmatpush1.msra.mxu0 0.0
  %6214 = vmatprep.subr.mxu0 0.0
  %6215 = vmatpush1.msra.mxu0 0.0
  %6216 = vmatprep.subr.mxu0 0.0
  %6217 = vmatpush1.msra.mxu0 0.0
  %6218 = vmatprep.subr.mxu0 0.0
  %6219 = vmatpush1.msra.mxu0 0.0
  %6220 = vmatprep.subr.mxu0 0.0
  %6221 = vmatpush1.msra.mxu0 0.0
  %6222 = vmatprep.subr.mxu0 0.0
  %6223 = vmatpush1.msra.mxu0 0.0
  %6224 = vmatprep.subr.mxu0 0.0
  %6225 = vmatpush1.msra.mxu0 0.0
  %6226 = vmatprep.subr.mxu0 0.0
  %6227 = vmatpush1.msra.mxu0 0.0
  %v6228 = vand.u32 %v35, 4294901760
  %6229 = vmatprep.subr.mxu0 %v6228
  %v6230 = vand.u32 %v34, 4294901760
  %6231 = vmatpush1.msra.mxu0 %v6230
  %v6232 = vand.u32 %v33, 4294901760
  %6233 = vmatprep.subr.mxu0 %v6232
  %v6234 = vand.u32 %v32, 4294901760
  %6235 = vmatpush1.msra.mxu0 %v6234
  %v6236 = vand.u32 %v31, 4294901760
  %6237 = vmatprep.subr.mxu0 %v6236
  %v6238 = vand.u32 %v30, 4294901760
  %6239 = vmatpush1.msra.mxu0 %v6238
  %v6240 = vand.u32 %v29, 4294901760
  %6241 = vmatprep.subr.mxu0 %v6240
  %v6242 = vand.u32 %v28, 4294901760
  %6243 = vmatpush1.msra.mxu0 %v6242
  %v6244 = vand.u32 %v27, 4294901760
  %6245 = vmatprep.subr.mxu0 %v6244
  %v6246 = vand.u32 %v26, 4294901760
  %6247 = vmatpush1.msra.mxu0 %v6246
  %v6248 = vand.u32 %v25, 4294901760
  %6249 = vmatprep.subr.mxu0 %v6248
  %v6250 = vand.u32 %v24, 4294901760
  %6251 = vmatpush1.msra.mxu0 %v6250
  %v6252 = vand.u32 %v23, 4294901760
  %6253 = vmatprep.subr.mxu0 %v6252
  %v6254 = vand.u32 %v22, 4294901760
  %6255 = vmatpush1.msra.mxu0 %v6254
  %v6256 = vand.u32 %v21, 4294901760
  %6257 = vmatprep.subr.mxu0 %v6256
  %v6258 = vand.u32 %v20, 4294901760
  %6259 = vmatpush1.msra.mxu0 %v6258
  %6260 = vmatprep.subr.mxu0 0.0
  %6261 = vmatpush2.msra.mxu0 0.0
  %6262 = vmatprep.subr.mxu0 0.0
  %6263 = vmatpush2.msra.mxu0 0.0
  %6264 = vmatprep.subr.mxu0 0.0
  %6265 = vmatpush2.msra.mxu0 0.0
  %6266 = vmatprep.subr.mxu0 0.0
  %6267 = vmatpush2.msra.mxu0 0.0
  %6268 = vmatprep.subr.mxu0 0.0
  %6269 = vmatpush2.msra.mxu0 0.0
  %6270 = vmatprep.subr.mxu0 0.0
  %6271 = vmatpush2.msra.mxu0 0.0
  %6272 = vmatprep.subr.mxu0 0.0
  %6273 = vmatpush2.msra.mxu0 0.0
  %6274 = vmatprep.subr.mxu0 0.0
  %6275 = vmatpush2.msra.mxu0 0.0
  %6276 = vmatprep.subr.mxu0 0.0
  %6277 = vmatpush2.msra.mxu0 0.0
  %6278 = vmatprep.subr.mxu0 0.0
  %6279 = vmatpush2.msra.mxu0 0.0
  %6280 = vmatprep.subr.mxu0 0.0
  %6281 = vmatpush2.msra.mxu0 0.0
  %6282 = vmatprep.subr.mxu0 0.0
  %6283 = vmatpush2.msra.mxu0 0.0
  %6284 = vmatprep.subr.mxu0 0.0
  %6285 = vmatpush2.msra.mxu0 0.0
  %6286 = vmatprep.subr.mxu0 0.0
  %6287 = vmatpush2.msra.mxu0 0.0
  %6288 = vmatprep.subr.mxu0 0.0
  %6289 = vmatpush2.msra.mxu0 0.0
  %6290 = vmatprep.subr.mxu0 0.0
  %6291 = vmatpush2.msra.mxu0 0.0
  %6292 = vmatprep.mubr.f32.mxu0 0.0
  %v6293 = vand.u32 %v6210, 4294901760
  %v6294 = vsub.f32 %v6210, %v6293
  %v6295 = vand.u32 %v6294, 4294901760
  %v6296 = vsub.f32 %v6294, %v6295
  %v6297 = vand.u32 %v6296, 4294901760
  %6298 = vmatmul.mubr.f32.gmra.mxu0 %v6297
  %v6299 = vpop.f32.mrf.mxu0
  %v6300 = vadd.f32 %v6203, %v6299
  %v6301 = vpop.f32.mrf.mxu0
  %v6302 = vadd.f32 %v6205, %v6301
  %6303 = vdwg.mxu0
  %6304 = vmatprep.subr.mxu0 0.0
  %6305 = vmatpush1.msra.mxu0 0.0
  %6306 = vmatprep.subr.mxu0 0.0
  %6307 = vmatpush1.msra.mxu0 0.0
  %6308 = vmatprep.subr.mxu0 0.0
  %6309 = vmatpush1.msra.mxu0 0.0
  %6310 = vmatprep.subr.mxu0 0.0
  %6311 = vmatpush1.msra.mxu0 0.0
  %6312 = vmatprep.subr.mxu0 0.0
  %6313 = vmatpush1.msra.mxu0 0.0
  %6314 = vmatprep.subr.mxu0 0.0
  %6315 = vmatpush1.msra.mxu0 0.0
  %6316 = vmatprep.subr.mxu0 0.0
  %6317 = vmatpush1.msra.mxu0 0.0
  %6318 = vmatprep.subr.mxu0 0.0
  %6319 = vmatpush1.msra.mxu0 0.0
  %v6320 = vand.u32 %v35, 4294901760
  %v6321 = vsub.f32 %v35, %v6320
  %v6322 = vand.u32 %v6321, 4294901760
  %v6323 = vsub.f32 %v6321, %v6322
  %v6324 = vand.u32 %v6323, 4294901760
  %6325 = vmatprep.subr.mxu0 %v6324
  %v6326 = vand.u32 %v34, 4294901760
  %v6327 = vsub.f32 %v34, %v6326
  %v6328 = vand.u32 %v6327, 4294901760
  %v6329 = vsub.f32 %v6327, %v6328
  %v6330 = vand.u32 %v6329, 4294901760
  %6331 = vmatpush1.msra.mxu0 %v6330
  %v6332 = vand.u32 %v33, 4294901760
  %v6333 = vsub.f32 %v33, %v6332
  %v6334 = vand.u32 %v6333, 4294901760
  %v6335 = vsub.f32 %v6333, %v6334
  %v6336 = vand.u32 %v6335, 4294901760
  %6337 = vmatprep.subr.mxu0 %v6336
  %v6338 = vand.u32 %v32, 4294901760
  %v6339 = vsub.f32 %v32, %v6338
  %v6340 = vand.u32 %v6339, 4294901760
  %v6341 = vsub.f32 %v6339, %v6340
  %v6342 = vand.u32 %v6341, 4294901760
  %6343 = vmatpush1.msra.mxu0 %v6342
  %v6344 = vand.u32 %v31, 4294901760
  %v6345 = vsub.f32 %v31, %v6344
  %v6346 = vand.u32 %v6345, 4294901760
  %v6347 = vsub.f32 %v6345, %v6346
  %v6348 = vand.u32 %v6347, 4294901760
  %6349 = vmatprep.subr.mxu0 %v6348
  %v6350 = vand.u32 %v30, 4294901760
  %v6351 = vsub.f32 %v30, %v6350
  %v6352 = vand.u32 %v6351, 4294901760
  %v6353 = vsub.f32 %v6351, %v6352
  %v6354 = vand.u32 %v6353, 4294901760
  %6355 = vmatpush1.msra.mxu0 %v6354
  %v6356 = vand.u32 %v29, 4294901760
  %v6357 = vsub.f32 %v29, %v6356
  %v6358 = vand.u32 %v6357, 4294901760
  %v6359 = vsub.f32 %v6357, %v6358
  %v6360 = vand.u32 %v6359, 4294901760
  %6361 = vmatprep.subr.mxu0 %v6360
  %v6362 = vand.u32 %v28, 4294901760
  %v6363 = vsub.f32 %v28, %v6362
  %v6364 = vand.u32 %v6363, 4294901760
  %v6365 = vsub.f32 %v6363, %v6364
  %v6366 = vand.u32 %v6365, 4294901760
  %6367 = vmatpush1.msra.mxu0 %v6366
  %v6368 = vand.u32 %v27, 4294901760
  %v6369 = vsub.f32 %v27, %v6368
  %v6370 = vand.u32 %v6369, 4294901760
  %v6371 = vsub.f32 %v6369, %v6370
  %v6372 = vand.u32 %v6371, 4294901760
  %6373 = vmatprep.subr.mxu0 %v6372
  %v6374 = vand.u32 %v26, 4294901760
  %v6375 = vsub.f32 %v26, %v6374
  %v6376 = vand.u32 %v6375, 4294901760
  %v6377 = vsub.f32 %v6375, %v6376
  %v6378 = vand.u32 %v6377, 4294901760
  %6379 = vmatpush1.msra.mxu0 %v6378
  %v6380 = vand.u32 %v25, 4294901760
  %v6381 = vsub.f32 %v25, %v6380
  %v6382 = vand.u32 %v6381, 4294901760
  %v6383 = vsub.f32 %v6381, %v6382
  %v6384 = vand.u32 %v6383, 4294901760
  %6385 = vmatprep.subr.mxu0 %v6384
  %v6386 = vand.u32 %v24, 4294901760
  %v6387 = vsub.f32 %v24, %v6386
  %v6388 = vand.u32 %v6387, 4294901760
  %v6389 = vsub.f32 %v6387, %v6388
  %v6390 = vand.u32 %v6389, 4294901760
  %6391 = vmatpush1.msra.mxu0 %v6390
  %v6392 = vand.u32 %v23, 4294901760
  %v6393 = vsub.f32 %v23, %v6392
  %v6394 = vand.u32 %v6393, 4294901760
  %v6395 = vsub.f32 %v6393, %v6394
  %v6396 = vand.u32 %v6395, 4294901760
  %6397 = vmatprep.subr.mxu0 %v6396
  %v6398 = vand.u32 %v22, 4294901760
  %v6399 = vsub.f32 %v22, %v6398
  %v6400 = vand.u32 %v6399, 4294901760
  %v6401 = vsub.f32 %v6399, %v6400
  %v6402 = vand.u32 %v6401, 4294901760
  %6403 = vmatpush1.msra.mxu0 %v6402
  %v6404 = vand.u32 %v21, 4294901760
  %v6405 = vsub.f32 %v21, %v6404
  %v6406 = vand.u32 %v6405, 4294901760
  %v6407 = vsub.f32 %v6405, %v6406
  %v6408 = vand.u32 %v6407, 4294901760
  %6409 = vmatprep.subr.mxu0 %v6408
  %v6410 = vand.u32 %v20, 4294901760
  %v6411 = vsub.f32 %v20, %v6410
  %v6412 = vand.u32 %v6411, 4294901760
  %v6413 = vsub.f32 %v6411, %v6412
  %v6414 = vand.u32 %v6413, 4294901760
  %6415 = vmatpush1.msra.mxu0 %v6414
  %6416 = vmatprep.subr.mxu0 0.0
  %6417 = vmatpush2.msra.mxu0 0.0
  %6418 = vmatprep.subr.mxu0 0.0
  %6419 = vmatpush2.msra.mxu0 0.0
  %6420 = vmatprep.subr.mxu0 0.0
  %6421 = vmatpush2.msra.mxu0 0.0
  %6422 = vmatprep.subr.mxu0 0.0
  %6423 = vmatpush2.msra.mxu0 0.0
  %6424 = vmatprep.subr.mxu0 0.0
  %6425 = vmatpush2.msra.mxu0 0.0
  %6426 = vmatprep.subr.mxu0 0.0
  %6427 = vmatpush2.msra.mxu0 0.0
  %6428 = vmatprep.subr.mxu0 0.0
  %6429 = vmatpush2.msra.mxu0 0.0
  %6430 = vmatprep.subr.mxu0 0.0
  %6431 = vmatpush2.msra.mxu0 0.0
  %6432 = vmatprep.subr.mxu0 0.0
  %6433 = vmatpush2.msra.mxu0 0.0
  %6434 = vmatprep.subr.mxu0 0.0
  %6435 = vmatpush2.msra.mxu0 0.0
  %6436 = vmatprep.subr.mxu0 0.0
  %6437 = vmatpush2.msra.mxu0 0.0
  %6438 = vmatprep.subr.mxu0 0.0
  %6439 = vmatpush2.msra.mxu0 0.0
  %6440 = vmatprep.subr.mxu0 0.0
  %6441 = vmatpush2.msra.mxu0 0.0
  %6442 = vmatprep.subr.mxu0 0.0
  %6443 = vmatpush2.msra.mxu0 0.0
  %6444 = vmatprep.subr.mxu0 0.0
  %6445 = vmatpush2.msra.mxu0 0.0
  %6446 = vmatprep.subr.mxu0 0.0
  %6447 = vmatpush2.msra.mxu0 0.0
  %6448 = vmatprep.mubr.f32.mxu0 0.0
  %v6449 = vand.u32 %v6210, 4294901760
  %6450 = vmatmul.mubr.f32.gmra.mxu0 %v6449
  %v6451 = vpop.f32.mrf.mxu0
  %v6452 = vadd.f32 %v6300, %v6451
  %v6453 = vpop.f32.mrf.mxu0
  %v6454 = vadd.f32 %v6302, %v6453
  %6455 = vdwg.mxu0
  %6456 = vmatprep.subr.mxu0 0.0
  %6457 = vmatpush1.msra.mxu0 0.0
  %6458 = vmatprep.subr.mxu0 0.0
  %6459 = vmatpush1.msra.mxu0 0.0
  %6460 = vmatprep.subr.mxu0 0.0
  %6461 = vmatpush1.msra.mxu0 0.0
  %6462 = vmatprep.subr.mxu0 0.0
  %6463 = vmatpush1.msra.mxu0 0.0
  %6464 = vmatprep.subr.mxu0 0.0
  %6465 = vmatpush1.msra.mxu0 0.0
  %6466 = vmatprep.subr.mxu0 0.0
  %6467 = vmatpush1.msra.mxu0 0.0
  %6468 = vmatprep.subr.mxu0 0.0
  %6469 = vmatpush1.msra.mxu0 0.0
  %6470 = vmatprep.subr.mxu0 0.0
  %6471 = vmatpush1.msra.mxu0 0.0
  %v6472 = vand.u32 %v35, 4294901760
  %v6473 = vsub.f32 %v35, %v6472
  %6474 = vmatprep.subr.mxu0 %v6473
  %v6475 = vand.u32 %v34, 4294901760
  %v6476 = vsub.f32 %v34, %v6475
  %6477 = vmatpush1.msra.mxu0 %v6476
  %v6478 = vand.u32 %v33, 4294901760
  %v6479 = vsub.f32 %v33, %v6478
  %6480 = vmatprep.subr.mxu0 %v6479
  %v6481 = vand.u32 %v32, 4294901760
  %v6482 = vsub.f32 %v32, %v6481
  %6483 = vmatpush1.msra.mxu0 %v6482
  %v6484 = vand.u32 %v31, 4294901760
  %v6485 = vsub.f32 %v31, %v6484
  %6486 = vmatprep.subr.mxu0 %v6485
  %v6487 = vand.u32 %v30, 4294901760
  %v6488 = vsub.f32 %v30, %v6487
  %6489 = vmatpush1.msra.mxu0 %v6488
  %v6490 = vand.u32 %v29, 4294901760
  %v6491 = vsub.f32 %v29, %v6490
  %6492 = vmatprep.subr.mxu0 %v6491
  %v6493 = vand.u32 %v28, 4294901760
  %v6494 = vsub.f32 %v28, %v6493
  %6495 = vmatpush1.msra.mxu0 %v6494
  %v6496 = vand.u32 %v27, 4294901760
  %v6497 = vsub.f32 %v27, %v6496
  %6498 = vmatprep.subr.mxu0 %v6497
  %v6499 = vand.u32 %v26, 4294901760
  %v6500 = vsub.f32 %v26, %v6499
  %6501 = vmatpush1.msra.mxu0 %v6500
  %v6502 = vand.u32 %v25, 4294901760
  %v6503 = vsub.f32 %v25, %v6502
  %6504 = vmatprep.subr.mxu0 %v6503
  %v6505 = vand.u32 %v24, 4294901760
  %v6506 = vsub.f32 %v24, %v6505
  %6507 = vmatpush1.msra.mxu0 %v6506
  %v6508 = vand.u32 %v23, 4294901760
  %v6509 = vsub.f32 %v23, %v6508
  %6510 = vmatprep.subr.mxu0 %v6509
  %v6511 = vand.u32 %v22, 4294901760
  %v6512 = vsub.f32 %v22, %v6511
  %6513 = vmatpush1.msra.mxu0 %v6512
  %v6514 = vand.u32 %v21, 4294901760
  %v6515 = vsub.f32 %v21, %v6514
  %6516 = vmatprep.subr.mxu0 %v6515
  %v6517 = vand.u32 %v20, 4294901760
  %v6518 = vsub.f32 %v20, %v6517
  %6519 = vmatpush1.msra.mxu0 %v6518
  %6520 = vmatprep.subr.mxu0 0.0
  %6521 = vmatpush2.msra.mxu0 0.0
  %6522 = vmatprep.subr.mxu0 0.0
  %6523 = vmatpush2.msra.mxu0 0.0
  %6524 = vmatprep.subr.mxu0 0.0
  %6525 = vmatpush2.msra.mxu0 0.0
  %6526 = vmatprep.subr.mxu0 0.0
  %6527 = vmatpush2.msra.mxu0 0.0
  %6528 = vmatprep.subr.mxu0 0.0
  %6529 = vmatpush2.msra.mxu0 0.0
  %6530 = vmatprep.subr.mxu0 0.0
  %6531 = vmatpush2.msra.mxu0 0.0
  %6532 = vmatprep.subr.mxu0 0.0
  %6533 = vmatpush2.msra.mxu0 0.0
  %6534 = vmatprep.subr.mxu0 0.0
  %6535 = vmatpush2.msra.mxu0 0.0
  %6536 = vmatprep.subr.mxu0 0.0
  %6537 = vmatpush2.msra.mxu0 0.0
  %6538 = vmatprep.subr.mxu0 0.0
  %6539 = vmatpush2.msra.mxu0 0.0
  %6540 = vmatprep.subr.mxu0 0.0
  %6541 = vmatpush2.msra.mxu0 0.0
  %6542 = vmatprep.subr.mxu0 0.0
  %6543 = vmatpush2.msra.mxu0 0.0
  %6544 = vmatprep.subr.mxu0 0.0
  %6545 = vmatpush2.msra.mxu0 0.0
  %6546 = vmatprep.subr.mxu0 0.0
  %6547 = vmatpush2.msra.mxu0 0.0
  %6548 = vmatprep.subr.mxu0 0.0
  %6549 = vmatpush2.msra.mxu0 0.0
  %6550 = vmatprep.subr.mxu0 0.0
  %6551 = vmatpush2.msra.mxu0 0.0
  %6552 = vmatprep.mubr.f32.mxu0 0.0
  %v6553 = vand.u32 %v6210, 4294901760
  %v6554 = vsub.f32 %v6210, %v6553
  %6555 = vmatmul.mubr.f32.gmra.mxu0 %v6554
  %v6556 = vpop.f32.mrf.mxu0
  %v6557 = vadd.f32 %v6452, %v6556
  %v6558 = vpop.f32.mrf.mxu0
  %v6559 = vadd.f32 %v6454, %v6558
  %6560 = vdwg.mxu0
  %6561 = vmatprep.subr.mxu0 0.0
  %6562 = vmatpush1.msra.mxu0 0.0
  %6563 = vmatprep.subr.mxu0 0.0
  %6564 = vmatpush1.msra.mxu0 0.0
  %6565 = vmatprep.subr.mxu0 0.0
  %6566 = vmatpush1.msra.mxu0 0.0
  %6567 = vmatprep.subr.mxu0 0.0
  %6568 = vmatpush1.msra.mxu0 0.0
  %6569 = vmatprep.subr.mxu0 0.0
  %6570 = vmatpush1.msra.mxu0 0.0
  %6571 = vmatprep.subr.mxu0 0.0
  %6572 = vmatpush1.msra.mxu0 0.0
  %6573 = vmatprep.subr.mxu0 0.0
  %6574 = vmatpush1.msra.mxu0 0.0
  %6575 = vmatprep.subr.mxu0 0.0
  %6576 = vmatpush1.msra.mxu0 0.0
  %v6577 = vand.u32 %v35, 4294901760
  %6578 = vmatprep.subr.mxu0 %v6577
  %v6579 = vand.u32 %v34, 4294901760
  %6580 = vmatpush1.msra.mxu0 %v6579
  %v6581 = vand.u32 %v33, 4294901760
  %6582 = vmatprep.subr.mxu0 %v6581
  %v6583 = vand.u32 %v32, 4294901760
  %6584 = vmatpush1.msra.mxu0 %v6583
  %v6585 = vand.u32 %v31, 4294901760
  %6586 = vmatprep.subr.mxu0 %v6585
  %v6587 = vand.u32 %v30, 4294901760
  %6588 = vmatpush1.msra.mxu0 %v6587
  %v6589 = vand.u32 %v29, 4294901760
  %6590 = vmatprep.subr.mxu0 %v6589
  %v6591 = vand.u32 %v28, 4294901760
  %6592 = vmatpush1.msra.mxu0 %v6591
  %v6593 = vand.u32 %v27, 4294901760
  %6594 = vmatprep.subr.mxu0 %v6593
  %v6595 = vand.u32 %v26, 4294901760
  %6596 = vmatpush1.msra.mxu0 %v6595
  %v6597 = vand.u32 %v25, 4294901760
  %6598 = vmatprep.subr.mxu0 %v6597
  %v6599 = vand.u32 %v24, 4294901760
  %6600 = vmatpush1.msra.mxu0 %v6599
  %v6601 = vand.u32 %v23, 4294901760
  %6602 = vmatprep.subr.mxu0 %v6601
  %v6603 = vand.u32 %v22, 4294901760
  %6604 = vmatpush1.msra.mxu0 %v6603
  %v6605 = vand.u32 %v21, 4294901760
  %6606 = vmatprep.subr.mxu0 %v6605
  %v6607 = vand.u32 %v20, 4294901760
  %6608 = vmatpush1.msra.mxu0 %v6607
  %6609 = vmatprep.subr.mxu0 0.0
  %6610 = vmatpush2.msra.mxu0 0.0
  %6611 = vmatprep.subr.mxu0 0.0
  %6612 = vmatpush2.msra.mxu0 0.0
  %6613 = vmatprep.subr.mxu0 0.0
  %6614 = vmatpush2.msra.mxu0 0.0
  %6615 = vmatprep.subr.mxu0 0.0
  %6616 = vmatpush2.msra.mxu0 0.0
  %6617 = vmatprep.subr.mxu0 0.0
  %6618 = vmatpush2.msra.mxu0 0.0
  %6619 = vmatprep.subr.mxu0 0.0
  %6620 = vmatpush2.msra.mxu0 0.0
  %6621 = vmatprep.subr.mxu0 0.0
  %6622 = vmatpush2.msra.mxu0 0.0
  %6623 = vmatprep.subr.mxu0 0.0
  %6624 = vmatpush2.msra.mxu0 0.0
  %6625 = vmatprep.subr.mxu0 0.0
  %6626 = vmatpush2.msra.mxu0 0.0
  %6627 = vmatprep.subr.mxu0 0.0
  %6628 = vmatpush2.msra.mxu0 0.0
  %6629 = vmatprep.subr.mxu0 0.0
  %6630 = vmatpush2.msra.mxu0 0.0
  %6631 = vmatprep.subr.mxu0 0.0
  %6632 = vmatpush2.msra.mxu0 0.0
  %6633 = vmatprep.subr.mxu0 0.0
  %6634 = vmatpush2.msra.mxu0 0.0
  %6635 = vmatprep.subr.mxu0 0.0
  %6636 = vmatpush2.msra.mxu0 0.0
  %6637 = vmatprep.subr.mxu0 0.0
  %6638 = vmatpush2.msra.mxu0 0.0
  %6639 = vmatprep.subr.mxu0 0.0
  %6640 = vmatpush2.msra.mxu0 0.0
  %6641 = vmatprep.mubr.f32.mxu0 0.0
  %v6642 = vand.u32 %v6210, 4294901760
  %v6643 = vsub.f32 %v6210, %v6642
  %v6644 = vand.u32 %v6643, 4294901760
  %6645 = vmatmul.mubr.f32.gmra.mxu0 %v6644
  %v6646 = vpop.f32.mrf.mxu0
  %v6647 = vadd.f32 %v6557, %v6646
  %v6648 = vpop.f32.mrf.mxu0
  %v6649 = vadd.f32 %v6559, %v6648
  %6650 = vdwg.mxu0
  %6651 = vmatprep.subr.mxu0 0.0
  %6652 = vmatpush1.msra.mxu0 0.0
  %6653 = vmatprep.subr.mxu0 0.0
  %6654 = vmatpush1.msra.mxu0 0.0
  %6655 = vmatprep.subr.mxu0 0.0
  %6656 = vmatpush1.msra.mxu0 0.0
  %6657 = vmatprep.subr.mxu0 0.0
  %6658 = vmatpush1.msra.mxu0 0.0
  %6659 = vmatprep.subr.mxu0 0.0
  %6660 = vmatpush1.msra.mxu0 0.0
  %6661 = vmatprep.subr.mxu0 0.0
  %6662 = vmatpush1.msra.mxu0 0.0
  %6663 = vmatprep.subr.mxu0 0.0
  %6664 = vmatpush1.msra.mxu0 0.0
  %6665 = vmatprep.subr.mxu0 0.0
  %6666 = vmatpush1.msra.mxu0 0.0
  %v6667 = vand.u32 %v35, 4294901760
  %v6668 = vsub.f32 %v35, %v6667
  %v6669 = vand.u32 %v6668, 4294901760
  %6670 = vmatprep.subr.mxu0 %v6669
  %v6671 = vand.u32 %v34, 4294901760
  %v6672 = vsub.f32 %v34, %v6671
  %v6673 = vand.u32 %v6672, 4294901760
  %6674 = vmatpush1.msra.mxu0 %v6673
  %v6675 = vand.u32 %v33, 4294901760
  %v6676 = vsub.f32 %v33, %v6675
  %v6677 = vand.u32 %v6676, 4294901760
  %6678 = vmatprep.subr.mxu0 %v6677
  %v6679 = vand.u32 %v32, 4294901760
  %v6680 = vsub.f32 %v32, %v6679
  %v6681 = vand.u32 %v6680, 4294901760
  %6682 = vmatpush1.msra.mxu0 %v6681
  %v6683 = vand.u32 %v31, 4294901760
  %v6684 = vsub.f32 %v31, %v6683
  %v6685 = vand.u32 %v6684, 4294901760
  %6686 = vmatprep.subr.mxu0 %v6685
  %v6687 = vand.u32 %v30, 4294901760
  %v6688 = vsub.f32 %v30, %v6687
  %v6689 = vand.u32 %v6688, 4294901760
  %6690 = vmatpush1.msra.mxu0 %v6689
  %v6691 = vand.u32 %v29, 4294901760
  %v6692 = vsub.f32 %v29, %v6691
  %v6693 = vand.u32 %v6692, 4294901760
  %6694 = vmatprep.subr.mxu0 %v6693
  %v6695 = vand.u32 %v28, 4294901760
  %v6696 = vsub.f32 %v28, %v6695
  %v6697 = vand.u32 %v6696, 4294901760
  %6698 = vmatpush1.msra.mxu0 %v6697
  %v6699 = vand.u32 %v27, 4294901760
  %v6700 = vsub.f32 %v27, %v6699
  %v6701 = vand.u32 %v6700, 4294901760
  %6702 = vmatprep.subr.mxu0 %v6701
  %v6703 = vand.u32 %v26, 4294901760
  %v6704 = vsub.f32 %v26, %v6703
  %v6705 = vand.u32 %v6704, 4294901760
  %6706 = vmatpush1.msra.mxu0 %v6705
  %v6707 = vand.u32 %v25, 4294901760
  %v6708 = vsub.f32 %v25, %v6707
  %v6709 = vand.u32 %v6708, 4294901760
  %6710 = vmatprep.subr.mxu0 %v6709
  %v6711 = vand.u32 %v24, 4294901760
  %v6712 = vsub.f32 %v24, %v6711
  %v6713 = vand.u32 %v6712, 4294901760
  %6714 = vmatpush1.msra.mxu0 %v6713
  %v6715 = vand.u32 %v23, 4294901760
  %v6716 = vsub.f32 %v23, %v6715
  %v6717 = vand.u32 %v6716, 4294901760
  %6718 = vmatprep.subr.mxu0 %v6717
  %v6719 = vand.u32 %v22, 4294901760
  %v6720 = vsub.f32 %v22, %v6719
  %v6721 = vand.u32 %v6720, 4294901760
  %6722 = vmatpush1.msra.mxu0 %v6721
  %v6723 = vand.u32 %v21, 4294901760
  %v6724 = vsub.f32 %v21, %v6723
  %v6725 = vand.u32 %v6724, 4294901760
  %6726 = vmatprep.subr.mxu0 %v6725
  %v6727 = vand.u32 %v20, 4294901760
  %v6728 = vsub.f32 %v20, %v6727
  %v6729 = vand.u32 %v6728, 4294901760
  %6730 = vmatpush1.msra.mxu0 %v6729
  %6731 = vmatprep.subr.mxu0 0.0
  %6732 = vmatpush2.msra.mxu0 0.0
  %6733 = vmatprep.subr.mxu0 0.0
  %6734 = vmatpush2.msra.mxu0 0.0
  %6735 = vmatprep.subr.mxu0 0.0
  %6736 = vmatpush2.msra.mxu0 0.0
  %6737 = vmatprep.subr.mxu0 0.0
  %6738 = vmatpush2.msra.mxu0 0.0
  %6739 = vmatprep.subr.mxu0 0.0
  %6740 = vmatpush2.msra.mxu0 0.0
  %6741 = vmatprep.subr.mxu0 0.0
  %6742 = vmatpush2.msra.mxu0 0.0
  %6743 = vmatprep.subr.mxu0 0.0
  %6744 = vmatpush2.msra.mxu0 0.0
  %6745 = vmatprep.subr.mxu0 0.0
  %6746 = vmatpush2.msra.mxu0 0.0
  %6747 = vmatprep.subr.mxu0 0.0
  %6748 = vmatpush2.msra.mxu0 0.0
  %6749 = vmatprep.subr.mxu0 0.0
  %6750 = vmatpush2.msra.mxu0 0.0
  %6751 = vmatprep.subr.mxu0 0.0
  %6752 = vmatpush2.msra.mxu0 0.0
  %6753 = vmatprep.subr.mxu0 0.0
  %6754 = vmatpush2.msra.mxu0 0.0
  %6755 = vmatprep.subr.mxu0 0.0
  %6756 = vmatpush2.msra.mxu0 0.0
  %6757 = vmatprep.subr.mxu0 0.0
  %6758 = vmatpush2.msra.mxu0 0.0
  %6759 = vmatprep.subr.mxu0 0.0
  %6760 = vmatpush2.msra.mxu0 0.0
  %6761 = vmatprep.subr.mxu0 0.0
  %6762 = vmatpush2.msra.mxu0 0.0
  %6763 = vmatprep.mubr.f32.mxu0 0.0
  %v6764 = vand.u32 %v6210, 4294901760
  %6765 = vmatmul.mubr.f32.gmra.mxu0 %v6764
  %v6766 = vpop.f32.mrf.mxu0
  %v6767 = vadd.f32 %v6647, %v6766
  %v6768 = vpop.f32.mrf.mxu0
  %v6769 = vadd.f32 %v6649, %v6768
  %6770 = vdwg.mxu0
  %6771 = vmatprep.subr.mxu0 0.0
  %6772 = vmatpush1.msra.mxu0 0.0
  %6773 = vmatprep.subr.mxu0 0.0
  %6774 = vmatpush1.msra.mxu0 0.0
  %6775 = vmatprep.subr.mxu0 0.0
  %6776 = vmatpush1.msra.mxu0 0.0
  %6777 = vmatprep.subr.mxu0 0.0
  %6778 = vmatpush1.msra.mxu0 0.0
  %6779 = vmatprep.subr.mxu0 0.0
  %6780 = vmatpush1.msra.mxu0 0.0
  %6781 = vmatprep.subr.mxu0 0.0
  %6782 = vmatpush1.msra.mxu0 0.0
  %6783 = vmatprep.subr.mxu0 0.0
  %6784 = vmatpush1.msra.mxu0 0.0
  %6785 = vmatprep.subr.mxu0 0.0
  %6786 = vmatpush1.msra.mxu0 0.0
  %v6787 = vand.u32 %v35, 4294901760
  %6788 = vmatprep.subr.mxu0 %v6787
  %v6789 = vand.u32 %v34, 4294901760
  %6790 = vmatpush1.msra.mxu0 %v6789
  %v6791 = vand.u32 %v33, 4294901760
  %6792 = vmatprep.subr.mxu0 %v6791
  %v6793 = vand.u32 %v32, 4294901760
  %6794 = vmatpush1.msra.mxu0 %v6793
  %v6795 = vand.u32 %v31, 4294901760
  %6796 = vmatprep.subr.mxu0 %v6795
  %v6797 = vand.u32 %v30, 4294901760
  %6798 = vmatpush1.msra.mxu0 %v6797
  %v6799 = vand.u32 %v29, 4294901760
  %6800 = vmatprep.subr.mxu0 %v6799
  %v6801 = vand.u32 %v28, 4294901760
  %6802 = vmatpush1.msra.mxu0 %v6801
  %v6803 = vand.u32 %v27, 4294901760
  %6804 = vmatprep.subr.mxu0 %v6803
  %v6805 = vand.u32 %v26, 4294901760
  %6806 = vmatpush1.msra.mxu0 %v6805
  %v6807 = vand.u32 %v25, 4294901760
  %6808 = vmatprep.subr.mxu0 %v6807
  %v6809 = vand.u32 %v24, 4294901760
  %6810 = vmatpush1.msra.mxu0 %v6809
  %v6811 = vand.u32 %v23, 4294901760
  %6812 = vmatprep.subr.mxu0 %v6811
  %v6813 = vand.u32 %v22, 4294901760
  %6814 = vmatpush1.msra.mxu0 %v6813
  %v6815 = vand.u32 %v21, 4294901760
  %6816 = vmatprep.subr.mxu0 %v6815
  %v6817 = vand.u32 %v20, 4294901760
  %6818 = vmatpush1.msra.mxu0 %v6817
  %6819 = vmatprep.subr.mxu0 0.0
  %6820 = vmatpush2.msra.mxu0 0.0
  %6821 = vmatprep.subr.mxu0 0.0
  %6822 = vmatpush2.msra.mxu0 0.0
  %6823 = vmatprep.subr.mxu0 0.0
  %6824 = vmatpush2.msra.mxu0 0.0
  %6825 = vmatprep.subr.mxu0 0.0
  %6826 = vmatpush2.msra.mxu0 0.0
  %6827 = vmatprep.subr.mxu0 0.0
  %6828 = vmatpush2.msra.mxu0 0.0
  %6829 = vmatprep.subr.mxu0 0.0
  %6830 = vmatpush2.msra.mxu0 0.0
  %6831 = vmatprep.subr.mxu0 0.0
  %6832 = vmatpush2.msra.mxu0 0.0
  %6833 = vmatprep.subr.mxu0 0.0
  %6834 = vmatpush2.msra.mxu0 0.0
  %6835 = vmatprep.subr.mxu0 0.0
  %6836 = vmatpush2.msra.mxu0 0.0
  %6837 = vmatprep.subr.mxu0 0.0
  %6838 = vmatpush2.msra.mxu0 0.0
  %6839 = vmatprep.subr.mxu0 0.0
  %6840 = vmatpush2.msra.mxu0 0.0
  %6841 = vmatprep.subr.mxu0 0.0
  %6842 = vmatpush2.msra.mxu0 0.0
  %6843 = vmatprep.subr.mxu0 0.0
  %6844 = vmatpush2.msra.mxu0 0.0
  %6845 = vmatprep.subr.mxu0 0.0
  %6846 = vmatpush2.msra.mxu0 0.0
  %6847 = vmatprep.subr.mxu0 0.0
  %6848 = vmatpush2.msra.mxu0 0.0
  %6849 = vmatprep.subr.mxu0 0.0
  %6850 = vmatpush2.msra.mxu0 0.0
  %6851 = vmatprep.mubr.f32.mxu0 0.0
  %v6852 = vand.u32 %v6210, 4294901760
  %6853 = vmatmul.mubr.f32.gmra.mxu0 %v6852
  %v6854 = vpop.f32.mrf.mxu0
  %v6855 = vadd.f32 %v6767, %v6854
  %v6856 = vpop.f32.mrf.mxu0
  %v6857 = vadd.f32 %v6769, %v6856
  %6858 = vdwg.mxu0
  %v6859 = vmul.f32 %v6855, 0.5
  %v6860 = vtanh.pop %v6859
  %v6861 = vmul.f32 %v6860, 0.5
  %v6862 = vadd.f32 %v6861, 0.5
  %v6863 = vtanh.pop %v6857
  %v6864 = vmul.f32 %v6857, 0.5
  %v6865 = vtanh.pop %v6864
  %v6866 = vmul.f32 %v6865, 0.5
  %v6867 = vadd.f32 %v6866, 0.5
  %v6868 = vmul.f32 %v6862, %v5734
  %v6869 = vmul.f32 %v6862, %v6863
  %6871 = vrot.lane.b32.xlu0 %v6869, 64
  %v6872 = vpop.permute.xlu0 %6871
  %v6874 = vadd.f32 %v6868, %v6872
  %v6875 = vtanh.pop %v6874
  %v6876 = vmul.f32 %v6867, %v6875
  %s6877 = scalar_lea.vmem %s0, 48
  %v6878 = vld [vmem:[%s6877] sm:$0xff]
  %v6880 = vsel %vm39, %v6878, 0
  %6882 = vmatprep.subr.mxu0 0.0
  %6883 = vmatpush1.msra.mxu0 0.0
  %6884 = vmatprep.subr.mxu0 0.0
  %6885 = vmatpush1.msra.mxu0 0.0
  %6886 = vmatprep.subr.mxu0 0.0
  %6887 = vmatpush1.msra.mxu0 0.0
  %6888 = vmatprep.subr.mxu0 0.0
  %6889 = vmatpush1.msra.mxu0 0.0
  %6890 = vmatprep.subr.mxu0 0.0
  %6891 = vmatpush1.msra.mxu0 0.0
  %6892 = vmatprep.subr.mxu0 0.0
  %6893 = vmatpush1.msra.mxu0 0.0
  %6894 = vmatprep.subr.mxu0 0.0
  %6895 = vmatpush1.msra.mxu0 0.0
  %6896 = vmatprep.subr.mxu0 0.0
  %6897 = vmatpush1.msra.mxu0 0.0
  %6898 = vmatprep.subr.mxu0 0.0
  %6899 = vmatpush1.msra.mxu0 0.0
  %6900 = vmatprep.subr.mxu0 0.0
  %6901 = vmatpush1.msra.mxu0 0.0
  %6902 = vmatprep.subr.mxu0 0.0
  %6903 = vmatpush1.msra.mxu0 0.0
  %6904 = vmatprep.subr.mxu0 0.0
  %6905 = vmatpush1.msra.mxu0 0.0
  %6906 = vmatprep.subr.mxu0 0.0
  %6907 = vmatpush1.msra.mxu0 0.0
  %6908 = vmatprep.subr.mxu0 0.0
  %6909 = vmatpush1.msra.mxu0 0.0
  %6910 = vmatprep.subr.mxu0 0.0
  %6911 = vmatpush1.msra.mxu0 0.0
  %v6912 = vand.u32 %v38, 4294901760
  %6913 = vmatprep.subr.mxu0 %v6912
  %v6914 = vand.u32 %v37, 4294901760
  %6915 = vmatpush1.msra.mxu0 %v6914
  %6916 = vmatprep.subr.mxu0 0.0
  %6917 = vmatpush2.msra.mxu0 0.0
  %6918 = vmatprep.subr.mxu0 0.0
  %6919 = vmatpush2.msra.mxu0 0.0
  %6920 = vmatprep.subr.mxu0 0.0
  %6921 = vmatpush2.msra.mxu0 0.0
  %6922 = vmatprep.subr.mxu0 0.0
  %6923 = vmatpush2.msra.mxu0 0.0
  %6924 = vmatprep.subr.mxu0 0.0
  %6925 = vmatpush2.msra.mxu0 0.0
  %6926 = vmatprep.subr.mxu0 0.0
  %6927 = vmatpush2.msra.mxu0 0.0
  %6928 = vmatprep.subr.mxu0 0.0
  %6929 = vmatpush2.msra.mxu0 0.0
  %6930 = vmatprep.subr.mxu0 0.0
  %6931 = vmatpush2.msra.mxu0 0.0
  %6932 = vmatprep.subr.mxu0 0.0
  %6933 = vmatpush2.msra.mxu0 0.0
  %6934 = vmatprep.subr.mxu0 0.0
  %6935 = vmatpush2.msra.mxu0 0.0
  %6936 = vmatprep.subr.mxu0 0.0
  %6937 = vmatpush2.msra.mxu0 0.0
  %6938 = vmatprep.subr.mxu0 0.0
  %6939 = vmatpush2.msra.mxu0 0.0
  %6940 = vmatprep.subr.mxu0 0.0
  %6941 = vmatpush2.msra.mxu0 0.0
  %6942 = vmatprep.subr.mxu0 0.0
  %6943 = vmatpush2.msra.mxu0 0.0
  %6944 = vmatprep.subr.mxu0 0.0
  %6945 = vmatpush2.msra.mxu0 0.0
  %6946 = vmatprep.subr.mxu0 0.0
  %6947 = vmatpush2.msra.mxu0 0.0
  %6948 = vmatprep.mubr.f32.mxu0 0.0
  %v6949 = vand.u32 %v6880, 4294901760
  %v6950 = vsub.f32 %v6880, %v6949
  %v6951 = vand.u32 %v6950, 4294901760
  %v6952 = vsub.f32 %v6950, %v6951
  %v6953 = vand.u32 %v6952, 4294901760
  %6954 = vmatmul.mubr.f32.gmra.mxu0 %v6953
  %v6955 = vpop.f32.mrf.mxu0
  %v6956 = vadd.f32 0.0, %v6955
  %v6957 = vpop.f32.mrf.mxu0
  %v6958 = vadd.f32 0.0, %v6957
  %6959 = vdwg.mxu0
  %6960 = vmatprep.subr.mxu0 0.0
  %6961 = vmatpush1.msra.mxu0 0.0
  %6962 = vmatprep.subr.mxu0 0.0
  %6963 = vmatpush1.msra.mxu0 0.0
  %6964 = vmatprep.subr.mxu0 0.0
  %6965 = vmatpush1.msra.mxu0 0.0
  %6966 = vmatprep.subr.mxu0 0.0
  %6967 = vmatpush1.msra.mxu0 0.0
  %6968 = vmatprep.subr.mxu0 0.0
  %6969 = vmatpush1.msra.mxu0 0.0
  %6970 = vmatprep.subr.mxu0 0.0
  %6971 = vmatpush1.msra.mxu0 0.0
  %6972 = vmatprep.subr.mxu0 0.0
  %6973 = vmatpush1.msra.mxu0 0.0
  %6974 = vmatprep.subr.mxu0 0.0
  %6975 = vmatpush1.msra.mxu0 0.0
  %6976 = vmatprep.subr.mxu0 0.0
  %6977 = vmatpush1.msra.mxu0 0.0
  %6978 = vmatprep.subr.mxu0 0.0
  %6979 = vmatpush1.msra.mxu0 0.0
  %6980 = vmatprep.subr.mxu0 0.0
  %6981 = vmatpush1.msra.mxu0 0.0
  %6982 = vmatprep.subr.mxu0 0.0
  %6983 = vmatpush1.msra.mxu0 0.0
  %6984 = vmatprep.subr.mxu0 0.0
  %6985 = vmatpush1.msra.mxu0 0.0
  %6986 = vmatprep.subr.mxu0 0.0
  %6987 = vmatpush1.msra.mxu0 0.0
  %6988 = vmatprep.subr.mxu0 0.0
  %6989 = vmatpush1.msra.mxu0 0.0
  %v6990 = vand.u32 %v38, 4294901760
  %v6991 = vsub.f32 %v38, %v6990
  %v6992 = vand.u32 %v6991, 4294901760
  %v6993 = vsub.f32 %v6991, %v6992
  %v6994 = vand.u32 %v6993, 4294901760
  %6995 = vmatprep.subr.mxu0 %v6994
  %v6996 = vand.u32 %v37, 4294901760
  %v6997 = vsub.f32 %v37, %v6996
  %v6998 = vand.u32 %v6997, 4294901760
  %v6999 = vsub.f32 %v6997, %v6998
  %v7000 = vand.u32 %v6999, 4294901760
  %7001 = vmatpush1.msra.mxu0 %v7000
  %7002 = vmatprep.subr.mxu0 0.0
  %7003 = vmatpush2.msra.mxu0 0.0
  %7004 = vmatprep.subr.mxu0 0.0
  %7005 = vmatpush2.msra.mxu0 0.0
  %7006 = vmatprep.subr.mxu0 0.0
  %7007 = vmatpush2.msra.mxu0 0.0
  %7008 = vmatprep.subr.mxu0 0.0
  %7009 = vmatpush2.msra.mxu0 0.0
  %7010 = vmatprep.subr.mxu0 0.0
  %7011 = vmatpush2.msra.mxu0 0.0
  %7012 = vmatprep.subr.mxu0 0.0
  %7013 = vmatpush2.msra.mxu0 0.0
  %7014 = vmatprep.subr.mxu0 0.0
  %7015 = vmatpush2.msra.mxu0 0.0
  %7016 = vmatprep.subr.mxu0 0.0
  %7017 = vmatpush2.msra.mxu0 0.0
  %7018 = vmatprep.subr.mxu0 0.0
  %7019 = vmatpush2.msra.mxu0 0.0
  %7020 = vmatprep.subr.mxu0 0.0
  %7021 = vmatpush2.msra.mxu0 0.0
  %7022 = vmatprep.subr.mxu0 0.0
  %7023 = vmatpush2.msra.mxu0 0.0
  %7024 = vmatprep.subr.mxu0 0.0
  %7025 = vmatpush2.msra.mxu0 0.0
  %7026 = vmatprep.subr.mxu0 0.0
  %7027 = vmatpush2.msra.mxu0 0.0
  %7028 = vmatprep.subr.mxu0 0.0
  %7029 = vmatpush2.msra.mxu0 0.0
  %7030 = vmatprep.subr.mxu0 0.0
  %7031 = vmatpush2.msra.mxu0 0.0
  %7032 = vmatprep.subr.mxu0 0.0
  %7033 = vmatpush2.msra.mxu0 0.0
  %7034 = vmatprep.mubr.f32.mxu0 0.0
  %v7035 = vand.u32 %v6880, 4294901760
  %7036 = vmatmul.mubr.f32.gmra.mxu0 %v7035
  %v7037 = vpop.f32.mrf.mxu0
  %v7038 = vadd.f32 %v6956, %v7037
  %v7039 = vpop.f32.mrf.mxu0
  %v7040 = vadd.f32 %v6958, %v7039
  %7041 = vdwg.mxu0
  %7042 = vmatprep.subr.mxu0 0.0
  %7043 = vmatpush1.msra.mxu0 0.0
  %7044 = vmatprep.subr.mxu0 0.0
  %7045 = vmatpush1.msra.mxu0 0.0
  %7046 = vmatprep.subr.mxu0 0.0
  %7047 = vmatpush1.msra.mxu0 0.0
  %7048 = vmatprep.subr.mxu0 0.0
  %7049 = vmatpush1.msra.mxu0 0.0
  %7050 = vmatprep.subr.mxu0 0.0
  %7051 = vmatpush1.msra.mxu0 0.0
  %7052 = vmatprep.subr.mxu0 0.0
  %7053 = vmatpush1.msra.mxu0 0.0
  %7054 = vmatprep.subr.mxu0 0.0
  %7055 = vmatpush1.msra.mxu0 0.0
  %7056 = vmatprep.subr.mxu0 0.0
  %7057 = vmatpush1.msra.mxu0 0.0
  %7058 = vmatprep.subr.mxu0 0.0
  %7059 = vmatpush1.msra.mxu0 0.0
  %7060 = vmatprep.subr.mxu0 0.0
  %7061 = vmatpush1.msra.mxu0 0.0
  %7062 = vmatprep.subr.mxu0 0.0
  %7063 = vmatpush1.msra.mxu0 0.0
  %7064 = vmatprep.subr.mxu0 0.0
  %7065 = vmatpush1.msra.mxu0 0.0
  %7066 = vmatprep.subr.mxu0 0.0
  %7067 = vmatpush1.msra.mxu0 0.0
  %7068 = vmatprep.subr.mxu0 0.0
  %7069 = vmatpush1.msra.mxu0 0.0
  %7070 = vmatprep.subr.mxu0 0.0
  %7071 = vmatpush1.msra.mxu0 0.0
  %v7072 = vand.u32 %v38, 4294901760
  %v7073 = vsub.f32 %v38, %v7072
  %7074 = vmatprep.subr.mxu0 %v7073
  %v7075 = vand.u32 %v37, 4294901760
  %v7076 = vsub.f32 %v37, %v7075
  %7077 = vmatpush1.msra.mxu0 %v7076
  %7078 = vmatprep.subr.mxu0 0.0
  %7079 = vmatpush2.msra.mxu0 0.0
  %7080 = vmatprep.subr.mxu0 0.0
  %7081 = vmatpush2.msra.mxu0 0.0
  %7082 = vmatprep.subr.mxu0 0.0
  %7083 = vmatpush2.msra.mxu0 0.0
  %7084 = vmatprep.subr.mxu0 0.0
  %7085 = vmatpush2.msra.mxu0 0.0
  %7086 = vmatprep.subr.mxu0 0.0
  %7087 = vmatpush2.msra.mxu0 0.0
  %7088 = vmatprep.subr.mxu0 0.0
  %7089 = vmatpush2.msra.mxu0 0.0
  %7090 = vmatprep.subr.mxu0 0.0
  %7091 = vmatpush2.msra.mxu0 0.0
  %7092 = vmatprep.subr.mxu0 0.0
  %7093 = vmatpush2.msra.mxu0 0.0
  %7094 = vmatprep.subr.mxu0 0.0
  %7095 = vmatpush2.msra.mxu0 0.0
  %7096 = vmatprep.subr.mxu0 0.0
  %7097 = vmatpush2.msra.mxu0 0.0
  %7098 = vmatprep.subr.mxu0 0.0
  %7099 = vmatpush2.msra.mxu0 0.0
  %7100 = vmatprep.subr.mxu0 0.0
  %7101 = vmatpush2.msra.mxu0 0.0
  %7102 = vmatprep.subr.mxu0 0.0
  %7103 = vmatpush2.msra.mxu0 0.0
  %7104 = vmatprep.subr.mxu0 0.0
  %7105 = vmatpush2.msra.mxu0 0.0
  %7106 = vmatprep.subr.mxu0 0.0
  %7107 = vmatpush2.msra.mxu0 0.0
  %7108 = vmatprep.subr.mxu0 0.0
  %7109 = vmatpush2.msra.mxu0 0.0
  %7110 = vmatprep.mubr.f32.mxu0 0.0
  %v7111 = vand.u32 %v6880, 4294901760
  %v7112 = vsub.f32 %v6880, %v7111
  %7113 = vmatmul.mubr.f32.gmra.mxu0 %v7112
  %v7114 = vpop.f32.mrf.mxu0
  %v7115 = vadd.f32 %v7038, %v7114
  %v7116 = vpop.f32.mrf.mxu0
  %v7117 = vadd.f32 %v7040, %v7116
  %7118 = vdwg.mxu0
  %7119 = vmatprep.subr.mxu0 0.0
  %7120 = vmatpush1.msra.mxu0 0.0
  %7121 = vmatprep.subr.mxu0 0.0
  %7122 = vmatpush1.msra.mxu0 0.0
  %7123 = vmatprep.subr.mxu0 0.0
  %7124 = vmatpush1.msra.mxu0 0.0
  %7125 = vmatprep.subr.mxu0 0.0
  %7126 = vmatpush1.msra.mxu0 0.0
  %7127 = vmatprep.subr.mxu0 0.0
  %7128 = vmatpush1.msra.mxu0 0.0
  %7129 = vmatprep.subr.mxu0 0.0
  %7130 = vmatpush1.msra.mxu0 0.0
  %7131 = vmatprep.subr.mxu0 0.0
  %7132 = vmatpush1.msra.mxu0 0.0
  %7133 = vmatprep.subr.mxu0 0.0
  %7134 = vmatpush1.msra.mxu0 0.0
  %7135 = vmatprep.subr.mxu0 0.0
  %7136 = vmatpush1.msra.mxu0 0.0
  %7137 = vmatprep.subr.mxu0 0.0
  %7138 = vmatpush1.msra.mxu0 0.0
  %7139 = vmatprep.subr.mxu0 0.0
  %7140 = vmatpush1.msra.mxu0 0.0
  %7141 = vmatprep.subr.mxu0 0.0
  %7142 = vmatpush1.msra.mxu0 0.0
  %7143 = vmatprep.subr.mxu0 0.0
  %7144 = vmatpush1.msra.mxu0 0.0
  %7145 = vmatprep.subr.mxu0 0.0
  %7146 = vmatpush1.msra.mxu0 0.0
  %7147 = vmatprep.subr.mxu0 0.0
  %7148 = vmatpush1.msra.mxu0 0.0
  %v7149 = vand.u32 %v38, 4294901760
  %7150 = vmatprep.subr.mxu0 %v7149
  %v7151 = vand.u32 %v37, 4294901760
  %7152 = vmatpush1.msra.mxu0 %v7151
  %7153 = vmatprep.subr.mxu0 0.0
  %7154 = vmatpush2.msra.mxu0 0.0
  %7155 = vmatprep.subr.mxu0 0.0
  %7156 = vmatpush2.msra.mxu0 0.0
  %7157 = vmatprep.subr.mxu0 0.0
  %7158 = vmatpush2.msra.mxu0 0.0
  %7159 = vmatprep.subr.mxu0 0.0
  %7160 = vmatpush2.msra.mxu0 0.0
  %7161 = vmatprep.subr.mxu0 0.0
  %7162 = vmatpush2.msra.mxu0 0.0
  %7163 = vmatprep.subr.mxu0 0.0
  %7164 = vmatpush2.msra.mxu0 0.0
  %7165 = vmatprep.subr.mxu0 0.0
  %7166 = vmatpush2.msra.mxu0 0.0
  %7167 = vmatprep.subr.mxu0 0.0
  %7168 = vmatpush2.msra.mxu0 0.0
  %7169 = vmatprep.subr.mxu0 0.0
  %7170 = vmatpush2.msra.mxu0 0.0
  %7171 = vmatprep.subr.mxu0 0.0
  %7172 = vmatpush2.msra.mxu0 0.0
  %7173 = vmatprep.subr.mxu0 0.0
  %7174 = vmatpush2.msra.mxu0 0.0
  %7175 = vmatprep.subr.mxu0 0.0
  %7176 = vmatpush2.msra.mxu0 0.0
  %7177 = vmatprep.subr.mxu0 0.0
  %7178 = vmatpush2.msra.mxu0 0.0
  %7179 = vmatprep.subr.mxu0 0.0
  %7180 = vmatpush2.msra.mxu0 0.0
  %7181 = vmatprep.subr.mxu0 0.0
  %7182 = vmatpush2.msra.mxu0 0.0
  %7183 = vmatprep.subr.mxu0 0.0
  %7184 = vmatpush2.msra.mxu0 0.0
  %7185 = vmatprep.mubr.f32.mxu0 0.0
  %v7186 = vand.u32 %v6880, 4294901760
  %v7187 = vsub.f32 %v6880, %v7186
  %v7188 = vand.u32 %v7187, 4294901760
  %7189 = vmatmul.mubr.f32.gmra.mxu0 %v7188
  %v7190 = vpop.f32.mrf.mxu0
  %v7191 = vadd.f32 %v7115, %v7190
  %v7192 = vpop.f32.mrf.mxu0
  %v7193 = vadd.f32 %v7117, %v7192
  %7194 = vdwg.mxu0
  %7195 = vmatprep.subr.mxu0 0.0
  %7196 = vmatpush1.msra.mxu0 0.0
  %7197 = vmatprep.subr.mxu0 0.0
  %7198 = vmatpush1.msra.mxu0 0.0
  %7199 = vmatprep.subr.mxu0 0.0
  %7200 = vmatpush1.msra.mxu0 0.0
  %7201 = vmatprep.subr.mxu0 0.0
  %7202 = vmatpush1.msra.mxu0 0.0
  %7203 = vmatprep.subr.mxu0 0.0
  %7204 = vmatpush1.msra.mxu0 0.0
  %7205 = vmatprep.subr.mxu0 0.0
  %7206 = vmatpush1.msra.mxu0 0.0
  %7207 = vmatprep.subr.mxu0 0.0
  %7208 = vmatpush1.msra.mxu0 0.0
  %7209 = vmatprep.subr.mxu0 0.0
  %7210 = vmatpush1.msra.mxu0 0.0
  %7211 = vmatprep.subr.mxu0 0.0
  %7212 = vmatpush1.msra.mxu0 0.0
  %7213 = vmatprep.subr.mxu0 0.0
  %7214 = vmatpush1.msra.mxu0 0.0
  %7215 = vmatprep.subr.mxu0 0.0
  %7216 = vmatpush1.msra.mxu0 0.0
  %7217 = vmatprep.subr.mxu0 0.0
  %7218 = vmatpush1.msra.mxu0 0.0
  %7219 = vmatprep.subr.mxu0 0.0
  %7220 = vmatpush1.msra.mxu0 0.0
  %7221 = vmatprep.subr.mxu0 0.0
  %7222 = vmatpush1.msra.mxu0 0.0
  %7223 = vmatprep.subr.mxu0 0.0
  %7224 = vmatpush1.msra.mxu0 0.0
  %v7225 = vand.u32 %v38, 4294901760
  %v7226 = vsub.f32 %v38, %v7225
  %v7227 = vand.u32 %v7226, 4294901760
  %7228 = vmatprep.subr.mxu0 %v7227
  %v7229 = vand.u32 %v37, 4294901760
  %v7230 = vsub.f32 %v37, %v7229
  %v7231 = vand.u32 %v7230, 4294901760
  %7232 = vmatpush1.msra.mxu0 %v7231
  %7233 = vmatprep.subr.mxu0 0.0
  %7234 = vmatpush2.msra.mxu0 0.0
  %7235 = vmatprep.subr.mxu0 0.0
  %7236 = vmatpush2.msra.mxu0 0.0
  %7237 = vmatprep.subr.mxu0 0.0
  %7238 = vmatpush2.msra.mxu0 0.0
  %7239 = vmatprep.subr.mxu0 0.0
  %7240 = vmatpush2.msra.mxu0 0.0
  %7241 = vmatprep.subr.mxu0 0.0
  %7242 = vmatpush2.msra.mxu0 0.0
  %7243 = vmatprep.subr.mxu0 0.0
  %7244 = vmatpush2.msra.mxu0 0.0
  %7245 = vmatprep.subr.mxu0 0.0
  %7246 = vmatpush2.msra.mxu0 0.0
  %7247 = vmatprep.subr.mxu0 0.0
  %7248 = vmatpush2.msra.mxu0 0.0
  %7249 = vmatprep.subr.mxu0 0.0
  %7250 = vmatpush2.msra.mxu0 0.0
  %7251 = vmatprep.subr.mxu0 0.0
  %7252 = vmatpush2.msra.mxu0 0.0
  %7253 = vmatprep.subr.mxu0 0.0
  %7254 = vmatpush2.msra.mxu0 0.0
  %7255 = vmatprep.subr.mxu0 0.0
  %7256 = vmatpush2.msra.mxu0 0.0
  %7257 = vmatprep.subr.mxu0 0.0
  %7258 = vmatpush2.msra.mxu0 0.0
  %7259 = vmatprep.subr.mxu0 0.0
  %7260 = vmatpush2.msra.mxu0 0.0
  %7261 = vmatprep.subr.mxu0 0.0
  %7262 = vmatpush2.msra.mxu0 0.0
  %7263 = vmatprep.subr.mxu0 0.0
  %7264 = vmatpush2.msra.mxu0 0.0
  %7265 = vmatprep.mubr.f32.mxu0 0.0
  %v7266 = vand.u32 %v6880, 4294901760
  %7267 = vmatmul.mubr.f32.gmra.mxu0 %v7266
  %v7268 = vpop.f32.mrf.mxu0
  %v7269 = vadd.f32 %v7191, %v7268
  %v7270 = vpop.f32.mrf.mxu0
  %v7271 = vadd.f32 %v7193, %v7270
  %7272 = vdwg.mxu0
  %7273 = vmatprep.subr.mxu0 0.0
  %7274 = vmatpush1.msra.mxu0 0.0
  %7275 = vmatprep.subr.mxu0 0.0
  %7276 = vmatpush1.msra.mxu0 0.0
  %7277 = vmatprep.subr.mxu0 0.0
  %7278 = vmatpush1.msra.mxu0 0.0
  %7279 = vmatprep.subr.mxu0 0.0
  %7280 = vmatpush1.msra.mxu0 0.0
  %7281 = vmatprep.subr.mxu0 0.0
  %7282 = vmatpush1.msra.mxu0 0.0
  %7283 = vmatprep.subr.mxu0 0.0
  %7284 = vmatpush1.msra.mxu0 0.0
  %7285 = vmatprep.subr.mxu0 0.0
  %7286 = vmatpush1.msra.mxu0 0.0
  %7287 = vmatprep.subr.mxu0 0.0
  %7288 = vmatpush1.msra.mxu0 0.0
  %7289 = vmatprep.subr.mxu0 0.0
  %7290 = vmatpush1.msra.mxu0 0.0
  %7291 = vmatprep.subr.mxu0 0.0
  %7292 = vmatpush1.msra.mxu0 0.0
  %7293 = vmatprep.subr.mxu0 0.0
  %7294 = vmatpush1.msra.mxu0 0.0
  %7295 = vmatprep.subr.mxu0 0.0
  %7296 = vmatpush1.msra.mxu0 0.0
  %7297 = vmatprep.subr.mxu0 0.0
  %7298 = vmatpush1.msra.mxu0 0.0
  %7299 = vmatprep.subr.mxu0 0.0
  %7300 = vmatpush1.msra.mxu0 0.0
  %7301 = vmatprep.subr.mxu0 0.0
  %7302 = vmatpush1.msra.mxu0 0.0
  %v7303 = vand.u32 %v38, 4294901760
  %7304 = vmatprep.subr.mxu0 %v7303
  %v7305 = vand.u32 %v37, 4294901760
  %7306 = vmatpush1.msra.mxu0 %v7305
  %7307 = vmatprep.subr.mxu0 0.0
  %7308 = vmatpush2.msra.mxu0 0.0
  %7309 = vmatprep.subr.mxu0 0.0
  %7310 = vmatpush2.msra.mxu0 0.0
  %7311 = vmatprep.subr.mxu0 0.0
  %7312 = vmatpush2.msra.mxu0 0.0
  %7313 = vmatprep.subr.mxu0 0.0
  %7314 = vmatpush2.msra.mxu0 0.0
  %7315 = vmatprep.subr.mxu0 0.0
  %7316 = vmatpush2.msra.mxu0 0.0
  %7317 = vmatprep.subr.mxu0 0.0
  %7318 = vmatpush2.msra.mxu0 0.0
  %7319 = vmatprep.subr.mxu0 0.0
  %7320 = vmatpush2.msra.mxu0 0.0
  %7321 = vmatprep.subr.mxu0 0.0
  %7322 = vmatpush2.msra.mxu0 0.0
  %7323 = vmatprep.subr.mxu0 0.0
  %7324 = vmatpush2.msra.mxu0 0.0
  %7325 = vmatprep.subr.mxu0 0.0
  %7326 = vmatpush2.msra.mxu0 0.0
  %7327 = vmatprep.subr.mxu0 0.0
  %7328 = vmatpush2.msra.mxu0 0.0
  %7329 = vmatprep.subr.mxu0 0.0
  %7330 = vmatpush2.msra.mxu0 0.0
  %7331 = vmatprep.subr.mxu0 0.0
  %7332 = vmatpush2.msra.mxu0 0.0
  %7333 = vmatprep.subr.mxu0 0.0
  %7334 = vmatpush2.msra.mxu0 0.0
  %7335 = vmatprep.subr.mxu0 0.0
  %7336 = vmatpush2.msra.mxu0 0.0
  %7337 = vmatprep.subr.mxu0 0.0
  %7338 = vmatpush2.msra.mxu0 0.0
  %7339 = vmatprep.mubr.f32.mxu0 0.0
  %v7340 = vand.u32 %v6880, 4294901760
  %7341 = vmatmul.mubr.f32.gmra.mxu0 %v7340
  %v7342 = vpop.f32.mrf.mxu0
  %v7343 = vadd.f32 %v7269, %v7342
  %v7344 = vpop.f32.mrf.mxu0
  %v7345 = vadd.f32 %v7271, %v7344
  %7346 = vdwg.mxu0
  %7348 = vrot.lane.b32.xlu0 %v6876, 64
  %v7349 = vpop.permute.xlu0 %7348
  %v7350 = vsel %vm508, %v7349, 0
  %7352 = vmatprep.subr.mxu0 0.0
  %7353 = vmatpush1.msra.mxu0 0.0
  %7354 = vmatprep.subr.mxu0 0.0
  %7355 = vmatpush1.msra.mxu0 0.0
  %7356 = vmatprep.subr.mxu0 0.0
  %7357 = vmatpush1.msra.mxu0 0.0
  %7358 = vmatprep.subr.mxu0 0.0
  %7359 = vmatpush1.msra.mxu0 0.0
  %7360 = vmatprep.subr.mxu0 0.0
  %7361 = vmatpush1.msra.mxu0 0.0
  %7362 = vmatprep.subr.mxu0 0.0
  %7363 = vmatpush1.msra.mxu0 0.0
  %7364 = vmatprep.subr.mxu0 0.0
  %7365 = vmatpush1.msra.mxu0 0.0
  %7366 = vmatprep.subr.mxu0 0.0
  %7367 = vmatpush1.msra.mxu0 0.0
  %v7368 = vand.u32 %v35, 4294901760
  %7369 = vmatprep.subr.mxu0 %v7368
  %v7370 = vand.u32 %v34, 4294901760
  %7371 = vmatpush1.msra.mxu0 %v7370
  %v7372 = vand.u32 %v33, 4294901760
  %7373 = vmatprep.subr.mxu0 %v7372
  %v7374 = vand.u32 %v32, 4294901760
  %7375 = vmatpush1.msra.mxu0 %v7374
  %v7376 = vand.u32 %v31, 4294901760
  %7377 = vmatprep.subr.mxu0 %v7376
  %v7378 = vand.u32 %v30, 4294901760
  %7379 = vmatpush1.msra.mxu0 %v7378
  %v7380 = vand.u32 %v29, 4294901760
  %7381 = vmatprep.subr.mxu0 %v7380
  %v7382 = vand.u32 %v28, 4294901760
  %7383 = vmatpush1.msra.mxu0 %v7382
  %v7384 = vand.u32 %v27, 4294901760
  %7385 = vmatprep.subr.mxu0 %v7384
  %v7386 = vand.u32 %v26, 4294901760
  %7387 = vmatpush1.msra.mxu0 %v7386
  %v7388 = vand.u32 %v25, 4294901760
  %7389 = vmatprep.subr.mxu0 %v7388
  %v7390 = vand.u32 %v24, 4294901760
  %7391 = vmatpush1.msra.mxu0 %v7390
  %v7392 = vand.u32 %v23, 4294901760
  %7393 = vmatprep.subr.mxu0 %v7392
  %v7394 = vand.u32 %v22, 4294901760
  %7395 = vmatpush1.msra.mxu0 %v7394
  %v7396 = vand.u32 %v21, 4294901760
  %7397 = vmatprep.subr.mxu0 %v7396
  %v7398 = vand.u32 %v20, 4294901760
  %7399 = vmatpush1.msra.mxu0 %v7398
  %7400 = vmatprep.subr.mxu0 0.0
  %7401 = vmatpush2.msra.mxu0 0.0
  %7402 = vmatprep.subr.mxu0 0.0
  %7403 = vmatpush2.msra.mxu0 0.0
  %7404 = vmatprep.subr.mxu0 0.0
  %7405 = vmatpush2.msra.mxu0 0.0
  %7406 = vmatprep.subr.mxu0 0.0
  %7407 = vmatpush2.msra.mxu0 0.0
  %7408 = vmatprep.subr.mxu0 0.0
  %7409 = vmatpush2.msra.mxu0 0.0
  %7410 = vmatprep.subr.mxu0 0.0
  %7411 = vmatpush2.msra.mxu0 0.0
  %7412 = vmatprep.subr.mxu0 0.0
  %7413 = vmatpush2.msra.mxu0 0.0
  %7414 = vmatprep.subr.mxu0 0.0
  %7415 = vmatpush2.msra.mxu0 0.0
  %7416 = vmatprep.subr.mxu0 0.0
  %7417 = vmatpush2.msra.mxu0 0.0
  %7418 = vmatprep.subr.mxu0 0.0
  %7419 = vmatpush2.msra.mxu0 0.0
  %7420 = vmatprep.subr.mxu0 0.0
  %7421 = vmatpush2.msra.mxu0 0.0
  %7422 = vmatprep.subr.mxu0 0.0
  %7423 = vmatpush2.msra.mxu0 0.0
  %7424 = vmatprep.subr.mxu0 0.0
  %7425 = vmatpush2.msra.mxu0 0.0
  %7426 = vmatprep.subr.mxu0 0.0
  %7427 = vmatpush2.msra.mxu0 0.0
  %7428 = vmatprep.subr.mxu0 0.0
  %7429 = vmatpush2.msra.mxu0 0.0
  %7430 = vmatprep.subr.mxu0 0.0
  %7431 = vmatpush2.msra.mxu0 0.0
  %7432 = vmatprep.mubr.f32.mxu0 0.0
  %v7433 = vand.u32 %v7350, 4294901760
  %v7434 = vsub.f32 %v7350, %v7433
  %v7435 = vand.u32 %v7434, 4294901760
  %v7436 = vsub.f32 %v7434, %v7435
  %v7437 = vand.u32 %v7436, 4294901760
  %7438 = vmatmul.mubr.f32.gmra.mxu0 %v7437
  %v7439 = vpop.f32.mrf.mxu0
  %v7440 = vadd.f32 %v7343, %v7439
  %v7441 = vpop.f32.mrf.mxu0
  %v7442 = vadd.f32 %v7345, %v7441
  %7443 = vdwg.mxu0
  %7444 = vmatprep.subr.mxu0 0.0
  %7445 = vmatpush1.msra.mxu0 0.0
  %7446 = vmatprep.subr.mxu0 0.0
  %7447 = vmatpush1.msra.mxu0 0.0
  %7448 = vmatprep.subr.mxu0 0.0
  %7449 = vmatpush1.msra.mxu0 0.0
  %7450 = vmatprep.subr.mxu0 0.0
  %7451 = vmatpush1.msra.mxu0 0.0
  %7452 = vmatprep.subr.mxu0 0.0
  %7453 = vmatpush1.msra.mxu0 0.0
  %7454 = vmatprep.subr.mxu0 0.0
  %7455 = vmatpush1.msra.mxu0 0.0
  %7456 = vmatprep.subr.mxu0 0.0
  %7457 = vmatpush1.msra.mxu0 0.0
  %7458 = vmatprep.subr.mxu0 0.0
  %7459 = vmatpush1.msra.mxu0 0.0
  %v7460 = vand.u32 %v35, 4294901760
  %v7461 = vsub.f32 %v35, %v7460
  %v7462 = vand.u32 %v7461, 4294901760
  %v7463 = vsub.f32 %v7461, %v7462
  %v7464 = vand.u32 %v7463, 4294901760
  %7465 = vmatprep.subr.mxu0 %v7464
  %v7466 = vand.u32 %v34, 4294901760
  %v7467 = vsub.f32 %v34, %v7466
  %v7468 = vand.u32 %v7467, 4294901760
  %v7469 = vsub.f32 %v7467, %v7468
  %v7470 = vand.u32 %v7469, 4294901760
  %7471 = vmatpush1.msra.mxu0 %v7470
  %v7472 = vand.u32 %v33, 4294901760
  %v7473 = vsub.f32 %v33, %v7472
  %v7474 = vand.u32 %v7473, 4294901760
  %v7475 = vsub.f32 %v7473, %v7474
  %v7476 = vand.u32 %v7475, 4294901760
  %7477 = vmatprep.subr.mxu0 %v7476
  %v7478 = vand.u32 %v32, 4294901760
  %v7479 = vsub.f32 %v32, %v7478
  %v7480 = vand.u32 %v7479, 4294901760
  %v7481 = vsub.f32 %v7479, %v7480
  %v7482 = vand.u32 %v7481, 4294901760
  %7483 = vmatpush1.msra.mxu0 %v7482
  %v7484 = vand.u32 %v31, 4294901760
  %v7485 = vsub.f32 %v31, %v7484
  %v7486 = vand.u32 %v7485, 4294901760
  %v7487 = vsub.f32 %v7485, %v7486
  %v7488 = vand.u32 %v7487, 4294901760
  %7489 = vmatprep.subr.mxu0 %v7488
  %v7490 = vand.u32 %v30, 4294901760
  %v7491 = vsub.f32 %v30, %v7490
  %v7492 = vand.u32 %v7491, 4294901760
  %v7493 = vsub.f32 %v7491, %v7492
  %v7494 = vand.u32 %v7493, 4294901760
  %7495 = vmatpush1.msra.mxu0 %v7494
  %v7496 = vand.u32 %v29, 4294901760
  %v7497 = vsub.f32 %v29, %v7496
  %v7498 = vand.u32 %v7497, 4294901760
  %v7499 = vsub.f32 %v7497, %v7498
  %v7500 = vand.u32 %v7499, 4294901760
  %7501 = vmatprep.subr.mxu0 %v7500
  %v7502 = vand.u32 %v28, 4294901760
  %v7503 = vsub.f32 %v28, %v7502
  %v7504 = vand.u32 %v7503, 4294901760
  %v7505 = vsub.f32 %v7503, %v7504
  %v7506 = vand.u32 %v7505, 4294901760
  %7507 = vmatpush1.msra.mxu0 %v7506
  %v7508 = vand.u32 %v27, 4294901760
  %v7509 = vsub.f32 %v27, %v7508
  %v7510 = vand.u32 %v7509, 4294901760
  %v7511 = vsub.f32 %v7509, %v7510
  %v7512 = vand.u32 %v7511, 4294901760
  %7513 = vmatprep.subr.mxu0 %v7512
  %v7514 = vand.u32 %v26, 4294901760
  %v7515 = vsub.f32 %v26, %v7514
  %v7516 = vand.u32 %v7515, 4294901760
  %v7517 = vsub.f32 %v7515, %v7516
  %v7518 = vand.u32 %v7517, 4294901760
  %7519 = vmatpush1.msra.mxu0 %v7518
  %v7520 = vand.u32 %v25, 4294901760
  %v7521 = vsub.f32 %v25, %v7520
  %v7522 = vand.u32 %v7521, 4294901760
  %v7523 = vsub.f32 %v7521, %v7522
  %v7524 = vand.u32 %v7523, 4294901760
  %7525 = vmatprep.subr.mxu0 %v7524
  %v7526 = vand.u32 %v24, 4294901760
  %v7527 = vsub.f32 %v24, %v7526
  %v7528 = vand.u32 %v7527, 4294901760
  %v7529 = vsub.f32 %v7527, %v7528
  %v7530 = vand.u32 %v7529, 4294901760
  %7531 = vmatpush1.msra.mxu0 %v7530
  %v7532 = vand.u32 %v23, 4294901760
  %v7533 = vsub.f32 %v23, %v7532
  %v7534 = vand.u32 %v7533, 4294901760
  %v7535 = vsub.f32 %v7533, %v7534
  %v7536 = vand.u32 %v7535, 4294901760
  %7537 = vmatprep.subr.mxu0 %v7536
  %v7538 = vand.u32 %v22, 4294901760
  %v7539 = vsub.f32 %v22, %v7538
  %v7540 = vand.u32 %v7539, 4294901760
  %v7541 = vsub.f32 %v7539, %v7540
  %v7542 = vand.u32 %v7541, 4294901760
  %7543 = vmatpush1.msra.mxu0 %v7542
  %v7544 = vand.u32 %v21, 4294901760
  %v7545 = vsub.f32 %v21, %v7544
  %v7546 = vand.u32 %v7545, 4294901760
  %v7547 = vsub.f32 %v7545, %v7546
  %v7548 = vand.u32 %v7547, 4294901760
  %7549 = vmatprep.subr.mxu0 %v7548
  %v7550 = vand.u32 %v20, 4294901760
  %v7551 = vsub.f32 %v20, %v7550
  %v7552 = vand.u32 %v7551, 4294901760
  %v7553 = vsub.f32 %v7551, %v7552
  %v7554 = vand.u32 %v7553, 4294901760
  %7555 = vmatpush1.msra.mxu0 %v7554
  %7556 = vmatprep.subr.mxu0 0.0
  %7557 = vmatpush2.msra.mxu0 0.0
  %7558 = vmatprep.subr.mxu0 0.0
  %7559 = vmatpush2.msra.mxu0 0.0
  %7560 = vmatprep.subr.mxu0 0.0
  %7561 = vmatpush2.msra.mxu0 0.0
  %7562 = vmatprep.subr.mxu0 0.0
  %7563 = vmatpush2.msra.mxu0 0.0
  %7564 = vmatprep.subr.mxu0 0.0
  %7565 = vmatpush2.msra.mxu0 0.0
  %7566 = vmatprep.subr.mxu0 0.0
  %7567 = vmatpush2.msra.mxu0 0.0
  %7568 = vmatprep.subr.mxu0 0.0
  %7569 = vmatpush2.msra.mxu0 0.0
  %7570 = vmatprep.subr.mxu0 0.0
  %7571 = vmatpush2.msra.mxu0 0.0
  %7572 = vmatprep.subr.mxu0 0.0
  %7573 = vmatpush2.msra.mxu0 0.0
  %7574 = vmatprep.subr.mxu0 0.0
  %7575 = vmatpush2.msra.mxu0 0.0
  %7576 = vmatprep.subr.mxu0 0.0
  %7577 = vmatpush2.msra.mxu0 0.0
  %7578 = vmatprep.subr.mxu0 0.0
  %7579 = vmatpush2.msra.mxu0 0.0
  %7580 = vmatprep.subr.mxu0 0.0
  %7581 = vmatpush2.msra.mxu0 0.0
  %7582 = vmatprep.subr.mxu0 0.0
  %7583 = vmatpush2.msra.mxu0 0.0
  %7584 = vmatprep.subr.mxu0 0.0
  %7585 = vmatpush2.msra.mxu0 0.0
  %7586 = vmatprep.subr.mxu0 0.0
  %7587 = vmatpush2.msra.mxu0 0.0
  %7588 = vmatprep.mubr.f32.mxu0 0.0
  %v7589 = vand.u32 %v7350, 4294901760
  %7590 = vmatmul.mubr.f32.gmra.mxu0 %v7589
  %v7591 = vpop.f32.mrf.mxu0
  %v7592 = vadd.f32 %v7440, %v7591
  %v7593 = vpop.f32.mrf.mxu0
  %v7594 = vadd.f32 %v7442, %v7593
  %7595 = vdwg.mxu0
  %7596 = vmatprep.subr.mxu0 0.0
  %7597 = vmatpush1.msra.mxu0 0.0
  %7598 = vmatprep.subr.mxu0 0.0
  %7599 = vmatpush1.msra.mxu0 0.0
  %7600 = vmatprep.subr.mxu0 0.0
  %7601 = vmatpush1.msra.mxu0 0.0
  %7602 = vmatprep.subr.mxu0 0.0
  %7603 = vmatpush1.msra.mxu0 0.0
  %7604 = vmatprep.subr.mxu0 0.0
  %7605 = vmatpush1.msra.mxu0 0.0
  %7606 = vmatprep.subr.mxu0 0.0
  %7607 = vmatpush1.msra.mxu0 0.0
  %7608 = vmatprep.subr.mxu0 0.0
  %7609 = vmatpush1.msra.mxu0 0.0
  %7610 = vmatprep.subr.mxu0 0.0
  %7611 = vmatpush1.msra.mxu0 0.0
  %v7612 = vand.u32 %v35, 4294901760
  %v7613 = vsub.f32 %v35, %v7612
  %7614 = vmatprep.subr.mxu0 %v7613
  %v7615 = vand.u32 %v34, 4294901760
  %v7616 = vsub.f32 %v34, %v7615
  %7617 = vmatpush1.msra.mxu0 %v7616
  %v7618 = vand.u32 %v33, 4294901760
  %v7619 = vsub.f32 %v33, %v7618
  %7620 = vmatprep.subr.mxu0 %v7619
  %v7621 = vand.u32 %v32, 4294901760
  %v7622 = vsub.f32 %v32, %v7621
  %7623 = vmatpush1.msra.mxu0 %v7622
  %v7624 = vand.u32 %v31, 4294901760
  %v7625 = vsub.f32 %v31, %v7624
  %7626 = vmatprep.subr.mxu0 %v7625
  %v7627 = vand.u32 %v30, 4294901760
  %v7628 = vsub.f32 %v30, %v7627
  %7629 = vmatpush1.msra.mxu0 %v7628
  %v7630 = vand.u32 %v29, 4294901760
  %v7631 = vsub.f32 %v29, %v7630
  %7632 = vmatprep.subr.mxu0 %v7631
  %v7633 = vand.u32 %v28, 4294901760
  %v7634 = vsub.f32 %v28, %v7633
  %7635 = vmatpush1.msra.mxu0 %v7634
  %v7636 = vand.u32 %v27, 4294901760
  %v7637 = vsub.f32 %v27, %v7636
  %7638 = vmatprep.subr.mxu0 %v7637
  %v7639 = vand.u32 %v26, 4294901760
  %v7640 = vsub.f32 %v26, %v7639
  %7641 = vmatpush1.msra.mxu0 %v7640
  %v7642 = vand.u32 %v25, 4294901760
  %v7643 = vsub.f32 %v25, %v7642
  %7644 = vmatprep.subr.mxu0 %v7643
  %v7645 = vand.u32 %v24, 4294901760
  %v7646 = vsub.f32 %v24, %v7645
  %7647 = vmatpush1.msra.mxu0 %v7646
  %v7648 = vand.u32 %v23, 4294901760
  %v7649 = vsub.f32 %v23, %v7648
  %7650 = vmatprep.subr.mxu0 %v7649
  %v7651 = vand.u32 %v22, 4294901760
  %v7652 = vsub.f32 %v22, %v7651
  %7653 = vmatpush1.msra.mxu0 %v7652
  %v7654 = vand.u32 %v21, 4294901760
  %v7655 = vsub.f32 %v21, %v7654
  %7656 = vmatprep.subr.mxu0 %v7655
  %v7657 = vand.u32 %v20, 4294901760
  %v7658 = vsub.f32 %v20, %v7657
  %7659 = vmatpush1.msra.mxu0 %v7658
  %7660 = vmatprep.subr.mxu0 0.0
  %7661 = vmatpush2.msra.mxu0 0.0
  %7662 = vmatprep.subr.mxu0 0.0
  %7663 = vmatpush2.msra.mxu0 0.0
  %7664 = vmatprep.subr.mxu0 0.0
  %7665 = vmatpush2.msra.mxu0 0.0
  %7666 = vmatprep.subr.mxu0 0.0
  %7667 = vmatpush2.msra.mxu0 0.0
  %7668 = vmatprep.subr.mxu0 0.0
  %7669 = vmatpush2.msra.mxu0 0.0
  %7670 = vmatprep.subr.mxu0 0.0
  %7671 = vmatpush2.msra.mxu0 0.0
  %7672 = vmatprep.subr.mxu0 0.0
  %7673 = vmatpush2.msra.mxu0 0.0
  %7674 = vmatprep.subr.mxu0 0.0
  %7675 = vmatpush2.msra.mxu0 0.0
  %7676 = vmatprep.subr.mxu0 0.0
  %7677 = vmatpush2.msra.mxu0 0.0
  %7678 = vmatprep.subr.mxu0 0.0
  %7679 = vmatpush2.msra.mxu0 0.0
  %7680 = vmatprep.subr.mxu0 0.0
  %7681 = vmatpush2.msra.mxu0 0.0
  %7682 = vmatprep.subr.mxu0 0.0
  %7683 = vmatpush2.msra.mxu0 0.0
  %7684 = vmatprep.subr.mxu0 0.0
  %7685 = vmatpush2.msra.mxu0 0.0
  %7686 = vmatprep.subr.mxu0 0.0
  %7687 = vmatpush2.msra.mxu0 0.0
  %7688 = vmatprep.subr.mxu0 0.0
  %7689 = vmatpush2.msra.mxu0 0.0
  %7690 = vmatprep.subr.mxu0 0.0
  %7691 = vmatpush2.msra.mxu0 0.0
  %7692 = vmatprep.mubr.f32.mxu0 0.0
  %v7693 = vand.u32 %v7350, 4294901760
  %v7694 = vsub.f32 %v7350, %v7693
  %7695 = vmatmul.mubr.f32.gmra.mxu0 %v7694
  %v7696 = vpop.f32.mrf.mxu0
  %v7697 = vadd.f32 %v7592, %v7696
  %v7698 = vpop.f32.mrf.mxu0
  %v7699 = vadd.f32 %v7594, %v7698
  %7700 = vdwg.mxu0
  %7701 = vmatprep.subr.mxu0 0.0
  %7702 = vmatpush1.msra.mxu0 0.0
  %7703 = vmatprep.subr.mxu0 0.0
  %7704 = vmatpush1.msra.mxu0 0.0
  %7705 = vmatprep.subr.mxu0 0.0
  %7706 = vmatpush1.msra.mxu0 0.0
  %7707 = vmatprep.subr.mxu0 0.0
  %7708 = vmatpush1.msra.mxu0 0.0
  %7709 = vmatprep.subr.mxu0 0.0
  %7710 = vmatpush1.msra.mxu0 0.0
  %7711 = vmatprep.subr.mxu0 0.0
  %7712 = vmatpush1.msra.mxu0 0.0
  %7713 = vmatprep.subr.mxu0 0.0
  %7714 = vmatpush1.msra.mxu0 0.0
  %7715 = vmatprep.subr.mxu0 0.0
  %7716 = vmatpush1.msra.mxu0 0.0
  %v7717 = vand.u32 %v35, 4294901760
  %7718 = vmatprep.subr.mxu0 %v7717
  %v7719 = vand.u32 %v34, 4294901760
  %7720 = vmatpush1.msra.mxu0 %v7719
  %v7721 = vand.u32 %v33, 4294901760
  %7722 = vmatprep.subr.mxu0 %v7721
  %v7723 = vand.u32 %v32, 4294901760
  %7724 = vmatpush1.msra.mxu0 %v7723
  %v7725 = vand.u32 %v31, 4294901760
  %7726 = vmatprep.subr.mxu0 %v7725
  %v7727 = vand.u32 %v30, 4294901760
  %7728 = vmatpush1.msra.mxu0 %v7727
  %v7729 = vand.u32 %v29, 4294901760
  %7730 = vmatprep.subr.mxu0 %v7729
  %v7731 = vand.u32 %v28, 4294901760
  %7732 = vmatpush1.msra.mxu0 %v7731
  %v7733 = vand.u32 %v27, 4294901760
  %7734 = vmatprep.subr.mxu0 %v7733
  %v7735 = vand.u32 %v26, 4294901760
  %7736 = vmatpush1.msra.mxu0 %v7735
  %v7737 = vand.u32 %v25, 4294901760
  %7738 = vmatprep.subr.mxu0 %v7737
  %v7739 = vand.u32 %v24, 4294901760
  %7740 = vmatpush1.msra.mxu0 %v7739
  %v7741 = vand.u32 %v23, 4294901760
  %7742 = vmatprep.subr.mxu0 %v7741
  %v7743 = vand.u32 %v22, 4294901760
  %7744 = vmatpush1.msra.mxu0 %v7743
  %v7745 = vand.u32 %v21, 4294901760
  %7746 = vmatprep.subr.mxu0 %v7745
  %v7747 = vand.u32 %v20, 4294901760
  %7748 = vmatpush1.msra.mxu0 %v7747
  %7749 = vmatprep.subr.mxu0 0.0
  %7750 = vmatpush2.msra.mxu0 0.0
  %7751 = vmatprep.subr.mxu0 0.0
  %7752 = vmatpush2.msra.mxu0 0.0
  %7753 = vmatprep.subr.mxu0 0.0
  %7754 = vmatpush2.msra.mxu0 0.0
  %7755 = vmatprep.subr.mxu0 0.0
  %7756 = vmatpush2.msra.mxu0 0.0
  %7757 = vmatprep.subr.mxu0 0.0
  %7758 = vmatpush2.msra.mxu0 0.0
  %7759 = vmatprep.subr.mxu0 0.0
  %7760 = vmatpush2.msra.mxu0 0.0
  %7761 = vmatprep.subr.mxu0 0.0
  %7762 = vmatpush2.msra.mxu0 0.0
  %7763 = vmatprep.subr.mxu0 0.0
  %7764 = vmatpush2.msra.mxu0 0.0
  %7765 = vmatprep.subr.mxu0 0.0
  %7766 = vmatpush2.msra.mxu0 0.0
  %7767 = vmatprep.subr.mxu0 0.0
  %7768 = vmatpush2.msra.mxu0 0.0
  %7769 = vmatprep.subr.mxu0 0.0
  %7770 = vmatpush2.msra.mxu0 0.0
  %7771 = vmatprep.subr.mxu0 0.0
  %7772 = vmatpush2.msra.mxu0 0.0
  %7773 = vmatprep.subr.mxu0 0.0
  %7774 = vmatpush2.msra.mxu0 0.0
  %7775 = vmatprep.subr.mxu0 0.0
  %7776 = vmatpush2.msra.mxu0 0.0
  %7777 = vmatprep.subr.mxu0 0.0
  %7778 = vmatpush2.msra.mxu0 0.0
  %7779 = vmatprep.subr.mxu0 0.0
  %7780 = vmatpush2.msra.mxu0 0.0
  %7781 = vmatprep.mubr.f32.mxu0 0.0
  %v7782 = vand.u32 %v7350, 4294901760
  %v7783 = vsub.f32 %v7350, %v7782
  %v7784 = vand.u32 %v7783, 4294901760
  %7785 = vmatmul.mubr.f32.gmra.mxu0 %v7784
  %v7786 = vpop.f32.mrf.mxu0
  %v7787 = vadd.f32 %v7697, %v7786
  %v7788 = vpop.f32.mrf.mxu0
  %v7789 = vadd.f32 %v7699, %v7788
  %7790 = vdwg.mxu0
  %7791 = vmatprep.subr.mxu0 0.0
  %7792 = vmatpush1.msra.mxu0 0.0
  %7793 = vmatprep.subr.mxu0 0.0
  %7794 = vmatpush1.msra.mxu0 0.0
  %7795 = vmatprep.subr.mxu0 0.0
  %7796 = vmatpush1.msra.mxu0 0.0
  %7797 = vmatprep.subr.mxu0 0.0
  %7798 = vmatpush1.msra.mxu0 0.0
  %7799 = vmatprep.subr.mxu0 0.0
  %7800 = vmatpush1.msra.mxu0 0.0
  %7801 = vmatprep.subr.mxu0 0.0
  %7802 = vmatpush1.msra.mxu0 0.0
  %7803 = vmatprep.subr.mxu0 0.0
  %7804 = vmatpush1.msra.mxu0 0.0
  %7805 = vmatprep.subr.mxu0 0.0
  %7806 = vmatpush1.msra.mxu0 0.0
  %v7807 = vand.u32 %v35, 4294901760
  %v7808 = vsub.f32 %v35, %v7807
  %v7809 = vand.u32 %v7808, 4294901760
  %7810 = vmatprep.subr.mxu0 %v7809
  %v7811 = vand.u32 %v34, 4294901760
  %v7812 = vsub.f32 %v34, %v7811
  %v7813 = vand.u32 %v7812, 4294901760
  %7814 = vmatpush1.msra.mxu0 %v7813
  %v7815 = vand.u32 %v33, 4294901760
  %v7816 = vsub.f32 %v33, %v7815
  %v7817 = vand.u32 %v7816, 4294901760
  %7818 = vmatprep.subr.mxu0 %v7817
  %v7819 = vand.u32 %v32, 4294901760
  %v7820 = vsub.f32 %v32, %v7819
  %v7821 = vand.u32 %v7820, 4294901760
  %7822 = vmatpush1.msra.mxu0 %v7821
  %v7823 = vand.u32 %v31, 4294901760
  %v7824 = vsub.f32 %v31, %v7823
  %v7825 = vand.u32 %v7824, 4294901760
  %7826 = vmatprep.subr.mxu0 %v7825
  %v7827 = vand.u32 %v30, 4294901760
  %v7828 = vsub.f32 %v30, %v7827
  %v7829 = vand.u32 %v7828, 4294901760
  %7830 = vmatpush1.msra.mxu0 %v7829
  %v7831 = vand.u32 %v29, 4294901760
  %v7832 = vsub.f32 %v29, %v7831
  %v7833 = vand.u32 %v7832, 4294901760
  %7834 = vmatprep.subr.mxu0 %v7833
  %v7835 = vand.u32 %v28, 4294901760
  %v7836 = vsub.f32 %v28, %v7835
  %v7837 = vand.u32 %v7836, 4294901760
  %7838 = vmatpush1.msra.mxu0 %v7837
  %v7839 = vand.u32 %v27, 4294901760
  %v7840 = vsub.f32 %v27, %v7839
  %v7841 = vand.u32 %v7840, 4294901760
  %7842 = vmatprep.subr.mxu0 %v7841
  %v7843 = vand.u32 %v26, 4294901760
  %v7844 = vsub.f32 %v26, %v7843
  %v7845 = vand.u32 %v7844, 4294901760
  %7846 = vmatpush1.msra.mxu0 %v7845
  %v7847 = vand.u32 %v25, 4294901760
  %v7848 = vsub.f32 %v25, %v7847
  %v7849 = vand.u32 %v7848, 4294901760
  %7850 = vmatprep.subr.mxu0 %v7849
  %v7851 = vand.u32 %v24, 4294901760
  %v7852 = vsub.f32 %v24, %v7851
  %v7853 = vand.u32 %v7852, 4294901760
  %7854 = vmatpush1.msra.mxu0 %v7853
  %v7855 = vand.u32 %v23, 4294901760
  %v7856 = vsub.f32 %v23, %v7855
  %v7857 = vand.u32 %v7856, 4294901760
  %7858 = vmatprep.subr.mxu0 %v7857
  %v7859 = vand.u32 %v22, 4294901760
  %v7860 = vsub.f32 %v22, %v7859
  %v7861 = vand.u32 %v7860, 4294901760
  %7862 = vmatpush1.msra.mxu0 %v7861
  %v7863 = vand.u32 %v21, 4294901760
  %v7864 = vsub.f32 %v21, %v7863
  %v7865 = vand.u32 %v7864, 4294901760
  %7866 = vmatprep.subr.mxu0 %v7865
  %v7867 = vand.u32 %v20, 4294901760
  %v7868 = vsub.f32 %v20, %v7867
  %v7869 = vand.u32 %v7868, 4294901760
  %7870 = vmatpush1.msra.mxu0 %v7869
  %7871 = vmatprep.subr.mxu0 0.0
  %7872 = vmatpush2.msra.mxu0 0.0
  %7873 = vmatprep.subr.mxu0 0.0
  %7874 = vmatpush2.msra.mxu0 0.0
  %7875 = vmatprep.subr.mxu0 0.0
  %7876 = vmatpush2.msra.mxu0 0.0
  %7877 = vmatprep.subr.mxu0 0.0
  %7878 = vmatpush2.msra.mxu0 0.0
  %7879 = vmatprep.subr.mxu0 0.0
  %7880 = vmatpush2.msra.mxu0 0.0
  %7881 = vmatprep.subr.mxu0 0.0
  %7882 = vmatpush2.msra.mxu0 0.0
  %7883 = vmatprep.subr.mxu0 0.0
  %7884 = vmatpush2.msra.mxu0 0.0
  %7885 = vmatprep.subr.mxu0 0.0
  %7886 = vmatpush2.msra.mxu0 0.0
  %7887 = vmatprep.subr.mxu0 0.0
  %7888 = vmatpush2.msra.mxu0 0.0
  %7889 = vmatprep.subr.mxu0 0.0
  %7890 = vmatpush2.msra.mxu0 0.0
  %7891 = vmatprep.subr.mxu0 0.0
  %7892 = vmatpush2.msra.mxu0 0.0
  %7893 = vmatprep.subr.mxu0 0.0
  %7894 = vmatpush2.msra.mxu0 0.0
  %7895 = vmatprep.subr.mxu0 0.0
  %7896 = vmatpush2.msra.mxu0 0.0
  %7897 = vmatprep.subr.mxu0 0.0
  %7898 = vmatpush2.msra.mxu0 0.0
  %7899 = vmatprep.subr.mxu0 0.0
  %7900 = vmatpush2.msra.mxu0 0.0
  %7901 = vmatprep.subr.mxu0 0.0
  %7902 = vmatpush2.msra.mxu0 0.0
  %7903 = vmatprep.mubr.f32.mxu0 0.0
  %v7904 = vand.u32 %v7350, 4294901760
  %7905 = vmatmul.mubr.f32.gmra.mxu0 %v7904
  %v7906 = vpop.f32.mrf.mxu0
  %v7907 = vadd.f32 %v7787, %v7906
  %v7908 = vpop.f32.mrf.mxu0
  %v7909 = vadd.f32 %v7789, %v7908
  %7910 = vdwg.mxu0
  %7911 = vmatprep.subr.mxu0 0.0
  %7912 = vmatpush1.msra.mxu0 0.0
  %7913 = vmatprep.subr.mxu0 0.0
  %7914 = vmatpush1.msra.mxu0 0.0
  %7915 = vmatprep.subr.mxu0 0.0
  %7916 = vmatpush1.msra.mxu0 0.0
  %7917 = vmatprep.subr.mxu0 0.0
  %7918 = vmatpush1.msra.mxu0 0.0
  %7919 = vmatprep.subr.mxu0 0.0
  %7920 = vmatpush1.msra.mxu0 0.0
  %7921 = vmatprep.subr.mxu0 0.0
  %7922 = vmatpush1.msra.mxu0 0.0
  %7923 = vmatprep.subr.mxu0 0.0
  %7924 = vmatpush1.msra.mxu0 0.0
  %7925 = vmatprep.subr.mxu0 0.0
  %7926 = vmatpush1.msra.mxu0 0.0
  %v7927 = vand.u32 %v35, 4294901760
  %7928 = vmatprep.subr.mxu0 %v7927
  %v7929 = vand.u32 %v34, 4294901760
  %7930 = vmatpush1.msra.mxu0 %v7929
  %v7931 = vand.u32 %v33, 4294901760
  %7932 = vmatprep.subr.mxu0 %v7931
  %v7933 = vand.u32 %v32, 4294901760
  %7934 = vmatpush1.msra.mxu0 %v7933
  %v7935 = vand.u32 %v31, 4294901760
  %7936 = vmatprep.subr.mxu0 %v7935
  %v7937 = vand.u32 %v30, 4294901760
  %7938 = vmatpush1.msra.mxu0 %v7937
  %v7939 = vand.u32 %v29, 4294901760
  %7940 = vmatprep.subr.mxu0 %v7939
  %v7941 = vand.u32 %v28, 4294901760
  %7942 = vmatpush1.msra.mxu0 %v7941
  %v7943 = vand.u32 %v27, 4294901760
  %7944 = vmatprep.subr.mxu0 %v7943
  %v7945 = vand.u32 %v26, 4294901760
  %7946 = vmatpush1.msra.mxu0 %v7945
  %v7947 = vand.u32 %v25, 4294901760
  %7948 = vmatprep.subr.mxu0 %v7947
  %v7949 = vand.u32 %v24, 4294901760
  %7950 = vmatpush1.msra.mxu0 %v7949
  %v7951 = vand.u32 %v23, 4294901760
  %7952 = vmatprep.subr.mxu0 %v7951
  %v7953 = vand.u32 %v22, 4294901760
  %7954 = vmatpush1.msra.mxu0 %v7953
  %v7955 = vand.u32 %v21, 4294901760
  %7956 = vmatprep.subr.mxu0 %v7955
  %v7957 = vand.u32 %v20, 4294901760
  %7958 = vmatpush1.msra.mxu0 %v7957
  %7959 = vmatprep.subr.mxu0 0.0
  %7960 = vmatpush2.msra.mxu0 0.0
  %7961 = vmatprep.subr.mxu0 0.0
  %7962 = vmatpush2.msra.mxu0 0.0
  %7963 = vmatprep.subr.mxu0 0.0
  %7964 = vmatpush2.msra.mxu0 0.0
  %7965 = vmatprep.subr.mxu0 0.0
  %7966 = vmatpush2.msra.mxu0 0.0
  %7967 = vmatprep.subr.mxu0 0.0
  %7968 = vmatpush2.msra.mxu0 0.0
  %7969 = vmatprep.subr.mxu0 0.0
  %7970 = vmatpush2.msra.mxu0 0.0
  %7971 = vmatprep.subr.mxu0 0.0
  %7972 = vmatpush2.msra.mxu0 0.0
  %7973 = vmatprep.subr.mxu0 0.0
  %7974 = vmatpush2.msra.mxu0 0.0
  %7975 = vmatprep.subr.mxu0 0.0
  %7976 = vmatpush2.msra.mxu0 0.0
  %7977 = vmatprep.subr.mxu0 0.0
  %7978 = vmatpush2.msra.mxu0 0.0
  %7979 = vmatprep.subr.mxu0 0.0
  %7980 = vmatpush2.msra.mxu0 0.0
  %7981 = vmatprep.subr.mxu0 0.0
  %7982 = vmatpush2.msra.mxu0 0.0
  %7983 = vmatprep.subr.mxu0 0.0
  %7984 = vmatpush2.msra.mxu0 0.0
  %7985 = vmatprep.subr.mxu0 0.0
  %7986 = vmatpush2.msra.mxu0 0.0
  %7987 = vmatprep.subr.mxu0 0.0
  %7988 = vmatpush2.msra.mxu0 0.0
  %7989 = vmatprep.subr.mxu0 0.0
  %7990 = vmatpush2.msra.mxu0 0.0
  %7991 = vmatprep.mubr.f32.mxu0 0.0
  %v7992 = vand.u32 %v7350, 4294901760
  %7993 = vmatmul.mubr.f32.gmra.mxu0 %v7992
  %v7994 = vpop.f32.mrf.mxu0
  %v7995 = vadd.f32 %v7907, %v7994
  %v7996 = vpop.f32.mrf.mxu0
  %v7997 = vadd.f32 %v7909, %v7996
  %7998 = vdwg.mxu0
  %v7999 = vmul.f32 %v7995, 0.5
  %v8000 = vtanh.pop %v7999
  %v8001 = vmul.f32 %v8000, 0.5
  %v8002 = vadd.f32 %v8001, 0.5
  %v8003 = vtanh.pop %v7997
  %v8004 = vmul.f32 %v7997, 0.5
  %v8005 = vtanh.pop %v8004
  %v8006 = vmul.f32 %v8005, 0.5
  %v8007 = vadd.f32 %v8006, 0.5
  %v8008 = vmul.f32 %v8002, %v6874
  %v8009 = vmul.f32 %v8002, %v8003
  %8011 = vrot.lane.b32.xlu0 %v8009, 64
  %v8012 = vpop.permute.xlu0 %8011
  %v8014 = vadd.f32 %v8008, %v8012
  %v8015 = vtanh.pop %v8014
  %v8016 = vmul.f32 %v8007, %v8015
  %s8017 = scalar_lea.vmem %s0, 56
  %v8018 = vld [vmem:[%s8017] sm:$0xff]
  %v8020 = vsel %vm39, %v8018, 0
  %8022 = vmatprep.subr.mxu0 0.0
  %8023 = vmatpush1.msra.mxu0 0.0
  %8024 = vmatprep.subr.mxu0 0.0
  %8025 = vmatpush1.msra.mxu0 0.0
  %8026 = vmatprep.subr.mxu0 0.0
  %8027 = vmatpush1.msra.mxu0 0.0
  %8028 = vmatprep.subr.mxu0 0.0
  %8029 = vmatpush1.msra.mxu0 0.0
  %8030 = vmatprep.subr.mxu0 0.0
  %8031 = vmatpush1.msra.mxu0 0.0
  %8032 = vmatprep.subr.mxu0 0.0
  %8033 = vmatpush1.msra.mxu0 0.0
  %8034 = vmatprep.subr.mxu0 0.0
  %8035 = vmatpush1.msra.mxu0 0.0
  %8036 = vmatprep.subr.mxu0 0.0
  %8037 = vmatpush1.msra.mxu0 0.0
  %8038 = vmatprep.subr.mxu0 0.0
  %8039 = vmatpush1.msra.mxu0 0.0
  %8040 = vmatprep.subr.mxu0 0.0
  %8041 = vmatpush1.msra.mxu0 0.0
  %8042 = vmatprep.subr.mxu0 0.0
  %8043 = vmatpush1.msra.mxu0 0.0
  %8044 = vmatprep.subr.mxu0 0.0
  %8045 = vmatpush1.msra.mxu0 0.0
  %8046 = vmatprep.subr.mxu0 0.0
  %8047 = vmatpush1.msra.mxu0 0.0
  %8048 = vmatprep.subr.mxu0 0.0
  %8049 = vmatpush1.msra.mxu0 0.0
  %8050 = vmatprep.subr.mxu0 0.0
  %8051 = vmatpush1.msra.mxu0 0.0
  %v8052 = vand.u32 %v38, 4294901760
  %8053 = vmatprep.subr.mxu0 %v8052
  %v8054 = vand.u32 %v37, 4294901760
  %8055 = vmatpush1.msra.mxu0 %v8054
  %8056 = vmatprep.subr.mxu0 0.0
  %8057 = vmatpush2.msra.mxu0 0.0
  %8058 = vmatprep.subr.mxu0 0.0
  %8059 = vmatpush2.msra.mxu0 0.0
  %8060 = vmatprep.subr.mxu0 0.0
  %8061 = vmatpush2.msra.mxu0 0.0
  %8062 = vmatprep.subr.mxu0 0.0
  %8063 = vmatpush2.msra.mxu0 0.0
  %8064 = vmatprep.subr.mxu0 0.0
  %8065 = vmatpush2.msra.mxu0 0.0
  %8066 = vmatprep.subr.mxu0 0.0
  %8067 = vmatpush2.msra.mxu0 0.0
  %8068 = vmatprep.subr.mxu0 0.0
  %8069 = vmatpush2.msra.mxu0 0.0
  %8070 = vmatprep.subr.mxu0 0.0
  %8071 = vmatpush2.msra.mxu0 0.0
  %8072 = vmatprep.subr.mxu0 0.0
  %8073 = vmatpush2.msra.mxu0 0.0
  %8074 = vmatprep.subr.mxu0 0.0
  %8075 = vmatpush2.msra.mxu0 0.0
  %8076 = vmatprep.subr.mxu0 0.0
  %8077 = vmatpush2.msra.mxu0 0.0
  %8078 = vmatprep.subr.mxu0 0.0
  %8079 = vmatpush2.msra.mxu0 0.0
  %8080 = vmatprep.subr.mxu0 0.0
  %8081 = vmatpush2.msra.mxu0 0.0
  %8082 = vmatprep.subr.mxu0 0.0
  %8083 = vmatpush2.msra.mxu0 0.0
  %8084 = vmatprep.subr.mxu0 0.0
  %8085 = vmatpush2.msra.mxu0 0.0
  %8086 = vmatprep.subr.mxu0 0.0
  %8087 = vmatpush2.msra.mxu0 0.0
  %8088 = vmatprep.mubr.f32.mxu0 0.0
  %v8089 = vand.u32 %v8020, 4294901760
  %v8090 = vsub.f32 %v8020, %v8089
  %v8091 = vand.u32 %v8090, 4294901760
  %v8092 = vsub.f32 %v8090, %v8091
  %v8093 = vand.u32 %v8092, 4294901760
  %8094 = vmatmul.mubr.f32.gmra.mxu0 %v8093
  %v8095 = vpop.f32.mrf.mxu0
  %v8096 = vadd.f32 0.0, %v8095
  %v8097 = vpop.f32.mrf.mxu0
  %v8098 = vadd.f32 0.0, %v8097
  %8099 = vdwg.mxu0
  %8100 = vmatprep.subr.mxu0 0.0
  %8101 = vmatpush1.msra.mxu0 0.0
  %8102 = vmatprep.subr.mxu0 0.0
  %8103 = vmatpush1.msra.mxu0 0.0
  %8104 = vmatprep.subr.mxu0 0.0
  %8105 = vmatpush1.msra.mxu0 0.0
  %8106 = vmatprep.subr.mxu0 0.0
  %8107 = vmatpush1.msra.mxu0 0.0
  %8108 = vmatprep.subr.mxu0 0.0
  %8109 = vmatpush1.msra.mxu0 0.0
  %8110 = vmatprep.subr.mxu0 0.0
  %8111 = vmatpush1.msra.mxu0 0.0
  %8112 = vmatprep.subr.mxu0 0.0
  %8113 = vmatpush1.msra.mxu0 0.0
  %8114 = vmatprep.subr.mxu0 0.0
  %8115 = vmatpush1.msra.mxu0 0.0
  %8116 = vmatprep.subr.mxu0 0.0
  %8117 = vmatpush1.msra.mxu0 0.0
  %8118 = vmatprep.subr.mxu0 0.0
  %8119 = vmatpush1.msra.mxu0 0.0
  %8120 = vmatprep.subr.mxu0 0.0
  %8121 = vmatpush1.msra.mxu0 0.0
  %8122 = vmatprep.subr.mxu0 0.0
  %8123 = vmatpush1.msra.mxu0 0.0
  %8124 = vmatprep.subr.mxu0 0.0
  %8125 = vmatpush1.msra.mxu0 0.0
  %8126 = vmatprep.subr.mxu0 0.0
  %8127 = vmatpush1.msra.mxu0 0.0
  %8128 = vmatprep.subr.mxu0 0.0
  %8129 = vmatpush1.msra.mxu0 0.0
  %v8130 = vand.u32 %v38, 4294901760
  %v8131 = vsub.f32 %v38, %v8130
  %v8132 = vand.u32 %v8131, 4294901760
  %v8133 = vsub.f32 %v8131, %v8132
  %v8134 = vand.u32 %v8133, 4294901760
  %8135 = vmatprep.subr.mxu0 %v8134
  %v8136 = vand.u32 %v37, 4294901760
  %v8137 = vsub.f32 %v37, %v8136
  %v8138 = vand.u32 %v8137, 4294901760
  %v8139 = vsub.f32 %v8137, %v8138
  %v8140 = vand.u32 %v8139, 4294901760
  %8141 = vmatpush1.msra.mxu0 %v8140
  %8142 = vmatprep.subr.mxu0 0.0
  %8143 = vmatpush2.msra.mxu0 0.0
  %8144 = vmatprep.subr.mxu0 0.0
  %8145 = vmatpush2.msra.mxu0 0.0
  %8146 = vmatprep.subr.mxu0 0.0
  %8147 = vmatpush2.msra.mxu0 0.0
  %8148 = vmatprep.subr.mxu0 0.0
  %8149 = vmatpush2.msra.mxu0 0.0
  %8150 = vmatprep.subr.mxu0 0.0
  %8151 = vmatpush2.msra.mxu0 0.0
  %8152 = vmatprep.subr.mxu0 0.0
  %8153 = vmatpush2.msra.mxu0 0.0
  %8154 = vmatprep.subr.mxu0 0.0
  %8155 = vmatpush2.msra.mxu0 0.0
  %8156 = vmatprep.subr.mxu0 0.0
  %8157 = vmatpush2.msra.mxu0 0.0
  %8158 = vmatprep.subr.mxu0 0.0
  %8159 = vmatpush2.msra.mxu0 0.0
  %8160 = vmatprep.subr.mxu0 0.0
  %8161 = vmatpush2.msra.mxu0 0.0
  %8162 = vmatprep.subr.mxu0 0.0
  %8163 = vmatpush2.msra.mxu0 0.0
  %8164 = vmatprep.subr.mxu0 0.0
  %8165 = vmatpush2.msra.mxu0 0.0
  %8166 = vmatprep.subr.mxu0 0.0
  %8167 = vmatpush2.msra.mxu0 0.0
  %8168 = vmatprep.subr.mxu0 0.0
  %8169 = vmatpush2.msra.mxu0 0.0
  %8170 = vmatprep.subr.mxu0 0.0
  %8171 = vmatpush2.msra.mxu0 0.0
  %8172 = vmatprep.subr.mxu0 0.0
  %8173 = vmatpush2.msra.mxu0 0.0
  %8174 = vmatprep.mubr.f32.mxu0 0.0
  %v8175 = vand.u32 %v8020, 4294901760
  %8176 = vmatmul.mubr.f32.gmra.mxu0 %v8175
  %v8177 = vpop.f32.mrf.mxu0
  %v8178 = vadd.f32 %v8096, %v8177
  %v8179 = vpop.f32.mrf.mxu0
  %v8180 = vadd.f32 %v8098, %v8179
  %8181 = vdwg.mxu0
  %8182 = vmatprep.subr.mxu0 0.0
  %8183 = vmatpush1.msra.mxu0 0.0
  %8184 = vmatprep.subr.mxu0 0.0
  %8185 = vmatpush1.msra.mxu0 0.0
  %8186 = vmatprep.subr.mxu0 0.0
  %8187 = vmatpush1.msra.mxu0 0.0
  %8188 = vmatprep.subr.mxu0 0.0
  %8189 = vmatpush1.msra.mxu0 0.0
  %8190 = vmatprep.subr.mxu0 0.0
  %8191 = vmatpush1.msra.mxu0 0.0
  %8192 = vmatprep.subr.mxu0 0.0
  %8193 = vmatpush1.msra.mxu0 0.0
  %8194 = vmatprep.subr.mxu0 0.0
  %8195 = vmatpush1.msra.mxu0 0.0
  %8196 = vmatprep.subr.mxu0 0.0
  %8197 = vmatpush1.msra.mxu0 0.0
  %8198 = vmatprep.subr.mxu0 0.0
  %8199 = vmatpush1.msra.mxu0 0.0
  %8200 = vmatprep.subr.mxu0 0.0
  %8201 = vmatpush1.msra.mxu0 0.0
  %8202 = vmatprep.subr.mxu0 0.0
  %8203 = vmatpush1.msra.mxu0 0.0
  %8204 = vmatprep.subr.mxu0 0.0
  %8205 = vmatpush1.msra.mxu0 0.0
  %8206 = vmatprep.subr.mxu0 0.0
  %8207 = vmatpush1.msra.mxu0 0.0
  %8208 = vmatprep.subr.mxu0 0.0
  %8209 = vmatpush1.msra.mxu0 0.0
  %8210 = vmatprep.subr.mxu0 0.0
  %8211 = vmatpush1.msra.mxu0 0.0
  %v8212 = vand.u32 %v38, 4294901760
  %v8213 = vsub.f32 %v38, %v8212
  %8214 = vmatprep.subr.mxu0 %v8213
  %v8215 = vand.u32 %v37, 4294901760
  %v8216 = vsub.f32 %v37, %v8215
  %8217 = vmatpush1.msra.mxu0 %v8216
  %8218 = vmatprep.subr.mxu0 0.0
  %8219 = vmatpush2.msra.mxu0 0.0
  %8220 = vmatprep.subr.mxu0 0.0
  %8221 = vmatpush2.msra.mxu0 0.0
  %8222 = vmatprep.subr.mxu0 0.0
  %8223 = vmatpush2.msra.mxu0 0.0
  %8224 = vmatprep.subr.mxu0 0.0
  %8225 = vmatpush2.msra.mxu0 0.0
  %8226 = vmatprep.subr.mxu0 0.0
  %8227 = vmatpush2.msra.mxu0 0.0
  %8228 = vmatprep.subr.mxu0 0.0
  %8229 = vmatpush2.msra.mxu0 0.0
  %8230 = vmatprep.subr.mxu0 0.0
  %8231 = vmatpush2.msra.mxu0 0.0
  %8232 = vmatprep.subr.mxu0 0.0
  %8233 = vmatpush2.msra.mxu0 0.0
  %8234 = vmatprep.subr.mxu0 0.0
  %8235 = vmatpush2.msra.mxu0 0.0
  %8236 = vmatprep.subr.mxu0 0.0
  %8237 = vmatpush2.msra.mxu0 0.0
  %8238 = vmatprep.subr.mxu0 0.0
  %8239 = vmatpush2.msra.mxu0 0.0
  %8240 = vmatprep.subr.mxu0 0.0
  %8241 = vmatpush2.msra.mxu0 0.0
  %8242 = vmatprep.subr.mxu0 0.0
  %8243 = vmatpush2.msra.mxu0 0.0
  %8244 = vmatprep.subr.mxu0 0.0
  %8245 = vmatpush2.msra.mxu0 0.0
  %8246 = vmatprep.subr.mxu0 0.0
  %8247 = vmatpush2.msra.mxu0 0.0
  %8248 = vmatprep.subr.mxu0 0.0
  %8249 = vmatpush2.msra.mxu0 0.0
  %8250 = vmatprep.mubr.f32.mxu0 0.0
  %v8251 = vand.u32 %v8020, 4294901760
  %v8252 = vsub.f32 %v8020, %v8251
  %8253 = vmatmul.mubr.f32.gmra.mxu0 %v8252
  %v8254 = vpop.f32.mrf.mxu0
  %v8255 = vadd.f32 %v8178, %v8254
  %v8256 = vpop.f32.mrf.mxu0
  %v8257 = vadd.f32 %v8180, %v8256
  %8258 = vdwg.mxu0
  %8259 = vmatprep.subr.mxu0 0.0
  %8260 = vmatpush1.msra.mxu0 0.0
  %8261 = vmatprep.subr.mxu0 0.0
  %8262 = vmatpush1.msra.mxu0 0.0
  %8263 = vmatprep.subr.mxu0 0.0
  %8264 = vmatpush1.msra.mxu0 0.0
  %8265 = vmatprep.subr.mxu0 0.0
  %8266 = vmatpush1.msra.mxu0 0.0
  %8267 = vmatprep.subr.mxu0 0.0
  %8268 = vmatpush1.msra.mxu0 0.0
  %8269 = vmatprep.subr.mxu0 0.0
  %8270 = vmatpush1.msra.mxu0 0.0
  %8271 = vmatprep.subr.mxu0 0.0
  %8272 = vmatpush1.msra.mxu0 0.0
  %8273 = vmatprep.subr.mxu0 0.0
  %8274 = vmatpush1.msra.mxu0 0.0
  %8275 = vmatprep.subr.mxu0 0.0
  %8276 = vmatpush1.msra.mxu0 0.0
  %8277 = vmatprep.subr.mxu0 0.0
  %8278 = vmatpush1.msra.mxu0 0.0
  %8279 = vmatprep.subr.mxu0 0.0
  %8280 = vmatpush1.msra.mxu0 0.0
  %8281 = vmatprep.subr.mxu0 0.0
  %8282 = vmatpush1.msra.mxu0 0.0
  %8283 = vmatprep.subr.mxu0 0.0
  %8284 = vmatpush1.msra.mxu0 0.0
  %8285 = vmatprep.subr.mxu0 0.0
  %8286 = vmatpush1.msra.mxu0 0.0
  %8287 = vmatprep.subr.mxu0 0.0
  %8288 = vmatpush1.msra.mxu0 0.0
  %v8289 = vand.u32 %v38, 4294901760
  %8290 = vmatprep.subr.mxu0 %v8289
  %v8291 = vand.u32 %v37, 4294901760
  %8292 = vmatpush1.msra.mxu0 %v8291
  %8293 = vmatprep.subr.mxu0 0.0
  %8294 = vmatpush2.msra.mxu0 0.0
  %8295 = vmatprep.subr.mxu0 0.0
  %8296 = vmatpush2.msra.mxu0 0.0
  %8297 = vmatprep.subr.mxu0 0.0
  %8298 = vmatpush2.msra.mxu0 0.0
  %8299 = vmatprep.subr.mxu0 0.0
  %8300 = vmatpush2.msra.mxu0 0.0
  %8301 = vmatprep.subr.mxu0 0.0
  %8302 = vmatpush2.msra.mxu0 0.0
  %8303 = vmatprep.subr.mxu0 0.0
  %8304 = vmatpush2.msra.mxu0 0.0
  %8305 = vmatprep.subr.mxu0 0.0
  %8306 = vmatpush2.msra.mxu0 0.0
  %8307 = vmatprep.subr.mxu0 0.0
  %8308 = vmatpush2.msra.mxu0 0.0
  %8309 = vmatprep.subr.mxu0 0.0
  %8310 = vmatpush2.msra.mxu0 0.0
  %8311 = vmatprep.subr.mxu0 0.0
  %8312 = vmatpush2.msra.mxu0 0.0
  %8313 = vmatprep.subr.mxu0 0.0
  %8314 = vmatpush2.msra.mxu0 0.0
  %8315 = vmatprep.subr.mxu0 0.0
  %8316 = vmatpush2.msra.mxu0 0.0
  %8317 = vmatprep.subr.mxu0 0.0
  %8318 = vmatpush2.msra.mxu0 0.0
  %8319 = vmatprep.subr.mxu0 0.0
  %8320 = vmatpush2.msra.mxu0 0.0
  %8321 = vmatprep.subr.mxu0 0.0
  %8322 = vmatpush2.msra.mxu0 0.0
  %8323 = vmatprep.subr.mxu0 0.0
  %8324 = vmatpush2.msra.mxu0 0.0
  %8325 = vmatprep.mubr.f32.mxu0 0.0
  %v8326 = vand.u32 %v8020, 4294901760
  %v8327 = vsub.f32 %v8020, %v8326
  %v8328 = vand.u32 %v8327, 4294901760
  %8329 = vmatmul.mubr.f32.gmra.mxu0 %v8328
  %v8330 = vpop.f32.mrf.mxu0
  %v8331 = vadd.f32 %v8255, %v8330
  %v8332 = vpop.f32.mrf.mxu0
  %v8333 = vadd.f32 %v8257, %v8332
  %8334 = vdwg.mxu0
  %8335 = vmatprep.subr.mxu0 0.0
  %8336 = vmatpush1.msra.mxu0 0.0
  %8337 = vmatprep.subr.mxu0 0.0
  %8338 = vmatpush1.msra.mxu0 0.0
  %8339 = vmatprep.subr.mxu0 0.0
  %8340 = vmatpush1.msra.mxu0 0.0
  %8341 = vmatprep.subr.mxu0 0.0
  %8342 = vmatpush1.msra.mxu0 0.0
  %8343 = vmatprep.subr.mxu0 0.0
  %8344 = vmatpush1.msra.mxu0 0.0
  %8345 = vmatprep.subr.mxu0 0.0
  %8346 = vmatpush1.msra.mxu0 0.0
  %8347 = vmatprep.subr.mxu0 0.0
  %8348 = vmatpush1.msra.mxu0 0.0
  %8349 = vmatprep.subr.mxu0 0.0
  %8350 = vmatpush1.msra.mxu0 0.0
  %8351 = vmatprep.subr.mxu0 0.0
  %8352 = vmatpush1.msra.mxu0 0.0
  %8353 = vmatprep.subr.mxu0 0.0
  %8354 = vmatpush1.msra.mxu0 0.0
  %8355 = vmatprep.subr.mxu0 0.0
  %8356 = vmatpush1.msra.mxu0 0.0
  %8357 = vmatprep.subr.mxu0 0.0
  %8358 = vmatpush1.msra.mxu0 0.0
  %8359 = vmatprep.subr.mxu0 0.0
  %8360 = vmatpush1.msra.mxu0 0.0
  %8361 = vmatprep.subr.mxu0 0.0
  %8362 = vmatpush1.msra.mxu0 0.0
  %8363 = vmatprep.subr.mxu0 0.0
  %8364 = vmatpush1.msra.mxu0 0.0
  %v8365 = vand.u32 %v38, 4294901760
  %v8366 = vsub.f32 %v38, %v8365
  %v8367 = vand.u32 %v8366, 4294901760
  %8368 = vmatprep.subr.mxu0 %v8367
  %v8369 = vand.u32 %v37, 4294901760
  %v8370 = vsub.f32 %v37, %v8369
  %v8371 = vand.u32 %v8370, 4294901760
  %8372 = vmatpush1.msra.mxu0 %v8371
  %8373 = vmatprep.subr.mxu0 0.0
  %8374 = vmatpush2.msra.mxu0 0.0
  %8375 = vmatprep.subr.mxu0 0.0
  %8376 = vmatpush2.msra.mxu0 0.0
  %8377 = vmatprep.subr.mxu0 0.0
  %8378 = vmatpush2.msra.mxu0 0.0
  %8379 = vmatprep.subr.mxu0 0.0
  %8380 = vmatpush2.msra.mxu0 0.0
  %8381 = vmatprep.subr.mxu0 0.0
  %8382 = vmatpush2.msra.mxu0 0.0
  %8383 = vmatprep.subr.mxu0 0.0
  %8384 = vmatpush2.msra.mxu0 0.0
  %8385 = vmatprep.subr.mxu0 0.0
  %8386 = vmatpush2.msra.mxu0 0.0
  %8387 = vmatprep.subr.mxu0 0.0
  %8388 = vmatpush2.msra.mxu0 0.0
  %8389 = vmatprep.subr.mxu0 0.0
  %8390 = vmatpush2.msra.mxu0 0.0
  %8391 = vmatprep.subr.mxu0 0.0
  %8392 = vmatpush2.msra.mxu0 0.0
  %8393 = vmatprep.subr.mxu0 0.0
  %8394 = vmatpush2.msra.mxu0 0.0
  %8395 = vmatprep.subr.mxu0 0.0
  %8396 = vmatpush2.msra.mxu0 0.0
  %8397 = vmatprep.subr.mxu0 0.0
  %8398 = vmatpush2.msra.mxu0 0.0
  %8399 = vmatprep.subr.mxu0 0.0
  %8400 = vmatpush2.msra.mxu0 0.0
  %8401 = vmatprep.subr.mxu0 0.0
  %8402 = vmatpush2.msra.mxu0 0.0
  %8403 = vmatprep.subr.mxu0 0.0
  %8404 = vmatpush2.msra.mxu0 0.0
  %8405 = vmatprep.mubr.f32.mxu0 0.0
  %v8406 = vand.u32 %v8020, 4294901760
  %8407 = vmatmul.mubr.f32.gmra.mxu0 %v8406
  %v8408 = vpop.f32.mrf.mxu0
  %v8409 = vadd.f32 %v8331, %v8408
  %v8410 = vpop.f32.mrf.mxu0
  %v8411 = vadd.f32 %v8333, %v8410
  %8412 = vdwg.mxu0
  %8413 = vmatprep.subr.mxu0 0.0
  %8414 = vmatpush1.msra.mxu0 0.0
  %8415 = vmatprep.subr.mxu0 0.0
  %8416 = vmatpush1.msra.mxu0 0.0
  %8417 = vmatprep.subr.mxu0 0.0
  %8418 = vmatpush1.msra.mxu0 0.0
  %8419 = vmatprep.subr.mxu0 0.0
  %8420 = vmatpush1.msra.mxu0 0.0
  %8421 = vmatprep.subr.mxu0 0.0
  %8422 = vmatpush1.msra.mxu0 0.0
  %8423 = vmatprep.subr.mxu0 0.0
  %8424 = vmatpush1.msra.mxu0 0.0
  %8425 = vmatprep.subr.mxu0 0.0
  %8426 = vmatpush1.msra.mxu0 0.0
  %8427 = vmatprep.subr.mxu0 0.0
  %8428 = vmatpush1.msra.mxu0 0.0
  %8429 = vmatprep.subr.mxu0 0.0
  %8430 = vmatpush1.msra.mxu0 0.0
  %8431 = vmatprep.subr.mxu0 0.0
  %8432 = vmatpush1.msra.mxu0 0.0
  %8433 = vmatprep.subr.mxu0 0.0
  %8434 = vmatpush1.msra.mxu0 0.0
  %8435 = vmatprep.subr.mxu0 0.0
  %8436 = vmatpush1.msra.mxu0 0.0
  %8437 = vmatprep.subr.mxu0 0.0
  %8438 = vmatpush1.msra.mxu0 0.0
  %8439 = vmatprep.subr.mxu0 0.0
  %8440 = vmatpush1.msra.mxu0 0.0
  %8441 = vmatprep.subr.mxu0 0.0
  %8442 = vmatpush1.msra.mxu0 0.0
  %v8443 = vand.u32 %v38, 4294901760
  %8444 = vmatprep.subr.mxu0 %v8443
  %v8445 = vand.u32 %v37, 4294901760
  %8446 = vmatpush1.msra.mxu0 %v8445
  %8447 = vmatprep.subr.mxu0 0.0
  %8448 = vmatpush2.msra.mxu0 0.0
  %8449 = vmatprep.subr.mxu0 0.0
  %8450 = vmatpush2.msra.mxu0 0.0
  %8451 = vmatprep.subr.mxu0 0.0
  %8452 = vmatpush2.msra.mxu0 0.0
  %8453 = vmatprep.subr.mxu0 0.0
  %8454 = vmatpush2.msra.mxu0 0.0
  %8455 = vmatprep.subr.mxu0 0.0
  %8456 = vmatpush2.msra.mxu0 0.0
  %8457 = vmatprep.subr.mxu0 0.0
  %8458 = vmatpush2.msra.mxu0 0.0
  %8459 = vmatprep.subr.mxu0 0.0
  %8460 = vmatpush2.msra.mxu0 0.0
  %8461 = vmatprep.subr.mxu0 0.0
  %8462 = vmatpush2.msra.mxu0 0.0
  %8463 = vmatprep.subr.mxu0 0.0
  %8464 = vmatpush2.msra.mxu0 0.0
  %8465 = vmatprep.subr.mxu0 0.0
  %8466 = vmatpush2.msra.mxu0 0.0
  %8467 = vmatprep.subr.mxu0 0.0
  %8468 = vmatpush2.msra.mxu0 0.0
  %8469 = vmatprep.subr.mxu0 0.0
  %8470 = vmatpush2.msra.mxu0 0.0
  %8471 = vmatprep.subr.mxu0 0.0
  %8472 = vmatpush2.msra.mxu0 0.0
  %8473 = vmatprep.subr.mxu0 0.0
  %8474 = vmatpush2.msra.mxu0 0.0
  %8475 = vmatprep.subr.mxu0 0.0
  %8476 = vmatpush2.msra.mxu0 0.0
  %8477 = vmatprep.subr.mxu0 0.0
  %8478 = vmatpush2.msra.mxu0 0.0
  %8479 = vmatprep.mubr.f32.mxu0 0.0
  %v8480 = vand.u32 %v8020, 4294901760
  %8481 = vmatmul.mubr.f32.gmra.mxu0 %v8480
  %v8482 = vpop.f32.mrf.mxu0
  %v8483 = vadd.f32 %v8409, %v8482
  %v8484 = vpop.f32.mrf.mxu0
  %v8485 = vadd.f32 %v8411, %v8484
  %8486 = vdwg.mxu0
  %8488 = vrot.lane.b32.xlu0 %v8016, 64
  %v8489 = vpop.permute.xlu0 %8488
  %v8490 = vsel %vm508, %v8489, 0
  %8492 = vmatprep.subr.mxu0 0.0
  %8493 = vmatpush1.msra.mxu0 0.0
  %8494 = vmatprep.subr.mxu0 0.0
  %8495 = vmatpush1.msra.mxu0 0.0
  %8496 = vmatprep.subr.mxu0 0.0
  %8497 = vmatpush1.msra.mxu0 0.0
  %8498 = vmatprep.subr.mxu0 0.0
  %8499 = vmatpush1.msra.mxu0 0.0
  %8500 = vmatprep.subr.mxu0 0.0
  %8501 = vmatpush1.msra.mxu0 0.0
  %8502 = vmatprep.subr.mxu0 0.0
  %8503 = vmatpush1.msra.mxu0 0.0
  %8504 = vmatprep.subr.mxu0 0.0
  %8505 = vmatpush1.msra.mxu0 0.0
  %8506 = vmatprep.subr.mxu0 0.0
  %8507 = vmatpush1.msra.mxu0 0.0
  %v8508 = vand.u32 %v35, 4294901760
  %8509 = vmatprep.subr.mxu0 %v8508
  %v8510 = vand.u32 %v34, 4294901760
  %8511 = vmatpush1.msra.mxu0 %v8510
  %v8512 = vand.u32 %v33, 4294901760
  %8513 = vmatprep.subr.mxu0 %v8512
  %v8514 = vand.u32 %v32, 4294901760
  %8515 = vmatpush1.msra.mxu0 %v8514
  %v8516 = vand.u32 %v31, 4294901760
  %8517 = vmatprep.subr.mxu0 %v8516
  %v8518 = vand.u32 %v30, 4294901760
  %8519 = vmatpush1.msra.mxu0 %v8518
  %v8520 = vand.u32 %v29, 4294901760
  %8521 = vmatprep.subr.mxu0 %v8520
  %v8522 = vand.u32 %v28, 4294901760
  %8523 = vmatpush1.msra.mxu0 %v8522
  %v8524 = vand.u32 %v27, 4294901760
  %8525 = vmatprep.subr.mxu0 %v8524
  %v8526 = vand.u32 %v26, 4294901760
  %8527 = vmatpush1.msra.mxu0 %v8526
  %v8528 = vand.u32 %v25, 4294901760
  %8529 = vmatprep.subr.mxu0 %v8528
  %v8530 = vand.u32 %v24, 4294901760
  %8531 = vmatpush1.msra.mxu0 %v8530
  %v8532 = vand.u32 %v23, 4294901760
  %8533 = vmatprep.subr.mxu0 %v8532
  %v8534 = vand.u32 %v22, 4294901760
  %8535 = vmatpush1.msra.mxu0 %v8534
  %v8536 = vand.u32 %v21, 4294901760
  %8537 = vmatprep.subr.mxu0 %v8536
  %v8538 = vand.u32 %v20, 4294901760
  %8539 = vmatpush1.msra.mxu0 %v8538
  %8540 = vmatprep.subr.mxu0 0.0
  %8541 = vmatpush2.msra.mxu0 0.0
  %8542 = vmatprep.subr.mxu0 0.0
  %8543 = vmatpush2.msra.mxu0 0.0
  %8544 = vmatprep.subr.mxu0 0.0
  %8545 = vmatpush2.msra.mxu0 0.0
  %8546 = vmatprep.subr.mxu0 0.0
  %8547 = vmatpush2.msra.mxu0 0.0
  %8548 = vmatprep.subr.mxu0 0.0
  %8549 = vmatpush2.msra.mxu0 0.0
  %8550 = vmatprep.subr.mxu0 0.0
  %8551 = vmatpush2.msra.mxu0 0.0
  %8552 = vmatprep.subr.mxu0 0.0
  %8553 = vmatpush2.msra.mxu0 0.0
  %8554 = vmatprep.subr.mxu0 0.0
  %8555 = vmatpush2.msra.mxu0 0.0
  %8556 = vmatprep.subr.mxu0 0.0
  %8557 = vmatpush2.msra.mxu0 0.0
  %8558 = vmatprep.subr.mxu0 0.0
  %8559 = vmatpush2.msra.mxu0 0.0
  %8560 = vmatprep.subr.mxu0 0.0
  %8561 = vmatpush2.msra.mxu0 0.0
  %8562 = vmatprep.subr.mxu0 0.0
  %8563 = vmatpush2.msra.mxu0 0.0
  %8564 = vmatprep.subr.mxu0 0.0
  %8565 = vmatpush2.msra.mxu0 0.0
  %8566 = vmatprep.subr.mxu0 0.0
  %8567 = vmatpush2.msra.mxu0 0.0
  %8568 = vmatprep.subr.mxu0 0.0
  %8569 = vmatpush2.msra.mxu0 0.0
  %8570 = vmatprep.subr.mxu0 0.0
  %8571 = vmatpush2.msra.mxu0 0.0
  %8572 = vmatprep.mubr.f32.mxu0 0.0
  %v8573 = vand.u32 %v8490, 4294901760
  %v8574 = vsub.f32 %v8490, %v8573
  %v8575 = vand.u32 %v8574, 4294901760
  %v8576 = vsub.f32 %v8574, %v8575
  %v8577 = vand.u32 %v8576, 4294901760
  %8578 = vmatmul.mubr.f32.gmra.mxu0 %v8577
  %v8579 = vpop.f32.mrf.mxu0
  %v8580 = vadd.f32 %v8483, %v8579
  %v8581 = vpop.f32.mrf.mxu0
  %v8582 = vadd.f32 %v8485, %v8581
  %8583 = vdwg.mxu0
  %8584 = vmatprep.subr.mxu0 0.0
  %8585 = vmatpush1.msra.mxu0 0.0
  %8586 = vmatprep.subr.mxu0 0.0
  %8587 = vmatpush1.msra.mxu0 0.0
  %8588 = vmatprep.subr.mxu0 0.0
  %8589 = vmatpush1.msra.mxu0 0.0
  %8590 = vmatprep.subr.mxu0 0.0
  %8591 = vmatpush1.msra.mxu0 0.0
  %8592 = vmatprep.subr.mxu0 0.0
  %8593 = vmatpush1.msra.mxu0 0.0
  %8594 = vmatprep.subr.mxu0 0.0
  %8595 = vmatpush1.msra.mxu0 0.0
  %8596 = vmatprep.subr.mxu0 0.0
  %8597 = vmatpush1.msra.mxu0 0.0
  %8598 = vmatprep.subr.mxu0 0.0
  %8599 = vmatpush1.msra.mxu0 0.0
  %v8600 = vand.u32 %v35, 4294901760
  %v8601 = vsub.f32 %v35, %v8600
  %v8602 = vand.u32 %v8601, 4294901760
  %v8603 = vsub.f32 %v8601, %v8602
  %v8604 = vand.u32 %v8603, 4294901760
  %8605 = vmatprep.subr.mxu0 %v8604
  %v8606 = vand.u32 %v34, 4294901760
  %v8607 = vsub.f32 %v34, %v8606
  %v8608 = vand.u32 %v8607, 4294901760
  %v8609 = vsub.f32 %v8607, %v8608
  %v8610 = vand.u32 %v8609, 4294901760
  %8611 = vmatpush1.msra.mxu0 %v8610
  %v8612 = vand.u32 %v33, 4294901760
  %v8613 = vsub.f32 %v33, %v8612
  %v8614 = vand.u32 %v8613, 4294901760
  %v8615 = vsub.f32 %v8613, %v8614
  %v8616 = vand.u32 %v8615, 4294901760
  %8617 = vmatprep.subr.mxu0 %v8616
  %v8618 = vand.u32 %v32, 4294901760
  %v8619 = vsub.f32 %v32, %v8618
  %v8620 = vand.u32 %v8619, 4294901760
  %v8621 = vsub.f32 %v8619, %v8620
  %v8622 = vand.u32 %v8621, 4294901760
  %8623 = vmatpush1.msra.mxu0 %v8622
  %v8624 = vand.u32 %v31, 4294901760
  %v8625 = vsub.f32 %v31, %v8624
  %v8626 = vand.u32 %v8625, 4294901760
  %v8627 = vsub.f32 %v8625, %v8626
  %v8628 = vand.u32 %v8627, 4294901760
  %8629 = vmatprep.subr.mxu0 %v8628
  %v8630 = vand.u32 %v30, 4294901760
  %v8631 = vsub.f32 %v30, %v8630
  %v8632 = vand.u32 %v8631, 4294901760
  %v8633 = vsub.f32 %v8631, %v8632
  %v8634 = vand.u32 %v8633, 4294901760
  %8635 = vmatpush1.msra.mxu0 %v8634
  %v8636 = vand.u32 %v29, 4294901760
  %v8637 = vsub.f32 %v29, %v8636
  %v8638 = vand.u32 %v8637, 4294901760
  %v8639 = vsub.f32 %v8637, %v8638
  %v8640 = vand.u32 %v8639, 4294901760
  %8641 = vmatprep.subr.mxu0 %v8640
  %v8642 = vand.u32 %v28, 4294901760
  %v8643 = vsub.f32 %v28, %v8642
  %v8644 = vand.u32 %v8643, 4294901760
  %v8645 = vsub.f32 %v8643, %v8644
  %v8646 = vand.u32 %v8645, 4294901760
  %8647 = vmatpush1.msra.mxu0 %v8646
  %v8648 = vand.u32 %v27, 4294901760
  %v8649 = vsub.f32 %v27, %v8648
  %v8650 = vand.u32 %v8649, 4294901760
  %v8651 = vsub.f32 %v8649, %v8650
  %v8652 = vand.u32 %v8651, 4294901760
  %8653 = vmatprep.subr.mxu0 %v8652
  %v8654 = vand.u32 %v26, 4294901760
  %v8655 = vsub.f32 %v26, %v8654
  %v8656 = vand.u32 %v8655, 4294901760
  %v8657 = vsub.f32 %v8655, %v8656
  %v8658 = vand.u32 %v8657, 4294901760
  %8659 = vmatpush1.msra.mxu0 %v8658
  %v8660 = vand.u32 %v25, 4294901760
  %v8661 = vsub.f32 %v25, %v8660
  %v8662 = vand.u32 %v8661, 4294901760
  %v8663 = vsub.f32 %v8661, %v8662
  %v8664 = vand.u32 %v8663, 4294901760
  %8665 = vmatprep.subr.mxu0 %v8664
  %v8666 = vand.u32 %v24, 4294901760
  %v8667 = vsub.f32 %v24, %v8666
  %v8668 = vand.u32 %v8667, 4294901760
  %v8669 = vsub.f32 %v8667, %v8668
  %v8670 = vand.u32 %v8669, 4294901760
  %8671 = vmatpush1.msra.mxu0 %v8670
  %v8672 = vand.u32 %v23, 4294901760
  %v8673 = vsub.f32 %v23, %v8672
  %v8674 = vand.u32 %v8673, 4294901760
  %v8675 = vsub.f32 %v8673, %v8674
  %v8676 = vand.u32 %v8675, 4294901760
  %8677 = vmatprep.subr.mxu0 %v8676
  %v8678 = vand.u32 %v22, 4294901760
  %v8679 = vsub.f32 %v22, %v8678
  %v8680 = vand.u32 %v8679, 4294901760
  %v8681 = vsub.f32 %v8679, %v8680
  %v8682 = vand.u32 %v8681, 4294901760
  %8683 = vmatpush1.msra.mxu0 %v8682
  %v8684 = vand.u32 %v21, 4294901760
  %v8685 = vsub.f32 %v21, %v8684
  %v8686 = vand.u32 %v8685, 4294901760
  %v8687 = vsub.f32 %v8685, %v8686
  %v8688 = vand.u32 %v8687, 4294901760
  %8689 = vmatprep.subr.mxu0 %v8688
  %v8690 = vand.u32 %v20, 4294901760
  %v8691 = vsub.f32 %v20, %v8690
  %v8692 = vand.u32 %v8691, 4294901760
  %v8693 = vsub.f32 %v8691, %v8692
  %v8694 = vand.u32 %v8693, 4294901760
  %8695 = vmatpush1.msra.mxu0 %v8694
  %8696 = vmatprep.subr.mxu0 0.0
  %8697 = vmatpush2.msra.mxu0 0.0
  %8698 = vmatprep.subr.mxu0 0.0
  %8699 = vmatpush2.msra.mxu0 0.0
  %8700 = vmatprep.subr.mxu0 0.0
  %8701 = vmatpush2.msra.mxu0 0.0
  %8702 = vmatprep.subr.mxu0 0.0
  %8703 = vmatpush2.msra.mxu0 0.0
  %8704 = vmatprep.subr.mxu0 0.0
  %8705 = vmatpush2.msra.mxu0 0.0
  %8706 = vmatprep.subr.mxu0 0.0
  %8707 = vmatpush2.msra.mxu0 0.0
  %8708 = vmatprep.subr.mxu0 0.0
  %8709 = vmatpush2.msra.mxu0 0.0
  %8710 = vmatprep.subr.mxu0 0.0
  %8711 = vmatpush2.msra.mxu0 0.0
  %8712 = vmatprep.subr.mxu0 0.0
  %8713 = vmatpush2.msra.mxu0 0.0
  %8714 = vmatprep.subr.mxu0 0.0
  %8715 = vmatpush2.msra.mxu0 0.0
  %8716 = vmatprep.subr.mxu0 0.0
  %8717 = vmatpush2.msra.mxu0 0.0
  %8718 = vmatprep.subr.mxu0 0.0
  %8719 = vmatpush2.msra.mxu0 0.0
  %8720 = vmatprep.subr.mxu0 0.0
  %8721 = vmatpush2.msra.mxu0 0.0
  %8722 = vmatprep.subr.mxu0 0.0
  %8723 = vmatpush2.msra.mxu0 0.0
  %8724 = vmatprep.subr.mxu0 0.0
  %8725 = vmatpush2.msra.mxu0 0.0
  %8726 = vmatprep.subr.mxu0 0.0
  %8727 = vmatpush2.msra.mxu0 0.0
  %8728 = vmatprep.mubr.f32.mxu0 0.0
  %v8729 = vand.u32 %v8490, 4294901760
  %8730 = vmatmul.mubr.f32.gmra.mxu0 %v8729
  %v8731 = vpop.f32.mrf.mxu0
  %v8732 = vadd.f32 %v8580, %v8731
  %v8733 = vpop.f32.mrf.mxu0
  %v8734 = vadd.f32 %v8582, %v8733
  %8735 = vdwg.mxu0
  %8736 = vmatprep.subr.mxu0 0.0
  %8737 = vmatpush1.msra.mxu0 0.0
  %8738 = vmatprep.subr.mxu0 0.0
  %8739 = vmatpush1.msra.mxu0 0.0
  %8740 = vmatprep.subr.mxu0 0.0
  %8741 = vmatpush1.msra.mxu0 0.0
  %8742 = vmatprep.subr.mxu0 0.0
  %8743 = vmatpush1.msra.mxu0 0.0
  %8744 = vmatprep.subr.mxu0 0.0
  %8745 = vmatpush1.msra.mxu0 0.0
  %8746 = vmatprep.subr.mxu0 0.0
  %8747 = vmatpush1.msra.mxu0 0.0
  %8748 = vmatprep.subr.mxu0 0.0
  %8749 = vmatpush1.msra.mxu0 0.0
  %8750 = vmatprep.subr.mxu0 0.0
  %8751 = vmatpush1.msra.mxu0 0.0
  %v8752 = vand.u32 %v35, 4294901760
  %v8753 = vsub.f32 %v35, %v8752
  %8754 = vmatprep.subr.mxu0 %v8753
  %v8755 = vand.u32 %v34, 4294901760
  %v8756 = vsub.f32 %v34, %v8755
  %8757 = vmatpush1.msra.mxu0 %v8756
  %v8758 = vand.u32 %v33, 4294901760
  %v8759 = vsub.f32 %v33, %v8758
  %8760 = vmatprep.subr.mxu0 %v8759
  %v8761 = vand.u32 %v32, 4294901760
  %v8762 = vsub.f32 %v32, %v8761
  %8763 = vmatpush1.msra.mxu0 %v8762
  %v8764 = vand.u32 %v31, 4294901760
  %v8765 = vsub.f32 %v31, %v8764
  %8766 = vmatprep.subr.mxu0 %v8765
  %v8767 = vand.u32 %v30, 4294901760
  %v8768 = vsub.f32 %v30, %v8767
  %8769 = vmatpush1.msra.mxu0 %v8768
  %v8770 = vand.u32 %v29, 4294901760
  %v8771 = vsub.f32 %v29, %v8770
  %8772 = vmatprep.subr.mxu0 %v8771
  %v8773 = vand.u32 %v28, 4294901760
  %v8774 = vsub.f32 %v28, %v8773
  %8775 = vmatpush1.msra.mxu0 %v8774
  %v8776 = vand.u32 %v27, 4294901760
  %v8777 = vsub.f32 %v27, %v8776
  %8778 = vmatprep.subr.mxu0 %v8777
  %v8779 = vand.u32 %v26, 4294901760
  %v8780 = vsub.f32 %v26, %v8779
  %8781 = vmatpush1.msra.mxu0 %v8780
  %v8782 = vand.u32 %v25, 4294901760
  %v8783 = vsub.f32 %v25, %v8782
  %8784 = vmatprep.subr.mxu0 %v8783
  %v8785 = vand.u32 %v24, 4294901760
  %v8786 = vsub.f32 %v24, %v8785
  %8787 = vmatpush1.msra.mxu0 %v8786
  %v8788 = vand.u32 %v23, 4294901760
  %v8789 = vsub.f32 %v23, %v8788
  %8790 = vmatprep.subr.mxu0 %v8789
  %v8791 = vand.u32 %v22, 4294901760
  %v8792 = vsub.f32 %v22, %v8791
  %8793 = vmatpush1.msra.mxu0 %v8792
  %v8794 = vand.u32 %v21, 4294901760
  %v8795 = vsub.f32 %v21, %v8794
  %8796 = vmatprep.subr.mxu0 %v8795
  %v8797 = vand.u32 %v20, 4294901760
  %v8798 = vsub.f32 %v20, %v8797
  %8799 = vmatpush1.msra.mxu0 %v8798
  %8800 = vmatprep.subr.mxu0 0.0
  %8801 = vmatpush2.msra.mxu0 0.0
  %8802 = vmatprep.subr.mxu0 0.0
  %8803 = vmatpush2.msra.mxu0 0.0
  %8804 = vmatprep.subr.mxu0 0.0
  %8805 = vmatpush2.msra.mxu0 0.0
  %8806 = vmatprep.subr.mxu0 0.0
  %8807 = vmatpush2.msra.mxu0 0.0
  %8808 = vmatprep.subr.mxu0 0.0
  %8809 = vmatpush2.msra.mxu0 0.0
  %8810 = vmatprep.subr.mxu0 0.0
  %8811 = vmatpush2.msra.mxu0 0.0
  %8812 = vmatprep.subr.mxu0 0.0
  %8813 = vmatpush2.msra.mxu0 0.0
  %8814 = vmatprep.subr.mxu0 0.0
  %8815 = vmatpush2.msra.mxu0 0.0
  %8816 = vmatprep.subr.mxu0 0.0
  %8817 = vmatpush2.msra.mxu0 0.0
  %8818 = vmatprep.subr.mxu0 0.0
  %8819 = vmatpush2.msra.mxu0 0.0
  %8820 = vmatprep.subr.mxu0 0.0
  %8821 = vmatpush2.msra.mxu0 0.0
  %8822 = vmatprep.subr.mxu0 0.0
  %8823 = vmatpush2.msra.mxu0 0.0
  %8824 = vmatprep.subr.mxu0 0.0
  %8825 = vmatpush2.msra.mxu0 0.0
  %8826 = vmatprep.subr.mxu0 0.0
  %8827 = vmatpush2.msra.mxu0 0.0
  %8828 = vmatprep.subr.mxu0 0.0
  %8829 = vmatpush2.msra.mxu0 0.0
  %8830 = vmatprep.subr.mxu0 0.0
  %8831 = vmatpush2.msra.mxu0 0.0
  %8832 = vmatprep.mubr.f32.mxu0 0.0
  %v8833 = vand.u32 %v8490, 4294901760
  %v8834 = vsub.f32 %v8490, %v8833
  %8835 = vmatmul.mubr.f32.gmra.mxu0 %v8834
  %v8836 = vpop.f32.mrf.mxu0
  %v8837 = vadd.f32 %v8732, %v8836
  %v8838 = vpop.f32.mrf.mxu0
  %v8839 = vadd.f32 %v8734, %v8838
  %8840 = vdwg.mxu0
  %8841 = vmatprep.subr.mxu0 0.0
  %8842 = vmatpush1.msra.mxu0 0.0
  %8843 = vmatprep.subr.mxu0 0.0
  %8844 = vmatpush1.msra.mxu0 0.0
  %8845 = vmatprep.subr.mxu0 0.0
  %8846 = vmatpush1.msra.mxu0 0.0
  %8847 = vmatprep.subr.mxu0 0.0
  %8848 = vmatpush1.msra.mxu0 0.0
  %8849 = vmatprep.subr.mxu0 0.0
  %8850 = vmatpush1.msra.mxu0 0.0
  %8851 = vmatprep.subr.mxu0 0.0
  %8852 = vmatpush1.msra.mxu0 0.0
  %8853 = vmatprep.subr.mxu0 0.0
  %8854 = vmatpush1.msra.mxu0 0.0
  %8855 = vmatprep.subr.mxu0 0.0
  %8856 = vmatpush1.msra.mxu0 0.0
  %v8857 = vand.u32 %v35, 4294901760
  %8858 = vmatprep.subr.mxu0 %v8857
  %v8859 = vand.u32 %v34, 4294901760
  %8860 = vmatpush1.msra.mxu0 %v8859
  %v8861 = vand.u32 %v33, 4294901760
  %8862 = vmatprep.subr.mxu0 %v8861
  %v8863 = vand.u32 %v32, 4294901760
  %8864 = vmatpush1.msra.mxu0 %v8863
  %v8865 = vand.u32 %v31, 4294901760
  %8866 = vmatprep.subr.mxu0 %v8865
  %v8867 = vand.u32 %v30, 4294901760
  %8868 = vmatpush1.msra.mxu0 %v8867
  %v8869 = vand.u32 %v29, 4294901760
  %8870 = vmatprep.subr.mxu0 %v8869
  %v8871 = vand.u32 %v28, 4294901760
  %8872 = vmatpush1.msra.mxu0 %v8871
  %v8873 = vand.u32 %v27, 4294901760
  %8874 = vmatprep.subr.mxu0 %v8873
  %v8875 = vand.u32 %v26, 4294901760
  %8876 = vmatpush1.msra.mxu0 %v8875
  %v8877 = vand.u32 %v25, 4294901760
  %8878 = vmatprep.subr.mxu0 %v8877
  %v8879 = vand.u32 %v24, 4294901760
  %8880 = vmatpush1.msra.mxu0 %v8879
  %v8881 = vand.u32 %v23, 4294901760
  %8882 = vmatprep.subr.mxu0 %v8881
  %v8883 = vand.u32 %v22, 4294901760
  %8884 = vmatpush1.msra.mxu0 %v8883
  %v8885 = vand.u32 %v21, 4294901760
  %8886 = vmatprep.subr.mxu0 %v8885
  %v8887 = vand.u32 %v20, 4294901760
  %8888 = vmatpush1.msra.mxu0 %v8887
  %8889 = vmatprep.subr.mxu0 0.0
  %8890 = vmatpush2.msra.mxu0 0.0
  %8891 = vmatprep.subr.mxu0 0.0
  %8892 = vmatpush2.msra.mxu0 0.0
  %8893 = vmatprep.subr.mxu0 0.0
  %8894 = vmatpush2.msra.mxu0 0.0
  %8895 = vmatprep.subr.mxu0 0.0
  %8896 = vmatpush2.msra.mxu0 0.0
  %8897 = vmatprep.subr.mxu0 0.0
  %8898 = vmatpush2.msra.mxu0 0.0
  %8899 = vmatprep.subr.mxu0 0.0
  %8900 = vmatpush2.msra.mxu0 0.0
  %8901 = vmatprep.subr.mxu0 0.0
  %8902 = vmatpush2.msra.mxu0 0.0
  %8903 = vmatprep.subr.mxu0 0.0
  %8904 = vmatpush2.msra.mxu0 0.0
  %8905 = vmatprep.subr.mxu0 0.0
  %8906 = vmatpush2.msra.mxu0 0.0
  %8907 = vmatprep.subr.mxu0 0.0
  %8908 = vmatpush2.msra.mxu0 0.0
  %8909 = vmatprep.subr.mxu0 0.0
  %8910 = vmatpush2.msra.mxu0 0.0
  %8911 = vmatprep.subr.mxu0 0.0
  %8912 = vmatpush2.msra.mxu0 0.0
  %8913 = vmatprep.subr.mxu0 0.0
  %8914 = vmatpush2.msra.mxu0 0.0
  %8915 = vmatprep.subr.mxu0 0.0
  %8916 = vmatpush2.msra.mxu0 0.0
  %8917 = vmatprep.subr.mxu0 0.0
  %8918 = vmatpush2.msra.mxu0 0.0
  %8919 = vmatprep.subr.mxu0 0.0
  %8920 = vmatpush2.msra.mxu0 0.0
  %8921 = vmatprep.mubr.f32.mxu0 0.0
  %v8922 = vand.u32 %v8490, 4294901760
  %v8923 = vsub.f32 %v8490, %v8922
  %v8924 = vand.u32 %v8923, 4294901760
  %8925 = vmatmul.mubr.f32.gmra.mxu0 %v8924
  %v8926 = vpop.f32.mrf.mxu0
  %v8927 = vadd.f32 %v8837, %v8926
  %v8928 = vpop.f32.mrf.mxu0
  %v8929 = vadd.f32 %v8839, %v8928
  %8930 = vdwg.mxu0
  %8931 = vmatprep.subr.mxu0 0.0
  %8932 = vmatpush1.msra.mxu0 0.0
  %8933 = vmatprep.subr.mxu0 0.0
  %8934 = vmatpush1.msra.mxu0 0.0
  %8935 = vmatprep.subr.mxu0 0.0
  %8936 = vmatpush1.msra.mxu0 0.0
  %8937 = vmatprep.subr.mxu0 0.0
  %8938 = vmatpush1.msra.mxu0 0.0
  %8939 = vmatprep.subr.mxu0 0.0
  %8940 = vmatpush1.msra.mxu0 0.0
  %8941 = vmatprep.subr.mxu0 0.0
  %8942 = vmatpush1.msra.mxu0 0.0
  %8943 = vmatprep.subr.mxu0 0.0
  %8944 = vmatpush1.msra.mxu0 0.0
  %8945 = vmatprep.subr.mxu0 0.0
  %8946 = vmatpush1.msra.mxu0 0.0
  %v8947 = vand.u32 %v35, 4294901760
  %v8948 = vsub.f32 %v35, %v8947
  %v8949 = vand.u32 %v8948, 4294901760
  %8950 = vmatprep.subr.mxu0 %v8949
  %v8951 = vand.u32 %v34, 4294901760
  %v8952 = vsub.f32 %v34, %v8951
  %v8953 = vand.u32 %v8952, 4294901760
  %8954 = vmatpush1.msra.mxu0 %v8953
  %v8955 = vand.u32 %v33, 4294901760
  %v8956 = vsub.f32 %v33, %v8955
  %v8957 = vand.u32 %v8956, 4294901760
  %8958 = vmatprep.subr.mxu0 %v8957
  %v8959 = vand.u32 %v32, 4294901760
  %v8960 = vsub.f32 %v32, %v8959
  %v8961 = vand.u32 %v8960, 4294901760
  %8962 = vmatpush1.msra.mxu0 %v8961
  %v8963 = vand.u32 %v31, 4294901760
  %v8964 = vsub.f32 %v31, %v8963
  %v8965 = vand.u32 %v8964, 4294901760
  %8966 = vmatprep.subr.mxu0 %v8965
  %v8967 = vand.u32 %v30, 4294901760
  %v8968 = vsub.f32 %v30, %v8967
  %v8969 = vand.u32 %v8968, 4294901760
  %8970 = vmatpush1.msra.mxu0 %v8969
  %v8971 = vand.u32 %v29, 4294901760
  %v8972 = vsub.f32 %v29, %v8971
  %v8973 = vand.u32 %v8972, 4294901760
  %8974 = vmatprep.subr.mxu0 %v8973
  %v8975 = vand.u32 %v28, 4294901760
  %v8976 = vsub.f32 %v28, %v8975
  %v8977 = vand.u32 %v8976, 4294901760
  %8978 = vmatpush1.msra.mxu0 %v8977
  %v8979 = vand.u32 %v27, 4294901760
  %v8980 = vsub.f32 %v27, %v8979
  %v8981 = vand.u32 %v8980, 4294901760
  %8982 = vmatprep.subr.mxu0 %v8981
  %v8983 = vand.u32 %v26, 4294901760
  %v8984 = vsub.f32 %v26, %v8983
  %v8985 = vand.u32 %v8984, 4294901760
  %8986 = vmatpush1.msra.mxu0 %v8985
  %v8987 = vand.u32 %v25, 4294901760
  %v8988 = vsub.f32 %v25, %v8987
  %v8989 = vand.u32 %v8988, 4294901760
  %8990 = vmatprep.subr.mxu0 %v8989
  %v8991 = vand.u32 %v24, 4294901760
  %v8992 = vsub.f32 %v24, %v8991
  %v8993 = vand.u32 %v8992, 4294901760
  %8994 = vmatpush1.msra.mxu0 %v8993
  %v8995 = vand.u32 %v23, 4294901760
  %v8996 = vsub.f32 %v23, %v8995
  %v8997 = vand.u32 %v8996, 4294901760
  %8998 = vmatprep.subr.mxu0 %v8997
  %v8999 = vand.u32 %v22, 4294901760
  %v9000 = vsub.f32 %v22, %v8999
  %v9001 = vand.u32 %v9000, 4294901760
  %9002 = vmatpush1.msra.mxu0 %v9001
  %v9003 = vand.u32 %v21, 4294901760
  %v9004 = vsub.f32 %v21, %v9003
  %v9005 = vand.u32 %v9004, 4294901760
  %9006 = vmatprep.subr.mxu0 %v9005
  %v9007 = vand.u32 %v20, 4294901760
  %v9008 = vsub.f32 %v20, %v9007
  %v9009 = vand.u32 %v9008, 4294901760
  %9010 = vmatpush1.msra.mxu0 %v9009
  %9011 = vmatprep.subr.mxu0 0.0
  %9012 = vmatpush2.msra.mxu0 0.0
  %9013 = vmatprep.subr.mxu0 0.0
  %9014 = vmatpush2.msra.mxu0 0.0
  %9015 = vmatprep.subr.mxu0 0.0
  %9016 = vmatpush2.msra.mxu0 0.0
  %9017 = vmatprep.subr.mxu0 0.0
  %9018 = vmatpush2.msra.mxu0 0.0
  %9019 = vmatprep.subr.mxu0 0.0
  %9020 = vmatpush2.msra.mxu0 0.0
  %9021 = vmatprep.subr.mxu0 0.0
  %9022 = vmatpush2.msra.mxu0 0.0
  %9023 = vmatprep.subr.mxu0 0.0
  %9024 = vmatpush2.msra.mxu0 0.0
  %9025 = vmatprep.subr.mxu0 0.0
  %9026 = vmatpush2.msra.mxu0 0.0
  %9027 = vmatprep.subr.mxu0 0.0
  %9028 = vmatpush2.msra.mxu0 0.0
  %9029 = vmatprep.subr.mxu0 0.0
  %9030 = vmatpush2.msra.mxu0 0.0
  %9031 = vmatprep.subr.mxu0 0.0
  %9032 = vmatpush2.msra.mxu0 0.0
  %9033 = vmatprep.subr.mxu0 0.0
  %9034 = vmatpush2.msra.mxu0 0.0
  %9035 = vmatprep.subr.mxu0 0.0
  %9036 = vmatpush2.msra.mxu0 0.0
  %9037 = vmatprep.subr.mxu0 0.0
  %9038 = vmatpush2.msra.mxu0 0.0
  %9039 = vmatprep.subr.mxu0 0.0
  %9040 = vmatpush2.msra.mxu0 0.0
  %9041 = vmatprep.subr.mxu0 0.0
  %9042 = vmatpush2.msra.mxu0 0.0
  %9043 = vmatprep.mubr.f32.mxu0 0.0
  %v9044 = vand.u32 %v8490, 4294901760
  %9045 = vmatmul.mubr.f32.gmra.mxu0 %v9044
  %v9046 = vpop.f32.mrf.mxu0
  %v9047 = vadd.f32 %v8927, %v9046
  %v9048 = vpop.f32.mrf.mxu0
  %v9049 = vadd.f32 %v8929, %v9048
  %9050 = vdwg.mxu0
  %9051 = vmatprep.subr.mxu0 0.0
  %9052 = vmatpush1.msra.mxu0 0.0
  %9053 = vmatprep.subr.mxu0 0.0
  %9054 = vmatpush1.msra.mxu0 0.0
  %9055 = vmatprep.subr.mxu0 0.0
  %9056 = vmatpush1.msra.mxu0 0.0
  %9057 = vmatprep.subr.mxu0 0.0
  %9058 = vmatpush1.msra.mxu0 0.0
  %9059 = vmatprep.subr.mxu0 0.0
  %9060 = vmatpush1.msra.mxu0 0.0
  %9061 = vmatprep.subr.mxu0 0.0
  %9062 = vmatpush1.msra.mxu0 0.0
  %9063 = vmatprep.subr.mxu0 0.0
  %9064 = vmatpush1.msra.mxu0 0.0
  %9065 = vmatprep.subr.mxu0 0.0
  %9066 = vmatpush1.msra.mxu0 0.0
  %v9067 = vand.u32 %v35, 4294901760
  %9068 = vmatprep.subr.mxu0 %v9067
  %v9069 = vand.u32 %v34, 4294901760
  %9070 = vmatpush1.msra.mxu0 %v9069
  %v9071 = vand.u32 %v33, 4294901760
  %9072 = vmatprep.subr.mxu0 %v9071
  %v9073 = vand.u32 %v32, 4294901760
  %9074 = vmatpush1.msra.mxu0 %v9073
  %v9075 = vand.u32 %v31, 4294901760
  %9076 = vmatprep.subr.mxu0 %v9075
  %v9077 = vand.u32 %v30, 4294901760
  %9078 = vmatpush1.msra.mxu0 %v9077
  %v9079 = vand.u32 %v29, 4294901760
  %9080 = vmatprep.subr.mxu0 %v9079
  %v9081 = vand.u32 %v28, 4294901760
  %9082 = vmatpush1.msra.mxu0 %v9081
  %v9083 = vand.u32 %v27, 4294901760
  %9084 = vmatprep.subr.mxu0 %v9083
  %v9085 = vand.u32 %v26, 4294901760
  %9086 = vmatpush1.msra.mxu0 %v9085
  %v9087 = vand.u32 %v25, 4294901760
  %9088 = vmatprep.subr.mxu0 %v9087
  %v9089 = vand.u32 %v24, 4294901760
  %9090 = vmatpush1.msra.mxu0 %v9089
  %v9091 = vand.u32 %v23, 4294901760
  %9092 = vmatprep.subr.mxu0 %v9091
  %v9093 = vand.u32 %v22, 4294901760
  %9094 = vmatpush1.msra.mxu0 %v9093
  %v9095 = vand.u32 %v21, 4294901760
  %9096 = vmatprep.subr.mxu0 %v9095
  %v9097 = vand.u32 %v20, 4294901760
  %9098 = vmatpush1.msra.mxu0 %v9097
  %9099 = vmatprep.subr.mxu0 0.0
  %9100 = vmatpush2.msra.mxu0 0.0
  %9101 = vmatprep.subr.mxu0 0.0
  %9102 = vmatpush2.msra.mxu0 0.0
  %9103 = vmatprep.subr.mxu0 0.0
  %9104 = vmatpush2.msra.mxu0 0.0
  %9105 = vmatprep.subr.mxu0 0.0
  %9106 = vmatpush2.msra.mxu0 0.0
  %9107 = vmatprep.subr.mxu0 0.0
  %9108 = vmatpush2.msra.mxu0 0.0
  %9109 = vmatprep.subr.mxu0 0.0
  %9110 = vmatpush2.msra.mxu0 0.0
  %9111 = vmatprep.subr.mxu0 0.0
  %9112 = vmatpush2.msra.mxu0 0.0
  %9113 = vmatprep.subr.mxu0 0.0
  %9114 = vmatpush2.msra.mxu0 0.0
  %9115 = vmatprep.subr.mxu0 0.0
  %9116 = vmatpush2.msra.mxu0 0.0
  %9117 = vmatprep.subr.mxu0 0.0
  %9118 = vmatpush2.msra.mxu0 0.0
  %9119 = vmatprep.subr.mxu0 0.0
  %9120 = vmatpush2.msra.mxu0 0.0
  %9121 = vmatprep.subr.mxu0 0.0
  %9122 = vmatpush2.msra.mxu0 0.0
  %9123 = vmatprep.subr.mxu0 0.0
  %9124 = vmatpush2.msra.mxu0 0.0
  %9125 = vmatprep.subr.mxu0 0.0
  %9126 = vmatpush2.msra.mxu0 0.0
  %9127 = vmatprep.subr.mxu0 0.0
  %9128 = vmatpush2.msra.mxu0 0.0
  %9129 = vmatprep.subr.mxu0 0.0
  %9130 = vmatpush2.msra.mxu0 0.0
  %9131 = vmatprep.mubr.f32.mxu0 0.0
  %v9132 = vand.u32 %v8490, 4294901760
  %9133 = vmatmul.mubr.f32.gmra.mxu0 %v9132
  %v9134 = vpop.f32.mrf.mxu0
  %v9135 = vadd.f32 %v9047, %v9134
  %v9136 = vpop.f32.mrf.mxu0
  %v9137 = vadd.f32 %v9049, %v9136
  %9138 = vdwg.mxu0
  %v9139 = vmul.f32 %v9135, 0.5
  %v9140 = vtanh.pop %v9139
  %v9141 = vmul.f32 %v9140, 0.5
  %v9142 = vadd.f32 %v9141, 0.5
  %v9143 = vtanh.pop %v9137
  %v9144 = vmul.f32 %v9137, 0.5
  %v9145 = vtanh.pop %v9144
  %v9146 = vmul.f32 %v9145, 0.5
  %v9147 = vadd.f32 %v9146, 0.5
  %v9148 = vmul.f32 %v9142, %v8014
  %v9149 = vmul.f32 %v9142, %v9143
  %9151 = vrot.lane.b32.xlu0 %v9149, 64
  %v9152 = vpop.permute.xlu0 %9151
  %v9154 = vadd.f32 %v9148, %v9152
  %v9155 = vtanh.pop %v9154
  %v9156 = vmul.f32 %v9147, %v9155
  %v9157 = vld [vmem:[%s3] sm:$0xff]
  %v9158 = vld [vmem:[%s3 + $0x8] sm:$0xff]
  %v9159 = vld [vmem:[%s3 + $0x10] sm:$0xff]
  %v9160 = vld [vmem:[%s3 + $0x18] sm:$0xff]
  %v9161 = vld [vmem:[%s3 + $0x20] sm:$0xff]
  %v9162 = vld [vmem:[%s3 + $0x28] sm:$0xff]
  %v9163 = vld [vmem:[%s3 + $0x30] sm:$0xff]
  %v9164 = vld [vmem:[%s3 + $0x38] sm:$0xff]
  %v9165 = vld [vmem:[%s4] sm:$0x1]
  %v9167 = vlaneseq
  %v9168 = vshrl.u32 %v9167, 7
  %v9169 = vsub.s32 0, %v9168
  %v9170 = vrot.slane %v9165, %v9169
  %9173 = vrot.lane.b32.xlu0 %v9156, 64
  %v9174 = vpop.permute.xlu0 %9173
  %v9175 = vsel %vm508, %v9174, 0
  %9177 = vmatprep.subr.mxu0 0.0
  %9178 = vmatpush1.msra.mxu0 0.0
  %9179 = vmatprep.subr.mxu0 0.0
  %9180 = vmatpush1.msra.mxu0 0.0
  %9181 = vmatprep.subr.mxu0 0.0
  %9182 = vmatpush1.msra.mxu0 0.0
  %9183 = vmatprep.subr.mxu0 0.0
  %9184 = vmatpush1.msra.mxu0 0.0
  %9185 = vmatprep.subr.mxu0 0.0
  %9186 = vmatpush1.msra.mxu0 0.0
  %9187 = vmatprep.subr.mxu0 0.0
  %9188 = vmatpush1.msra.mxu0 0.0
  %9189 = vmatprep.subr.mxu0 0.0
  %9190 = vmatpush1.msra.mxu0 0.0
  %9191 = vmatprep.subr.mxu0 0.0
  %9192 = vmatpush1.msra.mxu0 0.0
  %9193 = vmatprep.subr.mxu0 0.0
  %v9194 = vand.u32 %v9164, 4294901760
  %9195 = vmatpush1.msra.mxu0 %v9194
  %9196 = vmatprep.subr.mxu0 0.0
  %v9197 = vand.u32 %v9163, 4294901760
  %9198 = vmatpush1.msra.mxu0 %v9197
  %9199 = vmatprep.subr.mxu0 0.0
  %v9200 = vand.u32 %v9162, 4294901760
  %9201 = vmatpush1.msra.mxu0 %v9200
  %9202 = vmatprep.subr.mxu0 0.0
  %v9203 = vand.u32 %v9161, 4294901760
  %9204 = vmatpush1.msra.mxu0 %v9203
  %9205 = vmatprep.subr.mxu0 0.0
  %v9206 = vand.u32 %v9160, 4294901760
  %9207 = vmatpush1.msra.mxu0 %v9206
  %9208 = vmatprep.subr.mxu0 0.0
  %v9209 = vand.u32 %v9159, 4294901760
  %9210 = vmatpush1.msra.mxu0 %v9209
  %9211 = vmatprep.subr.mxu0 0.0
  %v9212 = vand.u32 %v9158, 4294901760
  %9213 = vmatpush1.msra.mxu0 %v9212
  %9214 = vmatprep.subr.mxu0 0.0
  %v9215 = vand.u32 %v9157, 4294901760
  %9216 = vmatpush1.msra.mxu0 %v9215
  %9217 = vmatprep.subr.mxu0 0.0
  %9218 = vmatpush2.msra.mxu0 0.0
  %9219 = vmatprep.subr.mxu0 0.0
  %9220 = vmatpush2.msra.mxu0 0.0
  %9221 = vmatprep.subr.mxu0 0.0
  %9222 = vmatpush2.msra.mxu0 0.0
  %9223 = vmatprep.subr.mxu0 0.0
  %9224 = vmatpush2.msra.mxu0 0.0
  %9225 = vmatprep.subr.mxu0 0.0
  %9226 = vmatpush2.msra.mxu0 0.0
  %9227 = vmatprep.subr.mxu0 0.0
  %9228 = vmatpush2.msra.mxu0 0.0
  %9229 = vmatprep.subr.mxu0 0.0
  %9230 = vmatpush2.msra.mxu0 0.0
  %9231 = vmatprep.subr.mxu0 0.0
  %9232 = vmatpush2.msra.mxu0 0.0
  %9233 = vmatprep.subr.mxu0 0.0
  %9234 = vmatpush2.msra.mxu0 0.0
  %9235 = vmatprep.subr.mxu0 0.0
  %9236 = vmatpush2.msra.mxu0 0.0
  %9237 = vmatprep.subr.mxu0 0.0
  %9238 = vmatpush2.msra.mxu0 0.0
  %9239 = vmatprep.subr.mxu0 0.0
  %9240 = vmatpush2.msra.mxu0 0.0
  %9241 = vmatprep.subr.mxu0 0.0
  %9242 = vmatpush2.msra.mxu0 0.0
  %9243 = vmatprep.subr.mxu0 0.0
  %9244 = vmatpush2.msra.mxu0 0.0
  %9245 = vmatprep.subr.mxu0 0.0
  %9246 = vmatpush2.msra.mxu0 0.0
  %9247 = vmatprep.subr.mxu0 0.0
  %9248 = vmatpush2.msra.mxu0 0.0
  %9249 = vmatprep.mubr.f32.mxu0 0.0
  %v9250 = vand.u32 %v9175, 4294901760
  %v9251 = vsub.f32 %v9175, %v9250
  %v9252 = vand.u32 %v9251, 4294901760
  %v9253 = vsub.f32 %v9251, %v9252
  %v9254 = vand.u32 %v9253, 4294901760
  %9255 = vmatmul.mubr.f32.gmra.mxu0 %v9254
  %v9256 = vpop.f32.mrf.mxu0
  %v9257 = vadd.f32 %v9170, %v9256
  %v9258 = vpop.f32.mrf.mxu0
  %9259 = vdwg.mxu0
  %9260 = vmatprep.subr.mxu0 0.0
  %9261 = vmatpush1.msra.mxu0 0.0
  %9262 = vmatprep.subr.mxu0 0.0
  %9263 = vmatpush1.msra.mxu0 0.0
  %9264 = vmatprep.subr.mxu0 0.0
  %9265 = vmatpush1.msra.mxu0 0.0
  %9266 = vmatprep.subr.mxu0 0.0
  %9267 = vmatpush1.msra.mxu0 0.0
  %9268 = vmatprep.subr.mxu0 0.0
  %9269 = vmatpush1.msra.mxu0 0.0
  %9270 = vmatprep.subr.mxu0 0.0
  %9271 = vmatpush1.msra.mxu0 0.0
  %9272 = vmatprep.subr.mxu0 0.0
  %9273 = vmatpush1.msra.mxu0 0.0
  %9274 = vmatprep.subr.mxu0 0.0
  %9275 = vmatpush1.msra.mxu0 0.0
  %9276 = vmatprep.subr.mxu0 0.0
  %v9277 = vand.u32 %v9164, 4294901760
  %v9278 = vsub.f32 %v9164, %v9277
  %v9279 = vand.u32 %v9278, 4294901760
  %v9280 = vsub.f32 %v9278, %v9279
  %v9281 = vand.u32 %v9280, 4294901760
  %9282 = vmatpush1.msra.mxu0 %v9281
  %9283 = vmatprep.subr.mxu0 0.0
  %v9284 = vand.u32 %v9163, 4294901760
  %v9285 = vsub.f32 %v9163, %v9284
  %v9286 = vand.u32 %v9285, 4294901760
  %v9287 = vsub.f32 %v9285, %v9286
  %v9288 = vand.u32 %v9287, 4294901760
  %9289 = vmatpush1.msra.mxu0 %v9288
  %9290 = vmatprep.subr.mxu0 0.0
  %v9291 = vand.u32 %v9162, 4294901760
  %v9292 = vsub.f32 %v9162, %v9291
  %v9293 = vand.u32 %v9292, 4294901760
  %v9294 = vsub.f32 %v9292, %v9293
  %v9295 = vand.u32 %v9294, 4294901760
  %9296 = vmatpush1.msra.mxu0 %v9295
  %9297 = vmatprep.subr.mxu0 0.0
  %v9298 = vand.u32 %v9161, 4294901760
  %v9299 = vsub.f32 %v9161, %v9298
  %v9300 = vand.u32 %v9299, 4294901760
  %v9301 = vsub.f32 %v9299, %v9300
  %v9302 = vand.u32 %v9301, 4294901760
  %9303 = vmatpush1.msra.mxu0 %v9302
  %9304 = vmatprep.subr.mxu0 0.0
  %v9305 = vand.u32 %v9160, 4294901760
  %v9306 = vsub.f32 %v9160, %v9305
  %v9307 = vand.u32 %v9306, 4294901760
  %v9308 = vsub.f32 %v9306, %v9307
  %v9309 = vand.u32 %v9308, 4294901760
  %9310 = vmatpush1.msra.mxu0 %v9309
  %9311 = vmatprep.subr.mxu0 0.0
  %v9312 = vand.u32 %v9159, 4294901760
  %v9313 = vsub.f32 %v9159, %v9312
  %v9314 = vand.u32 %v9313, 4294901760
  %v9315 = vsub.f32 %v9313, %v9314
  %v9316 = vand.u32 %v9315, 4294901760
  %9317 = vmatpush1.msra.mxu0 %v9316
  %9318 = vmatprep.subr.mxu0 0.0
  %v9319 = vand.u32 %v9158, 4294901760
  %v9320 = vsub.f32 %v9158, %v9319
  %v9321 = vand.u32 %v9320, 4294901760
  %v9322 = vsub.f32 %v9320, %v9321
  %v9323 = vand.u32 %v9322, 4294901760
  %9324 = vmatpush1.msra.mxu0 %v9323
  %9325 = vmatprep.subr.mxu0 0.0
  %v9326 = vand.u32 %v9157, 4294901760
  %v9327 = vsub.f32 %v9157, %v9326
  %v9328 = vand.u32 %v9327, 4294901760
  %v9329 = vsub.f32 %v9327, %v9328
  %v9330 = vand.u32 %v9329, 4294901760
  %9331 = vmatpush1.msra.mxu0 %v9330
  %9332 = vmatprep.subr.mxu0 0.0
  %9333 = vmatpush2.msra.mxu0 0.0
  %9334 = vmatprep.subr.mxu0 0.0
  %9335 = vmatpush2.msra.mxu0 0.0
  %9336 = vmatprep.subr.mxu0 0.0
  %9337 = vmatpush2.msra.mxu0 0.0
  %9338 = vmatprep.subr.mxu0 0.0
  %9339 = vmatpush2.msra.mxu0 0.0
  %9340 = vmatprep.subr.mxu0 0.0
  %9341 = vmatpush2.msra.mxu0 0.0
  %9342 = vmatprep.subr.mxu0 0.0
  %9343 = vmatpush2.msra.mxu0 0.0
  %9344 = vmatprep.subr.mxu0 0.0
  %9345 = vmatpush2.msra.mxu0 0.0
  %9346 = vmatprep.subr.mxu0 0.0
  %9347 = vmatpush2.msra.mxu0 0.0
  %9348 = vmatprep.subr.mxu0 0.0
  %9349 = vmatpush2.msra.mxu0 0.0
  %9350 = vmatprep.subr.mxu0 0.0
  %9351 = vmatpush2.msra.mxu0 0.0
  %9352 = vmatprep.subr.mxu0 0.0
  %9353 = vmatpush2.msra.mxu0 0.0
  %9354 = vmatprep.subr.mxu0 0.0
  %9355 = vmatpush2.msra.mxu0 0.0
  %9356 = vmatprep.subr.mxu0 0.0
  %9357 = vmatpush2.msra.mxu0 0.0
  %9358 = vmatprep.subr.mxu0 0.0
  %9359 = vmatpush2.msra.mxu0 0.0
  %9360 = vmatprep.subr.mxu0 0.0
  %9361 = vmatpush2.msra.mxu0 0.0
  %9362 = vmatprep.subr.mxu0 0.0
  %9363 = vmatpush2.msra.mxu0 0.0
  %9364 = vmatprep.mubr.f32.mxu0 0.0
  %v9365 = vand.u32 %v9175, 4294901760
  %9366 = vmatmul.mubr.f32.gmra.mxu0 %v9365
  %v9367 = vpop.f32.mrf.mxu0
  %v9368 = vadd.f32 %v9257, %v9367
  %v9369 = vpop.f32.mrf.mxu0
  %9370 = vdwg.mxu0
  %9371 = vmatprep.subr.mxu0 0.0
  %9372 = vmatpush1.msra.mxu0 0.0
  %9373 = vmatprep.subr.mxu0 0.0
  %9374 = vmatpush1.msra.mxu0 0.0
  %9375 = vmatprep.subr.mxu0 0.0
  %9376 = vmatpush1.msra.mxu0 0.0
  %9377 = vmatprep.subr.mxu0 0.0
  %9378 = vmatpush1.msra.mxu0 0.0
  %9379 = vmatprep.subr.mxu0 0.0
  %9380 = vmatpush1.msra.mxu0 0.0
  %9381 = vmatprep.subr.mxu0 0.0
  %9382 = vmatpush1.msra.mxu0 0.0
  %9383 = vmatprep.subr.mxu0 0.0
  %9384 = vmatpush1.msra.mxu0 0.0
  %9385 = vmatprep.subr.mxu0 0.0
  %9386 = vmatpush1.msra.mxu0 0.0
  %9387 = vmatprep.subr.mxu0 0.0
  %v9388 = vand.u32 %v9164, 4294901760
  %v9389 = vsub.f32 %v9164, %v9388
  %9390 = vmatpush1.msra.mxu0 %v9389
  %9391 = vmatprep.subr.mxu0 0.0
  %v9392 = vand.u32 %v9163, 4294901760
  %v9393 = vsub.f32 %v9163, %v9392
  %9394 = vmatpush1.msra.mxu0 %v9393
  %9395 = vmatprep.subr.mxu0 0.0
  %v9396 = vand.u32 %v9162, 4294901760
  %v9397 = vsub.f32 %v9162, %v9396
  %9398 = vmatpush1.msra.mxu0 %v9397
  %9399 = vmatprep.subr.mxu0 0.0
  %v9400 = vand.u32 %v9161, 4294901760
  %v9401 = vsub.f32 %v9161, %v9400
  %9402 = vmatpush1.msra.mxu0 %v9401
  %9403 = vmatprep.subr.mxu0 0.0
  %v9404 = vand.u32 %v9160, 4294901760
  %v9405 = vsub.f32 %v9160, %v9404
  %9406 = vmatpush1.msra.mxu0 %v9405
  %9407 = vmatprep.subr.mxu0 0.0
  %v9408 = vand.u32 %v9159, 4294901760
  %v9409 = vsub.f32 %v9159, %v9408
  %9410 = vmatpush1.msra.mxu0 %v9409
  %9411 = vmatprep.subr.mxu0 0.0
  %v9412 = vand.u32 %v9158, 4294901760
  %v9413 = vsub.f32 %v9158, %v9412
  %9414 = vmatpush1.msra.mxu0 %v9413
  %9415 = vmatprep.subr.mxu0 0.0
  %v9416 = vand.u32 %v9157, 4294901760
  %v9417 = vsub.f32 %v9157, %v9416
  %9418 = vmatpush1.msra.mxu0 %v9417
  %9419 = vmatprep.subr.mxu0 0.0
  %9420 = vmatpush2.msra.mxu0 0.0
  %9421 = vmatprep.subr.mxu0 0.0
  %9422 = vmatpush2.msra.mxu0 0.0
  %9423 = vmatprep.subr.mxu0 0.0
  %9424 = vmatpush2.msra.mxu0 0.0
  %9425 = vmatprep.subr.mxu0 0.0
  %9426 = vmatpush2.msra.mxu0 0.0
  %9427 = vmatprep.subr.mxu0 0.0
  %9428 = vmatpush2.msra.mxu0 0.0
  %9429 = vmatprep.subr.mxu0 0.0
  %9430 = vmatpush2.msra.mxu0 0.0
  %9431 = vmatprep.subr.mxu0 0.0
  %9432 = vmatpush2.msra.mxu0 0.0
  %9433 = vmatprep.subr.mxu0 0.0
  %9434 = vmatpush2.msra.mxu0 0.0
  %9435 = vmatprep.subr.mxu0 0.0
  %9436 = vmatpush2.msra.mxu0 0.0
  %9437 = vmatprep.subr.mxu0 0.0
  %9438 = vmatpush2.msra.mxu0 0.0
  %9439 = vmatprep.subr.mxu0 0.0
  %9440 = vmatpush2.msra.mxu0 0.0
  %9441 = vmatprep.subr.mxu0 0.0
  %9442 = vmatpush2.msra.mxu0 0.0
  %9443 = vmatprep.subr.mxu0 0.0
  %9444 = vmatpush2.msra.mxu0 0.0
  %9445 = vmatprep.subr.mxu0 0.0
  %9446 = vmatpush2.msra.mxu0 0.0
  %9447 = vmatprep.subr.mxu0 0.0
  %9448 = vmatpush2.msra.mxu0 0.0
  %9449 = vmatprep.subr.mxu0 0.0
  %9450 = vmatpush2.msra.mxu0 0.0
  %9451 = vmatprep.mubr.f32.mxu0 0.0
  %v9452 = vand.u32 %v9175, 4294901760
  %v9453 = vsub.f32 %v9175, %v9452
  %9454 = vmatmul.mubr.f32.gmra.mxu0 %v9453
  %v9455 = vpop.f32.mrf.mxu0
  %v9456 = vadd.f32 %v9368, %v9455
  %v9457 = vpop.f32.mrf.mxu0
  %9458 = vdwg.mxu0
  %9459 = vmatprep.subr.mxu0 0.0
  %9460 = vmatpush1.msra.mxu0 0.0
  %9461 = vmatprep.subr.mxu0 0.0
  %9462 = vmatpush1.msra.mxu0 0.0
  %9463 = vmatprep.subr.mxu0 0.0
  %9464 = vmatpush1.msra.mxu0 0.0
  %9465 = vmatprep.subr.mxu0 0.0
  %9466 = vmatpush1.msra.mxu0 0.0
  %9467 = vmatprep.subr.mxu0 0.0
  %9468 = vmatpush1.msra.mxu0 0.0
  %9469 = vmatprep.subr.mxu0 0.0
  %9470 = vmatpush1.msra.mxu0 0.0
  %9471 = vmatprep.subr.mxu0 0.0
  %9472 = vmatpush1.msra.mxu0 0.0
  %9473 = vmatprep.subr.mxu0 0.0
  %9474 = vmatpush1.msra.mxu0 0.0
  %9475 = vmatprep.subr.mxu0 0.0
  %v9476 = vand.u32 %v9164, 4294901760
  %9477 = vmatpush1.msra.mxu0 %v9476
  %9478 = vmatprep.subr.mxu0 0.0
  %v9479 = vand.u32 %v9163, 4294901760
  %9480 = vmatpush1.msra.mxu0 %v9479
  %9481 = vmatprep.subr.mxu0 0.0
  %v9482 = vand.u32 %v9162, 4294901760
  %9483 = vmatpush1.msra.mxu0 %v9482
  %9484 = vmatprep.subr.mxu0 0.0
  %v9485 = vand.u32 %v9161, 4294901760
  %9486 = vmatpush1.msra.mxu0 %v9485
  %9487 = vmatprep.subr.mxu0 0.0
  %v9488 = vand.u32 %v9160, 4294901760
  %9489 = vmatpush1.msra.mxu0 %v9488
  %9490 = vmatprep.subr.mxu0 0.0
  %v9491 = vand.u32 %v9159, 4294901760
  %9492 = vmatpush1.msra.mxu0 %v9491
  %9493 = vmatprep.subr.mxu0 0.0
  %v9494 = vand.u32 %v9158, 4294901760
  %9495 = vmatpush1.msra.mxu0 %v9494
  %9496 = vmatprep.subr.mxu0 0.0
  %v9497 = vand.u32 %v9157, 4294901760
  %9498 = vmatpush1.msra.mxu0 %v9497
  %9499 = vmatprep.subr.mxu0 0.0
  %9500 = vmatpush2.msra.mxu0 0.0
  %9501 = vmatprep.subr.mxu0 0.0
  %9502 = vmatpush2.msra.mxu0 0.0
  %9503 = vmatprep.subr.mxu0 0.0
  %9504 = vmatpush2.msra.mxu0 0.0
  %9505 = vmatprep.subr.mxu0 0.0
  %9506 = vmatpush2.msra.mxu0 0.0
  %9507 = vmatprep.subr.mxu0 0.0
  %9508 = vmatpush2.msra.mxu0 0.0
  %9509 = vmatprep.subr.mxu0 0.0
  %9510 = vmatpush2.msra.mxu0 0.0
  %9511 = vmatprep.subr.mxu0 0.0
  %9512 = vmatpush2.msra.mxu0 0.0
  %9513 = vmatprep.subr.mxu0 0.0
  %9514 = vmatpush2.msra.mxu0 0.0
  %9515 = vmatprep.subr.mxu0 0.0
  %9516 = vmatpush2.msra.mxu0 0.0
  %9517 = vmatprep.subr.mxu0 0.0
  %9518 = vmatpush2.msra.mxu0 0.0
  %9519 = vmatprep.subr.mxu0 0.0
  %9520 = vmatpush2.msra.mxu0 0.0
  %9521 = vmatprep.subr.mxu0 0.0
  %9522 = vmatpush2.msra.mxu0 0.0
  %9523 = vmatprep.subr.mxu0 0.0
  %9524 = vmatpush2.msra.mxu0 0.0
  %9525 = vmatprep.subr.mxu0 0.0
  %9526 = vmatpush2.msra.mxu0 0.0
  %9527 = vmatprep.subr.mxu0 0.0
  %9528 = vmatpush2.msra.mxu0 0.0
  %9529 = vmatprep.subr.mxu0 0.0
  %9530 = vmatpush2.msra.mxu0 0.0
  %9531 = vmatprep.mubr.f32.mxu0 0.0
  %v9532 = vand.u32 %v9175, 4294901760
  %v9533 = vsub.f32 %v9175, %v9532
  %v9534 = vand.u32 %v9533, 4294901760
  %9535 = vmatmul.mubr.f32.gmra.mxu0 %v9534
  %v9536 = vpop.f32.mrf.mxu0
  %v9537 = vadd.f32 %v9456, %v9536
  %v9538 = vpop.f32.mrf.mxu0
  %9539 = vdwg.mxu0
  %9540 = vmatprep.subr.mxu0 0.0
  %9541 = vmatpush1.msra.mxu0 0.0
  %9542 = vmatprep.subr.mxu0 0.0
  %9543 = vmatpush1.msra.mxu0 0.0
  %9544 = vmatprep.subr.mxu0 0.0
  %9545 = vmatpush1.msra.mxu0 0.0
  %9546 = vmatprep.subr.mxu0 0.0
  %9547 = vmatpush1.msra.mxu0 0.0
  %9548 = vmatprep.subr.mxu0 0.0
  %9549 = vmatpush1.msra.mxu0 0.0
  %9550 = vmatprep.subr.mxu0 0.0
  %9551 = vmatpush1.msra.mxu0 0.0
  %9552 = vmatprep.subr.mxu0 0.0
  %9553 = vmatpush1.msra.mxu0 0.0
  %9554 = vmatprep.subr.mxu0 0.0
  %9555 = vmatpush1.msra.mxu0 0.0
  %9556 = vmatprep.subr.mxu0 0.0
  %v9557 = vand.u32 %v9164, 4294901760
  %v9558 = vsub.f32 %v9164, %v9557
  %v9559 = vand.u32 %v9558, 4294901760
  %9560 = vmatpush1.msra.mxu0 %v9559
  %9561 = vmatprep.subr.mxu0 0.0
  %v9562 = vand.u32 %v9163, 4294901760
  %v9563 = vsub.f32 %v9163, %v9562
  %v9564 = vand.u32 %v9563, 4294901760
  %9565 = vmatpush1.msra.mxu0 %v9564
  %9566 = vmatprep.subr.mxu0 0.0
  %v9567 = vand.u32 %v9162, 4294901760
  %v9568 = vsub.f32 %v9162, %v9567
  %v9569 = vand.u32 %v9568, 4294901760
  %9570 = vmatpush1.msra.mxu0 %v9569
  %9571 = vmatprep.subr.mxu0 0.0
  %v9572 = vand.u32 %v9161, 4294901760
  %v9573 = vsub.f32 %v9161, %v9572
  %v9574 = vand.u32 %v9573, 4294901760
  %9575 = vmatpush1.msra.mxu0 %v9574
  %9576 = vmatprep.subr.mxu0 0.0
  %v9577 = vand.u32 %v9160, 4294901760
  %v9578 = vsub.f32 %v9160, %v9577
  %v9579 = vand.u32 %v9578, 4294901760
  %9580 = vmatpush1.msra.mxu0 %v9579
  %9581 = vmatprep.subr.mxu0 0.0
  %v9582 = vand.u32 %v9159, 4294901760
  %v9583 = vsub.f32 %v9159, %v9582
  %v9584 = vand.u32 %v9583, 4294901760
  %9585 = vmatpush1.msra.mxu0 %v9584
  %9586 = vmatprep.subr.mxu0 0.0
  %v9587 = vand.u32 %v9158, 4294901760
  %v9588 = vsub.f32 %v9158, %v9587
  %v9589 = vand.u32 %v9588, 4294901760
  %9590 = vmatpush1.msra.mxu0 %v9589
  %9591 = vmatprep.subr.mxu0 0.0
  %v9592 = vand.u32 %v9157, 4294901760
  %v9593 = vsub.f32 %v9157, %v9592
  %v9594 = vand.u32 %v9593, 4294901760
  %9595 = vmatpush1.msra.mxu0 %v9594
  %9596 = vmatprep.subr.mxu0 0.0
  %9597 = vmatpush2.msra.mxu0 0.0
  %9598 = vmatprep.subr.mxu0 0.0
  %9599 = vmatpush2.msra.mxu0 0.0
  %9600 = vmatprep.subr.mxu0 0.0
  %9601 = vmatpush2.msra.mxu0 0.0
  %9602 = vmatprep.subr.mxu0 0.0
  %9603 = vmatpush2.msra.mxu0 0.0
  %9604 = vmatprep.subr.mxu0 0.0
  %9605 = vmatpush2.msra.mxu0 0.0
  %9606 = vmatprep.subr.mxu0 0.0
  %9607 = vmatpush2.msra.mxu0 0.0
  %9608 = vmatprep.subr.mxu0 0.0
  %9609 = vmatpush2.msra.mxu0 0.0
  %9610 = vmatprep.subr.mxu0 0.0
  %9611 = vmatpush2.msra.mxu0 0.0
  %9612 = vmatprep.subr.mxu0 0.0
  %9613 = vmatpush2.msra.mxu0 0.0
  %9614 = vmatprep.subr.mxu0 0.0
  %9615 = vmatpush2.msra.mxu0 0.0
  %9616 = vmatprep.subr.mxu0 0.0
  %9617 = vmatpush2.msra.mxu0 0.0
  %9618 = vmatprep.subr.mxu0 0.0
  %9619 = vmatpush2.msra.mxu0 0.0
  %9620 = vmatprep.subr.mxu0 0.0
  %9621 = vmatpush2.msra.mxu0 0.0
  %9622 = vmatprep.subr.mxu0 0.0
  %9623 = vmatpush2.msra.mxu0 0.0
  %9624 = vmatprep.subr.mxu0 0.0
  %9625 = vmatpush2.msra.mxu0 0.0
  %9626 = vmatprep.subr.mxu0 0.0
  %9627 = vmatpush2.msra.mxu0 0.0
  %9628 = vmatprep.mubr.f32.mxu0 0.0
  %v9629 = vand.u32 %v9175, 4294901760
  %9630 = vmatmul.mubr.f32.gmra.mxu0 %v9629
  %v9631 = vpop.f32.mrf.mxu0
  %v9632 = vadd.f32 %v9537, %v9631
  %v9633 = vpop.f32.mrf.mxu0
  %9634 = vdwg.mxu0
  %9635 = vmatprep.subr.mxu0 0.0
  %9636 = vmatpush1.msra.mxu0 0.0
  %9637 = vmatprep.subr.mxu0 0.0
  %9638 = vmatpush1.msra.mxu0 0.0
  %9639 = vmatprep.subr.mxu0 0.0
  %9640 = vmatpush1.msra.mxu0 0.0
  %9641 = vmatprep.subr.mxu0 0.0
  %9642 = vmatpush1.msra.mxu0 0.0
  %9643 = vmatprep.subr.mxu0 0.0
  %9644 = vmatpush1.msra.mxu0 0.0
  %9645 = vmatprep.subr.mxu0 0.0
  %9646 = vmatpush1.msra.mxu0 0.0
  %9647 = vmatprep.subr.mxu0 0.0
  %9648 = vmatpush1.msra.mxu0 0.0
  %9649 = vmatprep.subr.mxu0 0.0
  %9650 = vmatpush1.msra.mxu0 0.0
  %9651 = vmatprep.subr.mxu0 0.0
  %v9652 = vand.u32 %v9164, 4294901760
  %9653 = vmatpush1.msra.mxu0 %v9652
  %9654 = vmatprep.subr.mxu0 0.0
  %v9655 = vand.u32 %v9163, 4294901760
  %9656 = vmatpush1.msra.mxu0 %v9655
  %9657 = vmatprep.subr.mxu0 0.0
  %v9658 = vand.u32 %v9162, 4294901760
  %9659 = vmatpush1.msra.mxu0 %v9658
  %9660 = vmatprep.subr.mxu0 0.0
  %v9661 = vand.u32 %v9161, 4294901760
  %9662 = vmatpush1.msra.mxu0 %v9661
  %9663 = vmatprep.subr.mxu0 0.0
  %v9664 = vand.u32 %v9160, 4294901760
  %9665 = vmatpush1.msra.mxu0 %v9664
  %9666 = vmatprep.subr.mxu0 0.0
  %v9667 = vand.u32 %v9159, 4294901760
  %9668 = vmatpush1.msra.mxu0 %v9667
  %9669 = vmatprep.subr.mxu0 0.0
  %v9670 = vand.u32 %v9158, 4294901760
  %9671 = vmatpush1.msra.mxu0 %v9670
  %9672 = vmatprep.subr.mxu0 0.0
  %v9673 = vand.u32 %v9157, 4294901760
  %9674 = vmatpush1.msra.mxu0 %v9673
  %9675 = vmatprep.subr.mxu0 0.0
  %9676 = vmatpush2.msra.mxu0 0.0
  %9677 = vmatprep.subr.mxu0 0.0
  %9678 = vmatpush2.msra.mxu0 0.0
  %9679 = vmatprep.subr.mxu0 0.0
  %9680 = vmatpush2.msra.mxu0 0.0
  %9681 = vmatprep.subr.mxu0 0.0
  %9682 = vmatpush2.msra.mxu0 0.0
  %9683 = vmatprep.subr.mxu0 0.0
  %9684 = vmatpush2.msra.mxu0 0.0
  %9685 = vmatprep.subr.mxu0 0.0
  %9686 = vmatpush2.msra.mxu0 0.0
  %9687 = vmatprep.subr.mxu0 0.0
  %9688 = vmatpush2.msra.mxu0 0.0
  %9689 = vmatprep.subr.mxu0 0.0
  %9690 = vmatpush2.msra.mxu0 0.0
  %9691 = vmatprep.subr.mxu0 0.0
  %9692 = vmatpush2.msra.mxu0 0.0
  %9693 = vmatprep.subr.mxu0 0.0
  %9694 = vmatpush2.msra.mxu0 0.0
  %9695 = vmatprep.subr.mxu0 0.0
  %9696 = vmatpush2.msra.mxu0 0.0
  %9697 = vmatprep.subr.mxu0 0.0
  %9698 = vmatpush2.msra.mxu0 0.0
  %9699 = vmatprep.subr.mxu0 0.0
  %9700 = vmatpush2.msra.mxu0 0.0
  %9701 = vmatprep.subr.mxu0 0.0
  %9702 = vmatpush2.msra.mxu0 0.0
  %9703 = vmatprep.subr.mxu0 0.0
  %9704 = vmatpush2.msra.mxu0 0.0
  %9705 = vmatprep.subr.mxu0 0.0
  %9706 = vmatpush2.msra.mxu0 0.0
  %9707 = vmatprep.mubr.f32.mxu0 0.0
  %v9708 = vand.u32 %v9175, 4294901760
  %9709 = vmatmul.mubr.f32.gmra.mxu0 %v9708
  %v9710 = vpop.f32.mrf.mxu0
  %v9711 = vadd.f32 %v9632, %v9710
  %v9712 = vpop.f32.mrf.mxu0
  %9713 = vdwg.mxu0
  %9714 = vst [vmem:[%s5] sm:$0xff] %v9711
  // Predicated region
  $region22: #{horse_race_lstm_forward.1} parent=0 // pred_check
    _
  $region23: #{horse_race_lstm_forward.1} parent=0 // pred_check_branch
    %9716 = sbr.rel (0) target = $region25
  $region24: #{horse_race_lstm_forward.1} parent=0 // pred_region
    _
  $region25: #{horse_race_lstm_forward.1} parent=0 // pred_fallthru
    _
  // Predicated region
  $region26: #{horse_race_lstm_forward.1} parent=0 // pred_check
    _
  $region27: #{horse_race_lstm_forward.1} parent=0 // pred_check_branch
    %9718 = sbr.rel (0) target = $region29
  $region28: #{horse_race_lstm_forward.1} parent=0 // pred_region
    _
  $region29: #{horse_race_lstm_forward.1} parent=0 // pred_fallthru
    _

</llo_original>
